<compile_context>
chip_gen: v7x
topology: tpu7x:2x2x1
jax: 0.10.0
libtpu: 0.0.40
codegen_flags: <defaults>
</compile_context>

<pallas_src>
import jax
import jax.numpy as jnp
from jax.experimental import pallas as pl
from jax.experimental.pallas import tpu as pltpu

CLASS_NUM = 751
CLASS_PAD = 768          # next multiple of 128 -> unmasked lane-dense stores
FEAT_DIM = 1024
BOTTLENECK = 256
BN_EPS = 1e-5

# Budget for the double-buffered (lane-padded) input tile.  Kept conservative
# so the total scoped-VMEM need stays well inside every generation's budget
# (v5e default 16 MiB is overridden via vmem_limit_bytes below).
_INPUT_VMEM_BUDGET = 20 * 1024 * 1024
_MAX_TB = 64
_TARGET_GRID_STEPS = 4   # >=2 steps -> dual-TC sharding + pipelining on v7x


def _head_kernel(x_ref, w1_ref, b1_ref, w2_ref, b2_ref, f_ref, out_ref):
    # x_ref: (TB, 1024, S) f32, native NCHW feature-map tile (spatial on lanes).
    # Global average pool: plain lane-axis sum; the 1/S factor is folded in W1.
    pooled = jnp.sum(x_ref[...], axis=-1)                          # (TB, 1024) f32

    # add_block: Linear(1024 -> 256) with eval-mode BatchNorm1d folded in.
    f = jnp.dot(pooled, w1_ref[...],
                preferred_element_type=jnp.float32) + b1_ref[...]  # (TB, 256)

    # add_block: Dropout(p=0.5) -> identity in eval mode.
    f_ref[...] = f

    # classifier: Linear(256 -> 751), padded to 768 lanes (sliced back outside).
    out_ref[...] = jnp.dot(f, w2_ref[...],
                           preferred_element_type=jnp.float32) + b2_ref[...]


def _pick_batch_tile(B, S):
    """Batch tile sized from the padded-VMEM footprint of the NCHW tile."""
    s_pad = -(-S // 128) * 128                       # lane padding of last dim
    row_bytes = FEAT_DIM * s_pad * 4                 # padded f32 bytes per row
    tb_vmem = max(8, (_INPUT_VMEM_BUDGET // (2 * row_bytes)) // 8 * 8)
    tb_steps = max(8, (-(-B // _TARGET_GRID_STEPS) + 7) // 8 * 8)
    return int(min(_MAX_TB, tb_vmem, tb_steps)), row_bytes


def dense_mlf_head(x_feat, params):
    """x_feat: (B, 1024, H, W) float32 NCHW feature map (densenet121 trunk out).
    Returns (f, f, logits) matching dense_mlf.forward in eval mode."""
    B, C, H, W = x_feat.shape
    assert C == FEAT_DIM
    S = H * W

    (w1, b1, gamma, beta, rmean, rvar, w2, b2) = params

    # ---- trace-time prep (free reshape + tiny weight folds; no HBM round
    # trip on the large activation) ---------------------------------------
    x3 = x_feat.reshape(B, C, S)                      # contiguous view, no copy

    # Fold eval-mode BatchNorm1d and the 1/S pooling factor into Linear #1.
    scale = gamma * jax.lax.rsqrt(rvar + BN_EPS)                  # (1, 256)
    w1f = (w1 * scale) * (1.0 / S)                                # (1024, 256) f32
    b1f = (b1 - rmean) * scale + beta                             # (1, 256)   f32

    # Pad classifier to 768 output lanes.
    w2p = jnp.pad(w2, ((0, 0), (0, CLASS_PAD - CLASS_NUM)))       # (256, 768) f32
    b2p = jnp.pad(b2, ((0, 0), (0, CLASS_PAD - CLASS_NUM)))       # (1, 768)   f32

    # ---- batch tiling ----------------------------------------------------
    TB, row_bytes = _pick_batch_tile(B, S)
    Bp = -(-B // TB) * TB
    if Bp != B:
        x3 = jnp.pad(x3, ((0, Bp - B), (0, 0), (0, 0)))
    n_blocks = Bp // TB

    # Explicit scoped-VMEM budget: 2x padded input tile + 2x weights + outputs.
    w_bytes = 4 * (w1f.size + b1f.size + w2p.size + b2p.size)
    o_bytes = 4 * TB * (BOTTLENECK + CLASS_PAD)
    vmem_limit = int(2 * (TB * row_bytes + w_bytes + o_bytes) + (16 << 20))
    vmem_limit = min(vmem_limit, 56 << 20)            # stay under v7x's 64 MiB

    const = lambda shape: pl.BlockSpec(shape, lambda i: (0,) * len(shape))

    f_pad, logits_pad = pl.pallas_call(
        _head_kernel,
        out_shape=(
            jax.ShapeDtypeStruct((Bp, BOTTLENECK), jnp.float32),
            jax.ShapeDtypeStruct((Bp, CLASS_PAD), jnp.float32),
        ),
        grid=(n_blocks,),
        in_specs=[
            pl.BlockSpec((TB, C, S), lambda i: (i, 0, 0)),   # x, batch-tiled
            const(w1f.shape),                                # W1' (1024,256) resident
            const(b1f.shape),                                # b1' (1,256)
            const(w2p.shape),                                # W2  (256,768) resident
            const(b2p.shape),                                # b2  (1,768)
        ],
        out_specs=[
            pl.BlockSpec((TB, BOTTLENECK), lambda i: (i, 0)),
            pl.BlockSpec((TB, CLASS_PAD), lambda i: (i, 0)),
        ],
        compiler_params=pltpu.CompilerParams(
            dimension_semantics=("parallel",),
            vmem_limit_bytes=vmem_limit),
    )(x3, w1f, b1f, w2p, b2p)

    f = f_pad[:B]
    logits = logits_pad[:B, :CLASS_NUM]
    return f, f, logits


def dense_mlf_head_ref(x_feat, params):
    """Pure-JAX f32 reference for the same head (eval mode)."""
    (w1, b1, gamma, beta, rmean, rvar, w2, b2) = params
    B, C, H, W = x_feat.shape
    pooled = jnp.mean(x_feat.reshape(B, C, H * W), axis=-1)
    y = pooled @ w1 + b1
    scale = gamma * jax.lax.rsqrt(rvar + BN_EPS)
    f = (y - rmean) * scale + beta
    logits = f @ w2 + b2
    return f, f, logits


def init_params(key):
    """Deterministic parameter init matching the PyTorch init functions."""
    k1, k2, k3 = jax.random.split(key, 3)

    # Linear(1024, 256): weights_init_kaiming -> kaiming_normal fan_out
    # (fan_out = out_features = 256, gain = sqrt(2)).  Stored as (in, out).
    std1 = (2.0 / BOTTLENECK) ** 0.5
    w1 = jax.random.normal(k1, (FEAT_DIM, BOTTLENECK), jnp.float32) * std1
    b1 = jnp.zeros((1, BOTTLENECK), jnp.float32)

    # BatchNorm1d(256): gamma ~ N(1, 0.02), beta = 0; running stats at init.
    gamma = 1.0 + 0.02 * jax.random.normal(k2, (1, BOTTLENECK), jnp.float32)
    beta = jnp.zeros((1, BOTTLENECK), jnp.float32)
    rmean = jnp.zeros((1, BOTTLENECK), jnp.float32)
    rvar = jnp.ones((1, BOTTLENECK), jnp.float32)

    # classifier Linear(256, 751): weights_init_classifier -> N(0, 0.001), b=0.
    w2 = jax.random.normal(k3, (BOTTLENECK, CLASS_NUM), jnp.float32) * 0.001
    b2 = jnp.zeros((1, CLASS_NUM), jnp.float32)

    return (w1, b1, gamma, beta, rmean, rvar, w2, b2)


if __name__ == "__main__":
    key = jax.random.PRNGKey(0)
    kx, kp = jax.random.split(key)

    # Small example: densenet121-style feature map (B, 1024, 4, 4), NCHW f32.
    B, H, W = 2, 4, 4
    x_feat = jax.random.normal(kx, (B, FEAT_DIM, H, W), jnp.float32)

    params = init_params(kp)

    f1, f2, logits = dense_mlf_head(x_feat, params)
    jax.block_until_ready((f1, f2, logits))

    assert f1.shape == (B, BOTTLENECK)
    assert f2.shape == (B, BOTTLENECK)
    assert logits.shape == (B, CLASS_NUM)

    # Tolerance check against the pure-f32 reference (loose: MXU default
    # precision may use bf16 passes).
    rf, _, rl = dense_mlf_head_ref(x_feat, params)
    rel_f = float(jnp.max(jnp.abs(f1 - rf)) / (jnp.max(jnp.abs(rf)) + 1e-9))
    rel_l = float(jnp.max(jnp.abs(logits - rl)) / (jnp.max(jnp.abs(rl)) + 1e-9))
    assert rel_f < 2e-2, f"feature mismatch rel_err={rel_f}"
    assert rel_l < 2e-2, f"logits mismatch rel_err={rel_l}"

    print("KERNEL_OK")
</pallas_src>

<mosaic_0001>
module attributes {stable_mosaic.version = 11 : i64} {
  func.func @_head_kernel(%arg0: i32, %arg1: memref<8x1024x16xf32, #tpu.memory_space<vmem>>, %arg2: memref<1024x256xf32, #tpu.memory_space<vmem>>, %arg3: memref<1x256xf32, #tpu.memory_space<vmem>>, %arg4: memref<256x768xf32, #tpu.memory_space<vmem>>, %arg5: memref<1x768xf32, #tpu.memory_space<vmem>>, %arg6: memref<8x256xf32, #tpu.memory_space<vmem>>, %arg7: memref<8x768xf32, #tpu.memory_space<vmem>>) attributes {dimension_semantics = [#tpu.dimension_semantics<parallel>], iteration_bounds = array<i64: 1>, scalar_prefetch = 0 : i64, scratch_operands = 0 : i64, tpu.core_type = #tpu.core_type<tc>, window_params = [{transform_indices = @transform_0, window_bounds = array<i64: 8, 1024, 16>}, {pipeline_mode = #tpu.pipeline_mode<synchronous>, transform_indices = @transform_1, window_bounds = array<i64: 1024, 256>}, {pipeline_mode = #tpu.pipeline_mode<synchronous>, transform_indices = @transform_2, window_bounds = array<i64: 1, 256>}, {pipeline_mode = #tpu.pipeline_mode<synchronous>, transform_indices = @transform_3, window_bounds = array<i64: 256, 768>}, {pipeline_mode = #tpu.pipeline_mode<synchronous>, transform_indices = @transform_4, window_bounds = array<i64: 1, 768>}, {transform_indices = @transform_5, window_bounds = array<i64: 8, 256>}, {transform_indices = @transform_6, window_bounds = array<i64: 8, 768>}]} {
    %c0 = arith.constant 0 : index
    %c0_0 = arith.constant 0 : index
    %c0_1 = arith.constant 0 : index
    %0 = vector.load %arg1[%c0, %c0_0, %c0_1] : memref<8x1024x16xf32, #tpu.memory_space<vmem>>, vector<8x1024x16xf32>
    %cst = arith.constant dense<0.000000e+00> : vector<8x1024xf32>
    %1 = vector.multi_reduction <add>, %0, %cst [2] : vector<8x1024x16xf32> to vector<8x1024xf32>
    %c0_2 = arith.constant 0 : index
    %c0_3 = arith.constant 0 : index
    %2 = vector.load %arg2[%c0_2, %c0_3] : memref<1024x256xf32, #tpu.memory_space<vmem>>, vector<1024x256xf32>
    %cst_4 = arith.constant dense<0.000000e+00> : vector<8x256xf32>
    %3 = tpu.matmul %1, %2, %cst_4 {dimension_numbers = #tpu.dot_dimension_numbers<[1], [0], [0], [1], [0, 0, 1, 1], [], []>} : vector<8x1024xf32>, vector<1024x256xf32>, vector<8x256xf32> -> vector<8x256xf32>
    %c0_5 = arith.constant 0 : index
    %c0_6 = arith.constant 0 : index
    %4 = vector.load %arg3[%c0_5, %c0_6] : memref<1x256xf32, #tpu.memory_space<vmem>>, vector<1x256xf32>
    %5 = vector.broadcast %4 : vector<1x256xf32> to vector<8x256xf32>
    %6 = arith.addf %3, %5 : vector<8x256xf32>
    %c0_7 = arith.constant 0 : index
    %c0_8 = arith.constant 0 : index
    %7 = vector.load %arg6[%c0_7, %c0_8] : memref<8x256xf32, #tpu.memory_space<vmem>>, vector<8x256xf32>
    tpu.vector_store %arg6[%c0_7, %c0_8], %6 {strides = array<i32>} : memref<8x256xf32, #tpu.memory_space<vmem>>, vector<8x256xf32>,
    %c0_9 = arith.constant 0 : index
    %c0_10 = arith.constant 0 : index
    %8 = vector.load %arg4[%c0_9, %c0_10] : memref<256x768xf32, #tpu.memory_space<vmem>>, vector<256x768xf32>
    %cst_11 = arith.constant dense<0.000000e+00> : vector<8x768xf32>
    %9 = tpu.matmul %6, %8, %cst_11 {dimension_numbers = #tpu.dot_dimension_numbers<[1], [0], [0], [1], [0, 0, 1, 1], [], []>} : vector<8x256xf32>, vector<256x768xf32>, vector<8x768xf32> -> vector<8x768xf32>
    %c0_12 = arith.constant 0 : index
    %c0_13 = arith.constant 0 : index
    %10 = vector.load %arg5[%c0_12, %c0_13] : memref<1x768xf32, #tpu.memory_space<vmem>>, vector<1x768xf32>
    %11 = vector.broadcast %10 : vector<1x768xf32> to vector<8x768xf32>
    %12 = arith.addf %9, %11 : vector<8x768xf32>
    %c0_14 = arith.constant 0 : index
    %c0_15 = arith.constant 0 : index
    %13 = vector.load %arg7[%c0_14, %c0_15] : memref<8x768xf32, #tpu.memory_space<vmem>>, vector<8x768xf32>
    tpu.vector_store %arg7[%c0_14, %c0_15], %12 {strides = array<i32>} : memref<8x768xf32, #tpu.memory_space<vmem>>, vector<8x768xf32>,
    return
  }
  func.func @transform_0(%arg0: i32) -> (i32, i32, i32) {
    %c0_i32 = arith.constant 0 : i32
    %c0_i32_0 = arith.constant 0 : i32
    %c0_i32_1 = arith.constant 0 : i32
    return %arg0, %c0_i32, %c0_i32_0 : i32, i32, i32
  }
  func.func @transform_1(%arg0: i32) -> (i32, i32) {
    %c0_i32 = arith.constant 0 : i32
    %c0_i32_0 = arith.constant 0 : i32
    %c0_i32_1 = arith.constant 0 : i32
    return %c0_i32, %c0_i32_0 : i32, i32
  }
  func.func @transform_2(%arg0: i32) -> (i32, i32) {
    %c0_i32 = arith.constant 0 : i32
    %c0_i32_0 = arith.constant 0 : i32
    %c0_i32_1 = arith.constant 0 : i32
    return %c0_i32, %c0_i32_0 : i32, i32
  }
  func.func @transform_3(%arg0: i32) -> (i32, i32) {
    %c0_i32 = arith.constant 0 : i32
    %c0_i32_0 = arith.constant 0 : i32
    %c0_i32_1 = arith.constant 0 : i32
    return %c0_i32, %c0_i32_0 : i32, i32
  }
  func.func @transform_4(%arg0: i32) -> (i32, i32) {
    %c0_i32 = arith.constant 0 : i32
    %c0_i32_0 = arith.constant 0 : i32
    %c0_i32_1 = arith.constant 0 : i32
    return %c0_i32, %c0_i32_0 : i32, i32
  }
  func.func @transform_5(%arg0: i32) -> (i32, i32) {
    %c0_i32 = arith.constant 0 : i32
    %c0_i32_0 = arith.constant 0 : i32
    return %arg0, %c0_i32 : i32, i32
  }
  func.func @transform_6(%arg0: i32) -> (i32, i32) {
    %c0_i32 = arith.constant 0 : i32
    %c0_i32_0 = arith.constant 0 : i32
    return %arg0, %c0_i32 : i32, i32
  }
}

</mosaic_0001>

<llo_original>
// kernel: tpu_custom_call.1
$region0: #{tpu_custom_call.1}
  #allocation0 [shape = 'u32[]', space=smem, size = 0x4, offset = 0x4, fixed_abs, tag = 'smem constant byte address 0x4 - core index']
  #allocation1 [shape = 'u32[144,128]{1,0:T(1,128)}', space=vmem, size = 0x12000, scoped, tag = 'internal scratch']
  %s0 = inlined_call_operand.vmem [shape: f32[8,1024,16], index: 0, kind: input, shape index: {}]
  %s1 = inlined_call_operand.vmem [shape: f32[1024,256], index: 1, kind: input, shape index: {}]
  %s2 = inlined_call_operand.vmem [shape: f32[1,256], index: 2, kind: input, shape index: {}]
  %s3 = inlined_call_operand.vmem [shape: f32[256,768], index: 3, kind: input, shape index: {}]
  %s4 = inlined_call_operand.vmem [shape: f32[1,768], index: 4, kind: input, shape index: {}]
  %s5 = inlined_call_operand.hbm [shape: f32[8,256], index: 5, kind: output, shape index: {0}]
  %s6 = inlined_call_operand.hbm [shape: f32[8,768], index: 6, kind: output, shape index: {1}]
  %7 = xla_tuple %s5, %s6
  %s8 = sld [smem:[#allocation0]]
  $region38: #{tpu_custom_call.1} parent=0
    _
  %s10 = ssub.s32 1, %s8
  %s11 = scalar_select 0, %s10, %s8
  $region1: #{tpu_custom_call.1} parent=0
    #allocation2 [shape = 'u8[8192]{0}', space=vmem, size = 0x2000, scoped, tag = 'output window, operand 0, single buffered']
    #allocation3 [shape = 's32[1]{0}', space=sflag, size = 0x4, scoped, tag = 'scoped memory for tpu_custom_call.1']
    #allocation4 [shape = 'u8[24576]{0}', space=vmem, size = 0x6000, scoped, tag = 'output window, operand 1, single buffered']
    #allocation5 [shape = 's32[1]{0}', space=sflag, size = 0x4, scoped, tag = 'scoped memory for tpu_custom_call.1']
    %12 = vsyncpa [#allocation3], 0
    %13 = vsyncpa [#allocation5], 0
    // Predicated region
    $region2: #{tpu_custom_call.1} parent=1 // pred_check
      _
    $region3: #{tpu_custom_call.1} parent=1 // pred_check_branch
      %15 = sbr.rel (0) target = $region5
    $region4: #{tpu_custom_call.1} parent=1 // pred_region
      _
    $region5: #{tpu_custom_call.1} parent=1 // pred_fallthru
      _
    // Predicated region
    $region6: #{tpu_custom_call.1} parent=1 // pred_check
      _
    $region7: #{tpu_custom_call.1} parent=1 // pred_check_branch
      %17 = sbr.rel (0) target = $region9
    $region8: #{tpu_custom_call.1} parent=1 // pred_region
      _
    $region9: #{tpu_custom_call.1} parent=1 // pred_fallthru
      _
    // Predicated region
    $region10: #{tpu_custom_call.1} parent=1 // pred_check
      _
    $region11: #{tpu_custom_call.1} parent=1 // pred_check_branch
      %19 = sbr.rel (0) target = $region13
    $region12: #{tpu_custom_call.1} parent=1 // pred_region
      _
    $region13: #{tpu_custom_call.1} parent=1 // pred_fallthru
      _
    // Predicated region
    $region14: #{tpu_custom_call.1} parent=1 // pred_check
      _
    $region15: #{tpu_custom_call.1} parent=1 // pred_check_branch
      %21 = sbr.rel (0) target = $region17
    $region16: #{tpu_custom_call.1} parent=1 // pred_region
      _
    $region17: #{tpu_custom_call.1} parent=1 // pred_fallthru
      _
    // Predicated region
    $region18: #{tpu_custom_call.1} parent=1 // pred_check
      _
    $region19: #{tpu_custom_call.1} parent=1 // pred_check_branch
      %23 = sbr.rel (0) target = $region21
    $region20: #{tpu_custom_call.1} parent=1 // pred_region
      _
    $region21: #{tpu_custom_call.1} parent=1 // pred_fallthru
      _
    %v24 = vld [vmem:[%s0] sm:$0xff]
    %v25 = vld [vmem:[%s0 + $0x8] sm:$0xff]
    %v26 = vld [vmem:[%s0 + $0x10] sm:$0xff]
    %v27 = vld [vmem:[%s0 + $0x18] sm:$0xff]
    %v28 = vld [vmem:[%s0 + $0x20] sm:$0xff]
    %v29 = vld [vmem:[%s0 + $0x28] sm:$0xff]
    %v30 = vld [vmem:[%s0 + $0x30] sm:$0xff]
    %v31 = vld [vmem:[%s0 + $0x38] sm:$0xff]
    %v32 = vld [vmem:[%s0 + $0x40] sm:$0xff]
    %v33 = vld [vmem:[%s0 + $0x48] sm:$0xff]
    %v34 = vld [vmem:[%s0 + $0x50] sm:$0xff]
    %v35 = vld [vmem:[%s0 + $0x58] sm:$0xff]
    %v36 = vld [vmem:[%s0 + $0x60] sm:$0xff]
    %v37 = vld [vmem:[%s0 + $0x68] sm:$0xff]
    %v38 = vld [vmem:[%s0 + $0x70] sm:$0xff]
    %v39 = vld [vmem:[%s0 + $0x78] sm:$0xff]
    %v40 = vld [vmem:[%s0 + $0x80] sm:$0xff]
    %v41 = vld [vmem:[%s0 + $0x88] sm:$0xff]
    %v42 = vld [vmem:[%s0 + $0x90] sm:$0xff]
    %v43 = vld [vmem:[%s0 + $0x98] sm:$0xff]
    %v44 = vld [vmem:[%s0 + $0xa0] sm:$0xff]
    %v45 = vld [vmem:[%s0 + $0xa8] sm:$0xff]
    %v46 = vld [vmem:[%s0 + $0xb0] sm:$0xff]
    %v47 = vld [vmem:[%s0 + $0xb8] sm:$0xff]
    %v48 = vld [vmem:[%s0 + $0xc0] sm:$0xff]
    %v49 = vld [vmem:[%s0 + $0xc8] sm:$0xff]
    %v50 = vld [vmem:[%s0 + $0xd0] sm:$0xff]
    %v51 = vld [vmem:[%s0 + $0xd8] sm:$0xff]
    %v52 = vld [vmem:[%s0 + $0xe0] sm:$0xff]
    %v53 = vld [vmem:[%s0 + $0xe8] sm:$0xff]
    %v54 = vld [vmem:[%s0 + $0xf0] sm:$0xff]
    %v55 = vld [vmem:[%s0 + $0xf8] sm:$0xff]
    %v56 = vld [vmem:[%s0 + $0x100] sm:$0xff]
    %v57 = vld [vmem:[%s0 + $0x108] sm:$0xff]
    %v58 = vld [vmem:[%s0 + $0x110] sm:$0xff]
    %v59 = vld [vmem:[%s0 + $0x118] sm:$0xff]
    %v60 = vld [vmem:[%s0 + $0x120] sm:$0xff]
    %v61 = vld [vmem:[%s0 + $0x128] sm:$0xff]
    %v62 = vld [vmem:[%s0 + $0x130] sm:$0xff]
    %v63 = vld [vmem:[%s0 + $0x138] sm:$0xff]
    %v64 = vld [vmem:[%s0 + $0x140] sm:$0xff]
    %v65 = vld [vmem:[%s0 + $0x148] sm:$0xff]
    %v66 = vld [vmem:[%s0 + $0x150] sm:$0xff]
    %v67 = vld [vmem:[%s0 + $0x158] sm:$0xff]
    %v68 = vld [vmem:[%s0 + $0x160] sm:$0xff]
    %v69 = vld [vmem:[%s0 + $0x168] sm:$0xff]
    %v70 = vld [vmem:[%s0 + $0x170] sm:$0xff]
    %v71 = vld [vmem:[%s0 + $0x178] sm:$0xff]
    %v72 = vld [vmem:[%s0 + $0x180] sm:$0xff]
    %v73 = vld [vmem:[%s0 + $0x188] sm:$0xff]
    %v74 = vld [vmem:[%s0 + $0x190] sm:$0xff]
    %v75 = vld [vmem:[%s0 + $0x198] sm:$0xff]
    %v76 = vld [vmem:[%s0 + $0x1a0] sm:$0xff]
    %v77 = vld [vmem:[%s0 + $0x1a8] sm:$0xff]
    %v78 = vld [vmem:[%s0 + $0x1b0] sm:$0xff]
    %v79 = vld [vmem:[%s0 + $0x1b8] sm:$0xff]
    %v80 = vld [vmem:[%s0 + $0x1c0] sm:$0xff]
    %v81 = vld [vmem:[%s0 + $0x1c8] sm:$0xff]
    %v82 = vld [vmem:[%s0 + $0x1d0] sm:$0xff]
    %v83 = vld [vmem:[%s0 + $0x1d8] sm:$0xff]
    %v84 = vld [vmem:[%s0 + $0x1e0] sm:$0xff]
    %v85 = vld [vmem:[%s0 + $0x1e8] sm:$0xff]
    %v86 = vld [vmem:[%s0 + $0x1f0] sm:$0xff]
    %v87 = vld [vmem:[%s0 + $0x1f8] sm:$0xff]
    %v88 = vld [vmem:[%s0 + $0x200] sm:$0xff]
    %v89 = vld [vmem:[%s0 + $0x208] sm:$0xff]
    %v90 = vld [vmem:[%s0 + $0x210] sm:$0xff]
    %v91 = vld [vmem:[%s0 + $0x218] sm:$0xff]
    %v92 = vld [vmem:[%s0 + $0x220] sm:$0xff]
    %v93 = vld [vmem:[%s0 + $0x228] sm:$0xff]
    %v94 = vld [vmem:[%s0 + $0x230] sm:$0xff]
    %v95 = vld [vmem:[%s0 + $0x238] sm:$0xff]
    %v96 = vld [vmem:[%s0 + $0x240] sm:$0xff]
    %v97 = vld [vmem:[%s0 + $0x248] sm:$0xff]
    %v98 = vld [vmem:[%s0 + $0x250] sm:$0xff]
    %v99 = vld [vmem:[%s0 + $0x258] sm:$0xff]
    %v100 = vld [vmem:[%s0 + $0x260] sm:$0xff]
    %v101 = vld [vmem:[%s0 + $0x268] sm:$0xff]
    %v102 = vld [vmem:[%s0 + $0x270] sm:$0xff]
    %v103 = vld [vmem:[%s0 + $0x278] sm:$0xff]
    %v104 = vld [vmem:[%s0 + $0x280] sm:$0xff]
    %v105 = vld [vmem:[%s0 + $0x288] sm:$0xff]
    %v106 = vld [vmem:[%s0 + $0x290] sm:$0xff]
    %v107 = vld [vmem:[%s0 + $0x298] sm:$0xff]
    %v108 = vld [vmem:[%s0 + $0x2a0] sm:$0xff]
    %v109 = vld [vmem:[%s0 + $0x2a8] sm:$0xff]
    %v110 = vld [vmem:[%s0 + $0x2b0] sm:$0xff]
    %v111 = vld [vmem:[%s0 + $0x2b8] sm:$0xff]
    %v112 = vld [vmem:[%s0 + $0x2c0] sm:$0xff]
    %v113 = vld [vmem:[%s0 + $0x2c8] sm:$0xff]
    %v114 = vld [vmem:[%s0 + $0x2d0] sm:$0xff]
    %v115 = vld [vmem:[%s0 + $0x2d8] sm:$0xff]
    %v116 = vld [vmem:[%s0 + $0x2e0] sm:$0xff]
    %v117 = vld [vmem:[%s0 + $0x2e8] sm:$0xff]
    %v118 = vld [vmem:[%s0 + $0x2f0] sm:$0xff]
    %v119 = vld [vmem:[%s0 + $0x2f8] sm:$0xff]
    %v120 = vld [vmem:[%s0 + $0x300] sm:$0xff]
    %v121 = vld [vmem:[%s0 + $0x308] sm:$0xff]
    %v122 = vld [vmem:[%s0 + $0x310] sm:$0xff]
    %v123 = vld [vmem:[%s0 + $0x318] sm:$0xff]
    %v124 = vld [vmem:[%s0 + $0x320] sm:$0xff]
    %v125 = vld [vmem:[%s0 + $0x328] sm:$0xff]
    %v126 = vld [vmem:[%s0 + $0x330] sm:$0xff]
    %v127 = vld [vmem:[%s0 + $0x338] sm:$0xff]
    %v128 = vld [vmem:[%s0 + $0x340] sm:$0xff]
    %v129 = vld [vmem:[%s0 + $0x348] sm:$0xff]
    %v130 = vld [vmem:[%s0 + $0x350] sm:$0xff]
    %v131 = vld [vmem:[%s0 + $0x358] sm:$0xff]
    %v132 = vld [vmem:[%s0 + $0x360] sm:$0xff]
    %v133 = vld [vmem:[%s0 + $0x368] sm:$0xff]
    %v134 = vld [vmem:[%s0 + $0x370] sm:$0xff]
    %v135 = vld [vmem:[%s0 + $0x378] sm:$0xff]
    %v136 = vld [vmem:[%s0 + $0x380] sm:$0xff]
    %v137 = vld [vmem:[%s0 + $0x388] sm:$0xff]
    %v138 = vld [vmem:[%s0 + $0x390] sm:$0xff]
    %v139 = vld [vmem:[%s0 + $0x398] sm:$0xff]
    %v140 = vld [vmem:[%s0 + $0x3a0] sm:$0xff]
    %v141 = vld [vmem:[%s0 + $0x3a8] sm:$0xff]
    %v142 = vld [vmem:[%s0 + $0x3b0] sm:$0xff]
    %v143 = vld [vmem:[%s0 + $0x3b8] sm:$0xff]
    %v144 = vld [vmem:[%s0 + $0x3c0] sm:$0xff]
    %v145 = vld [vmem:[%s0 + $0x3c8] sm:$0xff]
    %v146 = vld [vmem:[%s0 + $0x3d0] sm:$0xff]
    %v147 = vld [vmem:[%s0 + $0x3d8] sm:$0xff]
    %v148 = vld [vmem:[%s0 + $0x3e0] sm:$0xff]
    %v149 = vld [vmem:[%s0 + $0x3e8] sm:$0xff]
    %v150 = vld [vmem:[%s0 + $0x3f0] sm:$0xff]
    %v151 = vld [vmem:[%s0 + $0x3f8] sm:$0xff]
    %v152 = vld [vmem:[%s0 + $0x400] sm:$0xff]
    %v153 = vld [vmem:[%s0 + $0x408] sm:$0xff]
    %v154 = vld [vmem:[%s0 + $0x410] sm:$0xff]
    %v155 = vld [vmem:[%s0 + $0x418] sm:$0xff]
    %v156 = vld [vmem:[%s0 + $0x420] sm:$0xff]
    %v157 = vld [vmem:[%s0 + $0x428] sm:$0xff]
    %v158 = vld [vmem:[%s0 + $0x430] sm:$0xff]
    %v159 = vld [vmem:[%s0 + $0x438] sm:$0xff]
    %v160 = vld [vmem:[%s0 + $0x440] sm:$0xff]
    %v161 = vld [vmem:[%s0 + $0x448] sm:$0xff]
    %v162 = vld [vmem:[%s0 + $0x450] sm:$0xff]
    %v163 = vld [vmem:[%s0 + $0x458] sm:$0xff]
    %v164 = vld [vmem:[%s0 + $0x460] sm:$0xff]
    %v165 = vld [vmem:[%s0 + $0x468] sm:$0xff]
    %v166 = vld [vmem:[%s0 + $0x470] sm:$0xff]
    %v167 = vld [vmem:[%s0 + $0x478] sm:$0xff]
    %v168 = vld [vmem:[%s0 + $0x480] sm:$0xff]
    %v169 = vld [vmem:[%s0 + $0x488] sm:$0xff]
    %v170 = vld [vmem:[%s0 + $0x490] sm:$0xff]
    %v171 = vld [vmem:[%s0 + $0x498] sm:$0xff]
    %v172 = vld [vmem:[%s0 + $0x4a0] sm:$0xff]
    %v173 = vld [vmem:[%s0 + $0x4a8] sm:$0xff]
    %v174 = vld [vmem:[%s0 + $0x4b0] sm:$0xff]
    %v175 = vld [vmem:[%s0 + $0x4b8] sm:$0xff]
    %v176 = vld [vmem:[%s0 + $0x4c0] sm:$0xff]
    %v177 = vld [vmem:[%s0 + $0x4c8] sm:$0xff]
    %v178 = vld [vmem:[%s0 + $0x4d0] sm:$0xff]
    %v179 = vld [vmem:[%s0 + $0x4d8] sm:$0xff]
    %v180 = vld [vmem:[%s0 + $0x4e0] sm:$0xff]
    %v181 = vld [vmem:[%s0 + $0x4e8] sm:$0xff]
    %v182 = vld [vmem:[%s0 + $0x4f0] sm:$0xff]
    %v183 = vld [vmem:[%s0 + $0x4f8] sm:$0xff]
    %v184 = vld [vmem:[%s0 + $0x500] sm:$0xff]
    %v185 = vld [vmem:[%s0 + $0x508] sm:$0xff]
    %v186 = vld [vmem:[%s0 + $0x510] sm:$0xff]
    %v187 = vld [vmem:[%s0 + $0x518] sm:$0xff]
    %v188 = vld [vmem:[%s0 + $0x520] sm:$0xff]
    %v189 = vld [vmem:[%s0 + $0x528] sm:$0xff]
    %v190 = vld [vmem:[%s0 + $0x530] sm:$0xff]
    %v191 = vld [vmem:[%s0 + $0x538] sm:$0xff]
    %v192 = vld [vmem:[%s0 + $0x540] sm:$0xff]
    %v193 = vld [vmem:[%s0 + $0x548] sm:$0xff]
    %v194 = vld [vmem:[%s0 + $0x550] sm:$0xff]
    %v195 = vld [vmem:[%s0 + $0x558] sm:$0xff]
    %v196 = vld [vmem:[%s0 + $0x560] sm:$0xff]
    %v197 = vld [vmem:[%s0 + $0x568] sm:$0xff]
    %v198 = vld [vmem:[%s0 + $0x570] sm:$0xff]
    %v199 = vld [vmem:[%s0 + $0x578] sm:$0xff]
    %v200 = vld [vmem:[%s0 + $0x580] sm:$0xff]
    %v201 = vld [vmem:[%s0 + $0x588] sm:$0xff]
    %v202 = vld [vmem:[%s0 + $0x590] sm:$0xff]
    %v203 = vld [vmem:[%s0 + $0x598] sm:$0xff]
    %v204 = vld [vmem:[%s0 + $0x5a0] sm:$0xff]
    %v205 = vld [vmem:[%s0 + $0x5a8] sm:$0xff]
    %v206 = vld [vmem:[%s0 + $0x5b0] sm:$0xff]
    %v207 = vld [vmem:[%s0 + $0x5b8] sm:$0xff]
    %v208 = vld [vmem:[%s0 + $0x5c0] sm:$0xff]
    %v209 = vld [vmem:[%s0 + $0x5c8] sm:$0xff]
    %v210 = vld [vmem:[%s0 + $0x5d0] sm:$0xff]
    %v211 = vld [vmem:[%s0 + $0x5d8] sm:$0xff]
    %v212 = vld [vmem:[%s0 + $0x5e0] sm:$0xff]
    %v213 = vld [vmem:[%s0 + $0x5e8] sm:$0xff]
    %v214 = vld [vmem:[%s0 + $0x5f0] sm:$0xff]
    %v215 = vld [vmem:[%s0 + $0x5f8] sm:$0xff]
    %v216 = vld [vmem:[%s0 + $0x600] sm:$0xff]
    %v217 = vld [vmem:[%s0 + $0x608] sm:$0xff]
    %v218 = vld [vmem:[%s0 + $0x610] sm:$0xff]
    %v219 = vld [vmem:[%s0 + $0x618] sm:$0xff]
    %v220 = vld [vmem:[%s0 + $0x620] sm:$0xff]
    %v221 = vld [vmem:[%s0 + $0x628] sm:$0xff]
    %v222 = vld [vmem:[%s0 + $0x630] sm:$0xff]
    %v223 = vld [vmem:[%s0 + $0x638] sm:$0xff]
    %v224 = vld [vmem:[%s0 + $0x640] sm:$0xff]
    %v225 = vld [vmem:[%s0 + $0x648] sm:$0xff]
    %v226 = vld [vmem:[%s0 + $0x650] sm:$0xff]
    %v227 = vld [vmem:[%s0 + $0x658] sm:$0xff]
    %v228 = vld [vmem:[%s0 + $0x660] sm:$0xff]
    %v229 = vld [vmem:[%s0 + $0x668] sm:$0xff]
    %v230 = vld [vmem:[%s0 + $0x670] sm:$0xff]
    %v231 = vld [vmem:[%s0 + $0x678] sm:$0xff]
    %v232 = vld [vmem:[%s0 + $0x680] sm:$0xff]
    %v233 = vld [vmem:[%s0 + $0x688] sm:$0xff]
    %v234 = vld [vmem:[%s0 + $0x690] sm:$0xff]
    %v235 = vld [vmem:[%s0 + $0x698] sm:$0xff]
    %v236 = vld [vmem:[%s0 + $0x6a0] sm:$0xff]
    %v237 = vld [vmem:[%s0 + $0x6a8] sm:$0xff]
    %v238 = vld [vmem:[%s0 + $0x6b0] sm:$0xff]
    %v239 = vld [vmem:[%s0 + $0x6b8] sm:$0xff]
    %v240 = vld [vmem:[%s0 + $0x6c0] sm:$0xff]
    %v241 = vld [vmem:[%s0 + $0x6c8] sm:$0xff]
    %v242 = vld [vmem:[%s0 + $0x6d0] sm:$0xff]
    %v243 = vld [vmem:[%s0 + $0x6d8] sm:$0xff]
    %v244 = vld [vmem:[%s0 + $0x6e0] sm:$0xff]
    %v245 = vld [vmem:[%s0 + $0x6e8] sm:$0xff]
    %v246 = vld [vmem:[%s0 + $0x6f0] sm:$0xff]
    %v247 = vld [vmem:[%s0 + $0x6f8] sm:$0xff]
    %v248 = vld [vmem:[%s0 + $0x700] sm:$0xff]
    %v249 = vld [vmem:[%s0 + $0x708] sm:$0xff]
    %v250 = vld [vmem:[%s0 + $0x710] sm:$0xff]
    %v251 = vld [vmem:[%s0 + $0x718] sm:$0xff]
    %v252 = vld [vmem:[%s0 + $0x720] sm:$0xff]
    %v253 = vld [vmem:[%s0 + $0x728] sm:$0xff]
    %v254 = vld [vmem:[%s0 + $0x730] sm:$0xff]
    %v255 = vld [vmem:[%s0 + $0x738] sm:$0xff]
    %v256 = vld [vmem:[%s0 + $0x740] sm:$0xff]
    %v257 = vld [vmem:[%s0 + $0x748] sm:$0xff]
    %v258 = vld [vmem:[%s0 + $0x750] sm:$0xff]
    %v259 = vld [vmem:[%s0 + $0x758] sm:$0xff]
    %v260 = vld [vmem:[%s0 + $0x760] sm:$0xff]
    %v261 = vld [vmem:[%s0 + $0x768] sm:$0xff]
    %v262 = vld [vmem:[%s0 + $0x770] sm:$0xff]
    %v263 = vld [vmem:[%s0 + $0x778] sm:$0xff]
    %v264 = vld [vmem:[%s0 + $0x780] sm:$0xff]
    %v265 = vld [vmem:[%s0 + $0x788] sm:$0xff]
    %v266 = vld [vmem:[%s0 + $0x790] sm:$0xff]
    %v267 = vld [vmem:[%s0 + $0x798] sm:$0xff]
    %v268 = vld [vmem:[%s0 + $0x7a0] sm:$0xff]
    %v269 = vld [vmem:[%s0 + $0x7a8] sm:$0xff]
    %v270 = vld [vmem:[%s0 + $0x7b0] sm:$0xff]
    %v271 = vld [vmem:[%s0 + $0x7b8] sm:$0xff]
    %v272 = vld [vmem:[%s0 + $0x7c0] sm:$0xff]
    %v273 = vld [vmem:[%s0 + $0x7c8] sm:$0xff]
    %v274 = vld [vmem:[%s0 + $0x7d0] sm:$0xff]
    %v275 = vld [vmem:[%s0 + $0x7d8] sm:$0xff]
    %v276 = vld [vmem:[%s0 + $0x7e0] sm:$0xff]
    %v277 = vld [vmem:[%s0 + $0x7e8] sm:$0xff]
    %v278 = vld [vmem:[%s0 + $0x7f0] sm:$0xff]
    %v279 = vld [vmem:[%s0 + $0x7f8] sm:$0xff]
    %v280 = vld [vmem:[%s0 + $0x800] sm:$0xff]
    %v281 = vld [vmem:[%s0 + $0x808] sm:$0xff]
    %v282 = vld [vmem:[%s0 + $0x810] sm:$0xff]
    %v283 = vld [vmem:[%s0 + $0x818] sm:$0xff]
    %v284 = vld [vmem:[%s0 + $0x820] sm:$0xff]
    %v285 = vld [vmem:[%s0 + $0x828] sm:$0xff]
    %v286 = vld [vmem:[%s0 + $0x830] sm:$0xff]
    %v287 = vld [vmem:[%s0 + $0x838] sm:$0xff]
    %v288 = vld [vmem:[%s0 + $0x840] sm:$0xff]
    %v289 = vld [vmem:[%s0 + $0x848] sm:$0xff]
    %v290 = vld [vmem:[%s0 + $0x850] sm:$0xff]
    %v291 = vld [vmem:[%s0 + $0x858] sm:$0xff]
    %v292 = vld [vmem:[%s0 + $0x860] sm:$0xff]
    %v293 = vld [vmem:[%s0 + $0x868] sm:$0xff]
    %v294 = vld [vmem:[%s0 + $0x870] sm:$0xff]
    %v295 = vld [vmem:[%s0 + $0x878] sm:$0xff]
    %v296 = vld [vmem:[%s0 + $0x880] sm:$0xff]
    %v297 = vld [vmem:[%s0 + $0x888] sm:$0xff]
    %v298 = vld [vmem:[%s0 + $0x890] sm:$0xff]
    %v299 = vld [vmem:[%s0 + $0x898] sm:$0xff]
    %v300 = vld [vmem:[%s0 + $0x8a0] sm:$0xff]
    %v301 = vld [vmem:[%s0 + $0x8a8] sm:$0xff]
    %v302 = vld [vmem:[%s0 + $0x8b0] sm:$0xff]
    %v303 = vld [vmem:[%s0 + $0x8b8] sm:$0xff]
    %v304 = vld [vmem:[%s0 + $0x8c0] sm:$0xff]
    %v305 = vld [vmem:[%s0 + $0x8c8] sm:$0xff]
    %v306 = vld [vmem:[%s0 + $0x8d0] sm:$0xff]
    %v307 = vld [vmem:[%s0 + $0x8d8] sm:$0xff]
    %v308 = vld [vmem:[%s0 + $0x8e0] sm:$0xff]
    %v309 = vld [vmem:[%s0 + $0x8e8] sm:$0xff]
    %v310 = vld [vmem:[%s0 + $0x8f0] sm:$0xff]
    %v311 = vld [vmem:[%s0 + $0x8f8] sm:$0xff]
    %v312 = vld [vmem:[%s0 + $0x900] sm:$0xff]
    %v313 = vld [vmem:[%s0 + $0x908] sm:$0xff]
    %v314 = vld [vmem:[%s0 + $0x910] sm:$0xff]
    %v315 = vld [vmem:[%s0 + $0x918] sm:$0xff]
    %v316 = vld [vmem:[%s0 + $0x920] sm:$0xff]
    %v317 = vld [vmem:[%s0 + $0x928] sm:$0xff]
    %v318 = vld [vmem:[%s0 + $0x930] sm:$0xff]
    %v319 = vld [vmem:[%s0 + $0x938] sm:$0xff]
    %v320 = vld [vmem:[%s0 + $0x940] sm:$0xff]
    %v321 = vld [vmem:[%s0 + $0x948] sm:$0xff]
    %v322 = vld [vmem:[%s0 + $0x950] sm:$0xff]
    %v323 = vld [vmem:[%s0 + $0x958] sm:$0xff]
    %v324 = vld [vmem:[%s0 + $0x960] sm:$0xff]
    %v325 = vld [vmem:[%s0 + $0x968] sm:$0xff]
    %v326 = vld [vmem:[%s0 + $0x970] sm:$0xff]
    %v327 = vld [vmem:[%s0 + $0x978] sm:$0xff]
    %v328 = vld [vmem:[%s0 + $0x980] sm:$0xff]
    %v329 = vld [vmem:[%s0 + $0x988] sm:$0xff]
    %v330 = vld [vmem:[%s0 + $0x990] sm:$0xff]
    %v331 = vld [vmem:[%s0 + $0x998] sm:$0xff]
    %v332 = vld [vmem:[%s0 + $0x9a0] sm:$0xff]
    %v333 = vld [vmem:[%s0 + $0x9a8] sm:$0xff]
    %v334 = vld [vmem:[%s0 + $0x9b0] sm:$0xff]
    %v335 = vld [vmem:[%s0 + $0x9b8] sm:$0xff]
    %v336 = vld [vmem:[%s0 + $0x9c0] sm:$0xff]
    %v337 = vld [vmem:[%s0 + $0x9c8] sm:$0xff]
    %v338 = vld [vmem:[%s0 + $0x9d0] sm:$0xff]
    %v339 = vld [vmem:[%s0 + $0x9d8] sm:$0xff]
    %v340 = vld [vmem:[%s0 + $0x9e0] sm:$0xff]
    %v341 = vld [vmem:[%s0 + $0x9e8] sm:$0xff]
    %v342 = vld [vmem:[%s0 + $0x9f0] sm:$0xff]
    %v343 = vld [vmem:[%s0 + $0x9f8] sm:$0xff]
    %v344 = vld [vmem:[%s0 + $0xa00] sm:$0xff]
    %v345 = vld [vmem:[%s0 + $0xa08] sm:$0xff]
    %v346 = vld [vmem:[%s0 + $0xa10] sm:$0xff]
    %v347 = vld [vmem:[%s0 + $0xa18] sm:$0xff]
    %v348 = vld [vmem:[%s0 + $0xa20] sm:$0xff]
    %v349 = vld [vmem:[%s0 + $0xa28] sm:$0xff]
    %v350 = vld [vmem:[%s0 + $0xa30] sm:$0xff]
    %v351 = vld [vmem:[%s0 + $0xa38] sm:$0xff]
    %v352 = vld [vmem:[%s0 + $0xa40] sm:$0xff]
    %v353 = vld [vmem:[%s0 + $0xa48] sm:$0xff]
    %v354 = vld [vmem:[%s0 + $0xa50] sm:$0xff]
    %v355 = vld [vmem:[%s0 + $0xa58] sm:$0xff]
    %v356 = vld [vmem:[%s0 + $0xa60] sm:$0xff]
    %v357 = vld [vmem:[%s0 + $0xa68] sm:$0xff]
    %v358 = vld [vmem:[%s0 + $0xa70] sm:$0xff]
    %v359 = vld [vmem:[%s0 + $0xa78] sm:$0xff]
    %v360 = vld [vmem:[%s0 + $0xa80] sm:$0xff]
    %v361 = vld [vmem:[%s0 + $0xa88] sm:$0xff]
    %v362 = vld [vmem:[%s0 + $0xa90] sm:$0xff]
    %v363 = vld [vmem:[%s0 + $0xa98] sm:$0xff]
    %v364 = vld [vmem:[%s0 + $0xaa0] sm:$0xff]
    %v365 = vld [vmem:[%s0 + $0xaa8] sm:$0xff]
    %v366 = vld [vmem:[%s0 + $0xab0] sm:$0xff]
    %v367 = vld [vmem:[%s0 + $0xab8] sm:$0xff]
    %v368 = vld [vmem:[%s0 + $0xac0] sm:$0xff]
    %v369 = vld [vmem:[%s0 + $0xac8] sm:$0xff]
    %v370 = vld [vmem:[%s0 + $0xad0] sm:$0xff]
    %v371 = vld [vmem:[%s0 + $0xad8] sm:$0xff]
    %v372 = vld [vmem:[%s0 + $0xae0] sm:$0xff]
    %v373 = vld [vmem:[%s0 + $0xae8] sm:$0xff]
    %v374 = vld [vmem:[%s0 + $0xaf0] sm:$0xff]
    %v375 = vld [vmem:[%s0 + $0xaf8] sm:$0xff]
    %v376 = vld [vmem:[%s0 + $0xb00] sm:$0xff]
    %v377 = vld [vmem:[%s0 + $0xb08] sm:$0xff]
    %v378 = vld [vmem:[%s0 + $0xb10] sm:$0xff]
    %v379 = vld [vmem:[%s0 + $0xb18] sm:$0xff]
    %v380 = vld [vmem:[%s0 + $0xb20] sm:$0xff]
    %v381 = vld [vmem:[%s0 + $0xb28] sm:$0xff]
    %v382 = vld [vmem:[%s0 + $0xb30] sm:$0xff]
    %v383 = vld [vmem:[%s0 + $0xb38] sm:$0xff]
    %v384 = vld [vmem:[%s0 + $0xb40] sm:$0xff]
    %v385 = vld [vmem:[%s0 + $0xb48] sm:$0xff]
    %v386 = vld [vmem:[%s0 + $0xb50] sm:$0xff]
    %v387 = vld [vmem:[%s0 + $0xb58] sm:$0xff]
    %v388 = vld [vmem:[%s0 + $0xb60] sm:$0xff]
    %v389 = vld [vmem:[%s0 + $0xb68] sm:$0xff]
    %v390 = vld [vmem:[%s0 + $0xb70] sm:$0xff]
    %v391 = vld [vmem:[%s0 + $0xb78] sm:$0xff]
    %v392 = vld [vmem:[%s0 + $0xb80] sm:$0xff]
    %v393 = vld [vmem:[%s0 + $0xb88] sm:$0xff]
    %v394 = vld [vmem:[%s0 + $0xb90] sm:$0xff]
    %v395 = vld [vmem:[%s0 + $0xb98] sm:$0xff]
    %v396 = vld [vmem:[%s0 + $0xba0] sm:$0xff]
    %v397 = vld [vmem:[%s0 + $0xba8] sm:$0xff]
    %v398 = vld [vmem:[%s0 + $0xbb0] sm:$0xff]
    %v399 = vld [vmem:[%s0 + $0xbb8] sm:$0xff]
    %v400 = vld [vmem:[%s0 + $0xbc0] sm:$0xff]
    %v401 = vld [vmem:[%s0 + $0xbc8] sm:$0xff]
    %v402 = vld [vmem:[%s0 + $0xbd0] sm:$0xff]
    %v403 = vld [vmem:[%s0 + $0xbd8] sm:$0xff]
    %v404 = vld [vmem:[%s0 + $0xbe0] sm:$0xff]
    %v405 = vld [vmem:[%s0 + $0xbe8] sm:$0xff]
    %v406 = vld [vmem:[%s0 + $0xbf0] sm:$0xff]
    %v407 = vld [vmem:[%s0 + $0xbf8] sm:$0xff]
    %v408 = vld [vmem:[%s0 + $0xc00] sm:$0xff]
    %v409 = vld [vmem:[%s0 + $0xc08] sm:$0xff]
    %v410 = vld [vmem:[%s0 + $0xc10] sm:$0xff]
    %v411 = vld [vmem:[%s0 + $0xc18] sm:$0xff]
    %v412 = vld [vmem:[%s0 + $0xc20] sm:$0xff]
    %v413 = vld [vmem:[%s0 + $0xc28] sm:$0xff]
    %v414 = vld [vmem:[%s0 + $0xc30] sm:$0xff]
    %v415 = vld [vmem:[%s0 + $0xc38] sm:$0xff]
    %v416 = vld [vmem:[%s0 + $0xc40] sm:$0xff]
    %v417 = vld [vmem:[%s0 + $0xc48] sm:$0xff]
    %v418 = vld [vmem:[%s0 + $0xc50] sm:$0xff]
    %v419 = vld [vmem:[%s0 + $0xc58] sm:$0xff]
    %v420 = vld [vmem:[%s0 + $0xc60] sm:$0xff]
    %v421 = vld [vmem:[%s0 + $0xc68] sm:$0xff]
    %v422 = vld [vmem:[%s0 + $0xc70] sm:$0xff]
    %v423 = vld [vmem:[%s0 + $0xc78] sm:$0xff]
    %v424 = vld [vmem:[%s0 + $0xc80] sm:$0xff]
    %v425 = vld [vmem:[%s0 + $0xc88] sm:$0xff]
    %v426 = vld [vmem:[%s0 + $0xc90] sm:$0xff]
    %v427 = vld [vmem:[%s0 + $0xc98] sm:$0xff]
    %v428 = vld [vmem:[%s0 + $0xca0] sm:$0xff]
    %v429 = vld [vmem:[%s0 + $0xca8] sm:$0xff]
    %v430 = vld [vmem:[%s0 + $0xcb0] sm:$0xff]
    %v431 = vld [vmem:[%s0 + $0xcb8] sm:$0xff]
    %v432 = vld [vmem:[%s0 + $0xcc0] sm:$0xff]
    %v433 = vld [vmem:[%s0 + $0xcc8] sm:$0xff]
    %v434 = vld [vmem:[%s0 + $0xcd0] sm:$0xff]
    %v435 = vld [vmem:[%s0 + $0xcd8] sm:$0xff]
    %v436 = vld [vmem:[%s0 + $0xce0] sm:$0xff]
    %v437 = vld [vmem:[%s0 + $0xce8] sm:$0xff]
    %v438 = vld [vmem:[%s0 + $0xcf0] sm:$0xff]
    %v439 = vld [vmem:[%s0 + $0xcf8] sm:$0xff]
    %v440 = vld [vmem:[%s0 + $0xd00] sm:$0xff]
    %v441 = vld [vmem:[%s0 + $0xd08] sm:$0xff]
    %v442 = vld [vmem:[%s0 + $0xd10] sm:$0xff]
    %v443 = vld [vmem:[%s0 + $0xd18] sm:$0xff]
    %v444 = vld [vmem:[%s0 + $0xd20] sm:$0xff]
    %v445 = vld [vmem:[%s0 + $0xd28] sm:$0xff]
    %v446 = vld [vmem:[%s0 + $0xd30] sm:$0xff]
    %v447 = vld [vmem:[%s0 + $0xd38] sm:$0xff]
    %v448 = vld [vmem:[%s0 + $0xd40] sm:$0xff]
    %v449 = vld [vmem:[%s0 + $0xd48] sm:$0xff]
    %v450 = vld [vmem:[%s0 + $0xd50] sm:$0xff]
    %v451 = vld [vmem:[%s0 + $0xd58] sm:$0xff]
    %v452 = vld [vmem:[%s0 + $0xd60] sm:$0xff]
    %v453 = vld [vmem:[%s0 + $0xd68] sm:$0xff]
    %v454 = vld [vmem:[%s0 + $0xd70] sm:$0xff]
    %v455 = vld [vmem:[%s0 + $0xd78] sm:$0xff]
    %v456 = vld [vmem:[%s0 + $0xd80] sm:$0xff]
    %v457 = vld [vmem:[%s0 + $0xd88] sm:$0xff]
    %v458 = vld [vmem:[%s0 + $0xd90] sm:$0xff]
    %v459 = vld [vmem:[%s0 + $0xd98] sm:$0xff]
    %v460 = vld [vmem:[%s0 + $0xda0] sm:$0xff]
    %v461 = vld [vmem:[%s0 + $0xda8] sm:$0xff]
    %v462 = vld [vmem:[%s0 + $0xdb0] sm:$0xff]
    %v463 = vld [vmem:[%s0 + $0xdb8] sm:$0xff]
    %v464 = vld [vmem:[%s0 + $0xdc0] sm:$0xff]
    %v465 = vld [vmem:[%s0 + $0xdc8] sm:$0xff]
    %v466 = vld [vmem:[%s0 + $0xdd0] sm:$0xff]
    %v467 = vld [vmem:[%s0 + $0xdd8] sm:$0xff]
    %v468 = vld [vmem:[%s0 + $0xde0] sm:$0xff]
    %v469 = vld [vmem:[%s0 + $0xde8] sm:$0xff]
    %v470 = vld [vmem:[%s0 + $0xdf0] sm:$0xff]
    %v471 = vld [vmem:[%s0 + $0xdf8] sm:$0xff]
    %v472 = vld [vmem:[%s0 + $0xe00] sm:$0xff]
    %v473 = vld [vmem:[%s0 + $0xe08] sm:$0xff]
    %v474 = vld [vmem:[%s0 + $0xe10] sm:$0xff]
    %v475 = vld [vmem:[%s0 + $0xe18] sm:$0xff]
    %v476 = vld [vmem:[%s0 + $0xe20] sm:$0xff]
    %v477 = vld [vmem:[%s0 + $0xe28] sm:$0xff]
    %v478 = vld [vmem:[%s0 + $0xe30] sm:$0xff]
    %v479 = vld [vmem:[%s0 + $0xe38] sm:$0xff]
    %v480 = vld [vmem:[%s0 + $0xe40] sm:$0xff]
    %v481 = vld [vmem:[%s0 + $0xe48] sm:$0xff]
    %v482 = vld [vmem:[%s0 + $0xe50] sm:$0xff]
    %v483 = vld [vmem:[%s0 + $0xe58] sm:$0xff]
    %v484 = vld [vmem:[%s0 + $0xe60] sm:$0xff]
    %v485 = vld [vmem:[%s0 + $0xe68] sm:$0xff]
    %v486 = vld [vmem:[%s0 + $0xe70] sm:$0xff]
    %v487 = vld [vmem:[%s0 + $0xe78] sm:$0xff]
    %v488 = vld [vmem:[%s0 + $0xe80] sm:$0xff]
    %v489 = vld [vmem:[%s0 + $0xe88] sm:$0xff]
    %v490 = vld [vmem:[%s0 + $0xe90] sm:$0xff]
    %v491 = vld [vmem:[%s0 + $0xe98] sm:$0xff]
    %v492 = vld [vmem:[%s0 + $0xea0] sm:$0xff]
    %v493 = vld [vmem:[%s0 + $0xea8] sm:$0xff]
    %v494 = vld [vmem:[%s0 + $0xeb0] sm:$0xff]
    %v495 = vld [vmem:[%s0 + $0xeb8] sm:$0xff]
    %v496 = vld [vmem:[%s0 + $0xec0] sm:$0xff]
    %v497 = vld [vmem:[%s0 + $0xec8] sm:$0xff]
    %v498 = vld [vmem:[%s0 + $0xed0] sm:$0xff]
    %v499 = vld [vmem:[%s0 + $0xed8] sm:$0xff]
    %v500 = vld [vmem:[%s0 + $0xee0] sm:$0xff]
    %v501 = vld [vmem:[%s0 + $0xee8] sm:$0xff]
    %v502 = vld [vmem:[%s0 + $0xef0] sm:$0xff]
    %v503 = vld [vmem:[%s0 + $0xef8] sm:$0xff]
    %v504 = vld [vmem:[%s0 + $0xf00] sm:$0xff]
    %v505 = vld [vmem:[%s0 + $0xf08] sm:$0xff]
    %v506 = vld [vmem:[%s0 + $0xf10] sm:$0xff]
    %v507 = vld [vmem:[%s0 + $0xf18] sm:$0xff]
    %v508 = vld [vmem:[%s0 + $0xf20] sm:$0xff]
    %v509 = vld [vmem:[%s0 + $0xf28] sm:$0xff]
    %v510 = vld [vmem:[%s0 + $0xf30] sm:$0xff]
    %v511 = vld [vmem:[%s0 + $0xf38] sm:$0xff]
    %v512 = vld [vmem:[%s0 + $0xf40] sm:$0xff]
    %v513 = vld [vmem:[%s0 + $0xf48] sm:$0xff]
    %v514 = vld [vmem:[%s0 + $0xf50] sm:$0xff]
    %v515 = vld [vmem:[%s0 + $0xf58] sm:$0xff]
    %v516 = vld [vmem:[%s0 + $0xf60] sm:$0xff]
    %v517 = vld [vmem:[%s0 + $0xf68] sm:$0xff]
    %v518 = vld [vmem:[%s0 + $0xf70] sm:$0xff]
    %v519 = vld [vmem:[%s0 + $0xf78] sm:$0xff]
    %v520 = vld [vmem:[%s0 + $0xf80] sm:$0xff]
    %v521 = vld [vmem:[%s0 + $0xf88] sm:$0xff]
    %v522 = vld [vmem:[%s0 + $0xf90] sm:$0xff]
    %v523 = vld [vmem:[%s0 + $0xf98] sm:$0xff]
    %v524 = vld [vmem:[%s0 + $0xfa0] sm:$0xff]
    %v525 = vld [vmem:[%s0 + $0xfa8] sm:$0xff]
    %v526 = vld [vmem:[%s0 + $0xfb0] sm:$0xff]
    %v527 = vld [vmem:[%s0 + $0xfb8] sm:$0xff]
    %v528 = vld [vmem:[%s0 + $0xfc0] sm:$0xff]
    %v529 = vld [vmem:[%s0 + $0xfc8] sm:$0xff]
    %v530 = vld [vmem:[%s0 + $0xfd0] sm:$0xff]
    %v531 = vld [vmem:[%s0 + $0xfd8] sm:$0xff]
    %v532 = vld [vmem:[%s0 + $0xfe0] sm:$0xff]
    %v533 = vld [vmem:[%s0 + $0xfe8] sm:$0xff]
    %v534 = vld [vmem:[%s0 + $0xff0] sm:$0xff]
    %v535 = vld [vmem:[%s0 + $0xff8] sm:$0xff]
    %v536 = vld [vmem:[%s0 + $0x1000] sm:$0xff]
    %v537 = vld [vmem:[%s0 + $0x1008] sm:$0xff]
    %v538 = vld [vmem:[%s0 + $0x1010] sm:$0xff]
    %v539 = vld [vmem:[%s0 + $0x1018] sm:$0xff]
    %v540 = vld [vmem:[%s0 + $0x1020] sm:$0xff]
    %v541 = vld [vmem:[%s0 + $0x1028] sm:$0xff]
    %v542 = vld [vmem:[%s0 + $0x1030] sm:$0xff]
    %v543 = vld [vmem:[%s0 + $0x1038] sm:$0xff]
    %v544 = vld [vmem:[%s0 + $0x1040] sm:$0xff]
    %v545 = vld [vmem:[%s0 + $0x1048] sm:$0xff]
    %v546 = vld [vmem:[%s0 + $0x1050] sm:$0xff]
    %v547 = vld [vmem:[%s0 + $0x1058] sm:$0xff]
    %v548 = vld [vmem:[%s0 + $0x1060] sm:$0xff]
    %v549 = vld [vmem:[%s0 + $0x1068] sm:$0xff]
    %v550 = vld [vmem:[%s0 + $0x1070] sm:$0xff]
    %v551 = vld [vmem:[%s0 + $0x1078] sm:$0xff]
    %v552 = vld [vmem:[%s0 + $0x1080] sm:$0xff]
    %v553 = vld [vmem:[%s0 + $0x1088] sm:$0xff]
    %v554 = vld [vmem:[%s0 + $0x1090] sm:$0xff]
    %v555 = vld [vmem:[%s0 + $0x1098] sm:$0xff]
    %v556 = vld [vmem:[%s0 + $0x10a0] sm:$0xff]
    %v557 = vld [vmem:[%s0 + $0x10a8] sm:$0xff]
    %v558 = vld [vmem:[%s0 + $0x10b0] sm:$0xff]
    %v559 = vld [vmem:[%s0 + $0x10b8] sm:$0xff]
    %v560 = vld [vmem:[%s0 + $0x10c0] sm:$0xff]
    %v561 = vld [vmem:[%s0 + $0x10c8] sm:$0xff]
    %v562 = vld [vmem:[%s0 + $0x10d0] sm:$0xff]
    %v563 = vld [vmem:[%s0 + $0x10d8] sm:$0xff]
    %v564 = vld [vmem:[%s0 + $0x10e0] sm:$0xff]
    %v565 = vld [vmem:[%s0 + $0x10e8] sm:$0xff]
    %v566 = vld [vmem:[%s0 + $0x10f0] sm:$0xff]
    %v567 = vld [vmem:[%s0 + $0x10f8] sm:$0xff]
    %v568 = vld [vmem:[%s0 + $0x1100] sm:$0xff]
    %v569 = vld [vmem:[%s0 + $0x1108] sm:$0xff]
    %v570 = vld [vmem:[%s0 + $0x1110] sm:$0xff]
    %v571 = vld [vmem:[%s0 + $0x1118] sm:$0xff]
    %v572 = vld [vmem:[%s0 + $0x1120] sm:$0xff]
    %v573 = vld [vmem:[%s0 + $0x1128] sm:$0xff]
    %v574 = vld [vmem:[%s0 + $0x1130] sm:$0xff]
    %v575 = vld [vmem:[%s0 + $0x1138] sm:$0xff]
    %v576 = vld [vmem:[%s0 + $0x1140] sm:$0xff]
    %v577 = vld [vmem:[%s0 + $0x1148] sm:$0xff]
    %v578 = vld [vmem:[%s0 + $0x1150] sm:$0xff]
    %v579 = vld [vmem:[%s0 + $0x1158] sm:$0xff]
    %v580 = vld [vmem:[%s0 + $0x1160] sm:$0xff]
    %v581 = vld [vmem:[%s0 + $0x1168] sm:$0xff]
    %v582 = vld [vmem:[%s0 + $0x1170] sm:$0xff]
    %v583 = vld [vmem:[%s0 + $0x1178] sm:$0xff]
    %v584 = vld [vmem:[%s0 + $0x1180] sm:$0xff]
    %v585 = vld [vmem:[%s0 + $0x1188] sm:$0xff]
    %v586 = vld [vmem:[%s0 + $0x1190] sm:$0xff]
    %v587 = vld [vmem:[%s0 + $0x1198] sm:$0xff]
    %v588 = vld [vmem:[%s0 + $0x11a0] sm:$0xff]
    %v589 = vld [vmem:[%s0 + $0x11a8] sm:$0xff]
    %v590 = vld [vmem:[%s0 + $0x11b0] sm:$0xff]
    %v591 = vld [vmem:[%s0 + $0x11b8] sm:$0xff]
    %v592 = vld [vmem:[%s0 + $0x11c0] sm:$0xff]
    %v593 = vld [vmem:[%s0 + $0x11c8] sm:$0xff]
    %v594 = vld [vmem:[%s0 + $0x11d0] sm:$0xff]
    %v595 = vld [vmem:[%s0 + $0x11d8] sm:$0xff]
    %v596 = vld [vmem:[%s0 + $0x11e0] sm:$0xff]
    %v597 = vld [vmem:[%s0 + $0x11e8] sm:$0xff]
    %v598 = vld [vmem:[%s0 + $0x11f0] sm:$0xff]
    %v599 = vld [vmem:[%s0 + $0x11f8] sm:$0xff]
    %v600 = vld [vmem:[%s0 + $0x1200] sm:$0xff]
    %v601 = vld [vmem:[%s0 + $0x1208] sm:$0xff]
    %v602 = vld [vmem:[%s0 + $0x1210] sm:$0xff]
    %v603 = vld [vmem:[%s0 + $0x1218] sm:$0xff]
    %v604 = vld [vmem:[%s0 + $0x1220] sm:$0xff]
    %v605 = vld [vmem:[%s0 + $0x1228] sm:$0xff]
    %v606 = vld [vmem:[%s0 + $0x1230] sm:$0xff]
    %v607 = vld [vmem:[%s0 + $0x1238] sm:$0xff]
    %v608 = vld [vmem:[%s0 + $0x1240] sm:$0xff]
    %v609 = vld [vmem:[%s0 + $0x1248] sm:$0xff]
    %v610 = vld [vmem:[%s0 + $0x1250] sm:$0xff]
    %v611 = vld [vmem:[%s0 + $0x1258] sm:$0xff]
    %v612 = vld [vmem:[%s0 + $0x1260] sm:$0xff]
    %v613 = vld [vmem:[%s0 + $0x1268] sm:$0xff]
    %v614 = vld [vmem:[%s0 + $0x1270] sm:$0xff]
    %v615 = vld [vmem:[%s0 + $0x1278] sm:$0xff]
    %v616 = vld [vmem:[%s0 + $0x1280] sm:$0xff]
    %v617 = vld [vmem:[%s0 + $0x1288] sm:$0xff]
    %v618 = vld [vmem:[%s0 + $0x1290] sm:$0xff]
    %v619 = vld [vmem:[%s0 + $0x1298] sm:$0xff]
    %v620 = vld [vmem:[%s0 + $0x12a0] sm:$0xff]
    %v621 = vld [vmem:[%s0 + $0x12a8] sm:$0xff]
    %v622 = vld [vmem:[%s0 + $0x12b0] sm:$0xff]
    %v623 = vld [vmem:[%s0 + $0x12b8] sm:$0xff]
    %v624 = vld [vmem:[%s0 + $0x12c0] sm:$0xff]
    %v625 = vld [vmem:[%s0 + $0x12c8] sm:$0xff]
    %v626 = vld [vmem:[%s0 + $0x12d0] sm:$0xff]
    %v627 = vld [vmem:[%s0 + $0x12d8] sm:$0xff]
    %v628 = vld [vmem:[%s0 + $0x12e0] sm:$0xff]
    %v629 = vld [vmem:[%s0 + $0x12e8] sm:$0xff]
    %v630 = vld [vmem:[%s0 + $0x12f0] sm:$0xff]
    %v631 = vld [vmem:[%s0 + $0x12f8] sm:$0xff]
    %v632 = vld [vmem:[%s0 + $0x1300] sm:$0xff]
    %v633 = vld [vmem:[%s0 + $0x1308] sm:$0xff]
    %v634 = vld [vmem:[%s0 + $0x1310] sm:$0xff]
    %v635 = vld [vmem:[%s0 + $0x1318] sm:$0xff]
    %v636 = vld [vmem:[%s0 + $0x1320] sm:$0xff]
    %v637 = vld [vmem:[%s0 + $0x1328] sm:$0xff]
    %v638 = vld [vmem:[%s0 + $0x1330] sm:$0xff]
    %v639 = vld [vmem:[%s0 + $0x1338] sm:$0xff]
    %v640 = vld [vmem:[%s0 + $0x1340] sm:$0xff]
    %v641 = vld [vmem:[%s0 + $0x1348] sm:$0xff]
    %v642 = vld [vmem:[%s0 + $0x1350] sm:$0xff]
    %v643 = vld [vmem:[%s0 + $0x1358] sm:$0xff]
    %v644 = vld [vmem:[%s0 + $0x1360] sm:$0xff]
    %v645 = vld [vmem:[%s0 + $0x1368] sm:$0xff]
    %v646 = vld [vmem:[%s0 + $0x1370] sm:$0xff]
    %v647 = vld [vmem:[%s0 + $0x1378] sm:$0xff]
    %v648 = vld [vmem:[%s0 + $0x1380] sm:$0xff]
    %v649 = vld [vmem:[%s0 + $0x1388] sm:$0xff]
    %v650 = vld [vmem:[%s0 + $0x1390] sm:$0xff]
    %v651 = vld [vmem:[%s0 + $0x1398] sm:$0xff]
    %v652 = vld [vmem:[%s0 + $0x13a0] sm:$0xff]
    %v653 = vld [vmem:[%s0 + $0x13a8] sm:$0xff]
    %v654 = vld [vmem:[%s0 + $0x13b0] sm:$0xff]
    %v655 = vld [vmem:[%s0 + $0x13b8] sm:$0xff]
    %v656 = vld [vmem:[%s0 + $0x13c0] sm:$0xff]
    %v657 = vld [vmem:[%s0 + $0x13c8] sm:$0xff]
    %v658 = vld [vmem:[%s0 + $0x13d0] sm:$0xff]
    %v659 = vld [vmem:[%s0 + $0x13d8] sm:$0xff]
    %v660 = vld [vmem:[%s0 + $0x13e0] sm:$0xff]
    %v661 = vld [vmem:[%s0 + $0x13e8] sm:$0xff]
    %v662 = vld [vmem:[%s0 + $0x13f0] sm:$0xff]
    %v663 = vld [vmem:[%s0 + $0x13f8] sm:$0xff]
    %v664 = vld [vmem:[%s0 + $0x1400] sm:$0xff]
    %v665 = vld [vmem:[%s0 + $0x1408] sm:$0xff]
    %v666 = vld [vmem:[%s0 + $0x1410] sm:$0xff]
    %v667 = vld [vmem:[%s0 + $0x1418] sm:$0xff]
    %v668 = vld [vmem:[%s0 + $0x1420] sm:$0xff]
    %v669 = vld [vmem:[%s0 + $0x1428] sm:$0xff]
    %v670 = vld [vmem:[%s0 + $0x1430] sm:$0xff]
    %v671 = vld [vmem:[%s0 + $0x1438] sm:$0xff]
    %v672 = vld [vmem:[%s0 + $0x1440] sm:$0xff]
    %v673 = vld [vmem:[%s0 + $0x1448] sm:$0xff]
    %v674 = vld [vmem:[%s0 + $0x1450] sm:$0xff]
    %v675 = vld [vmem:[%s0 + $0x1458] sm:$0xff]
    %v676 = vld [vmem:[%s0 + $0x1460] sm:$0xff]
    %v677 = vld [vmem:[%s0 + $0x1468] sm:$0xff]
    %v678 = vld [vmem:[%s0 + $0x1470] sm:$0xff]
    %v679 = vld [vmem:[%s0 + $0x1478] sm:$0xff]
    %v680 = vld [vmem:[%s0 + $0x1480] sm:$0xff]
    %v681 = vld [vmem:[%s0 + $0x1488] sm:$0xff]
    %v682 = vld [vmem:[%s0 + $0x1490] sm:$0xff]
    %v683 = vld [vmem:[%s0 + $0x1498] sm:$0xff]
    %v684 = vld [vmem:[%s0 + $0x14a0] sm:$0xff]
    %v685 = vld [vmem:[%s0 + $0x14a8] sm:$0xff]
    %v686 = vld [vmem:[%s0 + $0x14b0] sm:$0xff]
    %v687 = vld [vmem:[%s0 + $0x14b8] sm:$0xff]
    %v688 = vld [vmem:[%s0 + $0x14c0] sm:$0xff]
    %v689 = vld [vmem:[%s0 + $0x14c8] sm:$0xff]
    %v690 = vld [vmem:[%s0 + $0x14d0] sm:$0xff]
    %v691 = vld [vmem:[%s0 + $0x14d8] sm:$0xff]
    %v692 = vld [vmem:[%s0 + $0x14e0] sm:$0xff]
    %v693 = vld [vmem:[%s0 + $0x14e8] sm:$0xff]
    %v694 = vld [vmem:[%s0 + $0x14f0] sm:$0xff]
    %v695 = vld [vmem:[%s0 + $0x14f8] sm:$0xff]
    %v696 = vld [vmem:[%s0 + $0x1500] sm:$0xff]
    %v697 = vld [vmem:[%s0 + $0x1508] sm:$0xff]
    %v698 = vld [vmem:[%s0 + $0x1510] sm:$0xff]
    %v699 = vld [vmem:[%s0 + $0x1518] sm:$0xff]
    %v700 = vld [vmem:[%s0 + $0x1520] sm:$0xff]
    %v701 = vld [vmem:[%s0 + $0x1528] sm:$0xff]
    %v702 = vld [vmem:[%s0 + $0x1530] sm:$0xff]
    %v703 = vld [vmem:[%s0 + $0x1538] sm:$0xff]
    %v704 = vld [vmem:[%s0 + $0x1540] sm:$0xff]
    %v705 = vld [vmem:[%s0 + $0x1548] sm:$0xff]
    %v706 = vld [vmem:[%s0 + $0x1550] sm:$0xff]
    %v707 = vld [vmem:[%s0 + $0x1558] sm:$0xff]
    %v708 = vld [vmem:[%s0 + $0x1560] sm:$0xff]
    %v709 = vld [vmem:[%s0 + $0x1568] sm:$0xff]
    %v710 = vld [vmem:[%s0 + $0x1570] sm:$0xff]
    %v711 = vld [vmem:[%s0 + $0x1578] sm:$0xff]
    %v712 = vld [vmem:[%s0 + $0x1580] sm:$0xff]
    %v713 = vld [vmem:[%s0 + $0x1588] sm:$0xff]
    %v714 = vld [vmem:[%s0 + $0x1590] sm:$0xff]
    %v715 = vld [vmem:[%s0 + $0x1598] sm:$0xff]
    %v716 = vld [vmem:[%s0 + $0x15a0] sm:$0xff]
    %v717 = vld [vmem:[%s0 + $0x15a8] sm:$0xff]
    %v718 = vld [vmem:[%s0 + $0x15b0] sm:$0xff]
    %v719 = vld [vmem:[%s0 + $0x15b8] sm:$0xff]
    %v720 = vld [vmem:[%s0 + $0x15c0] sm:$0xff]
    %v721 = vld [vmem:[%s0 + $0x15c8] sm:$0xff]
    %v722 = vld [vmem:[%s0 + $0x15d0] sm:$0xff]
    %v723 = vld [vmem:[%s0 + $0x15d8] sm:$0xff]
    %v724 = vld [vmem:[%s0 + $0x15e0] sm:$0xff]
    %v725 = vld [vmem:[%s0 + $0x15e8] sm:$0xff]
    %v726 = vld [vmem:[%s0 + $0x15f0] sm:$0xff]
    %v727 = vld [vmem:[%s0 + $0x15f8] sm:$0xff]
    %v728 = vld [vmem:[%s0 + $0x1600] sm:$0xff]
    %v729 = vld [vmem:[%s0 + $0x1608] sm:$0xff]
    %v730 = vld [vmem:[%s0 + $0x1610] sm:$0xff]
    %v731 = vld [vmem:[%s0 + $0x1618] sm:$0xff]
    %v732 = vld [vmem:[%s0 + $0x1620] sm:$0xff]
    %v733 = vld [vmem:[%s0 + $0x1628] sm:$0xff]
    %v734 = vld [vmem:[%s0 + $0x1630] sm:$0xff]
    %v735 = vld [vmem:[%s0 + $0x1638] sm:$0xff]
    %v736 = vld [vmem:[%s0 + $0x1640] sm:$0xff]
    %v737 = vld [vmem:[%s0 + $0x1648] sm:$0xff]
    %v738 = vld [vmem:[%s0 + $0x1650] sm:$0xff]
    %v739 = vld [vmem:[%s0 + $0x1658] sm:$0xff]
    %v740 = vld [vmem:[%s0 + $0x1660] sm:$0xff]
    %v741 = vld [vmem:[%s0 + $0x1668] sm:$0xff]
    %v742 = vld [vmem:[%s0 + $0x1670] sm:$0xff]
    %v743 = vld [vmem:[%s0 + $0x1678] sm:$0xff]
    %v744 = vld [vmem:[%s0 + $0x1680] sm:$0xff]
    %v745 = vld [vmem:[%s0 + $0x1688] sm:$0xff]
    %v746 = vld [vmem:[%s0 + $0x1690] sm:$0xff]
    %v747 = vld [vmem:[%s0 + $0x1698] sm:$0xff]
    %v748 = vld [vmem:[%s0 + $0x16a0] sm:$0xff]
    %v749 = vld [vmem:[%s0 + $0x16a8] sm:$0xff]
    %v750 = vld [vmem:[%s0 + $0x16b0] sm:$0xff]
    %v751 = vld [vmem:[%s0 + $0x16b8] sm:$0xff]
    %v752 = vld [vmem:[%s0 + $0x16c0] sm:$0xff]
    %v753 = vld [vmem:[%s0 + $0x16c8] sm:$0xff]
    %v754 = vld [vmem:[%s0 + $0x16d0] sm:$0xff]
    %v755 = vld [vmem:[%s0 + $0x16d8] sm:$0xff]
    %v756 = vld [vmem:[%s0 + $0x16e0] sm:$0xff]
    %v757 = vld [vmem:[%s0 + $0x16e8] sm:$0xff]
    %v758 = vld [vmem:[%s0 + $0x16f0] sm:$0xff]
    %v759 = vld [vmem:[%s0 + $0x16f8] sm:$0xff]
    %v760 = vld [vmem:[%s0 + $0x1700] sm:$0xff]
    %v761 = vld [vmem:[%s0 + $0x1708] sm:$0xff]
    %v762 = vld [vmem:[%s0 + $0x1710] sm:$0xff]
    %v763 = vld [vmem:[%s0 + $0x1718] sm:$0xff]
    %v764 = vld [vmem:[%s0 + $0x1720] sm:$0xff]
    %v765 = vld [vmem:[%s0 + $0x1728] sm:$0xff]
    %v766 = vld [vmem:[%s0 + $0x1730] sm:$0xff]
    %v767 = vld [vmem:[%s0 + $0x1738] sm:$0xff]
    %v768 = vld [vmem:[%s0 + $0x1740] sm:$0xff]
    %v769 = vld [vmem:[%s0 + $0x1748] sm:$0xff]
    %v770 = vld [vmem:[%s0 + $0x1750] sm:$0xff]
    %v771 = vld [vmem:[%s0 + $0x1758] sm:$0xff]
    %v772 = vld [vmem:[%s0 + $0x1760] sm:$0xff]
    %v773 = vld [vmem:[%s0 + $0x1768] sm:$0xff]
    %v774 = vld [vmem:[%s0 + $0x1770] sm:$0xff]
    %v775 = vld [vmem:[%s0 + $0x1778] sm:$0xff]
    %v776 = vld [vmem:[%s0 + $0x1780] sm:$0xff]
    %v777 = vld [vmem:[%s0 + $0x1788] sm:$0xff]
    %v778 = vld [vmem:[%s0 + $0x1790] sm:$0xff]
    %v779 = vld [vmem:[%s0 + $0x1798] sm:$0xff]
    %v780 = vld [vmem:[%s0 + $0x17a0] sm:$0xff]
    %v781 = vld [vmem:[%s0 + $0x17a8] sm:$0xff]
    %v782 = vld [vmem:[%s0 + $0x17b0] sm:$0xff]
    %v783 = vld [vmem:[%s0 + $0x17b8] sm:$0xff]
    %v784 = vld [vmem:[%s0 + $0x17c0] sm:$0xff]
    %v785 = vld [vmem:[%s0 + $0x17c8] sm:$0xff]
    %v786 = vld [vmem:[%s0 + $0x17d0] sm:$0xff]
    %v787 = vld [vmem:[%s0 + $0x17d8] sm:$0xff]
    %v788 = vld [vmem:[%s0 + $0x17e0] sm:$0xff]
    %v789 = vld [vmem:[%s0 + $0x17e8] sm:$0xff]
    %v790 = vld [vmem:[%s0 + $0x17f0] sm:$0xff]
    %v791 = vld [vmem:[%s0 + $0x17f8] sm:$0xff]
    %v792 = vld [vmem:[%s0 + $0x1800] sm:$0xff]
    %v793 = vld [vmem:[%s0 + $0x1808] sm:$0xff]
    %v794 = vld [vmem:[%s0 + $0x1810] sm:$0xff]
    %v795 = vld [vmem:[%s0 + $0x1818] sm:$0xff]
    %v796 = vld [vmem:[%s0 + $0x1820] sm:$0xff]
    %v797 = vld [vmem:[%s0 + $0x1828] sm:$0xff]
    %v798 = vld [vmem:[%s0 + $0x1830] sm:$0xff]
    %v799 = vld [vmem:[%s0 + $0x1838] sm:$0xff]
    %v800 = vld [vmem:[%s0 + $0x1840] sm:$0xff]
    %v801 = vld [vmem:[%s0 + $0x1848] sm:$0xff]
    %v802 = vld [vmem:[%s0 + $0x1850] sm:$0xff]
    %v803 = vld [vmem:[%s0 + $0x1858] sm:$0xff]
    %v804 = vld [vmem:[%s0 + $0x1860] sm:$0xff]
    %v805 = vld [vmem:[%s0 + $0x1868] sm:$0xff]
    %v806 = vld [vmem:[%s0 + $0x1870] sm:$0xff]
    %v807 = vld [vmem:[%s0 + $0x1878] sm:$0xff]
    %v808 = vld [vmem:[%s0 + $0x1880] sm:$0xff]
    %v809 = vld [vmem:[%s0 + $0x1888] sm:$0xff]
    %v810 = vld [vmem:[%s0 + $0x1890] sm:$0xff]
    %v811 = vld [vmem:[%s0 + $0x1898] sm:$0xff]
    %v812 = vld [vmem:[%s0 + $0x18a0] sm:$0xff]
    %v813 = vld [vmem:[%s0 + $0x18a8] sm:$0xff]
    %v814 = vld [vmem:[%s0 + $0x18b0] sm:$0xff]
    %v815 = vld [vmem:[%s0 + $0x18b8] sm:$0xff]
    %v816 = vld [vmem:[%s0 + $0x18c0] sm:$0xff]
    %v817 = vld [vmem:[%s0 + $0x18c8] sm:$0xff]
    %v818 = vld [vmem:[%s0 + $0x18d0] sm:$0xff]
    %v819 = vld [vmem:[%s0 + $0x18d8] sm:$0xff]
    %v820 = vld [vmem:[%s0 + $0x18e0] sm:$0xff]
    %v821 = vld [vmem:[%s0 + $0x18e8] sm:$0xff]
    %v822 = vld [vmem:[%s0 + $0x18f0] sm:$0xff]
    %v823 = vld [vmem:[%s0 + $0x18f8] sm:$0xff]
    %v824 = vld [vmem:[%s0 + $0x1900] sm:$0xff]
    %v825 = vld [vmem:[%s0 + $0x1908] sm:$0xff]
    %v826 = vld [vmem:[%s0 + $0x1910] sm:$0xff]
    %v827 = vld [vmem:[%s0 + $0x1918] sm:$0xff]
    %v828 = vld [vmem:[%s0 + $0x1920] sm:$0xff]
    %v829 = vld [vmem:[%s0 + $0x1928] sm:$0xff]
    %v830 = vld [vmem:[%s0 + $0x1930] sm:$0xff]
    %v831 = vld [vmem:[%s0 + $0x1938] sm:$0xff]
    %v832 = vld [vmem:[%s0 + $0x1940] sm:$0xff]
    %v833 = vld [vmem:[%s0 + $0x1948] sm:$0xff]
    %v834 = vld [vmem:[%s0 + $0x1950] sm:$0xff]
    %v835 = vld [vmem:[%s0 + $0x1958] sm:$0xff]
    %v836 = vld [vmem:[%s0 + $0x1960] sm:$0xff]
    %v837 = vld [vmem:[%s0 + $0x1968] sm:$0xff]
    %v838 = vld [vmem:[%s0 + $0x1970] sm:$0xff]
    %v839 = vld [vmem:[%s0 + $0x1978] sm:$0xff]
    %v840 = vld [vmem:[%s0 + $0x1980] sm:$0xff]
    %v841 = vld [vmem:[%s0 + $0x1988] sm:$0xff]
    %v842 = vld [vmem:[%s0 + $0x1990] sm:$0xff]
    %v843 = vld [vmem:[%s0 + $0x1998] sm:$0xff]
    %v844 = vld [vmem:[%s0 + $0x19a0] sm:$0xff]
    %v845 = vld [vmem:[%s0 + $0x19a8] sm:$0xff]
    %v846 = vld [vmem:[%s0 + $0x19b0] sm:$0xff]
    %v847 = vld [vmem:[%s0 + $0x19b8] sm:$0xff]
    %v848 = vld [vmem:[%s0 + $0x19c0] sm:$0xff]
    %v849 = vld [vmem:[%s0 + $0x19c8] sm:$0xff]
    %v850 = vld [vmem:[%s0 + $0x19d0] sm:$0xff]
    %v851 = vld [vmem:[%s0 + $0x19d8] sm:$0xff]
    %v852 = vld [vmem:[%s0 + $0x19e0] sm:$0xff]
    %v853 = vld [vmem:[%s0 + $0x19e8] sm:$0xff]
    %v854 = vld [vmem:[%s0 + $0x19f0] sm:$0xff]
    %v855 = vld [vmem:[%s0 + $0x19f8] sm:$0xff]
    %v856 = vld [vmem:[%s0 + $0x1a00] sm:$0xff]
    %v857 = vld [vmem:[%s0 + $0x1a08] sm:$0xff]
    %v858 = vld [vmem:[%s0 + $0x1a10] sm:$0xff]
    %v859 = vld [vmem:[%s0 + $0x1a18] sm:$0xff]
    %v860 = vld [vmem:[%s0 + $0x1a20] sm:$0xff]
    %v861 = vld [vmem:[%s0 + $0x1a28] sm:$0xff]
    %v862 = vld [vmem:[%s0 + $0x1a30] sm:$0xff]
    %v863 = vld [vmem:[%s0 + $0x1a38] sm:$0xff]
    %v864 = vld [vmem:[%s0 + $0x1a40] sm:$0xff]
    %v865 = vld [vmem:[%s0 + $0x1a48] sm:$0xff]
    %v866 = vld [vmem:[%s0 + $0x1a50] sm:$0xff]
    %v867 = vld [vmem:[%s0 + $0x1a58] sm:$0xff]
    %v868 = vld [vmem:[%s0 + $0x1a60] sm:$0xff]
    %v869 = vld [vmem:[%s0 + $0x1a68] sm:$0xff]
    %v870 = vld [vmem:[%s0 + $0x1a70] sm:$0xff]
    %v871 = vld [vmem:[%s0 + $0x1a78] sm:$0xff]
    %v872 = vld [vmem:[%s0 + $0x1a80] sm:$0xff]
    %v873 = vld [vmem:[%s0 + $0x1a88] sm:$0xff]
    %v874 = vld [vmem:[%s0 + $0x1a90] sm:$0xff]
    %v875 = vld [vmem:[%s0 + $0x1a98] sm:$0xff]
    %v876 = vld [vmem:[%s0 + $0x1aa0] sm:$0xff]
    %v877 = vld [vmem:[%s0 + $0x1aa8] sm:$0xff]
    %v878 = vld [vmem:[%s0 + $0x1ab0] sm:$0xff]
    %v879 = vld [vmem:[%s0 + $0x1ab8] sm:$0xff]
    %v880 = vld [vmem:[%s0 + $0x1ac0] sm:$0xff]
    %v881 = vld [vmem:[%s0 + $0x1ac8] sm:$0xff]
    %v882 = vld [vmem:[%s0 + $0x1ad0] sm:$0xff]
    %v883 = vld [vmem:[%s0 + $0x1ad8] sm:$0xff]
    %v884 = vld [vmem:[%s0 + $0x1ae0] sm:$0xff]
    %v885 = vld [vmem:[%s0 + $0x1ae8] sm:$0xff]
    %v886 = vld [vmem:[%s0 + $0x1af0] sm:$0xff]
    %v887 = vld [vmem:[%s0 + $0x1af8] sm:$0xff]
    %v888 = vld [vmem:[%s0 + $0x1b00] sm:$0xff]
    %v889 = vld [vmem:[%s0 + $0x1b08] sm:$0xff]
    %v890 = vld [vmem:[%s0 + $0x1b10] sm:$0xff]
    %v891 = vld [vmem:[%s0 + $0x1b18] sm:$0xff]
    %v892 = vld [vmem:[%s0 + $0x1b20] sm:$0xff]
    %v893 = vld [vmem:[%s0 + $0x1b28] sm:$0xff]
    %v894 = vld [vmem:[%s0 + $0x1b30] sm:$0xff]
    %v895 = vld [vmem:[%s0 + $0x1b38] sm:$0xff]
    %v896 = vld [vmem:[%s0 + $0x1b40] sm:$0xff]
    %v897 = vld [vmem:[%s0 + $0x1b48] sm:$0xff]
    %v898 = vld [vmem:[%s0 + $0x1b50] sm:$0xff]
    %v899 = vld [vmem:[%s0 + $0x1b58] sm:$0xff]
    %v900 = vld [vmem:[%s0 + $0x1b60] sm:$0xff]
    %v901 = vld [vmem:[%s0 + $0x1b68] sm:$0xff]
    %v902 = vld [vmem:[%s0 + $0x1b70] sm:$0xff]
    %v903 = vld [vmem:[%s0 + $0x1b78] sm:$0xff]
    %v904 = vld [vmem:[%s0 + $0x1b80] sm:$0xff]
    %v905 = vld [vmem:[%s0 + $0x1b88] sm:$0xff]
    %v906 = vld [vmem:[%s0 + $0x1b90] sm:$0xff]
    %v907 = vld [vmem:[%s0 + $0x1b98] sm:$0xff]
    %v908 = vld [vmem:[%s0 + $0x1ba0] sm:$0xff]
    %v909 = vld [vmem:[%s0 + $0x1ba8] sm:$0xff]
    %v910 = vld [vmem:[%s0 + $0x1bb0] sm:$0xff]
    %v911 = vld [vmem:[%s0 + $0x1bb8] sm:$0xff]
    %v912 = vld [vmem:[%s0 + $0x1bc0] sm:$0xff]
    %v913 = vld [vmem:[%s0 + $0x1bc8] sm:$0xff]
    %v914 = vld [vmem:[%s0 + $0x1bd0] sm:$0xff]
    %v915 = vld [vmem:[%s0 + $0x1bd8] sm:$0xff]
    %v916 = vld [vmem:[%s0 + $0x1be0] sm:$0xff]
    %v917 = vld [vmem:[%s0 + $0x1be8] sm:$0xff]
    %v918 = vld [vmem:[%s0 + $0x1bf0] sm:$0xff]
    %v919 = vld [vmem:[%s0 + $0x1bf8] sm:$0xff]
    %v920 = vld [vmem:[%s0 + $0x1c00] sm:$0xff]
    %v921 = vld [vmem:[%s0 + $0x1c08] sm:$0xff]
    %v922 = vld [vmem:[%s0 + $0x1c10] sm:$0xff]
    %v923 = vld [vmem:[%s0 + $0x1c18] sm:$0xff]
    %v924 = vld [vmem:[%s0 + $0x1c20] sm:$0xff]
    %v925 = vld [vmem:[%s0 + $0x1c28] sm:$0xff]
    %v926 = vld [vmem:[%s0 + $0x1c30] sm:$0xff]
    %v927 = vld [vmem:[%s0 + $0x1c38] sm:$0xff]
    %v928 = vld [vmem:[%s0 + $0x1c40] sm:$0xff]
    %v929 = vld [vmem:[%s0 + $0x1c48] sm:$0xff]
    %v930 = vld [vmem:[%s0 + $0x1c50] sm:$0xff]
    %v931 = vld [vmem:[%s0 + $0x1c58] sm:$0xff]
    %v932 = vld [vmem:[%s0 + $0x1c60] sm:$0xff]
    %v933 = vld [vmem:[%s0 + $0x1c68] sm:$0xff]
    %v934 = vld [vmem:[%s0 + $0x1c70] sm:$0xff]
    %v935 = vld [vmem:[%s0 + $0x1c78] sm:$0xff]
    %v936 = vld [vmem:[%s0 + $0x1c80] sm:$0xff]
    %v937 = vld [vmem:[%s0 + $0x1c88] sm:$0xff]
    %v938 = vld [vmem:[%s0 + $0x1c90] sm:$0xff]
    %v939 = vld [vmem:[%s0 + $0x1c98] sm:$0xff]
    %v940 = vld [vmem:[%s0 + $0x1ca0] sm:$0xff]
    %v941 = vld [vmem:[%s0 + $0x1ca8] sm:$0xff]
    %v942 = vld [vmem:[%s0 + $0x1cb0] sm:$0xff]
    %v943 = vld [vmem:[%s0 + $0x1cb8] sm:$0xff]
    %v944 = vld [vmem:[%s0 + $0x1cc0] sm:$0xff]
    %v945 = vld [vmem:[%s0 + $0x1cc8] sm:$0xff]
    %v946 = vld [vmem:[%s0 + $0x1cd0] sm:$0xff]
    %v947 = vld [vmem:[%s0 + $0x1cd8] sm:$0xff]
    %v948 = vld [vmem:[%s0 + $0x1ce0] sm:$0xff]
    %v949 = vld [vmem:[%s0 + $0x1ce8] sm:$0xff]
    %v950 = vld [vmem:[%s0 + $0x1cf0] sm:$0xff]
    %v951 = vld [vmem:[%s0 + $0x1cf8] sm:$0xff]
    %v952 = vld [vmem:[%s0 + $0x1d00] sm:$0xff]
    %v953 = vld [vmem:[%s0 + $0x1d08] sm:$0xff]
    %v954 = vld [vmem:[%s0 + $0x1d10] sm:$0xff]
    %v955 = vld [vmem:[%s0 + $0x1d18] sm:$0xff]
    %v956 = vld [vmem:[%s0 + $0x1d20] sm:$0xff]
    %v957 = vld [vmem:[%s0 + $0x1d28] sm:$0xff]
    %v958 = vld [vmem:[%s0 + $0x1d30] sm:$0xff]
    %v959 = vld [vmem:[%s0 + $0x1d38] sm:$0xff]
    %v960 = vld [vmem:[%s0 + $0x1d40] sm:$0xff]
    %v961 = vld [vmem:[%s0 + $0x1d48] sm:$0xff]
    %v962 = vld [vmem:[%s0 + $0x1d50] sm:$0xff]
    %v963 = vld [vmem:[%s0 + $0x1d58] sm:$0xff]
    %v964 = vld [vmem:[%s0 + $0x1d60] sm:$0xff]
    %v965 = vld [vmem:[%s0 + $0x1d68] sm:$0xff]
    %v966 = vld [vmem:[%s0 + $0x1d70] sm:$0xff]
    %v967 = vld [vmem:[%s0 + $0x1d78] sm:$0xff]
    %v968 = vld [vmem:[%s0 + $0x1d80] sm:$0xff]
    %v969 = vld [vmem:[%s0 + $0x1d88] sm:$0xff]
    %v970 = vld [vmem:[%s0 + $0x1d90] sm:$0xff]
    %v971 = vld [vmem:[%s0 + $0x1d98] sm:$0xff]
    %v972 = vld [vmem:[%s0 + $0x1da0] sm:$0xff]
    %v973 = vld [vmem:[%s0 + $0x1da8] sm:$0xff]
    %v974 = vld [vmem:[%s0 + $0x1db0] sm:$0xff]
    %v975 = vld [vmem:[%s0 + $0x1db8] sm:$0xff]
    %v976 = vld [vmem:[%s0 + $0x1dc0] sm:$0xff]
    %v977 = vld [vmem:[%s0 + $0x1dc8] sm:$0xff]
    %v978 = vld [vmem:[%s0 + $0x1dd0] sm:$0xff]
    %v979 = vld [vmem:[%s0 + $0x1dd8] sm:$0xff]
    %v980 = vld [vmem:[%s0 + $0x1de0] sm:$0xff]
    %v981 = vld [vmem:[%s0 + $0x1de8] sm:$0xff]
    %v982 = vld [vmem:[%s0 + $0x1df0] sm:$0xff]
    %v983 = vld [vmem:[%s0 + $0x1df8] sm:$0xff]
    %v984 = vld [vmem:[%s0 + $0x1e00] sm:$0xff]
    %v985 = vld [vmem:[%s0 + $0x1e08] sm:$0xff]
    %v986 = vld [vmem:[%s0 + $0x1e10] sm:$0xff]
    %v987 = vld [vmem:[%s0 + $0x1e18] sm:$0xff]
    %v988 = vld [vmem:[%s0 + $0x1e20] sm:$0xff]
    %v989 = vld [vmem:[%s0 + $0x1e28] sm:$0xff]
    %v990 = vld [vmem:[%s0 + $0x1e30] sm:$0xff]
    %v991 = vld [vmem:[%s0 + $0x1e38] sm:$0xff]
    %v992 = vld [vmem:[%s0 + $0x1e40] sm:$0xff]
    %v993 = vld [vmem:[%s0 + $0x1e48] sm:$0xff]
    %v994 = vld [vmem:[%s0 + $0x1e50] sm:$0xff]
    %v995 = vld [vmem:[%s0 + $0x1e58] sm:$0xff]
    %v996 = vld [vmem:[%s0 + $0x1e60] sm:$0xff]
    %v997 = vld [vmem:[%s0 + $0x1e68] sm:$0xff]
    %v998 = vld [vmem:[%s0 + $0x1e70] sm:$0xff]
    %v999 = vld [vmem:[%s0 + $0x1e78] sm:$0xff]
    %v1000 = vld [vmem:[%s0 + $0x1e80] sm:$0xff]
    %v1001 = vld [vmem:[%s0 + $0x1e88] sm:$0xff]
    %v1002 = vld [vmem:[%s0 + $0x1e90] sm:$0xff]
    %v1003 = vld [vmem:[%s0 + $0x1e98] sm:$0xff]
    %v1004 = vld [vmem:[%s0 + $0x1ea0] sm:$0xff]
    %v1005 = vld [vmem:[%s0 + $0x1ea8] sm:$0xff]
    %v1006 = vld [vmem:[%s0 + $0x1eb0] sm:$0xff]
    %v1007 = vld [vmem:[%s0 + $0x1eb8] sm:$0xff]
    %v1008 = vld [vmem:[%s0 + $0x1ec0] sm:$0xff]
    %v1009 = vld [vmem:[%s0 + $0x1ec8] sm:$0xff]
    %v1010 = vld [vmem:[%s0 + $0x1ed0] sm:$0xff]
    %v1011 = vld [vmem:[%s0 + $0x1ed8] sm:$0xff]
    %v1012 = vld [vmem:[%s0 + $0x1ee0] sm:$0xff]
    %v1013 = vld [vmem:[%s0 + $0x1ee8] sm:$0xff]
    %v1014 = vld [vmem:[%s0 + $0x1ef0] sm:$0xff]
    %v1015 = vld [vmem:[%s0 + $0x1ef8] sm:$0xff]
    %v1016 = vld [vmem:[%s0 + $0x1f00] sm:$0xff]
    %v1017 = vld [vmem:[%s0 + $0x1f08] sm:$0xff]
    %v1018 = vld [vmem:[%s0 + $0x1f10] sm:$0xff]
    %v1019 = vld [vmem:[%s0 + $0x1f18] sm:$0xff]
    %v1020 = vld [vmem:[%s0 + $0x1f20] sm:$0xff]
    %v1021 = vld [vmem:[%s0 + $0x1f28] sm:$0xff]
    %v1022 = vld [vmem:[%s0 + $0x1f30] sm:$0xff]
    %v1023 = vld [vmem:[%s0 + $0x1f38] sm:$0xff]
    %v1024 = vld [vmem:[%s0 + $0x1f40] sm:$0xff]
    %v1025 = vld [vmem:[%s0 + $0x1f48] sm:$0xff]
    %v1026 = vld [vmem:[%s0 + $0x1f50] sm:$0xff]
    %v1027 = vld [vmem:[%s0 + $0x1f58] sm:$0xff]
    %v1028 = vld [vmem:[%s0 + $0x1f60] sm:$0xff]
    %v1029 = vld [vmem:[%s0 + $0x1f68] sm:$0xff]
    %v1030 = vld [vmem:[%s0 + $0x1f70] sm:$0xff]
    %v1031 = vld [vmem:[%s0 + $0x1f78] sm:$0xff]
    %v1032 = vld [vmem:[%s0 + $0x1f80] sm:$0xff]
    %v1033 = vld [vmem:[%s0 + $0x1f88] sm:$0xff]
    %v1034 = vld [vmem:[%s0 + $0x1f90] sm:$0xff]
    %v1035 = vld [vmem:[%s0 + $0x1f98] sm:$0xff]
    %v1036 = vld [vmem:[%s0 + $0x1fa0] sm:$0xff]
    %v1037 = vld [vmem:[%s0 + $0x1fa8] sm:$0xff]
    %v1038 = vld [vmem:[%s0 + $0x1fb0] sm:$0xff]
    %v1039 = vld [vmem:[%s0 + $0x1fb8] sm:$0xff]
    %v1040 = vld [vmem:[%s0 + $0x1fc0] sm:$0xff]
    %v1041 = vld [vmem:[%s0 + $0x1fc8] sm:$0xff]
    %v1042 = vld [vmem:[%s0 + $0x1fd0] sm:$0xff]
    %v1043 = vld [vmem:[%s0 + $0x1fd8] sm:$0xff]
    %v1044 = vld [vmem:[%s0 + $0x1fe0] sm:$0xff]
    %v1045 = vld [vmem:[%s0 + $0x1fe8] sm:$0xff]
    %v1046 = vld [vmem:[%s0 + $0x1ff0] sm:$0xff]
    %v1047 = vld [vmem:[%s0 + $0x1ff8] sm:$0xff]
    %vm1048 = vcmask 130048
    %v1049 = vsel %vm1048, %v24, 0.0
    %1050 = vadd.xlane.f32.xlu0 %v1049
    %v1051 = vpop.xlane.xlu0 %1050
    %v1052 = vsel %vm1048, %v25, 0.0
    %1053 = vadd.xlane.f32.xlu0 %v1052
    %v1054 = vpop.xlane.xlu0 %1053
    %v1055 = vsel %vm1048, %v26, 0.0
    %1056 = vadd.xlane.f32.xlu0 %v1055
    %v1057 = vpop.xlane.xlu0 %1056
    %v1058 = vsel %vm1048, %v27, 0.0
    %1059 = vadd.xlane.f32.xlu0 %v1058
    %v1060 = vpop.xlane.xlu0 %1059
    %v1061 = vsel %vm1048, %v28, 0.0
    %1062 = vadd.xlane.f32.xlu0 %v1061
    %v1063 = vpop.xlane.xlu0 %1062
    %v1064 = vsel %vm1048, %v29, 0.0
    %1065 = vadd.xlane.f32.xlu0 %v1064
    %v1066 = vpop.xlane.xlu0 %1065
    %v1067 = vsel %vm1048, %v30, 0.0
    %1068 = vadd.xlane.f32.xlu0 %v1067
    %v1069 = vpop.xlane.xlu0 %1068
    %v1070 = vsel %vm1048, %v31, 0.0
    %1071 = vadd.xlane.f32.xlu0 %v1070
    %v1072 = vpop.xlane.xlu0 %1071
    %v1073 = vsel %vm1048, %v32, 0.0
    %1074 = vadd.xlane.f32.xlu0 %v1073
    %v1075 = vpop.xlane.xlu0 %1074
    %v1076 = vsel %vm1048, %v33, 0.0
    %1077 = vadd.xlane.f32.xlu0 %v1076
    %v1078 = vpop.xlane.xlu0 %1077
    %v1079 = vsel %vm1048, %v34, 0.0
    %1080 = vadd.xlane.f32.xlu0 %v1079
    %v1081 = vpop.xlane.xlu0 %1080
    %v1082 = vsel %vm1048, %v35, 0.0
    %1083 = vadd.xlane.f32.xlu0 %v1082
    %v1084 = vpop.xlane.xlu0 %1083
    %v1085 = vsel %vm1048, %v36, 0.0
    %1086 = vadd.xlane.f32.xlu0 %v1085
    %v1087 = vpop.xlane.xlu0 %1086
    %v1088 = vsel %vm1048, %v37, 0.0
    %1089 = vadd.xlane.f32.xlu0 %v1088
    %v1090 = vpop.xlane.xlu0 %1089
    %v1091 = vsel %vm1048, %v38, 0.0
    %1092 = vadd.xlane.f32.xlu0 %v1091
    %v1093 = vpop.xlane.xlu0 %1092
    %v1094 = vsel %vm1048, %v39, 0.0
    %1095 = vadd.xlane.f32.xlu0 %v1094
    %v1096 = vpop.xlane.xlu0 %1095
    %v1097 = vsel %vm1048, %v40, 0.0
    %1098 = vadd.xlane.f32.xlu0 %v1097
    %v1099 = vpop.xlane.xlu0 %1098
    %v1100 = vsel %vm1048, %v41, 0.0
    %1101 = vadd.xlane.f32.xlu0 %v1100
    %v1102 = vpop.xlane.xlu0 %1101
    %v1103 = vsel %vm1048, %v42, 0.0
    %1104 = vadd.xlane.f32.xlu0 %v1103
    %v1105 = vpop.xlane.xlu0 %1104
    %v1106 = vsel %vm1048, %v43, 0.0
    %1107 = vadd.xlane.f32.xlu0 %v1106
    %v1108 = vpop.xlane.xlu0 %1107
    %v1109 = vsel %vm1048, %v44, 0.0
    %1110 = vadd.xlane.f32.xlu0 %v1109
    %v1111 = vpop.xlane.xlu0 %1110
    %v1112 = vsel %vm1048, %v45, 0.0
    %1113 = vadd.xlane.f32.xlu0 %v1112
    %v1114 = vpop.xlane.xlu0 %1113
    %v1115 = vsel %vm1048, %v46, 0.0
    %1116 = vadd.xlane.f32.xlu0 %v1115
    %v1117 = vpop.xlane.xlu0 %1116
    %v1118 = vsel %vm1048, %v47, 0.0
    %1119 = vadd.xlane.f32.xlu0 %v1118
    %v1120 = vpop.xlane.xlu0 %1119
    %v1121 = vsel %vm1048, %v48, 0.0
    %1122 = vadd.xlane.f32.xlu0 %v1121
    %v1123 = vpop.xlane.xlu0 %1122
    %v1124 = vsel %vm1048, %v49, 0.0
    %1125 = vadd.xlane.f32.xlu0 %v1124
    %v1126 = vpop.xlane.xlu0 %1125
    %v1127 = vsel %vm1048, %v50, 0.0
    %1128 = vadd.xlane.f32.xlu0 %v1127
    %v1129 = vpop.xlane.xlu0 %1128
    %v1130 = vsel %vm1048, %v51, 0.0
    %1131 = vadd.xlane.f32.xlu0 %v1130
    %v1132 = vpop.xlane.xlu0 %1131
    %v1133 = vsel %vm1048, %v52, 0.0
    %1134 = vadd.xlane.f32.xlu0 %v1133
    %v1135 = vpop.xlane.xlu0 %1134
    %v1136 = vsel %vm1048, %v53, 0.0
    %1137 = vadd.xlane.f32.xlu0 %v1136
    %v1138 = vpop.xlane.xlu0 %1137
    %v1139 = vsel %vm1048, %v54, 0.0
    %1140 = vadd.xlane.f32.xlu0 %v1139
    %v1141 = vpop.xlane.xlu0 %1140
    %v1142 = vsel %vm1048, %v55, 0.0
    %1143 = vadd.xlane.f32.xlu0 %v1142
    %v1144 = vpop.xlane.xlu0 %1143
    %v1145 = vsel %vm1048, %v56, 0.0
    %1146 = vadd.xlane.f32.xlu0 %v1145
    %v1147 = vpop.xlane.xlu0 %1146
    %v1148 = vsel %vm1048, %v57, 0.0
    %1149 = vadd.xlane.f32.xlu0 %v1148
    %v1150 = vpop.xlane.xlu0 %1149
    %v1151 = vsel %vm1048, %v58, 0.0
    %1152 = vadd.xlane.f32.xlu0 %v1151
    %v1153 = vpop.xlane.xlu0 %1152
    %v1154 = vsel %vm1048, %v59, 0.0
    %1155 = vadd.xlane.f32.xlu0 %v1154
    %v1156 = vpop.xlane.xlu0 %1155
    %v1157 = vsel %vm1048, %v60, 0.0
    %1158 = vadd.xlane.f32.xlu0 %v1157
    %v1159 = vpop.xlane.xlu0 %1158
    %v1160 = vsel %vm1048, %v61, 0.0
    %1161 = vadd.xlane.f32.xlu0 %v1160
    %v1162 = vpop.xlane.xlu0 %1161
    %v1163 = vsel %vm1048, %v62, 0.0
    %1164 = vadd.xlane.f32.xlu0 %v1163
    %v1165 = vpop.xlane.xlu0 %1164
    %v1166 = vsel %vm1048, %v63, 0.0
    %1167 = vadd.xlane.f32.xlu0 %v1166
    %v1168 = vpop.xlane.xlu0 %1167
    %v1169 = vsel %vm1048, %v64, 0.0
    %1170 = vadd.xlane.f32.xlu0 %v1169
    %v1171 = vpop.xlane.xlu0 %1170
    %v1172 = vsel %vm1048, %v65, 0.0
    %1173 = vadd.xlane.f32.xlu0 %v1172
    %v1174 = vpop.xlane.xlu0 %1173
    %v1175 = vsel %vm1048, %v66, 0.0
    %1176 = vadd.xlane.f32.xlu0 %v1175
    %v1177 = vpop.xlane.xlu0 %1176
    %v1178 = vsel %vm1048, %v67, 0.0
    %1179 = vadd.xlane.f32.xlu0 %v1178
    %v1180 = vpop.xlane.xlu0 %1179
    %v1181 = vsel %vm1048, %v68, 0.0
    %1182 = vadd.xlane.f32.xlu0 %v1181
    %v1183 = vpop.xlane.xlu0 %1182
    %v1184 = vsel %vm1048, %v69, 0.0
    %1185 = vadd.xlane.f32.xlu0 %v1184
    %v1186 = vpop.xlane.xlu0 %1185
    %v1187 = vsel %vm1048, %v70, 0.0
    %1188 = vadd.xlane.f32.xlu0 %v1187
    %v1189 = vpop.xlane.xlu0 %1188
    %v1190 = vsel %vm1048, %v71, 0.0
    %1191 = vadd.xlane.f32.xlu0 %v1190
    %v1192 = vpop.xlane.xlu0 %1191
    %v1193 = vsel %vm1048, %v72, 0.0
    %1194 = vadd.xlane.f32.xlu0 %v1193
    %v1195 = vpop.xlane.xlu0 %1194
    %v1196 = vsel %vm1048, %v73, 0.0
    %1197 = vadd.xlane.f32.xlu0 %v1196
    %v1198 = vpop.xlane.xlu0 %1197
    %v1199 = vsel %vm1048, %v74, 0.0
    %1200 = vadd.xlane.f32.xlu0 %v1199
    %v1201 = vpop.xlane.xlu0 %1200
    %v1202 = vsel %vm1048, %v75, 0.0
    %1203 = vadd.xlane.f32.xlu0 %v1202
    %v1204 = vpop.xlane.xlu0 %1203
    %v1205 = vsel %vm1048, %v76, 0.0
    %1206 = vadd.xlane.f32.xlu0 %v1205
    %v1207 = vpop.xlane.xlu0 %1206
    %v1208 = vsel %vm1048, %v77, 0.0
    %1209 = vadd.xlane.f32.xlu0 %v1208
    %v1210 = vpop.xlane.xlu0 %1209
    %v1211 = vsel %vm1048, %v78, 0.0
    %1212 = vadd.xlane.f32.xlu0 %v1211
    %v1213 = vpop.xlane.xlu0 %1212
    %v1214 = vsel %vm1048, %v79, 0.0
    %1215 = vadd.xlane.f32.xlu0 %v1214
    %v1216 = vpop.xlane.xlu0 %1215
    %v1217 = vsel %vm1048, %v80, 0.0
    %1218 = vadd.xlane.f32.xlu0 %v1217
    %v1219 = vpop.xlane.xlu0 %1218
    %v1220 = vsel %vm1048, %v81, 0.0
    %1221 = vadd.xlane.f32.xlu0 %v1220
    %v1222 = vpop.xlane.xlu0 %1221
    %v1223 = vsel %vm1048, %v82, 0.0
    %1224 = vadd.xlane.f32.xlu0 %v1223
    %v1225 = vpop.xlane.xlu0 %1224
    %v1226 = vsel %vm1048, %v83, 0.0
    %1227 = vadd.xlane.f32.xlu0 %v1226
    %v1228 = vpop.xlane.xlu0 %1227
    %v1229 = vsel %vm1048, %v84, 0.0
    %1230 = vadd.xlane.f32.xlu0 %v1229
    %v1231 = vpop.xlane.xlu0 %1230
    %v1232 = vsel %vm1048, %v85, 0.0
    %1233 = vadd.xlane.f32.xlu0 %v1232
    %v1234 = vpop.xlane.xlu0 %1233
    %v1235 = vsel %vm1048, %v86, 0.0
    %1236 = vadd.xlane.f32.xlu0 %v1235
    %v1237 = vpop.xlane.xlu0 %1236
    %v1238 = vsel %vm1048, %v87, 0.0
    %1239 = vadd.xlane.f32.xlu0 %v1238
    %v1240 = vpop.xlane.xlu0 %1239
    %v1241 = vsel %vm1048, %v88, 0.0
    %1242 = vadd.xlane.f32.xlu0 %v1241
    %v1243 = vpop.xlane.xlu0 %1242
    %v1244 = vsel %vm1048, %v89, 0.0
    %1245 = vadd.xlane.f32.xlu0 %v1244
    %v1246 = vpop.xlane.xlu0 %1245
    %v1247 = vsel %vm1048, %v90, 0.0
    %1248 = vadd.xlane.f32.xlu0 %v1247
    %v1249 = vpop.xlane.xlu0 %1248
    %v1250 = vsel %vm1048, %v91, 0.0
    %1251 = vadd.xlane.f32.xlu0 %v1250
    %v1252 = vpop.xlane.xlu0 %1251
    %v1253 = vsel %vm1048, %v92, 0.0
    %1254 = vadd.xlane.f32.xlu0 %v1253
    %v1255 = vpop.xlane.xlu0 %1254
    %v1256 = vsel %vm1048, %v93, 0.0
    %1257 = vadd.xlane.f32.xlu0 %v1256
    %v1258 = vpop.xlane.xlu0 %1257
    %v1259 = vsel %vm1048, %v94, 0.0
    %1260 = vadd.xlane.f32.xlu0 %v1259
    %v1261 = vpop.xlane.xlu0 %1260
    %v1262 = vsel %vm1048, %v95, 0.0
    %1263 = vadd.xlane.f32.xlu0 %v1262
    %v1264 = vpop.xlane.xlu0 %1263
    %v1265 = vsel %vm1048, %v96, 0.0
    %1266 = vadd.xlane.f32.xlu0 %v1265
    %v1267 = vpop.xlane.xlu0 %1266
    %v1268 = vsel %vm1048, %v97, 0.0
    %1269 = vadd.xlane.f32.xlu0 %v1268
    %v1270 = vpop.xlane.xlu0 %1269
    %v1271 = vsel %vm1048, %v98, 0.0
    %1272 = vadd.xlane.f32.xlu0 %v1271
    %v1273 = vpop.xlane.xlu0 %1272
    %v1274 = vsel %vm1048, %v99, 0.0
    %1275 = vadd.xlane.f32.xlu0 %v1274
    %v1276 = vpop.xlane.xlu0 %1275
    %v1277 = vsel %vm1048, %v100, 0.0
    %1278 = vadd.xlane.f32.xlu0 %v1277
    %v1279 = vpop.xlane.xlu0 %1278
    %v1280 = vsel %vm1048, %v101, 0.0
    %1281 = vadd.xlane.f32.xlu0 %v1280
    %v1282 = vpop.xlane.xlu0 %1281
    %v1283 = vsel %vm1048, %v102, 0.0
    %1284 = vadd.xlane.f32.xlu0 %v1283
    %v1285 = vpop.xlane.xlu0 %1284
    %v1286 = vsel %vm1048, %v103, 0.0
    %1287 = vadd.xlane.f32.xlu0 %v1286
    %v1288 = vpop.xlane.xlu0 %1287
    %v1289 = vsel %vm1048, %v104, 0.0
    %1290 = vadd.xlane.f32.xlu0 %v1289
    %v1291 = vpop.xlane.xlu0 %1290
    %v1292 = vsel %vm1048, %v105, 0.0
    %1293 = vadd.xlane.f32.xlu0 %v1292
    %v1294 = vpop.xlane.xlu0 %1293
    %v1295 = vsel %vm1048, %v106, 0.0
    %1296 = vadd.xlane.f32.xlu0 %v1295
    %v1297 = vpop.xlane.xlu0 %1296
    %v1298 = vsel %vm1048, %v107, 0.0
    %1299 = vadd.xlane.f32.xlu0 %v1298
    %v1300 = vpop.xlane.xlu0 %1299
    %v1301 = vsel %vm1048, %v108, 0.0
    %1302 = vadd.xlane.f32.xlu0 %v1301
    %v1303 = vpop.xlane.xlu0 %1302
    %v1304 = vsel %vm1048, %v109, 0.0
    %1305 = vadd.xlane.f32.xlu0 %v1304
    %v1306 = vpop.xlane.xlu0 %1305
    %v1307 = vsel %vm1048, %v110, 0.0
    %1308 = vadd.xlane.f32.xlu0 %v1307
    %v1309 = vpop.xlane.xlu0 %1308
    %v1310 = vsel %vm1048, %v111, 0.0
    %1311 = vadd.xlane.f32.xlu0 %v1310
    %v1312 = vpop.xlane.xlu0 %1311
    %v1313 = vsel %vm1048, %v112, 0.0
    %1314 = vadd.xlane.f32.xlu0 %v1313
    %v1315 = vpop.xlane.xlu0 %1314
    %v1316 = vsel %vm1048, %v113, 0.0
    %1317 = vadd.xlane.f32.xlu0 %v1316
    %v1318 = vpop.xlane.xlu0 %1317
    %v1319 = vsel %vm1048, %v114, 0.0
    %1320 = vadd.xlane.f32.xlu0 %v1319
    %v1321 = vpop.xlane.xlu0 %1320
    %v1322 = vsel %vm1048, %v115, 0.0
    %1323 = vadd.xlane.f32.xlu0 %v1322
    %v1324 = vpop.xlane.xlu0 %1323
    %v1325 = vsel %vm1048, %v116, 0.0
    %1326 = vadd.xlane.f32.xlu0 %v1325
    %v1327 = vpop.xlane.xlu0 %1326
    %v1328 = vsel %vm1048, %v117, 0.0
    %1329 = vadd.xlane.f32.xlu0 %v1328
    %v1330 = vpop.xlane.xlu0 %1329
    %v1331 = vsel %vm1048, %v118, 0.0
    %1332 = vadd.xlane.f32.xlu0 %v1331
    %v1333 = vpop.xlane.xlu0 %1332
    %v1334 = vsel %vm1048, %v119, 0.0
    %1335 = vadd.xlane.f32.xlu0 %v1334
    %v1336 = vpop.xlane.xlu0 %1335
    %v1337 = vsel %vm1048, %v120, 0.0
    %1338 = vadd.xlane.f32.xlu0 %v1337
    %v1339 = vpop.xlane.xlu0 %1338
    %v1340 = vsel %vm1048, %v121, 0.0
    %1341 = vadd.xlane.f32.xlu0 %v1340
    %v1342 = vpop.xlane.xlu0 %1341
    %v1343 = vsel %vm1048, %v122, 0.0
    %1344 = vadd.xlane.f32.xlu0 %v1343
    %v1345 = vpop.xlane.xlu0 %1344
    %v1346 = vsel %vm1048, %v123, 0.0
    %1347 = vadd.xlane.f32.xlu0 %v1346
    %v1348 = vpop.xlane.xlu0 %1347
    %v1349 = vsel %vm1048, %v124, 0.0
    %1350 = vadd.xlane.f32.xlu0 %v1349
    %v1351 = vpop.xlane.xlu0 %1350
    %v1352 = vsel %vm1048, %v125, 0.0
    %1353 = vadd.xlane.f32.xlu0 %v1352
    %v1354 = vpop.xlane.xlu0 %1353
    %v1355 = vsel %vm1048, %v126, 0.0
    %1356 = vadd.xlane.f32.xlu0 %v1355
    %v1357 = vpop.xlane.xlu0 %1356
    %v1358 = vsel %vm1048, %v127, 0.0
    %1359 = vadd.xlane.f32.xlu0 %v1358
    %v1360 = vpop.xlane.xlu0 %1359
    %v1361 = vsel %vm1048, %v128, 0.0
    %1362 = vadd.xlane.f32.xlu0 %v1361
    %v1363 = vpop.xlane.xlu0 %1362
    %v1364 = vsel %vm1048, %v129, 0.0
    %1365 = vadd.xlane.f32.xlu0 %v1364
    %v1366 = vpop.xlane.xlu0 %1365
    %v1367 = vsel %vm1048, %v130, 0.0
    %1368 = vadd.xlane.f32.xlu0 %v1367
    %v1369 = vpop.xlane.xlu0 %1368
    %v1370 = vsel %vm1048, %v131, 0.0
    %1371 = vadd.xlane.f32.xlu0 %v1370
    %v1372 = vpop.xlane.xlu0 %1371
    %v1373 = vsel %vm1048, %v132, 0.0
    %1374 = vadd.xlane.f32.xlu0 %v1373
    %v1375 = vpop.xlane.xlu0 %1374
    %v1376 = vsel %vm1048, %v133, 0.0
    %1377 = vadd.xlane.f32.xlu0 %v1376
    %v1378 = vpop.xlane.xlu0 %1377
    %v1379 = vsel %vm1048, %v134, 0.0
    %1380 = vadd.xlane.f32.xlu0 %v1379
    %v1381 = vpop.xlane.xlu0 %1380
    %v1382 = vsel %vm1048, %v135, 0.0
    %1383 = vadd.xlane.f32.xlu0 %v1382
    %v1384 = vpop.xlane.xlu0 %1383
    %v1385 = vsel %vm1048, %v136, 0.0
    %1386 = vadd.xlane.f32.xlu0 %v1385
    %v1387 = vpop.xlane.xlu0 %1386
    %v1388 = vsel %vm1048, %v137, 0.0
    %1389 = vadd.xlane.f32.xlu0 %v1388
    %v1390 = vpop.xlane.xlu0 %1389
    %v1391 = vsel %vm1048, %v138, 0.0
    %1392 = vadd.xlane.f32.xlu0 %v1391
    %v1393 = vpop.xlane.xlu0 %1392
    %v1394 = vsel %vm1048, %v139, 0.0
    %1395 = vadd.xlane.f32.xlu0 %v1394
    %v1396 = vpop.xlane.xlu0 %1395
    %v1397 = vsel %vm1048, %v140, 0.0
    %1398 = vadd.xlane.f32.xlu0 %v1397
    %v1399 = vpop.xlane.xlu0 %1398
    %v1400 = vsel %vm1048, %v141, 0.0
    %1401 = vadd.xlane.f32.xlu0 %v1400
    %v1402 = vpop.xlane.xlu0 %1401
    %v1403 = vsel %vm1048, %v142, 0.0
    %1404 = vadd.xlane.f32.xlu0 %v1403
    %v1405 = vpop.xlane.xlu0 %1404
    %v1406 = vsel %vm1048, %v143, 0.0
    %1407 = vadd.xlane.f32.xlu0 %v1406
    %v1408 = vpop.xlane.xlu0 %1407
    %v1409 = vsel %vm1048, %v144, 0.0
    %1410 = vadd.xlane.f32.xlu0 %v1409
    %v1411 = vpop.xlane.xlu0 %1410
    %v1412 = vsel %vm1048, %v145, 0.0
    %1413 = vadd.xlane.f32.xlu0 %v1412
    %v1414 = vpop.xlane.xlu0 %1413
    %v1415 = vsel %vm1048, %v146, 0.0
    %1416 = vadd.xlane.f32.xlu0 %v1415
    %v1417 = vpop.xlane.xlu0 %1416
    %v1418 = vsel %vm1048, %v147, 0.0
    %1419 = vadd.xlane.f32.xlu0 %v1418
    %v1420 = vpop.xlane.xlu0 %1419
    %v1421 = vsel %vm1048, %v148, 0.0
    %1422 = vadd.xlane.f32.xlu0 %v1421
    %v1423 = vpop.xlane.xlu0 %1422
    %v1424 = vsel %vm1048, %v149, 0.0
    %1425 = vadd.xlane.f32.xlu0 %v1424
    %v1426 = vpop.xlane.xlu0 %1425
    %v1427 = vsel %vm1048, %v150, 0.0
    %1428 = vadd.xlane.f32.xlu0 %v1427
    %v1429 = vpop.xlane.xlu0 %1428
    %v1430 = vsel %vm1048, %v151, 0.0
    %1431 = vadd.xlane.f32.xlu0 %v1430
    %v1432 = vpop.xlane.xlu0 %1431
    %v1433 = vsel %vm1048, %v152, 0.0
    %1434 = vadd.xlane.f32.xlu0 %v1433
    %v1435 = vpop.xlane.xlu0 %1434
    %v1436 = vsel %vm1048, %v153, 0.0
    %1437 = vadd.xlane.f32.xlu0 %v1436
    %v1438 = vpop.xlane.xlu0 %1437
    %v1439 = vsel %vm1048, %v154, 0.0
    %1440 = vadd.xlane.f32.xlu0 %v1439
    %v1441 = vpop.xlane.xlu0 %1440
    %v1442 = vsel %vm1048, %v155, 0.0
    %1443 = vadd.xlane.f32.xlu0 %v1442
    %v1444 = vpop.xlane.xlu0 %1443
    %v1445 = vsel %vm1048, %v156, 0.0
    %1446 = vadd.xlane.f32.xlu0 %v1445
    %v1447 = vpop.xlane.xlu0 %1446
    %v1448 = vsel %vm1048, %v157, 0.0
    %1449 = vadd.xlane.f32.xlu0 %v1448
    %v1450 = vpop.xlane.xlu0 %1449
    %v1451 = vsel %vm1048, %v158, 0.0
    %1452 = vadd.xlane.f32.xlu0 %v1451
    %v1453 = vpop.xlane.xlu0 %1452
    %v1454 = vsel %vm1048, %v159, 0.0
    %1455 = vadd.xlane.f32.xlu0 %v1454
    %v1456 = vpop.xlane.xlu0 %1455
    %v1457 = vsel %vm1048, %v160, 0.0
    %1458 = vadd.xlane.f32.xlu0 %v1457
    %v1459 = vpop.xlane.xlu0 %1458
    %v1460 = vsel %vm1048, %v161, 0.0
    %1461 = vadd.xlane.f32.xlu0 %v1460
    %v1462 = vpop.xlane.xlu0 %1461
    %v1463 = vsel %vm1048, %v162, 0.0
    %1464 = vadd.xlane.f32.xlu0 %v1463
    %v1465 = vpop.xlane.xlu0 %1464
    %v1466 = vsel %vm1048, %v163, 0.0
    %1467 = vadd.xlane.f32.xlu0 %v1466
    %v1468 = vpop.xlane.xlu0 %1467
    %v1469 = vsel %vm1048, %v164, 0.0
    %1470 = vadd.xlane.f32.xlu0 %v1469
    %v1471 = vpop.xlane.xlu0 %1470
    %v1472 = vsel %vm1048, %v165, 0.0
    %1473 = vadd.xlane.f32.xlu0 %v1472
    %v1474 = vpop.xlane.xlu0 %1473
    %v1475 = vsel %vm1048, %v166, 0.0
    %1476 = vadd.xlane.f32.xlu0 %v1475
    %v1477 = vpop.xlane.xlu0 %1476
    %v1478 = vsel %vm1048, %v167, 0.0
    %1479 = vadd.xlane.f32.xlu0 %v1478
    %v1480 = vpop.xlane.xlu0 %1479
    %v1481 = vsel %vm1048, %v168, 0.0
    %1482 = vadd.xlane.f32.xlu0 %v1481
    %v1483 = vpop.xlane.xlu0 %1482
    %v1484 = vsel %vm1048, %v169, 0.0
    %1485 = vadd.xlane.f32.xlu0 %v1484
    %v1486 = vpop.xlane.xlu0 %1485
    %v1487 = vsel %vm1048, %v170, 0.0
    %1488 = vadd.xlane.f32.xlu0 %v1487
    %v1489 = vpop.xlane.xlu0 %1488
    %v1490 = vsel %vm1048, %v171, 0.0
    %1491 = vadd.xlane.f32.xlu0 %v1490
    %v1492 = vpop.xlane.xlu0 %1491
    %v1493 = vsel %vm1048, %v172, 0.0
    %1494 = vadd.xlane.f32.xlu0 %v1493
    %v1495 = vpop.xlane.xlu0 %1494
    %v1496 = vsel %vm1048, %v173, 0.0
    %1497 = vadd.xlane.f32.xlu0 %v1496
    %v1498 = vpop.xlane.xlu0 %1497
    %v1499 = vsel %vm1048, %v174, 0.0
    %1500 = vadd.xlane.f32.xlu0 %v1499
    %v1501 = vpop.xlane.xlu0 %1500
    %v1502 = vsel %vm1048, %v175, 0.0
    %1503 = vadd.xlane.f32.xlu0 %v1502
    %v1504 = vpop.xlane.xlu0 %1503
    %v1505 = vsel %vm1048, %v176, 0.0
    %1506 = vadd.xlane.f32.xlu0 %v1505
    %v1507 = vpop.xlane.xlu0 %1506
    %v1508 = vsel %vm1048, %v177, 0.0
    %1509 = vadd.xlane.f32.xlu0 %v1508
    %v1510 = vpop.xlane.xlu0 %1509
    %v1511 = vsel %vm1048, %v178, 0.0
    %1512 = vadd.xlane.f32.xlu0 %v1511
    %v1513 = vpop.xlane.xlu0 %1512
    %v1514 = vsel %vm1048, %v179, 0.0
    %1515 = vadd.xlane.f32.xlu0 %v1514
    %v1516 = vpop.xlane.xlu0 %1515
    %v1517 = vsel %vm1048, %v180, 0.0
    %1518 = vadd.xlane.f32.xlu0 %v1517
    %v1519 = vpop.xlane.xlu0 %1518
    %v1520 = vsel %vm1048, %v181, 0.0
    %1521 = vadd.xlane.f32.xlu0 %v1520
    %v1522 = vpop.xlane.xlu0 %1521
    %v1523 = vsel %vm1048, %v182, 0.0
    %1524 = vadd.xlane.f32.xlu0 %v1523
    %v1525 = vpop.xlane.xlu0 %1524
    %v1526 = vsel %vm1048, %v183, 0.0
    %1527 = vadd.xlane.f32.xlu0 %v1526
    %v1528 = vpop.xlane.xlu0 %1527
    %v1529 = vsel %vm1048, %v184, 0.0
    %1530 = vadd.xlane.f32.xlu0 %v1529
    %v1531 = vpop.xlane.xlu0 %1530
    %v1532 = vsel %vm1048, %v185, 0.0
    %1533 = vadd.xlane.f32.xlu0 %v1532
    %v1534 = vpop.xlane.xlu0 %1533
    %v1535 = vsel %vm1048, %v186, 0.0
    %1536 = vadd.xlane.f32.xlu0 %v1535
    %v1537 = vpop.xlane.xlu0 %1536
    %v1538 = vsel %vm1048, %v187, 0.0
    %1539 = vadd.xlane.f32.xlu0 %v1538
    %v1540 = vpop.xlane.xlu0 %1539
    %v1541 = vsel %vm1048, %v188, 0.0
    %1542 = vadd.xlane.f32.xlu0 %v1541
    %v1543 = vpop.xlane.xlu0 %1542
    %v1544 = vsel %vm1048, %v189, 0.0
    %1545 = vadd.xlane.f32.xlu0 %v1544
    %v1546 = vpop.xlane.xlu0 %1545
    %v1547 = vsel %vm1048, %v190, 0.0
    %1548 = vadd.xlane.f32.xlu0 %v1547
    %v1549 = vpop.xlane.xlu0 %1548
    %v1550 = vsel %vm1048, %v191, 0.0
    %1551 = vadd.xlane.f32.xlu0 %v1550
    %v1552 = vpop.xlane.xlu0 %1551
    %v1553 = vsel %vm1048, %v192, 0.0
    %1554 = vadd.xlane.f32.xlu0 %v1553
    %v1555 = vpop.xlane.xlu0 %1554
    %v1556 = vsel %vm1048, %v193, 0.0
    %1557 = vadd.xlane.f32.xlu0 %v1556
    %v1558 = vpop.xlane.xlu0 %1557
    %v1559 = vsel %vm1048, %v194, 0.0
    %1560 = vadd.xlane.f32.xlu0 %v1559
    %v1561 = vpop.xlane.xlu0 %1560
    %v1562 = vsel %vm1048, %v195, 0.0
    %1563 = vadd.xlane.f32.xlu0 %v1562
    %v1564 = vpop.xlane.xlu0 %1563
    %v1565 = vsel %vm1048, %v196, 0.0
    %1566 = vadd.xlane.f32.xlu0 %v1565
    %v1567 = vpop.xlane.xlu0 %1566
    %v1568 = vsel %vm1048, %v197, 0.0
    %1569 = vadd.xlane.f32.xlu0 %v1568
    %v1570 = vpop.xlane.xlu0 %1569
    %v1571 = vsel %vm1048, %v198, 0.0
    %1572 = vadd.xlane.f32.xlu0 %v1571
    %v1573 = vpop.xlane.xlu0 %1572
    %v1574 = vsel %vm1048, %v199, 0.0
    %1575 = vadd.xlane.f32.xlu0 %v1574
    %v1576 = vpop.xlane.xlu0 %1575
    %v1577 = vsel %vm1048, %v200, 0.0
    %1578 = vadd.xlane.f32.xlu0 %v1577
    %v1579 = vpop.xlane.xlu0 %1578
    %v1580 = vsel %vm1048, %v201, 0.0
    %1581 = vadd.xlane.f32.xlu0 %v1580
    %v1582 = vpop.xlane.xlu0 %1581
    %v1583 = vsel %vm1048, %v202, 0.0
    %1584 = vadd.xlane.f32.xlu0 %v1583
    %v1585 = vpop.xlane.xlu0 %1584
    %v1586 = vsel %vm1048, %v203, 0.0
    %1587 = vadd.xlane.f32.xlu0 %v1586
    %v1588 = vpop.xlane.xlu0 %1587
    %v1589 = vsel %vm1048, %v204, 0.0
    %1590 = vadd.xlane.f32.xlu0 %v1589
    %v1591 = vpop.xlane.xlu0 %1590
    %v1592 = vsel %vm1048, %v205, 0.0
    %1593 = vadd.xlane.f32.xlu0 %v1592
    %v1594 = vpop.xlane.xlu0 %1593
    %v1595 = vsel %vm1048, %v206, 0.0
    %1596 = vadd.xlane.f32.xlu0 %v1595
    %v1597 = vpop.xlane.xlu0 %1596
    %v1598 = vsel %vm1048, %v207, 0.0
    %1599 = vadd.xlane.f32.xlu0 %v1598
    %v1600 = vpop.xlane.xlu0 %1599
    %v1601 = vsel %vm1048, %v208, 0.0
    %1602 = vadd.xlane.f32.xlu0 %v1601
    %v1603 = vpop.xlane.xlu0 %1602
    %v1604 = vsel %vm1048, %v209, 0.0
    %1605 = vadd.xlane.f32.xlu0 %v1604
    %v1606 = vpop.xlane.xlu0 %1605
    %v1607 = vsel %vm1048, %v210, 0.0
    %1608 = vadd.xlane.f32.xlu0 %v1607
    %v1609 = vpop.xlane.xlu0 %1608
    %v1610 = vsel %vm1048, %v211, 0.0
    %1611 = vadd.xlane.f32.xlu0 %v1610
    %v1612 = vpop.xlane.xlu0 %1611
    %v1613 = vsel %vm1048, %v212, 0.0
    %1614 = vadd.xlane.f32.xlu0 %v1613
    %v1615 = vpop.xlane.xlu0 %1614
    %v1616 = vsel %vm1048, %v213, 0.0
    %1617 = vadd.xlane.f32.xlu0 %v1616
    %v1618 = vpop.xlane.xlu0 %1617
    %v1619 = vsel %vm1048, %v214, 0.0
    %1620 = vadd.xlane.f32.xlu0 %v1619
    %v1621 = vpop.xlane.xlu0 %1620
    %v1622 = vsel %vm1048, %v215, 0.0
    %1623 = vadd.xlane.f32.xlu0 %v1622
    %v1624 = vpop.xlane.xlu0 %1623
    %v1625 = vsel %vm1048, %v216, 0.0
    %1626 = vadd.xlane.f32.xlu0 %v1625
    %v1627 = vpop.xlane.xlu0 %1626
    %v1628 = vsel %vm1048, %v217, 0.0
    %1629 = vadd.xlane.f32.xlu0 %v1628
    %v1630 = vpop.xlane.xlu0 %1629
    %v1631 = vsel %vm1048, %v218, 0.0
    %1632 = vadd.xlane.f32.xlu0 %v1631
    %v1633 = vpop.xlane.xlu0 %1632
    %v1634 = vsel %vm1048, %v219, 0.0
    %1635 = vadd.xlane.f32.xlu0 %v1634
    %v1636 = vpop.xlane.xlu0 %1635
    %v1637 = vsel %vm1048, %v220, 0.0
    %1638 = vadd.xlane.f32.xlu0 %v1637
    %v1639 = vpop.xlane.xlu0 %1638
    %v1640 = vsel %vm1048, %v221, 0.0
    %1641 = vadd.xlane.f32.xlu0 %v1640
    %v1642 = vpop.xlane.xlu0 %1641
    %v1643 = vsel %vm1048, %v222, 0.0
    %1644 = vadd.xlane.f32.xlu0 %v1643
    %v1645 = vpop.xlane.xlu0 %1644
    %v1646 = vsel %vm1048, %v223, 0.0
    %1647 = vadd.xlane.f32.xlu0 %v1646
    %v1648 = vpop.xlane.xlu0 %1647
    %v1649 = vsel %vm1048, %v224, 0.0
    %1650 = vadd.xlane.f32.xlu0 %v1649
    %v1651 = vpop.xlane.xlu0 %1650
    %v1652 = vsel %vm1048, %v225, 0.0
    %1653 = vadd.xlane.f32.xlu0 %v1652
    %v1654 = vpop.xlane.xlu0 %1653
    %v1655 = vsel %vm1048, %v226, 0.0
    %1656 = vadd.xlane.f32.xlu0 %v1655
    %v1657 = vpop.xlane.xlu0 %1656
    %v1658 = vsel %vm1048, %v227, 0.0
    %1659 = vadd.xlane.f32.xlu0 %v1658
    %v1660 = vpop.xlane.xlu0 %1659
    %v1661 = vsel %vm1048, %v228, 0.0
    %1662 = vadd.xlane.f32.xlu0 %v1661
    %v1663 = vpop.xlane.xlu0 %1662
    %v1664 = vsel %vm1048, %v229, 0.0
    %1665 = vadd.xlane.f32.xlu0 %v1664
    %v1666 = vpop.xlane.xlu0 %1665
    %v1667 = vsel %vm1048, %v230, 0.0
    %1668 = vadd.xlane.f32.xlu0 %v1667
    %v1669 = vpop.xlane.xlu0 %1668
    %v1670 = vsel %vm1048, %v231, 0.0
    %1671 = vadd.xlane.f32.xlu0 %v1670
    %v1672 = vpop.xlane.xlu0 %1671
    %v1673 = vsel %vm1048, %v232, 0.0
    %1674 = vadd.xlane.f32.xlu0 %v1673
    %v1675 = vpop.xlane.xlu0 %1674
    %v1676 = vsel %vm1048, %v233, 0.0
    %1677 = vadd.xlane.f32.xlu0 %v1676
    %v1678 = vpop.xlane.xlu0 %1677
    %v1679 = vsel %vm1048, %v234, 0.0
    %1680 = vadd.xlane.f32.xlu0 %v1679
    %v1681 = vpop.xlane.xlu0 %1680
    %v1682 = vsel %vm1048, %v235, 0.0
    %1683 = vadd.xlane.f32.xlu0 %v1682
    %v1684 = vpop.xlane.xlu0 %1683
    %v1685 = vsel %vm1048, %v236, 0.0
    %1686 = vadd.xlane.f32.xlu0 %v1685
    %v1687 = vpop.xlane.xlu0 %1686
    %v1688 = vsel %vm1048, %v237, 0.0
    %1689 = vadd.xlane.f32.xlu0 %v1688
    %v1690 = vpop.xlane.xlu0 %1689
    %v1691 = vsel %vm1048, %v238, 0.0
    %1692 = vadd.xlane.f32.xlu0 %v1691
    %v1693 = vpop.xlane.xlu0 %1692
    %v1694 = vsel %vm1048, %v239, 0.0
    %1695 = vadd.xlane.f32.xlu0 %v1694
    %v1696 = vpop.xlane.xlu0 %1695
    %v1697 = vsel %vm1048, %v240, 0.0
    %1698 = vadd.xlane.f32.xlu0 %v1697
    %v1699 = vpop.xlane.xlu0 %1698
    %v1700 = vsel %vm1048, %v241, 0.0
    %1701 = vadd.xlane.f32.xlu0 %v1700
    %v1702 = vpop.xlane.xlu0 %1701
    %v1703 = vsel %vm1048, %v242, 0.0
    %1704 = vadd.xlane.f32.xlu0 %v1703
    %v1705 = vpop.xlane.xlu0 %1704
    %v1706 = vsel %vm1048, %v243, 0.0
    %1707 = vadd.xlane.f32.xlu0 %v1706
    %v1708 = vpop.xlane.xlu0 %1707
    %v1709 = vsel %vm1048, %v244, 0.0
    %1710 = vadd.xlane.f32.xlu0 %v1709
    %v1711 = vpop.xlane.xlu0 %1710
    %v1712 = vsel %vm1048, %v245, 0.0
    %1713 = vadd.xlane.f32.xlu0 %v1712
    %v1714 = vpop.xlane.xlu0 %1713
    %v1715 = vsel %vm1048, %v246, 0.0
    %1716 = vadd.xlane.f32.xlu0 %v1715
    %v1717 = vpop.xlane.xlu0 %1716
    %v1718 = vsel %vm1048, %v247, 0.0
    %1719 = vadd.xlane.f32.xlu0 %v1718
    %v1720 = vpop.xlane.xlu0 %1719
    %v1721 = vsel %vm1048, %v248, 0.0
    %1722 = vadd.xlane.f32.xlu0 %v1721
    %v1723 = vpop.xlane.xlu0 %1722
    %v1724 = vsel %vm1048, %v249, 0.0
    %1725 = vadd.xlane.f32.xlu0 %v1724
    %v1726 = vpop.xlane.xlu0 %1725
    %v1727 = vsel %vm1048, %v250, 0.0
    %1728 = vadd.xlane.f32.xlu0 %v1727
    %v1729 = vpop.xlane.xlu0 %1728
    %v1730 = vsel %vm1048, %v251, 0.0
    %1731 = vadd.xlane.f32.xlu0 %v1730
    %v1732 = vpop.xlane.xlu0 %1731
    %v1733 = vsel %vm1048, %v252, 0.0
    %1734 = vadd.xlane.f32.xlu0 %v1733
    %v1735 = vpop.xlane.xlu0 %1734
    %v1736 = vsel %vm1048, %v253, 0.0
    %1737 = vadd.xlane.f32.xlu0 %v1736
    %v1738 = vpop.xlane.xlu0 %1737
    %v1739 = vsel %vm1048, %v254, 0.0
    %1740 = vadd.xlane.f32.xlu0 %v1739
    %v1741 = vpop.xlane.xlu0 %1740
    %v1742 = vsel %vm1048, %v255, 0.0
    %1743 = vadd.xlane.f32.xlu0 %v1742
    %v1744 = vpop.xlane.xlu0 %1743
    %v1745 = vsel %vm1048, %v256, 0.0
    %1746 = vadd.xlane.f32.xlu0 %v1745
    %v1747 = vpop.xlane.xlu0 %1746
    %v1748 = vsel %vm1048, %v257, 0.0
    %1749 = vadd.xlane.f32.xlu0 %v1748
    %v1750 = vpop.xlane.xlu0 %1749
    %v1751 = vsel %vm1048, %v258, 0.0
    %1752 = vadd.xlane.f32.xlu0 %v1751
    %v1753 = vpop.xlane.xlu0 %1752
    %v1754 = vsel %vm1048, %v259, 0.0
    %1755 = vadd.xlane.f32.xlu0 %v1754
    %v1756 = vpop.xlane.xlu0 %1755
    %v1757 = vsel %vm1048, %v260, 0.0
    %1758 = vadd.xlane.f32.xlu0 %v1757
    %v1759 = vpop.xlane.xlu0 %1758
    %v1760 = vsel %vm1048, %v261, 0.0
    %1761 = vadd.xlane.f32.xlu0 %v1760
    %v1762 = vpop.xlane.xlu0 %1761
    %v1763 = vsel %vm1048, %v262, 0.0
    %1764 = vadd.xlane.f32.xlu0 %v1763
    %v1765 = vpop.xlane.xlu0 %1764
    %v1766 = vsel %vm1048, %v263, 0.0
    %1767 = vadd.xlane.f32.xlu0 %v1766
    %v1768 = vpop.xlane.xlu0 %1767
    %v1769 = vsel %vm1048, %v264, 0.0
    %1770 = vadd.xlane.f32.xlu0 %v1769
    %v1771 = vpop.xlane.xlu0 %1770
    %v1772 = vsel %vm1048, %v265, 0.0
    %1773 = vadd.xlane.f32.xlu0 %v1772
    %v1774 = vpop.xlane.xlu0 %1773
    %v1775 = vsel %vm1048, %v266, 0.0
    %1776 = vadd.xlane.f32.xlu0 %v1775
    %v1777 = vpop.xlane.xlu0 %1776
    %v1778 = vsel %vm1048, %v267, 0.0
    %1779 = vadd.xlane.f32.xlu0 %v1778
    %v1780 = vpop.xlane.xlu0 %1779
    %v1781 = vsel %vm1048, %v268, 0.0
    %1782 = vadd.xlane.f32.xlu0 %v1781
    %v1783 = vpop.xlane.xlu0 %1782
    %v1784 = vsel %vm1048, %v269, 0.0
    %1785 = vadd.xlane.f32.xlu0 %v1784
    %v1786 = vpop.xlane.xlu0 %1785
    %v1787 = vsel %vm1048, %v270, 0.0
    %1788 = vadd.xlane.f32.xlu0 %v1787
    %v1789 = vpop.xlane.xlu0 %1788
    %v1790 = vsel %vm1048, %v271, 0.0
    %1791 = vadd.xlane.f32.xlu0 %v1790
    %v1792 = vpop.xlane.xlu0 %1791
    %v1793 = vsel %vm1048, %v272, 0.0
    %1794 = vadd.xlane.f32.xlu0 %v1793
    %v1795 = vpop.xlane.xlu0 %1794
    %v1796 = vsel %vm1048, %v273, 0.0
    %1797 = vadd.xlane.f32.xlu0 %v1796
    %v1798 = vpop.xlane.xlu0 %1797
    %v1799 = vsel %vm1048, %v274, 0.0
    %1800 = vadd.xlane.f32.xlu0 %v1799
    %v1801 = vpop.xlane.xlu0 %1800
    %v1802 = vsel %vm1048, %v275, 0.0
    %1803 = vadd.xlane.f32.xlu0 %v1802
    %v1804 = vpop.xlane.xlu0 %1803
    %v1805 = vsel %vm1048, %v276, 0.0
    %1806 = vadd.xlane.f32.xlu0 %v1805
    %v1807 = vpop.xlane.xlu0 %1806
    %v1808 = vsel %vm1048, %v277, 0.0
    %1809 = vadd.xlane.f32.xlu0 %v1808
    %v1810 = vpop.xlane.xlu0 %1809
    %v1811 = vsel %vm1048, %v278, 0.0
    %1812 = vadd.xlane.f32.xlu0 %v1811
    %v1813 = vpop.xlane.xlu0 %1812
    %v1814 = vsel %vm1048, %v279, 0.0
    %1815 = vadd.xlane.f32.xlu0 %v1814
    %v1816 = vpop.xlane.xlu0 %1815
    %v1817 = vsel %vm1048, %v280, 0.0
    %1818 = vadd.xlane.f32.xlu0 %v1817
    %v1819 = vpop.xlane.xlu0 %1818
    %v1820 = vsel %vm1048, %v281, 0.0
    %1821 = vadd.xlane.f32.xlu0 %v1820
    %v1822 = vpop.xlane.xlu0 %1821
    %v1823 = vsel %vm1048, %v282, 0.0
    %1824 = vadd.xlane.f32.xlu0 %v1823
    %v1825 = vpop.xlane.xlu0 %1824
    %v1826 = vsel %vm1048, %v283, 0.0
    %1827 = vadd.xlane.f32.xlu0 %v1826
    %v1828 = vpop.xlane.xlu0 %1827
    %v1829 = vsel %vm1048, %v284, 0.0
    %1830 = vadd.xlane.f32.xlu0 %v1829
    %v1831 = vpop.xlane.xlu0 %1830
    %v1832 = vsel %vm1048, %v285, 0.0
    %1833 = vadd.xlane.f32.xlu0 %v1832
    %v1834 = vpop.xlane.xlu0 %1833
    %v1835 = vsel %vm1048, %v286, 0.0
    %1836 = vadd.xlane.f32.xlu0 %v1835
    %v1837 = vpop.xlane.xlu0 %1836
    %v1838 = vsel %vm1048, %v287, 0.0
    %1839 = vadd.xlane.f32.xlu0 %v1838
    %v1840 = vpop.xlane.xlu0 %1839
    %v1841 = vsel %vm1048, %v288, 0.0
    %1842 = vadd.xlane.f32.xlu0 %v1841
    %v1843 = vpop.xlane.xlu0 %1842
    %v1844 = vsel %vm1048, %v289, 0.0
    %1845 = vadd.xlane.f32.xlu0 %v1844
    %v1846 = vpop.xlane.xlu0 %1845
    %v1847 = vsel %vm1048, %v290, 0.0
    %1848 = vadd.xlane.f32.xlu0 %v1847
    %v1849 = vpop.xlane.xlu0 %1848
    %v1850 = vsel %vm1048, %v291, 0.0
    %1851 = vadd.xlane.f32.xlu0 %v1850
    %v1852 = vpop.xlane.xlu0 %1851
    %v1853 = vsel %vm1048, %v292, 0.0
    %1854 = vadd.xlane.f32.xlu0 %v1853
    %v1855 = vpop.xlane.xlu0 %1854
    %v1856 = vsel %vm1048, %v293, 0.0
    %1857 = vadd.xlane.f32.xlu0 %v1856
    %v1858 = vpop.xlane.xlu0 %1857
    %v1859 = vsel %vm1048, %v294, 0.0
    %1860 = vadd.xlane.f32.xlu0 %v1859
    %v1861 = vpop.xlane.xlu0 %1860
    %v1862 = vsel %vm1048, %v295, 0.0
    %1863 = vadd.xlane.f32.xlu0 %v1862
    %v1864 = vpop.xlane.xlu0 %1863
    %v1865 = vsel %vm1048, %v296, 0.0
    %1866 = vadd.xlane.f32.xlu0 %v1865
    %v1867 = vpop.xlane.xlu0 %1866
    %v1868 = vsel %vm1048, %v297, 0.0
    %1869 = vadd.xlane.f32.xlu0 %v1868
    %v1870 = vpop.xlane.xlu0 %1869
    %v1871 = vsel %vm1048, %v298, 0.0
    %1872 = vadd.xlane.f32.xlu0 %v1871
    %v1873 = vpop.xlane.xlu0 %1872
    %v1874 = vsel %vm1048, %v299, 0.0
    %1875 = vadd.xlane.f32.xlu0 %v1874
    %v1876 = vpop.xlane.xlu0 %1875
    %v1877 = vsel %vm1048, %v300, 0.0
    %1878 = vadd.xlane.f32.xlu0 %v1877
    %v1879 = vpop.xlane.xlu0 %1878
    %v1880 = vsel %vm1048, %v301, 0.0
    %1881 = vadd.xlane.f32.xlu0 %v1880
    %v1882 = vpop.xlane.xlu0 %1881
    %v1883 = vsel %vm1048, %v302, 0.0
    %1884 = vadd.xlane.f32.xlu0 %v1883
    %v1885 = vpop.xlane.xlu0 %1884
    %v1886 = vsel %vm1048, %v303, 0.0
    %1887 = vadd.xlane.f32.xlu0 %v1886
    %v1888 = vpop.xlane.xlu0 %1887
    %v1889 = vsel %vm1048, %v304, 0.0
    %1890 = vadd.xlane.f32.xlu0 %v1889
    %v1891 = vpop.xlane.xlu0 %1890
    %v1892 = vsel %vm1048, %v305, 0.0
    %1893 = vadd.xlane.f32.xlu0 %v1892
    %v1894 = vpop.xlane.xlu0 %1893
    %v1895 = vsel %vm1048, %v306, 0.0
    %1896 = vadd.xlane.f32.xlu0 %v1895
    %v1897 = vpop.xlane.xlu0 %1896
    %v1898 = vsel %vm1048, %v307, 0.0
    %1899 = vadd.xlane.f32.xlu0 %v1898
    %v1900 = vpop.xlane.xlu0 %1899
    %v1901 = vsel %vm1048, %v308, 0.0
    %1902 = vadd.xlane.f32.xlu0 %v1901
    %v1903 = vpop.xlane.xlu0 %1902
    %v1904 = vsel %vm1048, %v309, 0.0
    %1905 = vadd.xlane.f32.xlu0 %v1904
    %v1906 = vpop.xlane.xlu0 %1905
    %v1907 = vsel %vm1048, %v310, 0.0
    %1908 = vadd.xlane.f32.xlu0 %v1907
    %v1909 = vpop.xlane.xlu0 %1908
    %v1910 = vsel %vm1048, %v311, 0.0
    %1911 = vadd.xlane.f32.xlu0 %v1910
    %v1912 = vpop.xlane.xlu0 %1911
    %v1913 = vsel %vm1048, %v312, 0.0
    %1914 = vadd.xlane.f32.xlu0 %v1913
    %v1915 = vpop.xlane.xlu0 %1914
    %v1916 = vsel %vm1048, %v313, 0.0
    %1917 = vadd.xlane.f32.xlu0 %v1916
    %v1918 = vpop.xlane.xlu0 %1917
    %v1919 = vsel %vm1048, %v314, 0.0
    %1920 = vadd.xlane.f32.xlu0 %v1919
    %v1921 = vpop.xlane.xlu0 %1920
    %v1922 = vsel %vm1048, %v315, 0.0
    %1923 = vadd.xlane.f32.xlu0 %v1922
    %v1924 = vpop.xlane.xlu0 %1923
    %v1925 = vsel %vm1048, %v316, 0.0
    %1926 = vadd.xlane.f32.xlu0 %v1925
    %v1927 = vpop.xlane.xlu0 %1926
    %v1928 = vsel %vm1048, %v317, 0.0
    %1929 = vadd.xlane.f32.xlu0 %v1928
    %v1930 = vpop.xlane.xlu0 %1929
    %v1931 = vsel %vm1048, %v318, 0.0
    %1932 = vadd.xlane.f32.xlu0 %v1931
    %v1933 = vpop.xlane.xlu0 %1932
    %v1934 = vsel %vm1048, %v319, 0.0
    %1935 = vadd.xlane.f32.xlu0 %v1934
    %v1936 = vpop.xlane.xlu0 %1935
    %v1937 = vsel %vm1048, %v320, 0.0
    %1938 = vadd.xlane.f32.xlu0 %v1937
    %v1939 = vpop.xlane.xlu0 %1938
    %v1940 = vsel %vm1048, %v321, 0.0
    %1941 = vadd.xlane.f32.xlu0 %v1940
    %v1942 = vpop.xlane.xlu0 %1941
    %v1943 = vsel %vm1048, %v322, 0.0
    %1944 = vadd.xlane.f32.xlu0 %v1943
    %v1945 = vpop.xlane.xlu0 %1944
    %v1946 = vsel %vm1048, %v323, 0.0
    %1947 = vadd.xlane.f32.xlu0 %v1946
    %v1948 = vpop.xlane.xlu0 %1947
    %v1949 = vsel %vm1048, %v324, 0.0
    %1950 = vadd.xlane.f32.xlu0 %v1949
    %v1951 = vpop.xlane.xlu0 %1950
    %v1952 = vsel %vm1048, %v325, 0.0
    %1953 = vadd.xlane.f32.xlu0 %v1952
    %v1954 = vpop.xlane.xlu0 %1953
    %v1955 = vsel %vm1048, %v326, 0.0
    %1956 = vadd.xlane.f32.xlu0 %v1955
    %v1957 = vpop.xlane.xlu0 %1956
    %v1958 = vsel %vm1048, %v327, 0.0
    %1959 = vadd.xlane.f32.xlu0 %v1958
    %v1960 = vpop.xlane.xlu0 %1959
    %v1961 = vsel %vm1048, %v328, 0.0
    %1962 = vadd.xlane.f32.xlu0 %v1961
    %v1963 = vpop.xlane.xlu0 %1962
    %v1964 = vsel %vm1048, %v329, 0.0
    %1965 = vadd.xlane.f32.xlu0 %v1964
    %v1966 = vpop.xlane.xlu0 %1965
    %v1967 = vsel %vm1048, %v330, 0.0
    %1968 = vadd.xlane.f32.xlu0 %v1967
    %v1969 = vpop.xlane.xlu0 %1968
    %v1970 = vsel %vm1048, %v331, 0.0
    %1971 = vadd.xlane.f32.xlu0 %v1970
    %v1972 = vpop.xlane.xlu0 %1971
    %v1973 = vsel %vm1048, %v332, 0.0
    %1974 = vadd.xlane.f32.xlu0 %v1973
    %v1975 = vpop.xlane.xlu0 %1974
    %v1976 = vsel %vm1048, %v333, 0.0
    %1977 = vadd.xlane.f32.xlu0 %v1976
    %v1978 = vpop.xlane.xlu0 %1977
    %v1979 = vsel %vm1048, %v334, 0.0
    %1980 = vadd.xlane.f32.xlu0 %v1979
    %v1981 = vpop.xlane.xlu0 %1980
    %v1982 = vsel %vm1048, %v335, 0.0
    %1983 = vadd.xlane.f32.xlu0 %v1982
    %v1984 = vpop.xlane.xlu0 %1983
    %v1985 = vsel %vm1048, %v336, 0.0
    %1986 = vadd.xlane.f32.xlu0 %v1985
    %v1987 = vpop.xlane.xlu0 %1986
    %v1988 = vsel %vm1048, %v337, 0.0
    %1989 = vadd.xlane.f32.xlu0 %v1988
    %v1990 = vpop.xlane.xlu0 %1989
    %v1991 = vsel %vm1048, %v338, 0.0
    %1992 = vadd.xlane.f32.xlu0 %v1991
    %v1993 = vpop.xlane.xlu0 %1992
    %v1994 = vsel %vm1048, %v339, 0.0
    %1995 = vadd.xlane.f32.xlu0 %v1994
    %v1996 = vpop.xlane.xlu0 %1995
    %v1997 = vsel %vm1048, %v340, 0.0
    %1998 = vadd.xlane.f32.xlu0 %v1997
    %v1999 = vpop.xlane.xlu0 %1998
    %v2000 = vsel %vm1048, %v341, 0.0
    %2001 = vadd.xlane.f32.xlu0 %v2000
    %v2002 = vpop.xlane.xlu0 %2001
    %v2003 = vsel %vm1048, %v342, 0.0
    %2004 = vadd.xlane.f32.xlu0 %v2003
    %v2005 = vpop.xlane.xlu0 %2004
    %v2006 = vsel %vm1048, %v343, 0.0
    %2007 = vadd.xlane.f32.xlu0 %v2006
    %v2008 = vpop.xlane.xlu0 %2007
    %v2009 = vsel %vm1048, %v344, 0.0
    %2010 = vadd.xlane.f32.xlu0 %v2009
    %v2011 = vpop.xlane.xlu0 %2010
    %v2012 = vsel %vm1048, %v345, 0.0
    %2013 = vadd.xlane.f32.xlu0 %v2012
    %v2014 = vpop.xlane.xlu0 %2013
    %v2015 = vsel %vm1048, %v346, 0.0
    %2016 = vadd.xlane.f32.xlu0 %v2015
    %v2017 = vpop.xlane.xlu0 %2016
    %v2018 = vsel %vm1048, %v347, 0.0
    %2019 = vadd.xlane.f32.xlu0 %v2018
    %v2020 = vpop.xlane.xlu0 %2019
    %v2021 = vsel %vm1048, %v348, 0.0
    %2022 = vadd.xlane.f32.xlu0 %v2021
    %v2023 = vpop.xlane.xlu0 %2022
    %v2024 = vsel %vm1048, %v349, 0.0
    %2025 = vadd.xlane.f32.xlu0 %v2024
    %v2026 = vpop.xlane.xlu0 %2025
    %v2027 = vsel %vm1048, %v350, 0.0
    %2028 = vadd.xlane.f32.xlu0 %v2027
    %v2029 = vpop.xlane.xlu0 %2028
    %v2030 = vsel %vm1048, %v351, 0.0
    %2031 = vadd.xlane.f32.xlu0 %v2030
    %v2032 = vpop.xlane.xlu0 %2031
    %v2033 = vsel %vm1048, %v352, 0.0
    %2034 = vadd.xlane.f32.xlu0 %v2033
    %v2035 = vpop.xlane.xlu0 %2034
    %v2036 = vsel %vm1048, %v353, 0.0
    %2037 = vadd.xlane.f32.xlu0 %v2036
    %v2038 = vpop.xlane.xlu0 %2037
    %v2039 = vsel %vm1048, %v354, 0.0
    %2040 = vadd.xlane.f32.xlu0 %v2039
    %v2041 = vpop.xlane.xlu0 %2040
    %v2042 = vsel %vm1048, %v355, 0.0
    %2043 = vadd.xlane.f32.xlu0 %v2042
    %v2044 = vpop.xlane.xlu0 %2043
    %v2045 = vsel %vm1048, %v356, 0.0
    %2046 = vadd.xlane.f32.xlu0 %v2045
    %v2047 = vpop.xlane.xlu0 %2046
    %v2048 = vsel %vm1048, %v357, 0.0
    %2049 = vadd.xlane.f32.xlu0 %v2048
    %v2050 = vpop.xlane.xlu0 %2049
    %v2051 = vsel %vm1048, %v358, 0.0
    %2052 = vadd.xlane.f32.xlu0 %v2051
    %v2053 = vpop.xlane.xlu0 %2052
    %v2054 = vsel %vm1048, %v359, 0.0
    %2055 = vadd.xlane.f32.xlu0 %v2054
    %v2056 = vpop.xlane.xlu0 %2055
    %v2057 = vsel %vm1048, %v360, 0.0
    %2058 = vadd.xlane.f32.xlu0 %v2057
    %v2059 = vpop.xlane.xlu0 %2058
    %v2060 = vsel %vm1048, %v361, 0.0
    %2061 = vadd.xlane.f32.xlu0 %v2060
    %v2062 = vpop.xlane.xlu0 %2061
    %v2063 = vsel %vm1048, %v362, 0.0
    %2064 = vadd.xlane.f32.xlu0 %v2063
    %v2065 = vpop.xlane.xlu0 %2064
    %v2066 = vsel %vm1048, %v363, 0.0
    %2067 = vadd.xlane.f32.xlu0 %v2066
    %v2068 = vpop.xlane.xlu0 %2067
    %v2069 = vsel %vm1048, %v364, 0.0
    %2070 = vadd.xlane.f32.xlu0 %v2069
    %v2071 = vpop.xlane.xlu0 %2070
    %v2072 = vsel %vm1048, %v365, 0.0
    %2073 = vadd.xlane.f32.xlu0 %v2072
    %v2074 = vpop.xlane.xlu0 %2073
    %v2075 = vsel %vm1048, %v366, 0.0
    %2076 = vadd.xlane.f32.xlu0 %v2075
    %v2077 = vpop.xlane.xlu0 %2076
    %v2078 = vsel %vm1048, %v367, 0.0
    %2079 = vadd.xlane.f32.xlu0 %v2078
    %v2080 = vpop.xlane.xlu0 %2079
    %v2081 = vsel %vm1048, %v368, 0.0
    %2082 = vadd.xlane.f32.xlu0 %v2081
    %v2083 = vpop.xlane.xlu0 %2082
    %v2084 = vsel %vm1048, %v369, 0.0
    %2085 = vadd.xlane.f32.xlu0 %v2084
    %v2086 = vpop.xlane.xlu0 %2085
    %v2087 = vsel %vm1048, %v370, 0.0
    %2088 = vadd.xlane.f32.xlu0 %v2087
    %v2089 = vpop.xlane.xlu0 %2088
    %v2090 = vsel %vm1048, %v371, 0.0
    %2091 = vadd.xlane.f32.xlu0 %v2090
    %v2092 = vpop.xlane.xlu0 %2091
    %v2093 = vsel %vm1048, %v372, 0.0
    %2094 = vadd.xlane.f32.xlu0 %v2093
    %v2095 = vpop.xlane.xlu0 %2094
    %v2096 = vsel %vm1048, %v373, 0.0
    %2097 = vadd.xlane.f32.xlu0 %v2096
    %v2098 = vpop.xlane.xlu0 %2097
    %v2099 = vsel %vm1048, %v374, 0.0
    %2100 = vadd.xlane.f32.xlu0 %v2099
    %v2101 = vpop.xlane.xlu0 %2100
    %v2102 = vsel %vm1048, %v375, 0.0
    %2103 = vadd.xlane.f32.xlu0 %v2102
    %v2104 = vpop.xlane.xlu0 %2103
    %v2105 = vsel %vm1048, %v376, 0.0
    %2106 = vadd.xlane.f32.xlu0 %v2105
    %v2107 = vpop.xlane.xlu0 %2106
    %v2108 = vsel %vm1048, %v377, 0.0
    %2109 = vadd.xlane.f32.xlu0 %v2108
    %v2110 = vpop.xlane.xlu0 %2109
    %v2111 = vsel %vm1048, %v378, 0.0
    %2112 = vadd.xlane.f32.xlu0 %v2111
    %v2113 = vpop.xlane.xlu0 %2112
    %v2114 = vsel %vm1048, %v379, 0.0
    %2115 = vadd.xlane.f32.xlu0 %v2114
    %v2116 = vpop.xlane.xlu0 %2115
    %v2117 = vsel %vm1048, %v380, 0.0
    %2118 = vadd.xlane.f32.xlu0 %v2117
    %v2119 = vpop.xlane.xlu0 %2118
    %v2120 = vsel %vm1048, %v381, 0.0
    %2121 = vadd.xlane.f32.xlu0 %v2120
    %v2122 = vpop.xlane.xlu0 %2121
    %v2123 = vsel %vm1048, %v382, 0.0
    %2124 = vadd.xlane.f32.xlu0 %v2123
    %v2125 = vpop.xlane.xlu0 %2124
    %v2126 = vsel %vm1048, %v383, 0.0
    %2127 = vadd.xlane.f32.xlu0 %v2126
    %v2128 = vpop.xlane.xlu0 %2127
    %v2129 = vsel %vm1048, %v384, 0.0
    %2130 = vadd.xlane.f32.xlu0 %v2129
    %v2131 = vpop.xlane.xlu0 %2130
    %v2132 = vsel %vm1048, %v385, 0.0
    %2133 = vadd.xlane.f32.xlu0 %v2132
    %v2134 = vpop.xlane.xlu0 %2133
    %v2135 = vsel %vm1048, %v386, 0.0
    %2136 = vadd.xlane.f32.xlu0 %v2135
    %v2137 = vpop.xlane.xlu0 %2136
    %v2138 = vsel %vm1048, %v387, 0.0
    %2139 = vadd.xlane.f32.xlu0 %v2138
    %v2140 = vpop.xlane.xlu0 %2139
    %v2141 = vsel %vm1048, %v388, 0.0
    %2142 = vadd.xlane.f32.xlu0 %v2141
    %v2143 = vpop.xlane.xlu0 %2142
    %v2144 = vsel %vm1048, %v389, 0.0
    %2145 = vadd.xlane.f32.xlu0 %v2144
    %v2146 = vpop.xlane.xlu0 %2145
    %v2147 = vsel %vm1048, %v390, 0.0
    %2148 = vadd.xlane.f32.xlu0 %v2147
    %v2149 = vpop.xlane.xlu0 %2148
    %v2150 = vsel %vm1048, %v391, 0.0
    %2151 = vadd.xlane.f32.xlu0 %v2150
    %v2152 = vpop.xlane.xlu0 %2151
    %v2153 = vsel %vm1048, %v392, 0.0
    %2154 = vadd.xlane.f32.xlu0 %v2153
    %v2155 = vpop.xlane.xlu0 %2154
    %v2156 = vsel %vm1048, %v393, 0.0
    %2157 = vadd.xlane.f32.xlu0 %v2156
    %v2158 = vpop.xlane.xlu0 %2157
    %v2159 = vsel %vm1048, %v394, 0.0
    %2160 = vadd.xlane.f32.xlu0 %v2159
    %v2161 = vpop.xlane.xlu0 %2160
    %v2162 = vsel %vm1048, %v395, 0.0
    %2163 = vadd.xlane.f32.xlu0 %v2162
    %v2164 = vpop.xlane.xlu0 %2163
    %v2165 = vsel %vm1048, %v396, 0.0
    %2166 = vadd.xlane.f32.xlu0 %v2165
    %v2167 = vpop.xlane.xlu0 %2166
    %v2168 = vsel %vm1048, %v397, 0.0
    %2169 = vadd.xlane.f32.xlu0 %v2168
    %v2170 = vpop.xlane.xlu0 %2169
    %v2171 = vsel %vm1048, %v398, 0.0
    %2172 = vadd.xlane.f32.xlu0 %v2171
    %v2173 = vpop.xlane.xlu0 %2172
    %v2174 = vsel %vm1048, %v399, 0.0
    %2175 = vadd.xlane.f32.xlu0 %v2174
    %v2176 = vpop.xlane.xlu0 %2175
    %v2177 = vsel %vm1048, %v400, 0.0
    %2178 = vadd.xlane.f32.xlu0 %v2177
    %v2179 = vpop.xlane.xlu0 %2178
    %v2180 = vsel %vm1048, %v401, 0.0
    %2181 = vadd.xlane.f32.xlu0 %v2180
    %v2182 = vpop.xlane.xlu0 %2181
    %v2183 = vsel %vm1048, %v402, 0.0
    %2184 = vadd.xlane.f32.xlu0 %v2183
    %v2185 = vpop.xlane.xlu0 %2184
    %v2186 = vsel %vm1048, %v403, 0.0
    %2187 = vadd.xlane.f32.xlu0 %v2186
    %v2188 = vpop.xlane.xlu0 %2187
    %v2189 = vsel %vm1048, %v404, 0.0
    %2190 = vadd.xlane.f32.xlu0 %v2189
    %v2191 = vpop.xlane.xlu0 %2190
    %v2192 = vsel %vm1048, %v405, 0.0
    %2193 = vadd.xlane.f32.xlu0 %v2192
    %v2194 = vpop.xlane.xlu0 %2193
    %v2195 = vsel %vm1048, %v406, 0.0
    %2196 = vadd.xlane.f32.xlu0 %v2195
    %v2197 = vpop.xlane.xlu0 %2196
    %v2198 = vsel %vm1048, %v407, 0.0
    %2199 = vadd.xlane.f32.xlu0 %v2198
    %v2200 = vpop.xlane.xlu0 %2199
    %v2201 = vsel %vm1048, %v408, 0.0
    %2202 = vadd.xlane.f32.xlu0 %v2201
    %v2203 = vpop.xlane.xlu0 %2202
    %v2204 = vsel %vm1048, %v409, 0.0
    %2205 = vadd.xlane.f32.xlu0 %v2204
    %v2206 = vpop.xlane.xlu0 %2205
    %v2207 = vsel %vm1048, %v410, 0.0
    %2208 = vadd.xlane.f32.xlu0 %v2207
    %v2209 = vpop.xlane.xlu0 %2208
    %v2210 = vsel %vm1048, %v411, 0.0
    %2211 = vadd.xlane.f32.xlu0 %v2210
    %v2212 = vpop.xlane.xlu0 %2211
    %v2213 = vsel %vm1048, %v412, 0.0
    %2214 = vadd.xlane.f32.xlu0 %v2213
    %v2215 = vpop.xlane.xlu0 %2214
    %v2216 = vsel %vm1048, %v413, 0.0
    %2217 = vadd.xlane.f32.xlu0 %v2216
    %v2218 = vpop.xlane.xlu0 %2217
    %v2219 = vsel %vm1048, %v414, 0.0
    %2220 = vadd.xlane.f32.xlu0 %v2219
    %v2221 = vpop.xlane.xlu0 %2220
    %v2222 = vsel %vm1048, %v415, 0.0
    %2223 = vadd.xlane.f32.xlu0 %v2222
    %v2224 = vpop.xlane.xlu0 %2223
    %v2225 = vsel %vm1048, %v416, 0.0
    %2226 = vadd.xlane.f32.xlu0 %v2225
    %v2227 = vpop.xlane.xlu0 %2226
    %v2228 = vsel %vm1048, %v417, 0.0
    %2229 = vadd.xlane.f32.xlu0 %v2228
    %v2230 = vpop.xlane.xlu0 %2229
    %v2231 = vsel %vm1048, %v418, 0.0
    %2232 = vadd.xlane.f32.xlu0 %v2231
    %v2233 = vpop.xlane.xlu0 %2232
    %v2234 = vsel %vm1048, %v419, 0.0
    %2235 = vadd.xlane.f32.xlu0 %v2234
    %v2236 = vpop.xlane.xlu0 %2235
    %v2237 = vsel %vm1048, %v420, 0.0
    %2238 = vadd.xlane.f32.xlu0 %v2237
    %v2239 = vpop.xlane.xlu0 %2238
    %v2240 = vsel %vm1048, %v421, 0.0
    %2241 = vadd.xlane.f32.xlu0 %v2240
    %v2242 = vpop.xlane.xlu0 %2241
    %v2243 = vsel %vm1048, %v422, 0.0
    %2244 = vadd.xlane.f32.xlu0 %v2243
    %v2245 = vpop.xlane.xlu0 %2244
    %v2246 = vsel %vm1048, %v423, 0.0
    %2247 = vadd.xlane.f32.xlu0 %v2246
    %v2248 = vpop.xlane.xlu0 %2247
    %v2249 = vsel %vm1048, %v424, 0.0
    %2250 = vadd.xlane.f32.xlu0 %v2249
    %v2251 = vpop.xlane.xlu0 %2250
    %v2252 = vsel %vm1048, %v425, 0.0
    %2253 = vadd.xlane.f32.xlu0 %v2252
    %v2254 = vpop.xlane.xlu0 %2253
    %v2255 = vsel %vm1048, %v426, 0.0
    %2256 = vadd.xlane.f32.xlu0 %v2255
    %v2257 = vpop.xlane.xlu0 %2256
    %v2258 = vsel %vm1048, %v427, 0.0
    %2259 = vadd.xlane.f32.xlu0 %v2258
    %v2260 = vpop.xlane.xlu0 %2259
    %v2261 = vsel %vm1048, %v428, 0.0
    %2262 = vadd.xlane.f32.xlu0 %v2261
    %v2263 = vpop.xlane.xlu0 %2262
    %v2264 = vsel %vm1048, %v429, 0.0
    %2265 = vadd.xlane.f32.xlu0 %v2264
    %v2266 = vpop.xlane.xlu0 %2265
    %v2267 = vsel %vm1048, %v430, 0.0
    %2268 = vadd.xlane.f32.xlu0 %v2267
    %v2269 = vpop.xlane.xlu0 %2268
    %v2270 = vsel %vm1048, %v431, 0.0
    %2271 = vadd.xlane.f32.xlu0 %v2270
    %v2272 = vpop.xlane.xlu0 %2271
    %v2273 = vsel %vm1048, %v432, 0.0
    %2274 = vadd.xlane.f32.xlu0 %v2273
    %v2275 = vpop.xlane.xlu0 %2274
    %v2276 = vsel %vm1048, %v433, 0.0
    %2277 = vadd.xlane.f32.xlu0 %v2276
    %v2278 = vpop.xlane.xlu0 %2277
    %v2279 = vsel %vm1048, %v434, 0.0
    %2280 = vadd.xlane.f32.xlu0 %v2279
    %v2281 = vpop.xlane.xlu0 %2280
    %v2282 = vsel %vm1048, %v435, 0.0
    %2283 = vadd.xlane.f32.xlu0 %v2282
    %v2284 = vpop.xlane.xlu0 %2283
    %v2285 = vsel %vm1048, %v436, 0.0
    %2286 = vadd.xlane.f32.xlu0 %v2285
    %v2287 = vpop.xlane.xlu0 %2286
    %v2288 = vsel %vm1048, %v437, 0.0
    %2289 = vadd.xlane.f32.xlu0 %v2288
    %v2290 = vpop.xlane.xlu0 %2289
    %v2291 = vsel %vm1048, %v438, 0.0
    %2292 = vadd.xlane.f32.xlu0 %v2291
    %v2293 = vpop.xlane.xlu0 %2292
    %v2294 = vsel %vm1048, %v439, 0.0
    %2295 = vadd.xlane.f32.xlu0 %v2294
    %v2296 = vpop.xlane.xlu0 %2295
    %v2297 = vsel %vm1048, %v440, 0.0
    %2298 = vadd.xlane.f32.xlu0 %v2297
    %v2299 = vpop.xlane.xlu0 %2298
    %v2300 = vsel %vm1048, %v441, 0.0
    %2301 = vadd.xlane.f32.xlu0 %v2300
    %v2302 = vpop.xlane.xlu0 %2301
    %v2303 = vsel %vm1048, %v442, 0.0
    %2304 = vadd.xlane.f32.xlu0 %v2303
    %v2305 = vpop.xlane.xlu0 %2304
    %v2306 = vsel %vm1048, %v443, 0.0
    %2307 = vadd.xlane.f32.xlu0 %v2306
    %v2308 = vpop.xlane.xlu0 %2307
    %v2309 = vsel %vm1048, %v444, 0.0
    %2310 = vadd.xlane.f32.xlu0 %v2309
    %v2311 = vpop.xlane.xlu0 %2310
    %v2312 = vsel %vm1048, %v445, 0.0
    %2313 = vadd.xlane.f32.xlu0 %v2312
    %v2314 = vpop.xlane.xlu0 %2313
    %v2315 = vsel %vm1048, %v446, 0.0
    %2316 = vadd.xlane.f32.xlu0 %v2315
    %v2317 = vpop.xlane.xlu0 %2316
    %v2318 = vsel %vm1048, %v447, 0.0
    %2319 = vadd.xlane.f32.xlu0 %v2318
    %v2320 = vpop.xlane.xlu0 %2319
    %v2321 = vsel %vm1048, %v448, 0.0
    %2322 = vadd.xlane.f32.xlu0 %v2321
    %v2323 = vpop.xlane.xlu0 %2322
    %v2324 = vsel %vm1048, %v449, 0.0
    %2325 = vadd.xlane.f32.xlu0 %v2324
    %v2326 = vpop.xlane.xlu0 %2325
    %v2327 = vsel %vm1048, %v450, 0.0
    %2328 = vadd.xlane.f32.xlu0 %v2327
    %v2329 = vpop.xlane.xlu0 %2328
    %v2330 = vsel %vm1048, %v451, 0.0
    %2331 = vadd.xlane.f32.xlu0 %v2330
    %v2332 = vpop.xlane.xlu0 %2331
    %v2333 = vsel %vm1048, %v452, 0.0
    %2334 = vadd.xlane.f32.xlu0 %v2333
    %v2335 = vpop.xlane.xlu0 %2334
    %v2336 = vsel %vm1048, %v453, 0.0
    %2337 = vadd.xlane.f32.xlu0 %v2336
    %v2338 = vpop.xlane.xlu0 %2337
    %v2339 = vsel %vm1048, %v454, 0.0
    %2340 = vadd.xlane.f32.xlu0 %v2339
    %v2341 = vpop.xlane.xlu0 %2340
    %v2342 = vsel %vm1048, %v455, 0.0
    %2343 = vadd.xlane.f32.xlu0 %v2342
    %v2344 = vpop.xlane.xlu0 %2343
    %v2345 = vsel %vm1048, %v456, 0.0
    %2346 = vadd.xlane.f32.xlu0 %v2345
    %v2347 = vpop.xlane.xlu0 %2346
    %v2348 = vsel %vm1048, %v457, 0.0
    %2349 = vadd.xlane.f32.xlu0 %v2348
    %v2350 = vpop.xlane.xlu0 %2349
    %v2351 = vsel %vm1048, %v458, 0.0
    %2352 = vadd.xlane.f32.xlu0 %v2351
    %v2353 = vpop.xlane.xlu0 %2352
    %v2354 = vsel %vm1048, %v459, 0.0
    %2355 = vadd.xlane.f32.xlu0 %v2354
    %v2356 = vpop.xlane.xlu0 %2355
    %v2357 = vsel %vm1048, %v460, 0.0
    %2358 = vadd.xlane.f32.xlu0 %v2357
    %v2359 = vpop.xlane.xlu0 %2358
    %v2360 = vsel %vm1048, %v461, 0.0
    %2361 = vadd.xlane.f32.xlu0 %v2360
    %v2362 = vpop.xlane.xlu0 %2361
    %v2363 = vsel %vm1048, %v462, 0.0
    %2364 = vadd.xlane.f32.xlu0 %v2363
    %v2365 = vpop.xlane.xlu0 %2364
    %v2366 = vsel %vm1048, %v463, 0.0
    %2367 = vadd.xlane.f32.xlu0 %v2366
    %v2368 = vpop.xlane.xlu0 %2367
    %v2369 = vsel %vm1048, %v464, 0.0
    %2370 = vadd.xlane.f32.xlu0 %v2369
    %v2371 = vpop.xlane.xlu0 %2370
    %v2372 = vsel %vm1048, %v465, 0.0
    %2373 = vadd.xlane.f32.xlu0 %v2372
    %v2374 = vpop.xlane.xlu0 %2373
    %v2375 = vsel %vm1048, %v466, 0.0
    %2376 = vadd.xlane.f32.xlu0 %v2375
    %v2377 = vpop.xlane.xlu0 %2376
    %v2378 = vsel %vm1048, %v467, 0.0
    %2379 = vadd.xlane.f32.xlu0 %v2378
    %v2380 = vpop.xlane.xlu0 %2379
    %v2381 = vsel %vm1048, %v468, 0.0
    %2382 = vadd.xlane.f32.xlu0 %v2381
    %v2383 = vpop.xlane.xlu0 %2382
    %v2384 = vsel %vm1048, %v469, 0.0
    %2385 = vadd.xlane.f32.xlu0 %v2384
    %v2386 = vpop.xlane.xlu0 %2385
    %v2387 = vsel %vm1048, %v470, 0.0
    %2388 = vadd.xlane.f32.xlu0 %v2387
    %v2389 = vpop.xlane.xlu0 %2388
    %v2390 = vsel %vm1048, %v471, 0.0
    %2391 = vadd.xlane.f32.xlu0 %v2390
    %v2392 = vpop.xlane.xlu0 %2391
    %v2393 = vsel %vm1048, %v472, 0.0
    %2394 = vadd.xlane.f32.xlu0 %v2393
    %v2395 = vpop.xlane.xlu0 %2394
    %v2396 = vsel %vm1048, %v473, 0.0
    %2397 = vadd.xlane.f32.xlu0 %v2396
    %v2398 = vpop.xlane.xlu0 %2397
    %v2399 = vsel %vm1048, %v474, 0.0
    %2400 = vadd.xlane.f32.xlu0 %v2399
    %v2401 = vpop.xlane.xlu0 %2400
    %v2402 = vsel %vm1048, %v475, 0.0
    %2403 = vadd.xlane.f32.xlu0 %v2402
    %v2404 = vpop.xlane.xlu0 %2403
    %v2405 = vsel %vm1048, %v476, 0.0
    %2406 = vadd.xlane.f32.xlu0 %v2405
    %v2407 = vpop.xlane.xlu0 %2406
    %v2408 = vsel %vm1048, %v477, 0.0
    %2409 = vadd.xlane.f32.xlu0 %v2408
    %v2410 = vpop.xlane.xlu0 %2409
    %v2411 = vsel %vm1048, %v478, 0.0
    %2412 = vadd.xlane.f32.xlu0 %v2411
    %v2413 = vpop.xlane.xlu0 %2412
    %v2414 = vsel %vm1048, %v479, 0.0
    %2415 = vadd.xlane.f32.xlu0 %v2414
    %v2416 = vpop.xlane.xlu0 %2415
    %v2417 = vsel %vm1048, %v480, 0.0
    %2418 = vadd.xlane.f32.xlu0 %v2417
    %v2419 = vpop.xlane.xlu0 %2418
    %v2420 = vsel %vm1048, %v481, 0.0
    %2421 = vadd.xlane.f32.xlu0 %v2420
    %v2422 = vpop.xlane.xlu0 %2421
    %v2423 = vsel %vm1048, %v482, 0.0
    %2424 = vadd.xlane.f32.xlu0 %v2423
    %v2425 = vpop.xlane.xlu0 %2424
    %v2426 = vsel %vm1048, %v483, 0.0
    %2427 = vadd.xlane.f32.xlu0 %v2426
    %v2428 = vpop.xlane.xlu0 %2427
    %v2429 = vsel %vm1048, %v484, 0.0
    %2430 = vadd.xlane.f32.xlu0 %v2429
    %v2431 = vpop.xlane.xlu0 %2430
    %v2432 = vsel %vm1048, %v485, 0.0
    %2433 = vadd.xlane.f32.xlu0 %v2432
    %v2434 = vpop.xlane.xlu0 %2433
    %v2435 = vsel %vm1048, %v486, 0.0
    %2436 = vadd.xlane.f32.xlu0 %v2435
    %v2437 = vpop.xlane.xlu0 %2436
    %v2438 = vsel %vm1048, %v487, 0.0
    %2439 = vadd.xlane.f32.xlu0 %v2438
    %v2440 = vpop.xlane.xlu0 %2439
    %v2441 = vsel %vm1048, %v488, 0.0
    %2442 = vadd.xlane.f32.xlu0 %v2441
    %v2443 = vpop.xlane.xlu0 %2442
    %v2444 = vsel %vm1048, %v489, 0.0
    %2445 = vadd.xlane.f32.xlu0 %v2444
    %v2446 = vpop.xlane.xlu0 %2445
    %v2447 = vsel %vm1048, %v490, 0.0
    %2448 = vadd.xlane.f32.xlu0 %v2447
    %v2449 = vpop.xlane.xlu0 %2448
    %v2450 = vsel %vm1048, %v491, 0.0
    %2451 = vadd.xlane.f32.xlu0 %v2450
    %v2452 = vpop.xlane.xlu0 %2451
    %v2453 = vsel %vm1048, %v492, 0.0
    %2454 = vadd.xlane.f32.xlu0 %v2453
    %v2455 = vpop.xlane.xlu0 %2454
    %v2456 = vsel %vm1048, %v493, 0.0
    %2457 = vadd.xlane.f32.xlu0 %v2456
    %v2458 = vpop.xlane.xlu0 %2457
    %v2459 = vsel %vm1048, %v494, 0.0
    %2460 = vadd.xlane.f32.xlu0 %v2459
    %v2461 = vpop.xlane.xlu0 %2460
    %v2462 = vsel %vm1048, %v495, 0.0
    %2463 = vadd.xlane.f32.xlu0 %v2462
    %v2464 = vpop.xlane.xlu0 %2463
    %v2465 = vsel %vm1048, %v496, 0.0
    %2466 = vadd.xlane.f32.xlu0 %v2465
    %v2467 = vpop.xlane.xlu0 %2466
    %v2468 = vsel %vm1048, %v497, 0.0
    %2469 = vadd.xlane.f32.xlu0 %v2468
    %v2470 = vpop.xlane.xlu0 %2469
    %v2471 = vsel %vm1048, %v498, 0.0
    %2472 = vadd.xlane.f32.xlu0 %v2471
    %v2473 = vpop.xlane.xlu0 %2472
    %v2474 = vsel %vm1048, %v499, 0.0
    %2475 = vadd.xlane.f32.xlu0 %v2474
    %v2476 = vpop.xlane.xlu0 %2475
    %v2477 = vsel %vm1048, %v500, 0.0
    %2478 = vadd.xlane.f32.xlu0 %v2477
    %v2479 = vpop.xlane.xlu0 %2478
    %v2480 = vsel %vm1048, %v501, 0.0
    %2481 = vadd.xlane.f32.xlu0 %v2480
    %v2482 = vpop.xlane.xlu0 %2481
    %v2483 = vsel %vm1048, %v502, 0.0
    %2484 = vadd.xlane.f32.xlu0 %v2483
    %v2485 = vpop.xlane.xlu0 %2484
    %v2486 = vsel %vm1048, %v503, 0.0
    %2487 = vadd.xlane.f32.xlu0 %v2486
    %v2488 = vpop.xlane.xlu0 %2487
    %v2489 = vsel %vm1048, %v504, 0.0
    %2490 = vadd.xlane.f32.xlu0 %v2489
    %v2491 = vpop.xlane.xlu0 %2490
    %v2492 = vsel %vm1048, %v505, 0.0
    %2493 = vadd.xlane.f32.xlu0 %v2492
    %v2494 = vpop.xlane.xlu0 %2493
    %v2495 = vsel %vm1048, %v506, 0.0
    %2496 = vadd.xlane.f32.xlu0 %v2495
    %v2497 = vpop.xlane.xlu0 %2496
    %v2498 = vsel %vm1048, %v507, 0.0
    %2499 = vadd.xlane.f32.xlu0 %v2498
    %v2500 = vpop.xlane.xlu0 %2499
    %v2501 = vsel %vm1048, %v508, 0.0
    %2502 = vadd.xlane.f32.xlu0 %v2501
    %v2503 = vpop.xlane.xlu0 %2502
    %v2504 = vsel %vm1048, %v509, 0.0
    %2505 = vadd.xlane.f32.xlu0 %v2504
    %v2506 = vpop.xlane.xlu0 %2505
    %v2507 = vsel %vm1048, %v510, 0.0
    %2508 = vadd.xlane.f32.xlu0 %v2507
    %v2509 = vpop.xlane.xlu0 %2508
    %v2510 = vsel %vm1048, %v511, 0.0
    %2511 = vadd.xlane.f32.xlu0 %v2510
    %v2512 = vpop.xlane.xlu0 %2511
    %v2513 = vsel %vm1048, %v512, 0.0
    %2514 = vadd.xlane.f32.xlu0 %v2513
    %v2515 = vpop.xlane.xlu0 %2514
    %v2516 = vsel %vm1048, %v513, 0.0
    %2517 = vadd.xlane.f32.xlu0 %v2516
    %v2518 = vpop.xlane.xlu0 %2517
    %v2519 = vsel %vm1048, %v514, 0.0
    %2520 = vadd.xlane.f32.xlu0 %v2519
    %v2521 = vpop.xlane.xlu0 %2520
    %v2522 = vsel %vm1048, %v515, 0.0
    %2523 = vadd.xlane.f32.xlu0 %v2522
    %v2524 = vpop.xlane.xlu0 %2523
    %v2525 = vsel %vm1048, %v516, 0.0
    %2526 = vadd.xlane.f32.xlu0 %v2525
    %v2527 = vpop.xlane.xlu0 %2526
    %v2528 = vsel %vm1048, %v517, 0.0
    %2529 = vadd.xlane.f32.xlu0 %v2528
    %v2530 = vpop.xlane.xlu0 %2529
    %v2531 = vsel %vm1048, %v518, 0.0
    %2532 = vadd.xlane.f32.xlu0 %v2531
    %v2533 = vpop.xlane.xlu0 %2532
    %v2534 = vsel %vm1048, %v519, 0.0
    %2535 = vadd.xlane.f32.xlu0 %v2534
    %v2536 = vpop.xlane.xlu0 %2535
    %v2537 = vsel %vm1048, %v520, 0.0
    %2538 = vadd.xlane.f32.xlu0 %v2537
    %v2539 = vpop.xlane.xlu0 %2538
    %v2540 = vsel %vm1048, %v521, 0.0
    %2541 = vadd.xlane.f32.xlu0 %v2540
    %v2542 = vpop.xlane.xlu0 %2541
    %v2543 = vsel %vm1048, %v522, 0.0
    %2544 = vadd.xlane.f32.xlu0 %v2543
    %v2545 = vpop.xlane.xlu0 %2544
    %v2546 = vsel %vm1048, %v523, 0.0
    %2547 = vadd.xlane.f32.xlu0 %v2546
    %v2548 = vpop.xlane.xlu0 %2547
    %v2549 = vsel %vm1048, %v524, 0.0
    %2550 = vadd.xlane.f32.xlu0 %v2549
    %v2551 = vpop.xlane.xlu0 %2550
    %v2552 = vsel %vm1048, %v525, 0.0
    %2553 = vadd.xlane.f32.xlu0 %v2552
    %v2554 = vpop.xlane.xlu0 %2553
    %v2555 = vsel %vm1048, %v526, 0.0
    %2556 = vadd.xlane.f32.xlu0 %v2555
    %v2557 = vpop.xlane.xlu0 %2556
    %v2558 = vsel %vm1048, %v527, 0.0
    %2559 = vadd.xlane.f32.xlu0 %v2558
    %v2560 = vpop.xlane.xlu0 %2559
    %v2561 = vsel %vm1048, %v528, 0.0
    %2562 = vadd.xlane.f32.xlu0 %v2561
    %v2563 = vpop.xlane.xlu0 %2562
    %v2564 = vsel %vm1048, %v529, 0.0
    %2565 = vadd.xlane.f32.xlu0 %v2564
    %v2566 = vpop.xlane.xlu0 %2565
    %v2567 = vsel %vm1048, %v530, 0.0
    %2568 = vadd.xlane.f32.xlu0 %v2567
    %v2569 = vpop.xlane.xlu0 %2568
    %v2570 = vsel %vm1048, %v531, 0.0
    %2571 = vadd.xlane.f32.xlu0 %v2570
    %v2572 = vpop.xlane.xlu0 %2571
    %v2573 = vsel %vm1048, %v532, 0.0
    %2574 = vadd.xlane.f32.xlu0 %v2573
    %v2575 = vpop.xlane.xlu0 %2574
    %v2576 = vsel %vm1048, %v533, 0.0
    %2577 = vadd.xlane.f32.xlu0 %v2576
    %v2578 = vpop.xlane.xlu0 %2577
    %v2579 = vsel %vm1048, %v534, 0.0
    %2580 = vadd.xlane.f32.xlu0 %v2579
    %v2581 = vpop.xlane.xlu0 %2580
    %v2582 = vsel %vm1048, %v535, 0.0
    %2583 = vadd.xlane.f32.xlu0 %v2582
    %v2584 = vpop.xlane.xlu0 %2583
    %v2585 = vsel %vm1048, %v536, 0.0
    %2586 = vadd.xlane.f32.xlu0 %v2585
    %v2587 = vpop.xlane.xlu0 %2586
    %v2588 = vsel %vm1048, %v537, 0.0
    %2589 = vadd.xlane.f32.xlu0 %v2588
    %v2590 = vpop.xlane.xlu0 %2589
    %v2591 = vsel %vm1048, %v538, 0.0
    %2592 = vadd.xlane.f32.xlu0 %v2591
    %v2593 = vpop.xlane.xlu0 %2592
    %v2594 = vsel %vm1048, %v539, 0.0
    %2595 = vadd.xlane.f32.xlu0 %v2594
    %v2596 = vpop.xlane.xlu0 %2595
    %v2597 = vsel %vm1048, %v540, 0.0
    %2598 = vadd.xlane.f32.xlu0 %v2597
    %v2599 = vpop.xlane.xlu0 %2598
    %v2600 = vsel %vm1048, %v541, 0.0
    %2601 = vadd.xlane.f32.xlu0 %v2600
    %v2602 = vpop.xlane.xlu0 %2601
    %v2603 = vsel %vm1048, %v542, 0.0
    %2604 = vadd.xlane.f32.xlu0 %v2603
    %v2605 = vpop.xlane.xlu0 %2604
    %v2606 = vsel %vm1048, %v543, 0.0
    %2607 = vadd.xlane.f32.xlu0 %v2606
    %v2608 = vpop.xlane.xlu0 %2607
    %v2609 = vsel %vm1048, %v544, 0.0
    %2610 = vadd.xlane.f32.xlu0 %v2609
    %v2611 = vpop.xlane.xlu0 %2610
    %v2612 = vsel %vm1048, %v545, 0.0
    %2613 = vadd.xlane.f32.xlu0 %v2612
    %v2614 = vpop.xlane.xlu0 %2613
    %v2615 = vsel %vm1048, %v546, 0.0
    %2616 = vadd.xlane.f32.xlu0 %v2615
    %v2617 = vpop.xlane.xlu0 %2616
    %v2618 = vsel %vm1048, %v547, 0.0
    %2619 = vadd.xlane.f32.xlu0 %v2618
    %v2620 = vpop.xlane.xlu0 %2619
    %v2621 = vsel %vm1048, %v548, 0.0
    %2622 = vadd.xlane.f32.xlu0 %v2621
    %v2623 = vpop.xlane.xlu0 %2622
    %v2624 = vsel %vm1048, %v549, 0.0
    %2625 = vadd.xlane.f32.xlu0 %v2624
    %v2626 = vpop.xlane.xlu0 %2625
    %v2627 = vsel %vm1048, %v550, 0.0
    %2628 = vadd.xlane.f32.xlu0 %v2627
    %v2629 = vpop.xlane.xlu0 %2628
    %v2630 = vsel %vm1048, %v551, 0.0
    %2631 = vadd.xlane.f32.xlu0 %v2630
    %v2632 = vpop.xlane.xlu0 %2631
    %v2633 = vsel %vm1048, %v552, 0.0
    %2634 = vadd.xlane.f32.xlu0 %v2633
    %v2635 = vpop.xlane.xlu0 %2634
    %v2636 = vsel %vm1048, %v553, 0.0
    %2637 = vadd.xlane.f32.xlu0 %v2636
    %v2638 = vpop.xlane.xlu0 %2637
    %v2639 = vsel %vm1048, %v554, 0.0
    %2640 = vadd.xlane.f32.xlu0 %v2639
    %v2641 = vpop.xlane.xlu0 %2640
    %v2642 = vsel %vm1048, %v555, 0.0
    %2643 = vadd.xlane.f32.xlu0 %v2642
    %v2644 = vpop.xlane.xlu0 %2643
    %v2645 = vsel %vm1048, %v556, 0.0
    %2646 = vadd.xlane.f32.xlu0 %v2645
    %v2647 = vpop.xlane.xlu0 %2646
    %v2648 = vsel %vm1048, %v557, 0.0
    %2649 = vadd.xlane.f32.xlu0 %v2648
    %v2650 = vpop.xlane.xlu0 %2649
    %v2651 = vsel %vm1048, %v558, 0.0
    %2652 = vadd.xlane.f32.xlu0 %v2651
    %v2653 = vpop.xlane.xlu0 %2652
    %v2654 = vsel %vm1048, %v559, 0.0
    %2655 = vadd.xlane.f32.xlu0 %v2654
    %v2656 = vpop.xlane.xlu0 %2655
    %v2657 = vsel %vm1048, %v560, 0.0
    %2658 = vadd.xlane.f32.xlu0 %v2657
    %v2659 = vpop.xlane.xlu0 %2658
    %v2660 = vsel %vm1048, %v561, 0.0
    %2661 = vadd.xlane.f32.xlu0 %v2660
    %v2662 = vpop.xlane.xlu0 %2661
    %v2663 = vsel %vm1048, %v562, 0.0
    %2664 = vadd.xlane.f32.xlu0 %v2663
    %v2665 = vpop.xlane.xlu0 %2664
    %v2666 = vsel %vm1048, %v563, 0.0
    %2667 = vadd.xlane.f32.xlu0 %v2666
    %v2668 = vpop.xlane.xlu0 %2667
    %v2669 = vsel %vm1048, %v564, 0.0
    %2670 = vadd.xlane.f32.xlu0 %v2669
    %v2671 = vpop.xlane.xlu0 %2670
    %v2672 = vsel %vm1048, %v565, 0.0
    %2673 = vadd.xlane.f32.xlu0 %v2672
    %v2674 = vpop.xlane.xlu0 %2673
    %v2675 = vsel %vm1048, %v566, 0.0
    %2676 = vadd.xlane.f32.xlu0 %v2675
    %v2677 = vpop.xlane.xlu0 %2676
    %v2678 = vsel %vm1048, %v567, 0.0
    %2679 = vadd.xlane.f32.xlu0 %v2678
    %v2680 = vpop.xlane.xlu0 %2679
    %v2681 = vsel %vm1048, %v568, 0.0
    %2682 = vadd.xlane.f32.xlu0 %v2681
    %v2683 = vpop.xlane.xlu0 %2682
    %v2684 = vsel %vm1048, %v569, 0.0
    %2685 = vadd.xlane.f32.xlu0 %v2684
    %v2686 = vpop.xlane.xlu0 %2685
    %v2687 = vsel %vm1048, %v570, 0.0
    %2688 = vadd.xlane.f32.xlu0 %v2687
    %v2689 = vpop.xlane.xlu0 %2688
    %v2690 = vsel %vm1048, %v571, 0.0
    %2691 = vadd.xlane.f32.xlu0 %v2690
    %v2692 = vpop.xlane.xlu0 %2691
    %v2693 = vsel %vm1048, %v572, 0.0
    %2694 = vadd.xlane.f32.xlu0 %v2693
    %v2695 = vpop.xlane.xlu0 %2694
    %v2696 = vsel %vm1048, %v573, 0.0
    %2697 = vadd.xlane.f32.xlu0 %v2696
    %v2698 = vpop.xlane.xlu0 %2697
    %v2699 = vsel %vm1048, %v574, 0.0
    %2700 = vadd.xlane.f32.xlu0 %v2699
    %v2701 = vpop.xlane.xlu0 %2700
    %v2702 = vsel %vm1048, %v575, 0.0
    %2703 = vadd.xlane.f32.xlu0 %v2702
    %v2704 = vpop.xlane.xlu0 %2703
    %v2705 = vsel %vm1048, %v576, 0.0
    %2706 = vadd.xlane.f32.xlu0 %v2705
    %v2707 = vpop.xlane.xlu0 %2706
    %v2708 = vsel %vm1048, %v577, 0.0
    %2709 = vadd.xlane.f32.xlu0 %v2708
    %v2710 = vpop.xlane.xlu0 %2709
    %v2711 = vsel %vm1048, %v578, 0.0
    %2712 = vadd.xlane.f32.xlu0 %v2711
    %v2713 = vpop.xlane.xlu0 %2712
    %v2714 = vsel %vm1048, %v579, 0.0
    %2715 = vadd.xlane.f32.xlu0 %v2714
    %v2716 = vpop.xlane.xlu0 %2715
    %v2717 = vsel %vm1048, %v580, 0.0
    %2718 = vadd.xlane.f32.xlu0 %v2717
    %v2719 = vpop.xlane.xlu0 %2718
    %v2720 = vsel %vm1048, %v581, 0.0
    %2721 = vadd.xlane.f32.xlu0 %v2720
    %v2722 = vpop.xlane.xlu0 %2721
    %v2723 = vsel %vm1048, %v582, 0.0
    %2724 = vadd.xlane.f32.xlu0 %v2723
    %v2725 = vpop.xlane.xlu0 %2724
    %v2726 = vsel %vm1048, %v583, 0.0
    %2727 = vadd.xlane.f32.xlu0 %v2726
    %v2728 = vpop.xlane.xlu0 %2727
    %v2729 = vsel %vm1048, %v584, 0.0
    %2730 = vadd.xlane.f32.xlu0 %v2729
    %v2731 = vpop.xlane.xlu0 %2730
    %v2732 = vsel %vm1048, %v585, 0.0
    %2733 = vadd.xlane.f32.xlu0 %v2732
    %v2734 = vpop.xlane.xlu0 %2733
    %v2735 = vsel %vm1048, %v586, 0.0
    %2736 = vadd.xlane.f32.xlu0 %v2735
    %v2737 = vpop.xlane.xlu0 %2736
    %v2738 = vsel %vm1048, %v587, 0.0
    %2739 = vadd.xlane.f32.xlu0 %v2738
    %v2740 = vpop.xlane.xlu0 %2739
    %v2741 = vsel %vm1048, %v588, 0.0
    %2742 = vadd.xlane.f32.xlu0 %v2741
    %v2743 = vpop.xlane.xlu0 %2742
    %v2744 = vsel %vm1048, %v589, 0.0
    %2745 = vadd.xlane.f32.xlu0 %v2744
    %v2746 = vpop.xlane.xlu0 %2745
    %v2747 = vsel %vm1048, %v590, 0.0
    %2748 = vadd.xlane.f32.xlu0 %v2747
    %v2749 = vpop.xlane.xlu0 %2748
    %v2750 = vsel %vm1048, %v591, 0.0
    %2751 = vadd.xlane.f32.xlu0 %v2750
    %v2752 = vpop.xlane.xlu0 %2751
    %v2753 = vsel %vm1048, %v592, 0.0
    %2754 = vadd.xlane.f32.xlu0 %v2753
    %v2755 = vpop.xlane.xlu0 %2754
    %v2756 = vsel %vm1048, %v593, 0.0
    %2757 = vadd.xlane.f32.xlu0 %v2756
    %v2758 = vpop.xlane.xlu0 %2757
    %v2759 = vsel %vm1048, %v594, 0.0
    %2760 = vadd.xlane.f32.xlu0 %v2759
    %v2761 = vpop.xlane.xlu0 %2760
    %v2762 = vsel %vm1048, %v595, 0.0
    %2763 = vadd.xlane.f32.xlu0 %v2762
    %v2764 = vpop.xlane.xlu0 %2763
    %v2765 = vsel %vm1048, %v596, 0.0
    %2766 = vadd.xlane.f32.xlu0 %v2765
    %v2767 = vpop.xlane.xlu0 %2766
    %v2768 = vsel %vm1048, %v597, 0.0
    %2769 = vadd.xlane.f32.xlu0 %v2768
    %v2770 = vpop.xlane.xlu0 %2769
    %v2771 = vsel %vm1048, %v598, 0.0
    %2772 = vadd.xlane.f32.xlu0 %v2771
    %v2773 = vpop.xlane.xlu0 %2772
    %v2774 = vsel %vm1048, %v599, 0.0
    %2775 = vadd.xlane.f32.xlu0 %v2774
    %v2776 = vpop.xlane.xlu0 %2775
    %v2777 = vsel %vm1048, %v600, 0.0
    %2778 = vadd.xlane.f32.xlu0 %v2777
    %v2779 = vpop.xlane.xlu0 %2778
    %v2780 = vsel %vm1048, %v601, 0.0
    %2781 = vadd.xlane.f32.xlu0 %v2780
    %v2782 = vpop.xlane.xlu0 %2781
    %v2783 = vsel %vm1048, %v602, 0.0
    %2784 = vadd.xlane.f32.xlu0 %v2783
    %v2785 = vpop.xlane.xlu0 %2784
    %v2786 = vsel %vm1048, %v603, 0.0
    %2787 = vadd.xlane.f32.xlu0 %v2786
    %v2788 = vpop.xlane.xlu0 %2787
    %v2789 = vsel %vm1048, %v604, 0.0
    %2790 = vadd.xlane.f32.xlu0 %v2789
    %v2791 = vpop.xlane.xlu0 %2790
    %v2792 = vsel %vm1048, %v605, 0.0
    %2793 = vadd.xlane.f32.xlu0 %v2792
    %v2794 = vpop.xlane.xlu0 %2793
    %v2795 = vsel %vm1048, %v606, 0.0
    %2796 = vadd.xlane.f32.xlu0 %v2795
    %v2797 = vpop.xlane.xlu0 %2796
    %v2798 = vsel %vm1048, %v607, 0.0
    %2799 = vadd.xlane.f32.xlu0 %v2798
    %v2800 = vpop.xlane.xlu0 %2799
    %v2801 = vsel %vm1048, %v608, 0.0
    %2802 = vadd.xlane.f32.xlu0 %v2801
    %v2803 = vpop.xlane.xlu0 %2802
    %v2804 = vsel %vm1048, %v609, 0.0
    %2805 = vadd.xlane.f32.xlu0 %v2804
    %v2806 = vpop.xlane.xlu0 %2805
    %v2807 = vsel %vm1048, %v610, 0.0
    %2808 = vadd.xlane.f32.xlu0 %v2807
    %v2809 = vpop.xlane.xlu0 %2808
    %v2810 = vsel %vm1048, %v611, 0.0
    %2811 = vadd.xlane.f32.xlu0 %v2810
    %v2812 = vpop.xlane.xlu0 %2811
    %v2813 = vsel %vm1048, %v612, 0.0
    %2814 = vadd.xlane.f32.xlu0 %v2813
    %v2815 = vpop.xlane.xlu0 %2814
    %v2816 = vsel %vm1048, %v613, 0.0
    %2817 = vadd.xlane.f32.xlu0 %v2816
    %v2818 = vpop.xlane.xlu0 %2817
    %v2819 = vsel %vm1048, %v614, 0.0
    %2820 = vadd.xlane.f32.xlu0 %v2819
    %v2821 = vpop.xlane.xlu0 %2820
    %v2822 = vsel %vm1048, %v615, 0.0
    %2823 = vadd.xlane.f32.xlu0 %v2822
    %v2824 = vpop.xlane.xlu0 %2823
    %v2825 = vsel %vm1048, %v616, 0.0
    %2826 = vadd.xlane.f32.xlu0 %v2825
    %v2827 = vpop.xlane.xlu0 %2826
    %v2828 = vsel %vm1048, %v617, 0.0
    %2829 = vadd.xlane.f32.xlu0 %v2828
    %v2830 = vpop.xlane.xlu0 %2829
    %v2831 = vsel %vm1048, %v618, 0.0
    %2832 = vadd.xlane.f32.xlu0 %v2831
    %v2833 = vpop.xlane.xlu0 %2832
    %v2834 = vsel %vm1048, %v619, 0.0
    %2835 = vadd.xlane.f32.xlu0 %v2834
    %v2836 = vpop.xlane.xlu0 %2835
    %v2837 = vsel %vm1048, %v620, 0.0
    %2838 = vadd.xlane.f32.xlu0 %v2837
    %v2839 = vpop.xlane.xlu0 %2838
    %v2840 = vsel %vm1048, %v621, 0.0
    %2841 = vadd.xlane.f32.xlu0 %v2840
    %v2842 = vpop.xlane.xlu0 %2841
    %v2843 = vsel %vm1048, %v622, 0.0
    %2844 = vadd.xlane.f32.xlu0 %v2843
    %v2845 = vpop.xlane.xlu0 %2844
    %v2846 = vsel %vm1048, %v623, 0.0
    %2847 = vadd.xlane.f32.xlu0 %v2846
    %v2848 = vpop.xlane.xlu0 %2847
    %v2849 = vsel %vm1048, %v624, 0.0
    %2850 = vadd.xlane.f32.xlu0 %v2849
    %v2851 = vpop.xlane.xlu0 %2850
    %v2852 = vsel %vm1048, %v625, 0.0
    %2853 = vadd.xlane.f32.xlu0 %v2852
    %v2854 = vpop.xlane.xlu0 %2853
    %v2855 = vsel %vm1048, %v626, 0.0
    %2856 = vadd.xlane.f32.xlu0 %v2855
    %v2857 = vpop.xlane.xlu0 %2856
    %v2858 = vsel %vm1048, %v627, 0.0
    %2859 = vadd.xlane.f32.xlu0 %v2858
    %v2860 = vpop.xlane.xlu0 %2859
    %v2861 = vsel %vm1048, %v628, 0.0
    %2862 = vadd.xlane.f32.xlu0 %v2861
    %v2863 = vpop.xlane.xlu0 %2862
    %v2864 = vsel %vm1048, %v629, 0.0
    %2865 = vadd.xlane.f32.xlu0 %v2864
    %v2866 = vpop.xlane.xlu0 %2865
    %v2867 = vsel %vm1048, %v630, 0.0
    %2868 = vadd.xlane.f32.xlu0 %v2867
    %v2869 = vpop.xlane.xlu0 %2868
    %v2870 = vsel %vm1048, %v631, 0.0
    %2871 = vadd.xlane.f32.xlu0 %v2870
    %v2872 = vpop.xlane.xlu0 %2871
    %v2873 = vsel %vm1048, %v632, 0.0
    %2874 = vadd.xlane.f32.xlu0 %v2873
    %v2875 = vpop.xlane.xlu0 %2874
    %v2876 = vsel %vm1048, %v633, 0.0
    %2877 = vadd.xlane.f32.xlu0 %v2876
    %v2878 = vpop.xlane.xlu0 %2877
    %v2879 = vsel %vm1048, %v634, 0.0
    %2880 = vadd.xlane.f32.xlu0 %v2879
    %v2881 = vpop.xlane.xlu0 %2880
    %v2882 = vsel %vm1048, %v635, 0.0
    %2883 = vadd.xlane.f32.xlu0 %v2882
    %v2884 = vpop.xlane.xlu0 %2883
    %v2885 = vsel %vm1048, %v636, 0.0
    %2886 = vadd.xlane.f32.xlu0 %v2885
    %v2887 = vpop.xlane.xlu0 %2886
    %v2888 = vsel %vm1048, %v637, 0.0
    %2889 = vadd.xlane.f32.xlu0 %v2888
    %v2890 = vpop.xlane.xlu0 %2889
    %v2891 = vsel %vm1048, %v638, 0.0
    %2892 = vadd.xlane.f32.xlu0 %v2891
    %v2893 = vpop.xlane.xlu0 %2892
    %v2894 = vsel %vm1048, %v639, 0.0
    %2895 = vadd.xlane.f32.xlu0 %v2894
    %v2896 = vpop.xlane.xlu0 %2895
    %v2897 = vsel %vm1048, %v640, 0.0
    %2898 = vadd.xlane.f32.xlu0 %v2897
    %v2899 = vpop.xlane.xlu0 %2898
    %v2900 = vsel %vm1048, %v641, 0.0
    %2901 = vadd.xlane.f32.xlu0 %v2900
    %v2902 = vpop.xlane.xlu0 %2901
    %v2903 = vsel %vm1048, %v642, 0.0
    %2904 = vadd.xlane.f32.xlu0 %v2903
    %v2905 = vpop.xlane.xlu0 %2904
    %v2906 = vsel %vm1048, %v643, 0.0
    %2907 = vadd.xlane.f32.xlu0 %v2906
    %v2908 = vpop.xlane.xlu0 %2907
    %v2909 = vsel %vm1048, %v644, 0.0
    %2910 = vadd.xlane.f32.xlu0 %v2909
    %v2911 = vpop.xlane.xlu0 %2910
    %v2912 = vsel %vm1048, %v645, 0.0
    %2913 = vadd.xlane.f32.xlu0 %v2912
    %v2914 = vpop.xlane.xlu0 %2913
    %v2915 = vsel %vm1048, %v646, 0.0
    %2916 = vadd.xlane.f32.xlu0 %v2915
    %v2917 = vpop.xlane.xlu0 %2916
    %v2918 = vsel %vm1048, %v647, 0.0
    %2919 = vadd.xlane.f32.xlu0 %v2918
    %v2920 = vpop.xlane.xlu0 %2919
    %v2921 = vsel %vm1048, %v648, 0.0
    %2922 = vadd.xlane.f32.xlu0 %v2921
    %v2923 = vpop.xlane.xlu0 %2922
    %v2924 = vsel %vm1048, %v649, 0.0
    %2925 = vadd.xlane.f32.xlu0 %v2924
    %v2926 = vpop.xlane.xlu0 %2925
    %v2927 = vsel %vm1048, %v650, 0.0
    %2928 = vadd.xlane.f32.xlu0 %v2927
    %v2929 = vpop.xlane.xlu0 %2928
    %v2930 = vsel %vm1048, %v651, 0.0
    %2931 = vadd.xlane.f32.xlu0 %v2930
    %v2932 = vpop.xlane.xlu0 %2931
    %v2933 = vsel %vm1048, %v652, 0.0
    %2934 = vadd.xlane.f32.xlu0 %v2933
    %v2935 = vpop.xlane.xlu0 %2934
    %v2936 = vsel %vm1048, %v653, 0.0
    %2937 = vadd.xlane.f32.xlu0 %v2936
    %v2938 = vpop.xlane.xlu0 %2937
    %v2939 = vsel %vm1048, %v654, 0.0
    %2940 = vadd.xlane.f32.xlu0 %v2939
    %v2941 = vpop.xlane.xlu0 %2940
    %v2942 = vsel %vm1048, %v655, 0.0
    %2943 = vadd.xlane.f32.xlu0 %v2942
    %v2944 = vpop.xlane.xlu0 %2943
    %v2945 = vsel %vm1048, %v656, 0.0
    %2946 = vadd.xlane.f32.xlu0 %v2945
    %v2947 = vpop.xlane.xlu0 %2946
    %v2948 = vsel %vm1048, %v657, 0.0
    %2949 = vadd.xlane.f32.xlu0 %v2948
    %v2950 = vpop.xlane.xlu0 %2949
    %v2951 = vsel %vm1048, %v658, 0.0
    %2952 = vadd.xlane.f32.xlu0 %v2951
    %v2953 = vpop.xlane.xlu0 %2952
    %v2954 = vsel %vm1048, %v659, 0.0
    %2955 = vadd.xlane.f32.xlu0 %v2954
    %v2956 = vpop.xlane.xlu0 %2955
    %v2957 = vsel %vm1048, %v660, 0.0
    %2958 = vadd.xlane.f32.xlu0 %v2957
    %v2959 = vpop.xlane.xlu0 %2958
    %v2960 = vsel %vm1048, %v661, 0.0
    %2961 = vadd.xlane.f32.xlu0 %v2960
    %v2962 = vpop.xlane.xlu0 %2961
    %v2963 = vsel %vm1048, %v662, 0.0
    %2964 = vadd.xlane.f32.xlu0 %v2963
    %v2965 = vpop.xlane.xlu0 %2964
    %v2966 = vsel %vm1048, %v663, 0.0
    %2967 = vadd.xlane.f32.xlu0 %v2966
    %v2968 = vpop.xlane.xlu0 %2967
    %v2969 = vsel %vm1048, %v664, 0.0
    %2970 = vadd.xlane.f32.xlu0 %v2969
    %v2971 = vpop.xlane.xlu0 %2970
    %v2972 = vsel %vm1048, %v665, 0.0
    %2973 = vadd.xlane.f32.xlu0 %v2972
    %v2974 = vpop.xlane.xlu0 %2973
    %v2975 = vsel %vm1048, %v666, 0.0
    %2976 = vadd.xlane.f32.xlu0 %v2975
    %v2977 = vpop.xlane.xlu0 %2976
    %v2978 = vsel %vm1048, %v667, 0.0
    %2979 = vadd.xlane.f32.xlu0 %v2978
    %v2980 = vpop.xlane.xlu0 %2979
    %v2981 = vsel %vm1048, %v668, 0.0
    %2982 = vadd.xlane.f32.xlu0 %v2981
    %v2983 = vpop.xlane.xlu0 %2982
    %v2984 = vsel %vm1048, %v669, 0.0
    %2985 = vadd.xlane.f32.xlu0 %v2984
    %v2986 = vpop.xlane.xlu0 %2985
    %v2987 = vsel %vm1048, %v670, 0.0
    %2988 = vadd.xlane.f32.xlu0 %v2987
    %v2989 = vpop.xlane.xlu0 %2988
    %v2990 = vsel %vm1048, %v671, 0.0
    %2991 = vadd.xlane.f32.xlu0 %v2990
    %v2992 = vpop.xlane.xlu0 %2991
    %v2993 = vsel %vm1048, %v672, 0.0
    %2994 = vadd.xlane.f32.xlu0 %v2993
    %v2995 = vpop.xlane.xlu0 %2994
    %v2996 = vsel %vm1048, %v673, 0.0
    %2997 = vadd.xlane.f32.xlu0 %v2996
    %v2998 = vpop.xlane.xlu0 %2997
    %v2999 = vsel %vm1048, %v674, 0.0
    %3000 = vadd.xlane.f32.xlu0 %v2999
    %v3001 = vpop.xlane.xlu0 %3000
    %v3002 = vsel %vm1048, %v675, 0.0
    %3003 = vadd.xlane.f32.xlu0 %v3002
    %v3004 = vpop.xlane.xlu0 %3003
    %v3005 = vsel %vm1048, %v676, 0.0
    %3006 = vadd.xlane.f32.xlu0 %v3005
    %v3007 = vpop.xlane.xlu0 %3006
    %v3008 = vsel %vm1048, %v677, 0.0
    %3009 = vadd.xlane.f32.xlu0 %v3008
    %v3010 = vpop.xlane.xlu0 %3009
    %v3011 = vsel %vm1048, %v678, 0.0
    %3012 = vadd.xlane.f32.xlu0 %v3011
    %v3013 = vpop.xlane.xlu0 %3012
    %v3014 = vsel %vm1048, %v679, 0.0
    %3015 = vadd.xlane.f32.xlu0 %v3014
    %v3016 = vpop.xlane.xlu0 %3015
    %v3017 = vsel %vm1048, %v680, 0.0
    %3018 = vadd.xlane.f32.xlu0 %v3017
    %v3019 = vpop.xlane.xlu0 %3018
    %v3020 = vsel %vm1048, %v681, 0.0
    %3021 = vadd.xlane.f32.xlu0 %v3020
    %v3022 = vpop.xlane.xlu0 %3021
    %v3023 = vsel %vm1048, %v682, 0.0
    %3024 = vadd.xlane.f32.xlu0 %v3023
    %v3025 = vpop.xlane.xlu0 %3024
    %v3026 = vsel %vm1048, %v683, 0.0
    %3027 = vadd.xlane.f32.xlu0 %v3026
    %v3028 = vpop.xlane.xlu0 %3027
    %v3029 = vsel %vm1048, %v684, 0.0
    %3030 = vadd.xlane.f32.xlu0 %v3029
    %v3031 = vpop.xlane.xlu0 %3030
    %v3032 = vsel %vm1048, %v685, 0.0
    %3033 = vadd.xlane.f32.xlu0 %v3032
    %v3034 = vpop.xlane.xlu0 %3033
    %v3035 = vsel %vm1048, %v686, 0.0
    %3036 = vadd.xlane.f32.xlu0 %v3035
    %v3037 = vpop.xlane.xlu0 %3036
    %v3038 = vsel %vm1048, %v687, 0.0
    %3039 = vadd.xlane.f32.xlu0 %v3038
    %v3040 = vpop.xlane.xlu0 %3039
    %v3041 = vsel %vm1048, %v688, 0.0
    %3042 = vadd.xlane.f32.xlu0 %v3041
    %v3043 = vpop.xlane.xlu0 %3042
    %v3044 = vsel %vm1048, %v689, 0.0
    %3045 = vadd.xlane.f32.xlu0 %v3044
    %v3046 = vpop.xlane.xlu0 %3045
    %v3047 = vsel %vm1048, %v690, 0.0
    %3048 = vadd.xlane.f32.xlu0 %v3047
    %v3049 = vpop.xlane.xlu0 %3048
    %v3050 = vsel %vm1048, %v691, 0.0
    %3051 = vadd.xlane.f32.xlu0 %v3050
    %v3052 = vpop.xlane.xlu0 %3051
    %v3053 = vsel %vm1048, %v692, 0.0
    %3054 = vadd.xlane.f32.xlu0 %v3053
    %v3055 = vpop.xlane.xlu0 %3054
    %v3056 = vsel %vm1048, %v693, 0.0
    %3057 = vadd.xlane.f32.xlu0 %v3056
    %v3058 = vpop.xlane.xlu0 %3057
    %v3059 = vsel %vm1048, %v694, 0.0
    %3060 = vadd.xlane.f32.xlu0 %v3059
    %v3061 = vpop.xlane.xlu0 %3060
    %v3062 = vsel %vm1048, %v695, 0.0
    %3063 = vadd.xlane.f32.xlu0 %v3062
    %v3064 = vpop.xlane.xlu0 %3063
    %v3065 = vsel %vm1048, %v696, 0.0
    %3066 = vadd.xlane.f32.xlu0 %v3065
    %v3067 = vpop.xlane.xlu0 %3066
    %v3068 = vsel %vm1048, %v697, 0.0
    %3069 = vadd.xlane.f32.xlu0 %v3068
    %v3070 = vpop.xlane.xlu0 %3069
    %v3071 = vsel %vm1048, %v698, 0.0
    %3072 = vadd.xlane.f32.xlu0 %v3071
    %v3073 = vpop.xlane.xlu0 %3072
    %v3074 = vsel %vm1048, %v699, 0.0
    %3075 = vadd.xlane.f32.xlu0 %v3074
    %v3076 = vpop.xlane.xlu0 %3075
    %v3077 = vsel %vm1048, %v700, 0.0
    %3078 = vadd.xlane.f32.xlu0 %v3077
    %v3079 = vpop.xlane.xlu0 %3078
    %v3080 = vsel %vm1048, %v701, 0.0
    %3081 = vadd.xlane.f32.xlu0 %v3080
    %v3082 = vpop.xlane.xlu0 %3081
    %v3083 = vsel %vm1048, %v702, 0.0
    %3084 = vadd.xlane.f32.xlu0 %v3083
    %v3085 = vpop.xlane.xlu0 %3084
    %v3086 = vsel %vm1048, %v703, 0.0
    %3087 = vadd.xlane.f32.xlu0 %v3086
    %v3088 = vpop.xlane.xlu0 %3087
    %v3089 = vsel %vm1048, %v704, 0.0
    %3090 = vadd.xlane.f32.xlu0 %v3089
    %v3091 = vpop.xlane.xlu0 %3090
    %v3092 = vsel %vm1048, %v705, 0.0
    %3093 = vadd.xlane.f32.xlu0 %v3092
    %v3094 = vpop.xlane.xlu0 %3093
    %v3095 = vsel %vm1048, %v706, 0.0
    %3096 = vadd.xlane.f32.xlu0 %v3095
    %v3097 = vpop.xlane.xlu0 %3096
    %v3098 = vsel %vm1048, %v707, 0.0
    %3099 = vadd.xlane.f32.xlu0 %v3098
    %v3100 = vpop.xlane.xlu0 %3099
    %v3101 = vsel %vm1048, %v708, 0.0
    %3102 = vadd.xlane.f32.xlu0 %v3101
    %v3103 = vpop.xlane.xlu0 %3102
    %v3104 = vsel %vm1048, %v709, 0.0
    %3105 = vadd.xlane.f32.xlu0 %v3104
    %v3106 = vpop.xlane.xlu0 %3105
    %v3107 = vsel %vm1048, %v710, 0.0
    %3108 = vadd.xlane.f32.xlu0 %v3107
    %v3109 = vpop.xlane.xlu0 %3108
    %v3110 = vsel %vm1048, %v711, 0.0
    %3111 = vadd.xlane.f32.xlu0 %v3110
    %v3112 = vpop.xlane.xlu0 %3111
    %v3113 = vsel %vm1048, %v712, 0.0
    %3114 = vadd.xlane.f32.xlu0 %v3113
    %v3115 = vpop.xlane.xlu0 %3114
    %v3116 = vsel %vm1048, %v713, 0.0
    %3117 = vadd.xlane.f32.xlu0 %v3116
    %v3118 = vpop.xlane.xlu0 %3117
    %v3119 = vsel %vm1048, %v714, 0.0
    %3120 = vadd.xlane.f32.xlu0 %v3119
    %v3121 = vpop.xlane.xlu0 %3120
    %v3122 = vsel %vm1048, %v715, 0.0
    %3123 = vadd.xlane.f32.xlu0 %v3122
    %v3124 = vpop.xlane.xlu0 %3123
    %v3125 = vsel %vm1048, %v716, 0.0
    %3126 = vadd.xlane.f32.xlu0 %v3125
    %v3127 = vpop.xlane.xlu0 %3126
    %v3128 = vsel %vm1048, %v717, 0.0
    %3129 = vadd.xlane.f32.xlu0 %v3128
    %v3130 = vpop.xlane.xlu0 %3129
    %v3131 = vsel %vm1048, %v718, 0.0
    %3132 = vadd.xlane.f32.xlu0 %v3131
    %v3133 = vpop.xlane.xlu0 %3132
    %v3134 = vsel %vm1048, %v719, 0.0
    %3135 = vadd.xlane.f32.xlu0 %v3134
    %v3136 = vpop.xlane.xlu0 %3135
    %v3137 = vsel %vm1048, %v720, 0.0
    %3138 = vadd.xlane.f32.xlu0 %v3137
    %v3139 = vpop.xlane.xlu0 %3138
    %v3140 = vsel %vm1048, %v721, 0.0
    %3141 = vadd.xlane.f32.xlu0 %v3140
    %v3142 = vpop.xlane.xlu0 %3141
    %v3143 = vsel %vm1048, %v722, 0.0
    %3144 = vadd.xlane.f32.xlu0 %v3143
    %v3145 = vpop.xlane.xlu0 %3144
    %v3146 = vsel %vm1048, %v723, 0.0
    %3147 = vadd.xlane.f32.xlu0 %v3146
    %v3148 = vpop.xlane.xlu0 %3147
    %v3149 = vsel %vm1048, %v724, 0.0
    %3150 = vadd.xlane.f32.xlu0 %v3149
    %v3151 = vpop.xlane.xlu0 %3150
    %v3152 = vsel %vm1048, %v725, 0.0
    %3153 = vadd.xlane.f32.xlu0 %v3152
    %v3154 = vpop.xlane.xlu0 %3153
    %v3155 = vsel %vm1048, %v726, 0.0
    %3156 = vadd.xlane.f32.xlu0 %v3155
    %v3157 = vpop.xlane.xlu0 %3156
    %v3158 = vsel %vm1048, %v727, 0.0
    %3159 = vadd.xlane.f32.xlu0 %v3158
    %v3160 = vpop.xlane.xlu0 %3159
    %v3161 = vsel %vm1048, %v728, 0.0
    %3162 = vadd.xlane.f32.xlu0 %v3161
    %v3163 = vpop.xlane.xlu0 %3162
    %v3164 = vsel %vm1048, %v729, 0.0
    %3165 = vadd.xlane.f32.xlu0 %v3164
    %v3166 = vpop.xlane.xlu0 %3165
    %v3167 = vsel %vm1048, %v730, 0.0
    %3168 = vadd.xlane.f32.xlu0 %v3167
    %v3169 = vpop.xlane.xlu0 %3168
    %v3170 = vsel %vm1048, %v731, 0.0
    %3171 = vadd.xlane.f32.xlu0 %v3170
    %v3172 = vpop.xlane.xlu0 %3171
    %v3173 = vsel %vm1048, %v732, 0.0
    %3174 = vadd.xlane.f32.xlu0 %v3173
    %v3175 = vpop.xlane.xlu0 %3174
    %v3176 = vsel %vm1048, %v733, 0.0
    %3177 = vadd.xlane.f32.xlu0 %v3176
    %v3178 = vpop.xlane.xlu0 %3177
    %v3179 = vsel %vm1048, %v734, 0.0
    %3180 = vadd.xlane.f32.xlu0 %v3179
    %v3181 = vpop.xlane.xlu0 %3180
    %v3182 = vsel %vm1048, %v735, 0.0
    %3183 = vadd.xlane.f32.xlu0 %v3182
    %v3184 = vpop.xlane.xlu0 %3183
    %v3185 = vsel %vm1048, %v736, 0.0
    %3186 = vadd.xlane.f32.xlu0 %v3185
    %v3187 = vpop.xlane.xlu0 %3186
    %v3188 = vsel %vm1048, %v737, 0.0
    %3189 = vadd.xlane.f32.xlu0 %v3188
    %v3190 = vpop.xlane.xlu0 %3189
    %v3191 = vsel %vm1048, %v738, 0.0
    %3192 = vadd.xlane.f32.xlu0 %v3191
    %v3193 = vpop.xlane.xlu0 %3192
    %v3194 = vsel %vm1048, %v739, 0.0
    %3195 = vadd.xlane.f32.xlu0 %v3194
    %v3196 = vpop.xlane.xlu0 %3195
    %v3197 = vsel %vm1048, %v740, 0.0
    %3198 = vadd.xlane.f32.xlu0 %v3197
    %v3199 = vpop.xlane.xlu0 %3198
    %v3200 = vsel %vm1048, %v741, 0.0
    %3201 = vadd.xlane.f32.xlu0 %v3200
    %v3202 = vpop.xlane.xlu0 %3201
    %v3203 = vsel %vm1048, %v742, 0.0
    %3204 = vadd.xlane.f32.xlu0 %v3203
    %v3205 = vpop.xlane.xlu0 %3204
    %v3206 = vsel %vm1048, %v743, 0.0
    %3207 = vadd.xlane.f32.xlu0 %v3206
    %v3208 = vpop.xlane.xlu0 %3207
    %v3209 = vsel %vm1048, %v744, 0.0
    %3210 = vadd.xlane.f32.xlu0 %v3209
    %v3211 = vpop.xlane.xlu0 %3210
    %v3212 = vsel %vm1048, %v745, 0.0
    %3213 = vadd.xlane.f32.xlu0 %v3212
    %v3214 = vpop.xlane.xlu0 %3213
    %v3215 = vsel %vm1048, %v746, 0.0
    %3216 = vadd.xlane.f32.xlu0 %v3215
    %v3217 = vpop.xlane.xlu0 %3216
    %v3218 = vsel %vm1048, %v747, 0.0
    %3219 = vadd.xlane.f32.xlu0 %v3218
    %v3220 = vpop.xlane.xlu0 %3219
    %v3221 = vsel %vm1048, %v748, 0.0
    %3222 = vadd.xlane.f32.xlu0 %v3221
    %v3223 = vpop.xlane.xlu0 %3222
    %v3224 = vsel %vm1048, %v749, 0.0
    %3225 = vadd.xlane.f32.xlu0 %v3224
    %v3226 = vpop.xlane.xlu0 %3225
    %v3227 = vsel %vm1048, %v750, 0.0
    %3228 = vadd.xlane.f32.xlu0 %v3227
    %v3229 = vpop.xlane.xlu0 %3228
    %v3230 = vsel %vm1048, %v751, 0.0
    %3231 = vadd.xlane.f32.xlu0 %v3230
    %v3232 = vpop.xlane.xlu0 %3231
    %v3233 = vsel %vm1048, %v752, 0.0
    %3234 = vadd.xlane.f32.xlu0 %v3233
    %v3235 = vpop.xlane.xlu0 %3234
    %v3236 = vsel %vm1048, %v753, 0.0
    %3237 = vadd.xlane.f32.xlu0 %v3236
    %v3238 = vpop.xlane.xlu0 %3237
    %v3239 = vsel %vm1048, %v754, 0.0
    %3240 = vadd.xlane.f32.xlu0 %v3239
    %v3241 = vpop.xlane.xlu0 %3240
    %v3242 = vsel %vm1048, %v755, 0.0
    %3243 = vadd.xlane.f32.xlu0 %v3242
    %v3244 = vpop.xlane.xlu0 %3243
    %v3245 = vsel %vm1048, %v756, 0.0
    %3246 = vadd.xlane.f32.xlu0 %v3245
    %v3247 = vpop.xlane.xlu0 %3246
    %v3248 = vsel %vm1048, %v757, 0.0
    %3249 = vadd.xlane.f32.xlu0 %v3248
    %v3250 = vpop.xlane.xlu0 %3249
    %v3251 = vsel %vm1048, %v758, 0.0
    %3252 = vadd.xlane.f32.xlu0 %v3251
    %v3253 = vpop.xlane.xlu0 %3252
    %v3254 = vsel %vm1048, %v759, 0.0
    %3255 = vadd.xlane.f32.xlu0 %v3254
    %v3256 = vpop.xlane.xlu0 %3255
    %v3257 = vsel %vm1048, %v760, 0.0
    %3258 = vadd.xlane.f32.xlu0 %v3257
    %v3259 = vpop.xlane.xlu0 %3258
    %v3260 = vsel %vm1048, %v761, 0.0
    %3261 = vadd.xlane.f32.xlu0 %v3260
    %v3262 = vpop.xlane.xlu0 %3261
    %v3263 = vsel %vm1048, %v762, 0.0
    %3264 = vadd.xlane.f32.xlu0 %v3263
    %v3265 = vpop.xlane.xlu0 %3264
    %v3266 = vsel %vm1048, %v763, 0.0
    %3267 = vadd.xlane.f32.xlu0 %v3266
    %v3268 = vpop.xlane.xlu0 %3267
    %v3269 = vsel %vm1048, %v764, 0.0
    %3270 = vadd.xlane.f32.xlu0 %v3269
    %v3271 = vpop.xlane.xlu0 %3270
    %v3272 = vsel %vm1048, %v765, 0.0
    %3273 = vadd.xlane.f32.xlu0 %v3272
    %v3274 = vpop.xlane.xlu0 %3273
    %v3275 = vsel %vm1048, %v766, 0.0
    %3276 = vadd.xlane.f32.xlu0 %v3275
    %v3277 = vpop.xlane.xlu0 %3276
    %v3278 = vsel %vm1048, %v767, 0.0
    %3279 = vadd.xlane.f32.xlu0 %v3278
    %v3280 = vpop.xlane.xlu0 %3279
    %v3281 = vsel %vm1048, %v768, 0.0
    %3282 = vadd.xlane.f32.xlu0 %v3281
    %v3283 = vpop.xlane.xlu0 %3282
    %v3284 = vsel %vm1048, %v769, 0.0
    %3285 = vadd.xlane.f32.xlu0 %v3284
    %v3286 = vpop.xlane.xlu0 %3285
    %v3287 = vsel %vm1048, %v770, 0.0
    %3288 = vadd.xlane.f32.xlu0 %v3287
    %v3289 = vpop.xlane.xlu0 %3288
    %v3290 = vsel %vm1048, %v771, 0.0
    %3291 = vadd.xlane.f32.xlu0 %v3290
    %v3292 = vpop.xlane.xlu0 %3291
    %v3293 = vsel %vm1048, %v772, 0.0
    %3294 = vadd.xlane.f32.xlu0 %v3293
    %v3295 = vpop.xlane.xlu0 %3294
    %v3296 = vsel %vm1048, %v773, 0.0
    %3297 = vadd.xlane.f32.xlu0 %v3296
    %v3298 = vpop.xlane.xlu0 %3297
    %v3299 = vsel %vm1048, %v774, 0.0
    %3300 = vadd.xlane.f32.xlu0 %v3299
    %v3301 = vpop.xlane.xlu0 %3300
    %v3302 = vsel %vm1048, %v775, 0.0
    %3303 = vadd.xlane.f32.xlu0 %v3302
    %v3304 = vpop.xlane.xlu0 %3303
    %v3305 = vsel %vm1048, %v776, 0.0
    %3306 = vadd.xlane.f32.xlu0 %v3305
    %v3307 = vpop.xlane.xlu0 %3306
    %v3308 = vsel %vm1048, %v777, 0.0
    %3309 = vadd.xlane.f32.xlu0 %v3308
    %v3310 = vpop.xlane.xlu0 %3309
    %v3311 = vsel %vm1048, %v778, 0.0
    %3312 = vadd.xlane.f32.xlu0 %v3311
    %v3313 = vpop.xlane.xlu0 %3312
    %v3314 = vsel %vm1048, %v779, 0.0
    %3315 = vadd.xlane.f32.xlu0 %v3314
    %v3316 = vpop.xlane.xlu0 %3315
    %v3317 = vsel %vm1048, %v780, 0.0
    %3318 = vadd.xlane.f32.xlu0 %v3317
    %v3319 = vpop.xlane.xlu0 %3318
    %v3320 = vsel %vm1048, %v781, 0.0
    %3321 = vadd.xlane.f32.xlu0 %v3320
    %v3322 = vpop.xlane.xlu0 %3321
    %v3323 = vsel %vm1048, %v782, 0.0
    %3324 = vadd.xlane.f32.xlu0 %v3323
    %v3325 = vpop.xlane.xlu0 %3324
    %v3326 = vsel %vm1048, %v783, 0.0
    %3327 = vadd.xlane.f32.xlu0 %v3326
    %v3328 = vpop.xlane.xlu0 %3327
    %v3329 = vsel %vm1048, %v784, 0.0
    %3330 = vadd.xlane.f32.xlu0 %v3329
    %v3331 = vpop.xlane.xlu0 %3330
    %v3332 = vsel %vm1048, %v785, 0.0
    %3333 = vadd.xlane.f32.xlu0 %v3332
    %v3334 = vpop.xlane.xlu0 %3333
    %v3335 = vsel %vm1048, %v786, 0.0
    %3336 = vadd.xlane.f32.xlu0 %v3335
    %v3337 = vpop.xlane.xlu0 %3336
    %v3338 = vsel %vm1048, %v787, 0.0
    %3339 = vadd.xlane.f32.xlu0 %v3338
    %v3340 = vpop.xlane.xlu0 %3339
    %v3341 = vsel %vm1048, %v788, 0.0
    %3342 = vadd.xlane.f32.xlu0 %v3341
    %v3343 = vpop.xlane.xlu0 %3342
    %v3344 = vsel %vm1048, %v789, 0.0
    %3345 = vadd.xlane.f32.xlu0 %v3344
    %v3346 = vpop.xlane.xlu0 %3345
    %v3347 = vsel %vm1048, %v790, 0.0
    %3348 = vadd.xlane.f32.xlu0 %v3347
    %v3349 = vpop.xlane.xlu0 %3348
    %v3350 = vsel %vm1048, %v791, 0.0
    %3351 = vadd.xlane.f32.xlu0 %v3350
    %v3352 = vpop.xlane.xlu0 %3351
    %v3353 = vsel %vm1048, %v792, 0.0
    %3354 = vadd.xlane.f32.xlu0 %v3353
    %v3355 = vpop.xlane.xlu0 %3354
    %v3356 = vsel %vm1048, %v793, 0.0
    %3357 = vadd.xlane.f32.xlu0 %v3356
    %v3358 = vpop.xlane.xlu0 %3357
    %v3359 = vsel %vm1048, %v794, 0.0
    %3360 = vadd.xlane.f32.xlu0 %v3359
    %v3361 = vpop.xlane.xlu0 %3360
    %v3362 = vsel %vm1048, %v795, 0.0
    %3363 = vadd.xlane.f32.xlu0 %v3362
    %v3364 = vpop.xlane.xlu0 %3363
    %v3365 = vsel %vm1048, %v796, 0.0
    %3366 = vadd.xlane.f32.xlu0 %v3365
    %v3367 = vpop.xlane.xlu0 %3366
    %v3368 = vsel %vm1048, %v797, 0.0
    %3369 = vadd.xlane.f32.xlu0 %v3368
    %v3370 = vpop.xlane.xlu0 %3369
    %v3371 = vsel %vm1048, %v798, 0.0
    %3372 = vadd.xlane.f32.xlu0 %v3371
    %v3373 = vpop.xlane.xlu0 %3372
    %v3374 = vsel %vm1048, %v799, 0.0
    %3375 = vadd.xlane.f32.xlu0 %v3374
    %v3376 = vpop.xlane.xlu0 %3375
    %v3377 = vsel %vm1048, %v800, 0.0
    %3378 = vadd.xlane.f32.xlu0 %v3377
    %v3379 = vpop.xlane.xlu0 %3378
    %v3380 = vsel %vm1048, %v801, 0.0
    %3381 = vadd.xlane.f32.xlu0 %v3380
    %v3382 = vpop.xlane.xlu0 %3381
    %v3383 = vsel %vm1048, %v802, 0.0
    %3384 = vadd.xlane.f32.xlu0 %v3383
    %v3385 = vpop.xlane.xlu0 %3384
    %v3386 = vsel %vm1048, %v803, 0.0
    %3387 = vadd.xlane.f32.xlu0 %v3386
    %v3388 = vpop.xlane.xlu0 %3387
    %v3389 = vsel %vm1048, %v804, 0.0
    %3390 = vadd.xlane.f32.xlu0 %v3389
    %v3391 = vpop.xlane.xlu0 %3390
    %v3392 = vsel %vm1048, %v805, 0.0
    %3393 = vadd.xlane.f32.xlu0 %v3392
    %v3394 = vpop.xlane.xlu0 %3393
    %v3395 = vsel %vm1048, %v806, 0.0
    %3396 = vadd.xlane.f32.xlu0 %v3395
    %v3397 = vpop.xlane.xlu0 %3396
    %v3398 = vsel %vm1048, %v807, 0.0
    %3399 = vadd.xlane.f32.xlu0 %v3398
    %v3400 = vpop.xlane.xlu0 %3399
    %v3401 = vsel %vm1048, %v808, 0.0
    %3402 = vadd.xlane.f32.xlu0 %v3401
    %v3403 = vpop.xlane.xlu0 %3402
    %v3404 = vsel %vm1048, %v809, 0.0
    %3405 = vadd.xlane.f32.xlu0 %v3404
    %v3406 = vpop.xlane.xlu0 %3405
    %v3407 = vsel %vm1048, %v810, 0.0
    %3408 = vadd.xlane.f32.xlu0 %v3407
    %v3409 = vpop.xlane.xlu0 %3408
    %v3410 = vsel %vm1048, %v811, 0.0
    %3411 = vadd.xlane.f32.xlu0 %v3410
    %v3412 = vpop.xlane.xlu0 %3411
    %v3413 = vsel %vm1048, %v812, 0.0
    %3414 = vadd.xlane.f32.xlu0 %v3413
    %v3415 = vpop.xlane.xlu0 %3414
    %v3416 = vsel %vm1048, %v813, 0.0
    %3417 = vadd.xlane.f32.xlu0 %v3416
    %v3418 = vpop.xlane.xlu0 %3417
    %v3419 = vsel %vm1048, %v814, 0.0
    %3420 = vadd.xlane.f32.xlu0 %v3419
    %v3421 = vpop.xlane.xlu0 %3420
    %v3422 = vsel %vm1048, %v815, 0.0
    %3423 = vadd.xlane.f32.xlu0 %v3422
    %v3424 = vpop.xlane.xlu0 %3423
    %v3425 = vsel %vm1048, %v816, 0.0
    %3426 = vadd.xlane.f32.xlu0 %v3425
    %v3427 = vpop.xlane.xlu0 %3426
    %v3428 = vsel %vm1048, %v817, 0.0
    %3429 = vadd.xlane.f32.xlu0 %v3428
    %v3430 = vpop.xlane.xlu0 %3429
    %v3431 = vsel %vm1048, %v818, 0.0
    %3432 = vadd.xlane.f32.xlu0 %v3431
    %v3433 = vpop.xlane.xlu0 %3432
    %v3434 = vsel %vm1048, %v819, 0.0
    %3435 = vadd.xlane.f32.xlu0 %v3434
    %v3436 = vpop.xlane.xlu0 %3435
    %v3437 = vsel %vm1048, %v820, 0.0
    %3438 = vadd.xlane.f32.xlu0 %v3437
    %v3439 = vpop.xlane.xlu0 %3438
    %v3440 = vsel %vm1048, %v821, 0.0
    %3441 = vadd.xlane.f32.xlu0 %v3440
    %v3442 = vpop.xlane.xlu0 %3441
    %v3443 = vsel %vm1048, %v822, 0.0
    %3444 = vadd.xlane.f32.xlu0 %v3443
    %v3445 = vpop.xlane.xlu0 %3444
    %v3446 = vsel %vm1048, %v823, 0.0
    %3447 = vadd.xlane.f32.xlu0 %v3446
    %v3448 = vpop.xlane.xlu0 %3447
    %v3449 = vsel %vm1048, %v824, 0.0
    %3450 = vadd.xlane.f32.xlu0 %v3449
    %v3451 = vpop.xlane.xlu0 %3450
    %v3452 = vsel %vm1048, %v825, 0.0
    %3453 = vadd.xlane.f32.xlu0 %v3452
    %v3454 = vpop.xlane.xlu0 %3453
    %v3455 = vsel %vm1048, %v826, 0.0
    %3456 = vadd.xlane.f32.xlu0 %v3455
    %v3457 = vpop.xlane.xlu0 %3456
    %v3458 = vsel %vm1048, %v827, 0.0
    %3459 = vadd.xlane.f32.xlu0 %v3458
    %v3460 = vpop.xlane.xlu0 %3459
    %v3461 = vsel %vm1048, %v828, 0.0
    %3462 = vadd.xlane.f32.xlu0 %v3461
    %v3463 = vpop.xlane.xlu0 %3462
    %v3464 = vsel %vm1048, %v829, 0.0
    %3465 = vadd.xlane.f32.xlu0 %v3464
    %v3466 = vpop.xlane.xlu0 %3465
    %v3467 = vsel %vm1048, %v830, 0.0
    %3468 = vadd.xlane.f32.xlu0 %v3467
    %v3469 = vpop.xlane.xlu0 %3468
    %v3470 = vsel %vm1048, %v831, 0.0
    %3471 = vadd.xlane.f32.xlu0 %v3470
    %v3472 = vpop.xlane.xlu0 %3471
    %v3473 = vsel %vm1048, %v832, 0.0
    %3474 = vadd.xlane.f32.xlu0 %v3473
    %v3475 = vpop.xlane.xlu0 %3474
    %v3476 = vsel %vm1048, %v833, 0.0
    %3477 = vadd.xlane.f32.xlu0 %v3476
    %v3478 = vpop.xlane.xlu0 %3477
    %v3479 = vsel %vm1048, %v834, 0.0
    %3480 = vadd.xlane.f32.xlu0 %v3479
    %v3481 = vpop.xlane.xlu0 %3480
    %v3482 = vsel %vm1048, %v835, 0.0
    %3483 = vadd.xlane.f32.xlu0 %v3482
    %v3484 = vpop.xlane.xlu0 %3483
    %v3485 = vsel %vm1048, %v836, 0.0
    %3486 = vadd.xlane.f32.xlu0 %v3485
    %v3487 = vpop.xlane.xlu0 %3486
    %v3488 = vsel %vm1048, %v837, 0.0
    %3489 = vadd.xlane.f32.xlu0 %v3488
    %v3490 = vpop.xlane.xlu0 %3489
    %v3491 = vsel %vm1048, %v838, 0.0
    %3492 = vadd.xlane.f32.xlu0 %v3491
    %v3493 = vpop.xlane.xlu0 %3492
    %v3494 = vsel %vm1048, %v839, 0.0
    %3495 = vadd.xlane.f32.xlu0 %v3494
    %v3496 = vpop.xlane.xlu0 %3495
    %v3497 = vsel %vm1048, %v840, 0.0
    %3498 = vadd.xlane.f32.xlu0 %v3497
    %v3499 = vpop.xlane.xlu0 %3498
    %v3500 = vsel %vm1048, %v841, 0.0
    %3501 = vadd.xlane.f32.xlu0 %v3500
    %v3502 = vpop.xlane.xlu0 %3501
    %v3503 = vsel %vm1048, %v842, 0.0
    %3504 = vadd.xlane.f32.xlu0 %v3503
    %v3505 = vpop.xlane.xlu0 %3504
    %v3506 = vsel %vm1048, %v843, 0.0
    %3507 = vadd.xlane.f32.xlu0 %v3506
    %v3508 = vpop.xlane.xlu0 %3507
    %v3509 = vsel %vm1048, %v844, 0.0
    %3510 = vadd.xlane.f32.xlu0 %v3509
    %v3511 = vpop.xlane.xlu0 %3510
    %v3512 = vsel %vm1048, %v845, 0.0
    %3513 = vadd.xlane.f32.xlu0 %v3512
    %v3514 = vpop.xlane.xlu0 %3513
    %v3515 = vsel %vm1048, %v846, 0.0
    %3516 = vadd.xlane.f32.xlu0 %v3515
    %v3517 = vpop.xlane.xlu0 %3516
    %v3518 = vsel %vm1048, %v847, 0.0
    %3519 = vadd.xlane.f32.xlu0 %v3518
    %v3520 = vpop.xlane.xlu0 %3519
    %v3521 = vsel %vm1048, %v848, 0.0
    %3522 = vadd.xlane.f32.xlu0 %v3521
    %v3523 = vpop.xlane.xlu0 %3522
    %v3524 = vsel %vm1048, %v849, 0.0
    %3525 = vadd.xlane.f32.xlu0 %v3524
    %v3526 = vpop.xlane.xlu0 %3525
    %v3527 = vsel %vm1048, %v850, 0.0
    %3528 = vadd.xlane.f32.xlu0 %v3527
    %v3529 = vpop.xlane.xlu0 %3528
    %v3530 = vsel %vm1048, %v851, 0.0
    %3531 = vadd.xlane.f32.xlu0 %v3530
    %v3532 = vpop.xlane.xlu0 %3531
    %v3533 = vsel %vm1048, %v852, 0.0
    %3534 = vadd.xlane.f32.xlu0 %v3533
    %v3535 = vpop.xlane.xlu0 %3534
    %v3536 = vsel %vm1048, %v853, 0.0
    %3537 = vadd.xlane.f32.xlu0 %v3536
    %v3538 = vpop.xlane.xlu0 %3537
    %v3539 = vsel %vm1048, %v854, 0.0
    %3540 = vadd.xlane.f32.xlu0 %v3539
    %v3541 = vpop.xlane.xlu0 %3540
    %v3542 = vsel %vm1048, %v855, 0.0
    %3543 = vadd.xlane.f32.xlu0 %v3542
    %v3544 = vpop.xlane.xlu0 %3543
    %v3545 = vsel %vm1048, %v856, 0.0
    %3546 = vadd.xlane.f32.xlu0 %v3545
    %v3547 = vpop.xlane.xlu0 %3546
    %v3548 = vsel %vm1048, %v857, 0.0
    %3549 = vadd.xlane.f32.xlu0 %v3548
    %v3550 = vpop.xlane.xlu0 %3549
    %v3551 = vsel %vm1048, %v858, 0.0
    %3552 = vadd.xlane.f32.xlu0 %v3551
    %v3553 = vpop.xlane.xlu0 %3552
    %v3554 = vsel %vm1048, %v859, 0.0
    %3555 = vadd.xlane.f32.xlu0 %v3554
    %v3556 = vpop.xlane.xlu0 %3555
    %v3557 = vsel %vm1048, %v860, 0.0
    %3558 = vadd.xlane.f32.xlu0 %v3557
    %v3559 = vpop.xlane.xlu0 %3558
    %v3560 = vsel %vm1048, %v861, 0.0
    %3561 = vadd.xlane.f32.xlu0 %v3560
    %v3562 = vpop.xlane.xlu0 %3561
    %v3563 = vsel %vm1048, %v862, 0.0
    %3564 = vadd.xlane.f32.xlu0 %v3563
    %v3565 = vpop.xlane.xlu0 %3564
    %v3566 = vsel %vm1048, %v863, 0.0
    %3567 = vadd.xlane.f32.xlu0 %v3566
    %v3568 = vpop.xlane.xlu0 %3567
    %v3569 = vsel %vm1048, %v864, 0.0
    %3570 = vadd.xlane.f32.xlu0 %v3569
    %v3571 = vpop.xlane.xlu0 %3570
    %v3572 = vsel %vm1048, %v865, 0.0
    %3573 = vadd.xlane.f32.xlu0 %v3572
    %v3574 = vpop.xlane.xlu0 %3573
    %v3575 = vsel %vm1048, %v866, 0.0
    %3576 = vadd.xlane.f32.xlu0 %v3575
    %v3577 = vpop.xlane.xlu0 %3576
    %v3578 = vsel %vm1048, %v867, 0.0
    %3579 = vadd.xlane.f32.xlu0 %v3578
    %v3580 = vpop.xlane.xlu0 %3579
    %v3581 = vsel %vm1048, %v868, 0.0
    %3582 = vadd.xlane.f32.xlu0 %v3581
    %v3583 = vpop.xlane.xlu0 %3582
    %v3584 = vsel %vm1048, %v869, 0.0
    %3585 = vadd.xlane.f32.xlu0 %v3584
    %v3586 = vpop.xlane.xlu0 %3585
    %v3587 = vsel %vm1048, %v870, 0.0
    %3588 = vadd.xlane.f32.xlu0 %v3587
    %v3589 = vpop.xlane.xlu0 %3588
    %v3590 = vsel %vm1048, %v871, 0.0
    %3591 = vadd.xlane.f32.xlu0 %v3590
    %v3592 = vpop.xlane.xlu0 %3591
    %v3593 = vsel %vm1048, %v872, 0.0
    %3594 = vadd.xlane.f32.xlu0 %v3593
    %v3595 = vpop.xlane.xlu0 %3594
    %v3596 = vsel %vm1048, %v873, 0.0
    %3597 = vadd.xlane.f32.xlu0 %v3596
    %v3598 = vpop.xlane.xlu0 %3597
    %v3599 = vsel %vm1048, %v874, 0.0
    %3600 = vadd.xlane.f32.xlu0 %v3599
    %v3601 = vpop.xlane.xlu0 %3600
    %v3602 = vsel %vm1048, %v875, 0.0
    %3603 = vadd.xlane.f32.xlu0 %v3602
    %v3604 = vpop.xlane.xlu0 %3603
    %v3605 = vsel %vm1048, %v876, 0.0
    %3606 = vadd.xlane.f32.xlu0 %v3605
    %v3607 = vpop.xlane.xlu0 %3606
    %v3608 = vsel %vm1048, %v877, 0.0
    %3609 = vadd.xlane.f32.xlu0 %v3608
    %v3610 = vpop.xlane.xlu0 %3609
    %v3611 = vsel %vm1048, %v878, 0.0
    %3612 = vadd.xlane.f32.xlu0 %v3611
    %v3613 = vpop.xlane.xlu0 %3612
    %v3614 = vsel %vm1048, %v879, 0.0
    %3615 = vadd.xlane.f32.xlu0 %v3614
    %v3616 = vpop.xlane.xlu0 %3615
    %v3617 = vsel %vm1048, %v880, 0.0
    %3618 = vadd.xlane.f32.xlu0 %v3617
    %v3619 = vpop.xlane.xlu0 %3618
    %v3620 = vsel %vm1048, %v881, 0.0
    %3621 = vadd.xlane.f32.xlu0 %v3620
    %v3622 = vpop.xlane.xlu0 %3621
    %v3623 = vsel %vm1048, %v882, 0.0
    %3624 = vadd.xlane.f32.xlu0 %v3623
    %v3625 = vpop.xlane.xlu0 %3624
    %v3626 = vsel %vm1048, %v883, 0.0
    %3627 = vadd.xlane.f32.xlu0 %v3626
    %v3628 = vpop.xlane.xlu0 %3627
    %v3629 = vsel %vm1048, %v884, 0.0
    %3630 = vadd.xlane.f32.xlu0 %v3629
    %v3631 = vpop.xlane.xlu0 %3630
    %v3632 = vsel %vm1048, %v885, 0.0
    %3633 = vadd.xlane.f32.xlu0 %v3632
    %v3634 = vpop.xlane.xlu0 %3633
    %v3635 = vsel %vm1048, %v886, 0.0
    %3636 = vadd.xlane.f32.xlu0 %v3635
    %v3637 = vpop.xlane.xlu0 %3636
    %v3638 = vsel %vm1048, %v887, 0.0
    %3639 = vadd.xlane.f32.xlu0 %v3638
    %v3640 = vpop.xlane.xlu0 %3639
    %v3641 = vsel %vm1048, %v888, 0.0
    %3642 = vadd.xlane.f32.xlu0 %v3641
    %v3643 = vpop.xlane.xlu0 %3642
    %v3644 = vsel %vm1048, %v889, 0.0
    %3645 = vadd.xlane.f32.xlu0 %v3644
    %v3646 = vpop.xlane.xlu0 %3645
    %v3647 = vsel %vm1048, %v890, 0.0
    %3648 = vadd.xlane.f32.xlu0 %v3647
    %v3649 = vpop.xlane.xlu0 %3648
    %v3650 = vsel %vm1048, %v891, 0.0
    %3651 = vadd.xlane.f32.xlu0 %v3650
    %v3652 = vpop.xlane.xlu0 %3651
    %v3653 = vsel %vm1048, %v892, 0.0
    %3654 = vadd.xlane.f32.xlu0 %v3653
    %v3655 = vpop.xlane.xlu0 %3654
    %v3656 = vsel %vm1048, %v893, 0.0
    %3657 = vadd.xlane.f32.xlu0 %v3656
    %v3658 = vpop.xlane.xlu0 %3657
    %v3659 = vsel %vm1048, %v894, 0.0
    %3660 = vadd.xlane.f32.xlu0 %v3659
    %v3661 = vpop.xlane.xlu0 %3660
    %v3662 = vsel %vm1048, %v895, 0.0
    %3663 = vadd.xlane.f32.xlu0 %v3662
    %v3664 = vpop.xlane.xlu0 %3663
    %v3665 = vsel %vm1048, %v896, 0.0
    %3666 = vadd.xlane.f32.xlu0 %v3665
    %v3667 = vpop.xlane.xlu0 %3666
    %v3668 = vsel %vm1048, %v897, 0.0
    %3669 = vadd.xlane.f32.xlu0 %v3668
    %v3670 = vpop.xlane.xlu0 %3669
    %v3671 = vsel %vm1048, %v898, 0.0
    %3672 = vadd.xlane.f32.xlu0 %v3671
    %v3673 = vpop.xlane.xlu0 %3672
    %v3674 = vsel %vm1048, %v899, 0.0
    %3675 = vadd.xlane.f32.xlu0 %v3674
    %v3676 = vpop.xlane.xlu0 %3675
    %v3677 = vsel %vm1048, %v900, 0.0
    %3678 = vadd.xlane.f32.xlu0 %v3677
    %v3679 = vpop.xlane.xlu0 %3678
    %v3680 = vsel %vm1048, %v901, 0.0
    %3681 = vadd.xlane.f32.xlu0 %v3680
    %v3682 = vpop.xlane.xlu0 %3681
    %v3683 = vsel %vm1048, %v902, 0.0
    %3684 = vadd.xlane.f32.xlu0 %v3683
    %v3685 = vpop.xlane.xlu0 %3684
    %v3686 = vsel %vm1048, %v903, 0.0
    %3687 = vadd.xlane.f32.xlu0 %v3686
    %v3688 = vpop.xlane.xlu0 %3687
    %v3689 = vsel %vm1048, %v904, 0.0
    %3690 = vadd.xlane.f32.xlu0 %v3689
    %v3691 = vpop.xlane.xlu0 %3690
    %v3692 = vsel %vm1048, %v905, 0.0
    %3693 = vadd.xlane.f32.xlu0 %v3692
    %v3694 = vpop.xlane.xlu0 %3693
    %v3695 = vsel %vm1048, %v906, 0.0
    %3696 = vadd.xlane.f32.xlu0 %v3695
    %v3697 = vpop.xlane.xlu0 %3696
    %v3698 = vsel %vm1048, %v907, 0.0
    %3699 = vadd.xlane.f32.xlu0 %v3698
    %v3700 = vpop.xlane.xlu0 %3699
    %v3701 = vsel %vm1048, %v908, 0.0
    %3702 = vadd.xlane.f32.xlu0 %v3701
    %v3703 = vpop.xlane.xlu0 %3702
    %v3704 = vsel %vm1048, %v909, 0.0
    %3705 = vadd.xlane.f32.xlu0 %v3704
    %v3706 = vpop.xlane.xlu0 %3705
    %v3707 = vsel %vm1048, %v910, 0.0
    %3708 = vadd.xlane.f32.xlu0 %v3707
    %v3709 = vpop.xlane.xlu0 %3708
    %v3710 = vsel %vm1048, %v911, 0.0
    %3711 = vadd.xlane.f32.xlu0 %v3710
    %v3712 = vpop.xlane.xlu0 %3711
    %v3713 = vsel %vm1048, %v912, 0.0
    %3714 = vadd.xlane.f32.xlu0 %v3713
    %v3715 = vpop.xlane.xlu0 %3714
    %v3716 = vsel %vm1048, %v913, 0.0
    %3717 = vadd.xlane.f32.xlu0 %v3716
    %v3718 = vpop.xlane.xlu0 %3717
    %v3719 = vsel %vm1048, %v914, 0.0
    %3720 = vadd.xlane.f32.xlu0 %v3719
    %v3721 = vpop.xlane.xlu0 %3720
    %v3722 = vsel %vm1048, %v915, 0.0
    %3723 = vadd.xlane.f32.xlu0 %v3722
    %v3724 = vpop.xlane.xlu0 %3723
    %v3725 = vsel %vm1048, %v916, 0.0
    %3726 = vadd.xlane.f32.xlu0 %v3725
    %v3727 = vpop.xlane.xlu0 %3726
    %v3728 = vsel %vm1048, %v917, 0.0
    %3729 = vadd.xlane.f32.xlu0 %v3728
    %v3730 = vpop.xlane.xlu0 %3729
    %v3731 = vsel %vm1048, %v918, 0.0
    %3732 = vadd.xlane.f32.xlu0 %v3731
    %v3733 = vpop.xlane.xlu0 %3732
    %v3734 = vsel %vm1048, %v919, 0.0
    %3735 = vadd.xlane.f32.xlu0 %v3734
    %v3736 = vpop.xlane.xlu0 %3735
    %v3737 = vsel %vm1048, %v920, 0.0
    %3738 = vadd.xlane.f32.xlu0 %v3737
    %v3739 = vpop.xlane.xlu0 %3738
    %v3740 = vsel %vm1048, %v921, 0.0
    %3741 = vadd.xlane.f32.xlu0 %v3740
    %v3742 = vpop.xlane.xlu0 %3741
    %v3743 = vsel %vm1048, %v922, 0.0
    %3744 = vadd.xlane.f32.xlu0 %v3743
    %v3745 = vpop.xlane.xlu0 %3744
    %v3746 = vsel %vm1048, %v923, 0.0
    %3747 = vadd.xlane.f32.xlu0 %v3746
    %v3748 = vpop.xlane.xlu0 %3747
    %v3749 = vsel %vm1048, %v924, 0.0
    %3750 = vadd.xlane.f32.xlu0 %v3749
    %v3751 = vpop.xlane.xlu0 %3750
    %v3752 = vsel %vm1048, %v925, 0.0
    %3753 = vadd.xlane.f32.xlu0 %v3752
    %v3754 = vpop.xlane.xlu0 %3753
    %v3755 = vsel %vm1048, %v926, 0.0
    %3756 = vadd.xlane.f32.xlu0 %v3755
    %v3757 = vpop.xlane.xlu0 %3756
    %v3758 = vsel %vm1048, %v927, 0.0
    %3759 = vadd.xlane.f32.xlu0 %v3758
    %v3760 = vpop.xlane.xlu0 %3759
    %v3761 = vsel %vm1048, %v928, 0.0
    %3762 = vadd.xlane.f32.xlu0 %v3761
    %v3763 = vpop.xlane.xlu0 %3762
    %v3764 = vsel %vm1048, %v929, 0.0
    %3765 = vadd.xlane.f32.xlu0 %v3764
    %v3766 = vpop.xlane.xlu0 %3765
    %v3767 = vsel %vm1048, %v930, 0.0
    %3768 = vadd.xlane.f32.xlu0 %v3767
    %v3769 = vpop.xlane.xlu0 %3768
    %v3770 = vsel %vm1048, %v931, 0.0
    %3771 = vadd.xlane.f32.xlu0 %v3770
    %v3772 = vpop.xlane.xlu0 %3771
    %v3773 = vsel %vm1048, %v932, 0.0
    %3774 = vadd.xlane.f32.xlu0 %v3773
    %v3775 = vpop.xlane.xlu0 %3774
    %v3776 = vsel %vm1048, %v933, 0.0
    %3777 = vadd.xlane.f32.xlu0 %v3776
    %v3778 = vpop.xlane.xlu0 %3777
    %v3779 = vsel %vm1048, %v934, 0.0
    %3780 = vadd.xlane.f32.xlu0 %v3779
    %v3781 = vpop.xlane.xlu0 %3780
    %v3782 = vsel %vm1048, %v935, 0.0
    %3783 = vadd.xlane.f32.xlu0 %v3782
    %v3784 = vpop.xlane.xlu0 %3783
    %v3785 = vsel %vm1048, %v936, 0.0
    %3786 = vadd.xlane.f32.xlu0 %v3785
    %v3787 = vpop.xlane.xlu0 %3786
    %v3788 = vsel %vm1048, %v937, 0.0
    %3789 = vadd.xlane.f32.xlu0 %v3788
    %v3790 = vpop.xlane.xlu0 %3789
    %v3791 = vsel %vm1048, %v938, 0.0
    %3792 = vadd.xlane.f32.xlu0 %v3791
    %v3793 = vpop.xlane.xlu0 %3792
    %v3794 = vsel %vm1048, %v939, 0.0
    %3795 = vadd.xlane.f32.xlu0 %v3794
    %v3796 = vpop.xlane.xlu0 %3795
    %v3797 = vsel %vm1048, %v940, 0.0
    %3798 = vadd.xlane.f32.xlu0 %v3797
    %v3799 = vpop.xlane.xlu0 %3798
    %v3800 = vsel %vm1048, %v941, 0.0
    %3801 = vadd.xlane.f32.xlu0 %v3800
    %v3802 = vpop.xlane.xlu0 %3801
    %v3803 = vsel %vm1048, %v942, 0.0
    %3804 = vadd.xlane.f32.xlu0 %v3803
    %v3805 = vpop.xlane.xlu0 %3804
    %v3806 = vsel %vm1048, %v943, 0.0
    %3807 = vadd.xlane.f32.xlu0 %v3806
    %v3808 = vpop.xlane.xlu0 %3807
    %v3809 = vsel %vm1048, %v944, 0.0
    %3810 = vadd.xlane.f32.xlu0 %v3809
    %v3811 = vpop.xlane.xlu0 %3810
    %v3812 = vsel %vm1048, %v945, 0.0
    %3813 = vadd.xlane.f32.xlu0 %v3812
    %v3814 = vpop.xlane.xlu0 %3813
    %v3815 = vsel %vm1048, %v946, 0.0
    %3816 = vadd.xlane.f32.xlu0 %v3815
    %v3817 = vpop.xlane.xlu0 %3816
    %v3818 = vsel %vm1048, %v947, 0.0
    %3819 = vadd.xlane.f32.xlu0 %v3818
    %v3820 = vpop.xlane.xlu0 %3819
    %v3821 = vsel %vm1048, %v948, 0.0
    %3822 = vadd.xlane.f32.xlu0 %v3821
    %v3823 = vpop.xlane.xlu0 %3822
    %v3824 = vsel %vm1048, %v949, 0.0
    %3825 = vadd.xlane.f32.xlu0 %v3824
    %v3826 = vpop.xlane.xlu0 %3825
    %v3827 = vsel %vm1048, %v950, 0.0
    %3828 = vadd.xlane.f32.xlu0 %v3827
    %v3829 = vpop.xlane.xlu0 %3828
    %v3830 = vsel %vm1048, %v951, 0.0
    %3831 = vadd.xlane.f32.xlu0 %v3830
    %v3832 = vpop.xlane.xlu0 %3831
    %v3833 = vsel %vm1048, %v952, 0.0
    %3834 = vadd.xlane.f32.xlu0 %v3833
    %v3835 = vpop.xlane.xlu0 %3834
    %v3836 = vsel %vm1048, %v953, 0.0
    %3837 = vadd.xlane.f32.xlu0 %v3836
    %v3838 = vpop.xlane.xlu0 %3837
    %v3839 = vsel %vm1048, %v954, 0.0
    %3840 = vadd.xlane.f32.xlu0 %v3839
    %v3841 = vpop.xlane.xlu0 %3840
    %v3842 = vsel %vm1048, %v955, 0.0
    %3843 = vadd.xlane.f32.xlu0 %v3842
    %v3844 = vpop.xlane.xlu0 %3843
    %v3845 = vsel %vm1048, %v956, 0.0
    %3846 = vadd.xlane.f32.xlu0 %v3845
    %v3847 = vpop.xlane.xlu0 %3846
    %v3848 = vsel %vm1048, %v957, 0.0
    %3849 = vadd.xlane.f32.xlu0 %v3848
    %v3850 = vpop.xlane.xlu0 %3849
    %v3851 = vsel %vm1048, %v958, 0.0
    %3852 = vadd.xlane.f32.xlu0 %v3851
    %v3853 = vpop.xlane.xlu0 %3852
    %v3854 = vsel %vm1048, %v959, 0.0
    %3855 = vadd.xlane.f32.xlu0 %v3854
    %v3856 = vpop.xlane.xlu0 %3855
    %v3857 = vsel %vm1048, %v960, 0.0
    %3858 = vadd.xlane.f32.xlu0 %v3857
    %v3859 = vpop.xlane.xlu0 %3858
    %v3860 = vsel %vm1048, %v961, 0.0
    %3861 = vadd.xlane.f32.xlu0 %v3860
    %v3862 = vpop.xlane.xlu0 %3861
    %v3863 = vsel %vm1048, %v962, 0.0
    %3864 = vadd.xlane.f32.xlu0 %v3863
    %v3865 = vpop.xlane.xlu0 %3864
    %v3866 = vsel %vm1048, %v963, 0.0
    %3867 = vadd.xlane.f32.xlu0 %v3866
    %v3868 = vpop.xlane.xlu0 %3867
    %v3869 = vsel %vm1048, %v964, 0.0
    %3870 = vadd.xlane.f32.xlu0 %v3869
    %v3871 = vpop.xlane.xlu0 %3870
    %v3872 = vsel %vm1048, %v965, 0.0
    %3873 = vadd.xlane.f32.xlu0 %v3872
    %v3874 = vpop.xlane.xlu0 %3873
    %v3875 = vsel %vm1048, %v966, 0.0
    %3876 = vadd.xlane.f32.xlu0 %v3875
    %v3877 = vpop.xlane.xlu0 %3876
    %v3878 = vsel %vm1048, %v967, 0.0
    %3879 = vadd.xlane.f32.xlu0 %v3878
    %v3880 = vpop.xlane.xlu0 %3879
    %v3881 = vsel %vm1048, %v968, 0.0
    %3882 = vadd.xlane.f32.xlu0 %v3881
    %v3883 = vpop.xlane.xlu0 %3882
    %v3884 = vsel %vm1048, %v969, 0.0
    %3885 = vadd.xlane.f32.xlu0 %v3884
    %v3886 = vpop.xlane.xlu0 %3885
    %v3887 = vsel %vm1048, %v970, 0.0
    %3888 = vadd.xlane.f32.xlu0 %v3887
    %v3889 = vpop.xlane.xlu0 %3888
    %v3890 = vsel %vm1048, %v971, 0.0
    %3891 = vadd.xlane.f32.xlu0 %v3890
    %v3892 = vpop.xlane.xlu0 %3891
    %v3893 = vsel %vm1048, %v972, 0.0
    %3894 = vadd.xlane.f32.xlu0 %v3893
    %v3895 = vpop.xlane.xlu0 %3894
    %v3896 = vsel %vm1048, %v973, 0.0
    %3897 = vadd.xlane.f32.xlu0 %v3896
    %v3898 = vpop.xlane.xlu0 %3897
    %v3899 = vsel %vm1048, %v974, 0.0
    %3900 = vadd.xlane.f32.xlu0 %v3899
    %v3901 = vpop.xlane.xlu0 %3900
    %v3902 = vsel %vm1048, %v975, 0.0
    %3903 = vadd.xlane.f32.xlu0 %v3902
    %v3904 = vpop.xlane.xlu0 %3903
    %v3905 = vsel %vm1048, %v976, 0.0
    %3906 = vadd.xlane.f32.xlu0 %v3905
    %v3907 = vpop.xlane.xlu0 %3906
    %v3908 = vsel %vm1048, %v977, 0.0
    %3909 = vadd.xlane.f32.xlu0 %v3908
    %v3910 = vpop.xlane.xlu0 %3909
    %v3911 = vsel %vm1048, %v978, 0.0
    %3912 = vadd.xlane.f32.xlu0 %v3911
    %v3913 = vpop.xlane.xlu0 %3912
    %v3914 = vsel %vm1048, %v979, 0.0
    %3915 = vadd.xlane.f32.xlu0 %v3914
    %v3916 = vpop.xlane.xlu0 %3915
    %v3917 = vsel %vm1048, %v980, 0.0
    %3918 = vadd.xlane.f32.xlu0 %v3917
    %v3919 = vpop.xlane.xlu0 %3918
    %v3920 = vsel %vm1048, %v981, 0.0
    %3921 = vadd.xlane.f32.xlu0 %v3920
    %v3922 = vpop.xlane.xlu0 %3921
    %v3923 = vsel %vm1048, %v982, 0.0
    %3924 = vadd.xlane.f32.xlu0 %v3923
    %v3925 = vpop.xlane.xlu0 %3924
    %v3926 = vsel %vm1048, %v983, 0.0
    %3927 = vadd.xlane.f32.xlu0 %v3926
    %v3928 = vpop.xlane.xlu0 %3927
    %v3929 = vsel %vm1048, %v984, 0.0
    %3930 = vadd.xlane.f32.xlu0 %v3929
    %v3931 = vpop.xlane.xlu0 %3930
    %v3932 = vsel %vm1048, %v985, 0.0
    %3933 = vadd.xlane.f32.xlu0 %v3932
    %v3934 = vpop.xlane.xlu0 %3933
    %v3935 = vsel %vm1048, %v986, 0.0
    %3936 = vadd.xlane.f32.xlu0 %v3935
    %v3937 = vpop.xlane.xlu0 %3936
    %v3938 = vsel %vm1048, %v987, 0.0
    %3939 = vadd.xlane.f32.xlu0 %v3938
    %v3940 = vpop.xlane.xlu0 %3939
    %v3941 = vsel %vm1048, %v988, 0.0
    %3942 = vadd.xlane.f32.xlu0 %v3941
    %v3943 = vpop.xlane.xlu0 %3942
    %v3944 = vsel %vm1048, %v989, 0.0
    %3945 = vadd.xlane.f32.xlu0 %v3944
    %v3946 = vpop.xlane.xlu0 %3945
    %v3947 = vsel %vm1048, %v990, 0.0
    %3948 = vadd.xlane.f32.xlu0 %v3947
    %v3949 = vpop.xlane.xlu0 %3948
    %v3950 = vsel %vm1048, %v991, 0.0
    %3951 = vadd.xlane.f32.xlu0 %v3950
    %v3952 = vpop.xlane.xlu0 %3951
    %v3953 = vsel %vm1048, %v992, 0.0
    %3954 = vadd.xlane.f32.xlu0 %v3953
    %v3955 = vpop.xlane.xlu0 %3954
    %v3956 = vsel %vm1048, %v993, 0.0
    %3957 = vadd.xlane.f32.xlu0 %v3956
    %v3958 = vpop.xlane.xlu0 %3957
    %v3959 = vsel %vm1048, %v994, 0.0
    %3960 = vadd.xlane.f32.xlu0 %v3959
    %v3961 = vpop.xlane.xlu0 %3960
    %v3962 = vsel %vm1048, %v995, 0.0
    %3963 = vadd.xlane.f32.xlu0 %v3962
    %v3964 = vpop.xlane.xlu0 %3963
    %v3965 = vsel %vm1048, %v996, 0.0
    %3966 = vadd.xlane.f32.xlu0 %v3965
    %v3967 = vpop.xlane.xlu0 %3966
    %v3968 = vsel %vm1048, %v997, 0.0
    %3969 = vadd.xlane.f32.xlu0 %v3968
    %v3970 = vpop.xlane.xlu0 %3969
    %v3971 = vsel %vm1048, %v998, 0.0
    %3972 = vadd.xlane.f32.xlu0 %v3971
    %v3973 = vpop.xlane.xlu0 %3972
    %v3974 = vsel %vm1048, %v999, 0.0
    %3975 = vadd.xlane.f32.xlu0 %v3974
    %v3976 = vpop.xlane.xlu0 %3975
    %v3977 = vsel %vm1048, %v1000, 0.0
    %3978 = vadd.xlane.f32.xlu0 %v3977
    %v3979 = vpop.xlane.xlu0 %3978
    %v3980 = vsel %vm1048, %v1001, 0.0
    %3981 = vadd.xlane.f32.xlu0 %v3980
    %v3982 = vpop.xlane.xlu0 %3981
    %v3983 = vsel %vm1048, %v1002, 0.0
    %3984 = vadd.xlane.f32.xlu0 %v3983
    %v3985 = vpop.xlane.xlu0 %3984
    %v3986 = vsel %vm1048, %v1003, 0.0
    %3987 = vadd.xlane.f32.xlu0 %v3986
    %v3988 = vpop.xlane.xlu0 %3987
    %v3989 = vsel %vm1048, %v1004, 0.0
    %3990 = vadd.xlane.f32.xlu0 %v3989
    %v3991 = vpop.xlane.xlu0 %3990
    %v3992 = vsel %vm1048, %v1005, 0.0
    %3993 = vadd.xlane.f32.xlu0 %v3992
    %v3994 = vpop.xlane.xlu0 %3993
    %v3995 = vsel %vm1048, %v1006, 0.0
    %3996 = vadd.xlane.f32.xlu0 %v3995
    %v3997 = vpop.xlane.xlu0 %3996
    %v3998 = vsel %vm1048, %v1007, 0.0
    %3999 = vadd.xlane.f32.xlu0 %v3998
    %v4000 = vpop.xlane.xlu0 %3999
    %v4001 = vsel %vm1048, %v1008, 0.0
    %4002 = vadd.xlane.f32.xlu0 %v4001
    %v4003 = vpop.xlane.xlu0 %4002
    %v4004 = vsel %vm1048, %v1009, 0.0
    %4005 = vadd.xlane.f32.xlu0 %v4004
    %v4006 = vpop.xlane.xlu0 %4005
    %v4007 = vsel %vm1048, %v1010, 0.0
    %4008 = vadd.xlane.f32.xlu0 %v4007
    %v4009 = vpop.xlane.xlu0 %4008
    %v4010 = vsel %vm1048, %v1011, 0.0
    %4011 = vadd.xlane.f32.xlu0 %v4010
    %v4012 = vpop.xlane.xlu0 %4011
    %v4013 = vsel %vm1048, %v1012, 0.0
    %4014 = vadd.xlane.f32.xlu0 %v4013
    %v4015 = vpop.xlane.xlu0 %4014
    %v4016 = vsel %vm1048, %v1013, 0.0
    %4017 = vadd.xlane.f32.xlu0 %v4016
    %v4018 = vpop.xlane.xlu0 %4017
    %v4019 = vsel %vm1048, %v1014, 0.0
    %4020 = vadd.xlane.f32.xlu0 %v4019
    %v4021 = vpop.xlane.xlu0 %4020
    %v4022 = vsel %vm1048, %v1015, 0.0
    %4023 = vadd.xlane.f32.xlu0 %v4022
    %v4024 = vpop.xlane.xlu0 %4023
    %v4025 = vsel %vm1048, %v1016, 0.0
    %4026 = vadd.xlane.f32.xlu0 %v4025
    %v4027 = vpop.xlane.xlu0 %4026
    %v4028 = vsel %vm1048, %v1017, 0.0
    %4029 = vadd.xlane.f32.xlu0 %v4028
    %v4030 = vpop.xlane.xlu0 %4029
    %v4031 = vsel %vm1048, %v1018, 0.0
    %4032 = vadd.xlane.f32.xlu0 %v4031
    %v4033 = vpop.xlane.xlu0 %4032
    %v4034 = vsel %vm1048, %v1019, 0.0
    %4035 = vadd.xlane.f32.xlu0 %v4034
    %v4036 = vpop.xlane.xlu0 %4035
    %v4037 = vsel %vm1048, %v1020, 0.0
    %4038 = vadd.xlane.f32.xlu0 %v4037
    %v4039 = vpop.xlane.xlu0 %4038
    %v4040 = vsel %vm1048, %v1021, 0.0
    %4041 = vadd.xlane.f32.xlu0 %v4040
    %v4042 = vpop.xlane.xlu0 %4041
    %v4043 = vsel %vm1048, %v1022, 0.0
    %4044 = vadd.xlane.f32.xlu0 %v4043
    %v4045 = vpop.xlane.xlu0 %4044
    %v4046 = vsel %vm1048, %v1023, 0.0
    %4047 = vadd.xlane.f32.xlu0 %v4046
    %v4048 = vpop.xlane.xlu0 %4047
    %v4049 = vsel %vm1048, %v1024, 0.0
    %4050 = vadd.xlane.f32.xlu0 %v4049
    %v4051 = vpop.xlane.xlu0 %4050
    %v4052 = vsel %vm1048, %v1025, 0.0
    %4053 = vadd.xlane.f32.xlu0 %v4052
    %v4054 = vpop.xlane.xlu0 %4053
    %v4055 = vsel %vm1048, %v1026, 0.0
    %4056 = vadd.xlane.f32.xlu0 %v4055
    %v4057 = vpop.xlane.xlu0 %4056
    %v4058 = vsel %vm1048, %v1027, 0.0
    %4059 = vadd.xlane.f32.xlu0 %v4058
    %v4060 = vpop.xlane.xlu0 %4059
    %v4061 = vsel %vm1048, %v1028, 0.0
    %4062 = vadd.xlane.f32.xlu0 %v4061
    %v4063 = vpop.xlane.xlu0 %4062
    %v4064 = vsel %vm1048, %v1029, 0.0
    %4065 = vadd.xlane.f32.xlu0 %v4064
    %v4066 = vpop.xlane.xlu0 %4065
    %v4067 = vsel %vm1048, %v1030, 0.0
    %4068 = vadd.xlane.f32.xlu0 %v4067
    %v4069 = vpop.xlane.xlu0 %4068
    %v4070 = vsel %vm1048, %v1031, 0.0
    %4071 = vadd.xlane.f32.xlu0 %v4070
    %v4072 = vpop.xlane.xlu0 %4071
    %v4073 = vsel %vm1048, %v1032, 0.0
    %4074 = vadd.xlane.f32.xlu0 %v4073
    %v4075 = vpop.xlane.xlu0 %4074
    %v4076 = vsel %vm1048, %v1033, 0.0
    %4077 = vadd.xlane.f32.xlu0 %v4076
    %v4078 = vpop.xlane.xlu0 %4077
    %v4079 = vsel %vm1048, %v1034, 0.0
    %4080 = vadd.xlane.f32.xlu0 %v4079
    %v4081 = vpop.xlane.xlu0 %4080
    %v4082 = vsel %vm1048, %v1035, 0.0
    %4083 = vadd.xlane.f32.xlu0 %v4082
    %v4084 = vpop.xlane.xlu0 %4083
    %v4085 = vsel %vm1048, %v1036, 0.0
    %4086 = vadd.xlane.f32.xlu0 %v4085
    %v4087 = vpop.xlane.xlu0 %4086
    %v4088 = vsel %vm1048, %v1037, 0.0
    %4089 = vadd.xlane.f32.xlu0 %v4088
    %v4090 = vpop.xlane.xlu0 %4089
    %v4091 = vsel %vm1048, %v1038, 0.0
    %4092 = vadd.xlane.f32.xlu0 %v4091
    %v4093 = vpop.xlane.xlu0 %4092
    %v4094 = vsel %vm1048, %v1039, 0.0
    %4095 = vadd.xlane.f32.xlu0 %v4094
    %v4096 = vpop.xlane.xlu0 %4095
    %v4097 = vsel %vm1048, %v1040, 0.0
    %4098 = vadd.xlane.f32.xlu0 %v4097
    %v4099 = vpop.xlane.xlu0 %4098
    %v4100 = vsel %vm1048, %v1041, 0.0
    %4101 = vadd.xlane.f32.xlu0 %v4100
    %v4102 = vpop.xlane.xlu0 %4101
    %v4103 = vsel %vm1048, %v1042, 0.0
    %4104 = vadd.xlane.f32.xlu0 %v4103
    %v4105 = vpop.xlane.xlu0 %4104
    %v4106 = vsel %vm1048, %v1043, 0.0
    %4107 = vadd.xlane.f32.xlu0 %v4106
    %v4108 = vpop.xlane.xlu0 %4107
    %v4109 = vsel %vm1048, %v1044, 0.0
    %4110 = vadd.xlane.f32.xlu0 %v4109
    %v4111 = vpop.xlane.xlu0 %4110
    %v4112 = vsel %vm1048, %v1045, 0.0
    %4113 = vadd.xlane.f32.xlu0 %v4112
    %v4114 = vpop.xlane.xlu0 %4113
    %v4115 = vsel %vm1048, %v1046, 0.0
    %4116 = vadd.xlane.f32.xlu0 %v4115
    %v4117 = vpop.xlane.xlu0 %4116
    %v4118 = vsel %vm1048, %v1047, 0.0
    %4119 = vadd.xlane.f32.xlu0 %v4118
    %v4120 = vpop.xlane.xlu0 %4119
    %v4121 = vld [vmem:[%s1] sm:$0xff]
    %v4122 = vld [vmem:[%s1 + $0x8] sm:$0xff]
    %v4123 = vld [vmem:[%s1 + $0x10] sm:$0xff]
    %v4124 = vld [vmem:[%s1 + $0x18] sm:$0xff]
    %v4125 = vld [vmem:[%s1 + $0x20] sm:$0xff]
    %v4126 = vld [vmem:[%s1 + $0x28] sm:$0xff]
    %v4127 = vld [vmem:[%s1 + $0x30] sm:$0xff]
    %v4128 = vld [vmem:[%s1 + $0x38] sm:$0xff]
    %v4129 = vld [vmem:[%s1 + $0x40] sm:$0xff]
    %v4130 = vld [vmem:[%s1 + $0x48] sm:$0xff]
    %v4131 = vld [vmem:[%s1 + $0x50] sm:$0xff]
    %v4132 = vld [vmem:[%s1 + $0x58] sm:$0xff]
    %v4133 = vld [vmem:[%s1 + $0x60] sm:$0xff]
    %v4134 = vld [vmem:[%s1 + $0x68] sm:$0xff]
    %v4135 = vld [vmem:[%s1 + $0x70] sm:$0xff]
    %v4136 = vld [vmem:[%s1 + $0x78] sm:$0xff]
    %v4137 = vld [vmem:[%s1 + $0x80] sm:$0xff]
    %v4138 = vld [vmem:[%s1 + $0x88] sm:$0xff]
    %v4139 = vld [vmem:[%s1 + $0x90] sm:$0xff]
    %v4140 = vld [vmem:[%s1 + $0x98] sm:$0xff]
    %v4141 = vld [vmem:[%s1 + $0xa0] sm:$0xff]
    %v4142 = vld [vmem:[%s1 + $0xa8] sm:$0xff]
    %v4143 = vld [vmem:[%s1 + $0xb0] sm:$0xff]
    %v4144 = vld [vmem:[%s1 + $0xb8] sm:$0xff]
    %v4145 = vld [vmem:[%s1 + $0xc0] sm:$0xff]
    %v4146 = vld [vmem:[%s1 + $0xc8] sm:$0xff]
    %v4147 = vld [vmem:[%s1 + $0xd0] sm:$0xff]
    %v4148 = vld [vmem:[%s1 + $0xd8] sm:$0xff]
    %v4149 = vld [vmem:[%s1 + $0xe0] sm:$0xff]
    %v4150 = vld [vmem:[%s1 + $0xe8] sm:$0xff]
    %v4151 = vld [vmem:[%s1 + $0xf0] sm:$0xff]
    %v4152 = vld [vmem:[%s1 + $0xf8] sm:$0xff]
    %v4153 = vld [vmem:[%s1 + $0x100] sm:$0xff]
    %v4154 = vld [vmem:[%s1 + $0x108] sm:$0xff]
    %v4155 = vld [vmem:[%s1 + $0x110] sm:$0xff]
    %v4156 = vld [vmem:[%s1 + $0x118] sm:$0xff]
    %v4157 = vld [vmem:[%s1 + $0x120] sm:$0xff]
    %v4158 = vld [vmem:[%s1 + $0x128] sm:$0xff]
    %v4159 = vld [vmem:[%s1 + $0x130] sm:$0xff]
    %v4160 = vld [vmem:[%s1 + $0x138] sm:$0xff]
    %v4161 = vld [vmem:[%s1 + $0x140] sm:$0xff]
    %v4162 = vld [vmem:[%s1 + $0x148] sm:$0xff]
    %v4163 = vld [vmem:[%s1 + $0x150] sm:$0xff]
    %v4164 = vld [vmem:[%s1 + $0x158] sm:$0xff]
    %v4165 = vld [vmem:[%s1 + $0x160] sm:$0xff]
    %v4166 = vld [vmem:[%s1 + $0x168] sm:$0xff]
    %v4167 = vld [vmem:[%s1 + $0x170] sm:$0xff]
    %v4168 = vld [vmem:[%s1 + $0x178] sm:$0xff]
    %v4169 = vld [vmem:[%s1 + $0x180] sm:$0xff]
    %v4170 = vld [vmem:[%s1 + $0x188] sm:$0xff]
    %v4171 = vld [vmem:[%s1 + $0x190] sm:$0xff]
    %v4172 = vld [vmem:[%s1 + $0x198] sm:$0xff]
    %v4173 = vld [vmem:[%s1 + $0x1a0] sm:$0xff]
    %v4174 = vld [vmem:[%s1 + $0x1a8] sm:$0xff]
    %v4175 = vld [vmem:[%s1 + $0x1b0] sm:$0xff]
    %v4176 = vld [vmem:[%s1 + $0x1b8] sm:$0xff]
    %v4177 = vld [vmem:[%s1 + $0x1c0] sm:$0xff]
    %v4178 = vld [vmem:[%s1 + $0x1c8] sm:$0xff]
    %v4179 = vld [vmem:[%s1 + $0x1d0] sm:$0xff]
    %v4180 = vld [vmem:[%s1 + $0x1d8] sm:$0xff]
    %v4181 = vld [vmem:[%s1 + $0x1e0] sm:$0xff]
    %v4182 = vld [vmem:[%s1 + $0x1e8] sm:$0xff]
    %v4183 = vld [vmem:[%s1 + $0x1f0] sm:$0xff]
    %v4184 = vld [vmem:[%s1 + $0x1f8] sm:$0xff]
    %v4185 = vld [vmem:[%s1 + $0x200] sm:$0xff]
    %v4186 = vld [vmem:[%s1 + $0x208] sm:$0xff]
    %v4187 = vld [vmem:[%s1 + $0x210] sm:$0xff]
    %v4188 = vld [vmem:[%s1 + $0x218] sm:$0xff]
    %v4189 = vld [vmem:[%s1 + $0x220] sm:$0xff]
    %v4190 = vld [vmem:[%s1 + $0x228] sm:$0xff]
    %v4191 = vld [vmem:[%s1 + $0x230] sm:$0xff]
    %v4192 = vld [vmem:[%s1 + $0x238] sm:$0xff]
    %v4193 = vld [vmem:[%s1 + $0x240] sm:$0xff]
    %v4194 = vld [vmem:[%s1 + $0x248] sm:$0xff]
    %v4195 = vld [vmem:[%s1 + $0x250] sm:$0xff]
    %v4196 = vld [vmem:[%s1 + $0x258] sm:$0xff]
    %v4197 = vld [vmem:[%s1 + $0x260] sm:$0xff]
    %v4198 = vld [vmem:[%s1 + $0x268] sm:$0xff]
    %v4199 = vld [vmem:[%s1 + $0x270] sm:$0xff]
    %v4200 = vld [vmem:[%s1 + $0x278] sm:$0xff]
    %v4201 = vld [vmem:[%s1 + $0x280] sm:$0xff]
    %v4202 = vld [vmem:[%s1 + $0x288] sm:$0xff]
    %v4203 = vld [vmem:[%s1 + $0x290] sm:$0xff]
    %v4204 = vld [vmem:[%s1 + $0x298] sm:$0xff]
    %v4205 = vld [vmem:[%s1 + $0x2a0] sm:$0xff]
    %v4206 = vld [vmem:[%s1 + $0x2a8] sm:$0xff]
    %v4207 = vld [vmem:[%s1 + $0x2b0] sm:$0xff]
    %v4208 = vld [vmem:[%s1 + $0x2b8] sm:$0xff]
    %v4209 = vld [vmem:[%s1 + $0x2c0] sm:$0xff]
    %v4210 = vld [vmem:[%s1 + $0x2c8] sm:$0xff]
    %v4211 = vld [vmem:[%s1 + $0x2d0] sm:$0xff]
    %v4212 = vld [vmem:[%s1 + $0x2d8] sm:$0xff]
    %v4213 = vld [vmem:[%s1 + $0x2e0] sm:$0xff]
    %v4214 = vld [vmem:[%s1 + $0x2e8] sm:$0xff]
    %v4215 = vld [vmem:[%s1 + $0x2f0] sm:$0xff]
    %v4216 = vld [vmem:[%s1 + $0x2f8] sm:$0xff]
    %v4217 = vld [vmem:[%s1 + $0x300] sm:$0xff]
    %v4218 = vld [vmem:[%s1 + $0x308] sm:$0xff]
    %v4219 = vld [vmem:[%s1 + $0x310] sm:$0xff]
    %v4220 = vld [vmem:[%s1 + $0x318] sm:$0xff]
    %v4221 = vld [vmem:[%s1 + $0x320] sm:$0xff]
    %v4222 = vld [vmem:[%s1 + $0x328] sm:$0xff]
    %v4223 = vld [vmem:[%s1 + $0x330] sm:$0xff]
    %v4224 = vld [vmem:[%s1 + $0x338] sm:$0xff]
    %v4225 = vld [vmem:[%s1 + $0x340] sm:$0xff]
    %v4226 = vld [vmem:[%s1 + $0x348] sm:$0xff]
    %v4227 = vld [vmem:[%s1 + $0x350] sm:$0xff]
    %v4228 = vld [vmem:[%s1 + $0x358] sm:$0xff]
    %v4229 = vld [vmem:[%s1 + $0x360] sm:$0xff]
    %v4230 = vld [vmem:[%s1 + $0x368] sm:$0xff]
    %v4231 = vld [vmem:[%s1 + $0x370] sm:$0xff]
    %v4232 = vld [vmem:[%s1 + $0x378] sm:$0xff]
    %v4233 = vld [vmem:[%s1 + $0x380] sm:$0xff]
    %v4234 = vld [vmem:[%s1 + $0x388] sm:$0xff]
    %v4235 = vld [vmem:[%s1 + $0x390] sm:$0xff]
    %v4236 = vld [vmem:[%s1 + $0x398] sm:$0xff]
    %v4237 = vld [vmem:[%s1 + $0x3a0] sm:$0xff]
    %v4238 = vld [vmem:[%s1 + $0x3a8] sm:$0xff]
    %v4239 = vld [vmem:[%s1 + $0x3b0] sm:$0xff]
    %v4240 = vld [vmem:[%s1 + $0x3b8] sm:$0xff]
    %v4241 = vld [vmem:[%s1 + $0x3c0] sm:$0xff]
    %v4242 = vld [vmem:[%s1 + $0x3c8] sm:$0xff]
    %v4243 = vld [vmem:[%s1 + $0x3d0] sm:$0xff]
    %v4244 = vld [vmem:[%s1 + $0x3d8] sm:$0xff]
    %v4245 = vld [vmem:[%s1 + $0x3e0] sm:$0xff]
    %v4246 = vld [vmem:[%s1 + $0x3e8] sm:$0xff]
    %v4247 = vld [vmem:[%s1 + $0x3f0] sm:$0xff]
    %v4248 = vld [vmem:[%s1 + $0x3f8] sm:$0xff]
    %v4249 = vld [vmem:[%s1 + $0x400] sm:$0xff]
    %v4250 = vld [vmem:[%s1 + $0x408] sm:$0xff]
    %v4251 = vld [vmem:[%s1 + $0x410] sm:$0xff]
    %v4252 = vld [vmem:[%s1 + $0x418] sm:$0xff]
    %v4253 = vld [vmem:[%s1 + $0x420] sm:$0xff]
    %v4254 = vld [vmem:[%s1 + $0x428] sm:$0xff]
    %v4255 = vld [vmem:[%s1 + $0x430] sm:$0xff]
    %v4256 = vld [vmem:[%s1 + $0x438] sm:$0xff]
    %v4257 = vld [vmem:[%s1 + $0x440] sm:$0xff]
    %v4258 = vld [vmem:[%s1 + $0x448] sm:$0xff]
    %v4259 = vld [vmem:[%s1 + $0x450] sm:$0xff]
    %v4260 = vld [vmem:[%s1 + $0x458] sm:$0xff]
    %v4261 = vld [vmem:[%s1 + $0x460] sm:$0xff]
    %v4262 = vld [vmem:[%s1 + $0x468] sm:$0xff]
    %v4263 = vld [vmem:[%s1 + $0x470] sm:$0xff]
    %v4264 = vld [vmem:[%s1 + $0x478] sm:$0xff]
    %v4265 = vld [vmem:[%s1 + $0x480] sm:$0xff]
    %v4266 = vld [vmem:[%s1 + $0x488] sm:$0xff]
    %v4267 = vld [vmem:[%s1 + $0x490] sm:$0xff]
    %v4268 = vld [vmem:[%s1 + $0x498] sm:$0xff]
    %v4269 = vld [vmem:[%s1 + $0x4a0] sm:$0xff]
    %v4270 = vld [vmem:[%s1 + $0x4a8] sm:$0xff]
    %v4271 = vld [vmem:[%s1 + $0x4b0] sm:$0xff]
    %v4272 = vld [vmem:[%s1 + $0x4b8] sm:$0xff]
    %v4273 = vld [vmem:[%s1 + $0x4c0] sm:$0xff]
    %v4274 = vld [vmem:[%s1 + $0x4c8] sm:$0xff]
    %v4275 = vld [vmem:[%s1 + $0x4d0] sm:$0xff]
    %v4276 = vld [vmem:[%s1 + $0x4d8] sm:$0xff]
    %v4277 = vld [vmem:[%s1 + $0x4e0] sm:$0xff]
    %v4278 = vld [vmem:[%s1 + $0x4e8] sm:$0xff]
    %v4279 = vld [vmem:[%s1 + $0x4f0] sm:$0xff]
    %v4280 = vld [vmem:[%s1 + $0x4f8] sm:$0xff]
    %v4281 = vld [vmem:[%s1 + $0x500] sm:$0xff]
    %v4282 = vld [vmem:[%s1 + $0x508] sm:$0xff]
    %v4283 = vld [vmem:[%s1 + $0x510] sm:$0xff]
    %v4284 = vld [vmem:[%s1 + $0x518] sm:$0xff]
    %v4285 = vld [vmem:[%s1 + $0x520] sm:$0xff]
    %v4286 = vld [vmem:[%s1 + $0x528] sm:$0xff]
    %v4287 = vld [vmem:[%s1 + $0x530] sm:$0xff]
    %v4288 = vld [vmem:[%s1 + $0x538] sm:$0xff]
    %v4289 = vld [vmem:[%s1 + $0x540] sm:$0xff]
    %v4290 = vld [vmem:[%s1 + $0x548] sm:$0xff]
    %v4291 = vld [vmem:[%s1 + $0x550] sm:$0xff]
    %v4292 = vld [vmem:[%s1 + $0x558] sm:$0xff]
    %v4293 = vld [vmem:[%s1 + $0x560] sm:$0xff]
    %v4294 = vld [vmem:[%s1 + $0x568] sm:$0xff]
    %v4295 = vld [vmem:[%s1 + $0x570] sm:$0xff]
    %v4296 = vld [vmem:[%s1 + $0x578] sm:$0xff]
    %v4297 = vld [vmem:[%s1 + $0x580] sm:$0xff]
    %v4298 = vld [vmem:[%s1 + $0x588] sm:$0xff]
    %v4299 = vld [vmem:[%s1 + $0x590] sm:$0xff]
    %v4300 = vld [vmem:[%s1 + $0x598] sm:$0xff]
    %v4301 = vld [vmem:[%s1 + $0x5a0] sm:$0xff]
    %v4302 = vld [vmem:[%s1 + $0x5a8] sm:$0xff]
    %v4303 = vld [vmem:[%s1 + $0x5b0] sm:$0xff]
    %v4304 = vld [vmem:[%s1 + $0x5b8] sm:$0xff]
    %v4305 = vld [vmem:[%s1 + $0x5c0] sm:$0xff]
    %v4306 = vld [vmem:[%s1 + $0x5c8] sm:$0xff]
    %v4307 = vld [vmem:[%s1 + $0x5d0] sm:$0xff]
    %v4308 = vld [vmem:[%s1 + $0x5d8] sm:$0xff]
    %v4309 = vld [vmem:[%s1 + $0x5e0] sm:$0xff]
    %v4310 = vld [vmem:[%s1 + $0x5e8] sm:$0xff]
    %v4311 = vld [vmem:[%s1 + $0x5f0] sm:$0xff]
    %v4312 = vld [vmem:[%s1 + $0x5f8] sm:$0xff]
    %v4313 = vld [vmem:[%s1 + $0x600] sm:$0xff]
    %v4314 = vld [vmem:[%s1 + $0x608] sm:$0xff]
    %v4315 = vld [vmem:[%s1 + $0x610] sm:$0xff]
    %v4316 = vld [vmem:[%s1 + $0x618] sm:$0xff]
    %v4317 = vld [vmem:[%s1 + $0x620] sm:$0xff]
    %v4318 = vld [vmem:[%s1 + $0x628] sm:$0xff]
    %v4319 = vld [vmem:[%s1 + $0x630] sm:$0xff]
    %v4320 = vld [vmem:[%s1 + $0x638] sm:$0xff]
    %v4321 = vld [vmem:[%s1 + $0x640] sm:$0xff]
    %v4322 = vld [vmem:[%s1 + $0x648] sm:$0xff]
    %v4323 = vld [vmem:[%s1 + $0x650] sm:$0xff]
    %v4324 = vld [vmem:[%s1 + $0x658] sm:$0xff]
    %v4325 = vld [vmem:[%s1 + $0x660] sm:$0xff]
    %v4326 = vld [vmem:[%s1 + $0x668] sm:$0xff]
    %v4327 = vld [vmem:[%s1 + $0x670] sm:$0xff]
    %v4328 = vld [vmem:[%s1 + $0x678] sm:$0xff]
    %v4329 = vld [vmem:[%s1 + $0x680] sm:$0xff]
    %v4330 = vld [vmem:[%s1 + $0x688] sm:$0xff]
    %v4331 = vld [vmem:[%s1 + $0x690] sm:$0xff]
    %v4332 = vld [vmem:[%s1 + $0x698] sm:$0xff]
    %v4333 = vld [vmem:[%s1 + $0x6a0] sm:$0xff]
    %v4334 = vld [vmem:[%s1 + $0x6a8] sm:$0xff]
    %v4335 = vld [vmem:[%s1 + $0x6b0] sm:$0xff]
    %v4336 = vld [vmem:[%s1 + $0x6b8] sm:$0xff]
    %v4337 = vld [vmem:[%s1 + $0x6c0] sm:$0xff]
    %v4338 = vld [vmem:[%s1 + $0x6c8] sm:$0xff]
    %v4339 = vld [vmem:[%s1 + $0x6d0] sm:$0xff]
    %v4340 = vld [vmem:[%s1 + $0x6d8] sm:$0xff]
    %v4341 = vld [vmem:[%s1 + $0x6e0] sm:$0xff]
    %v4342 = vld [vmem:[%s1 + $0x6e8] sm:$0xff]
    %v4343 = vld [vmem:[%s1 + $0x6f0] sm:$0xff]
    %v4344 = vld [vmem:[%s1 + $0x6f8] sm:$0xff]
    %v4345 = vld [vmem:[%s1 + $0x700] sm:$0xff]
    %v4346 = vld [vmem:[%s1 + $0x708] sm:$0xff]
    %v4347 = vld [vmem:[%s1 + $0x710] sm:$0xff]
    %v4348 = vld [vmem:[%s1 + $0x718] sm:$0xff]
    %v4349 = vld [vmem:[%s1 + $0x720] sm:$0xff]
    %v4350 = vld [vmem:[%s1 + $0x728] sm:$0xff]
    %v4351 = vld [vmem:[%s1 + $0x730] sm:$0xff]
    %v4352 = vld [vmem:[%s1 + $0x738] sm:$0xff]
    %v4353 = vld [vmem:[%s1 + $0x740] sm:$0xff]
    %v4354 = vld [vmem:[%s1 + $0x748] sm:$0xff]
    %v4355 = vld [vmem:[%s1 + $0x750] sm:$0xff]
    %v4356 = vld [vmem:[%s1 + $0x758] sm:$0xff]
    %v4357 = vld [vmem:[%s1 + $0x760] sm:$0xff]
    %v4358 = vld [vmem:[%s1 + $0x768] sm:$0xff]
    %v4359 = vld [vmem:[%s1 + $0x770] sm:$0xff]
    %v4360 = vld [vmem:[%s1 + $0x778] sm:$0xff]
    %v4361 = vld [vmem:[%s1 + $0x780] sm:$0xff]
    %v4362 = vld [vmem:[%s1 + $0x788] sm:$0xff]
    %v4363 = vld [vmem:[%s1 + $0x790] sm:$0xff]
    %v4364 = vld [vmem:[%s1 + $0x798] sm:$0xff]
    %v4365 = vld [vmem:[%s1 + $0x7a0] sm:$0xff]
    %v4366 = vld [vmem:[%s1 + $0x7a8] sm:$0xff]
    %v4367 = vld [vmem:[%s1 + $0x7b0] sm:$0xff]
    %v4368 = vld [vmem:[%s1 + $0x7b8] sm:$0xff]
    %v4369 = vld [vmem:[%s1 + $0x7c0] sm:$0xff]
    %v4370 = vld [vmem:[%s1 + $0x7c8] sm:$0xff]
    %v4371 = vld [vmem:[%s1 + $0x7d0] sm:$0xff]
    %v4372 = vld [vmem:[%s1 + $0x7d8] sm:$0xff]
    %v4373 = vld [vmem:[%s1 + $0x7e0] sm:$0xff]
    %v4374 = vld [vmem:[%s1 + $0x7e8] sm:$0xff]
    %v4375 = vld [vmem:[%s1 + $0x7f0] sm:$0xff]
    %v4376 = vld [vmem:[%s1 + $0x7f8] sm:$0xff]
    %v4377 = vld [vmem:[%s2] sm:$0x3]
    %v4379 = vlaneseq
    %v4380 = vshrl.u32 %v4379, 7
    %v4381 = vsub.s32 0, %v4380
    %v4382 = vrot.slane %v4377, %v4381
    %v4383 = vlaneseq
    %v4384 = vshrl.u32 %v4383, 7
    %v4385 = vsub.s32 1, %v4384
    %v4386 = vrot.slane %v4377, %v4385
    %v5413 = vlaneseq
    %v5414 = vand.u32 %v5413, 127
    %v5415 = vlaneseq
    %v5416 = vshrl.u32 %v5415, 7
    %v5417 = vsub.s32 %v5414, %v5416
    %v5418 = vrot.slane %v1051, %v5417
    %v5419 = vadd.s32 %v5414, 4294967288
    %v5420 = vlaneseq
    %v5421 = vshrl.u32 %v5420, 7
    %v5422 = vsub.s32 %v5419, %v5421
    %v5423 = vrot.slane %v1054, %v5422
    %vm5424 = vcmask 130112
    %v5425 = vsel %vm5424, %v5423, %v5418
    %v5426 = vadd.s32 %v5414, 4294967280
    %v5427 = vlaneseq
    %v5428 = vshrl.u32 %v5427, 7
    %v5429 = vsub.s32 %v5426, %v5428
    %v5430 = vrot.slane %v1057, %v5429
    %vm5431 = vcmask 195712
    %v5432 = vsel %vm5431, %v5430, %v5425
    %v5433 = vadd.s32 %v5414, 4294967272
    %v5434 = vlaneseq
    %v5435 = vshrl.u32 %v5434, 7
    %v5436 = vsub.s32 %v5433, %v5435
    %v5437 = vrot.slane %v1060, %v5436
    %vm5438 = vcmask 261312
    %v5439 = vsel %vm5438, %v5437, %v5432
    %v5440 = vadd.s32 %v5414, 4294967264
    %v5441 = vlaneseq
    %v5442 = vshrl.u32 %v5441, 7
    %v5443 = vsub.s32 %v5440, %v5442
    %v5444 = vrot.slane %v1063, %v5443
    %vm5445 = vcmask 326912
    %v5446 = vsel %vm5445, %v5444, %v5439
    %v5447 = vadd.s32 %v5414, 4294967256
    %v5448 = vlaneseq
    %v5449 = vshrl.u32 %v5448, 7
    %v5450 = vsub.s32 %v5447, %v5449
    %v5451 = vrot.slane %v1066, %v5450
    %vm5452 = vcmask 392512
    %v5453 = vsel %vm5452, %v5451, %v5446
    %v5454 = vadd.s32 %v5414, 4294967248
    %v5455 = vlaneseq
    %v5456 = vshrl.u32 %v5455, 7
    %v5457 = vsub.s32 %v5454, %v5456
    %v5458 = vrot.slane %v1069, %v5457
    %vm5459 = vcmask 458112
    %v5460 = vsel %vm5459, %v5458, %v5453
    %v5461 = vadd.s32 %v5414, 4294967240
    %v5462 = vlaneseq
    %v5463 = vshrl.u32 %v5462, 7
    %v5464 = vsub.s32 %v5461, %v5463
    %v5465 = vrot.slane %v1072, %v5464
    %vm5466 = vcmask 523712
    %v5467 = vsel %vm5466, %v5465, %v5460
    %v5468 = vadd.s32 %v5414, 4294967232
    %v5469 = vlaneseq
    %v5470 = vshrl.u32 %v5469, 7
    %v5471 = vsub.s32 %v5468, %v5470
    %v5472 = vrot.slane %v1075, %v5471
    %vm5473 = vcmask 589312
    %v5474 = vsel %vm5473, %v5472, %v5467
    %v5475 = vadd.s32 %v5414, 4294967224
    %v5476 = vlaneseq
    %v5477 = vshrl.u32 %v5476, 7
    %v5478 = vsub.s32 %v5475, %v5477
    %v5479 = vrot.slane %v1078, %v5478
    %vm5480 = vcmask 654912
    %v5481 = vsel %vm5480, %v5479, %v5474
    %v5482 = vadd.s32 %v5414, 4294967216
    %v5483 = vlaneseq
    %v5484 = vshrl.u32 %v5483, 7
    %v5485 = vsub.s32 %v5482, %v5484
    %v5486 = vrot.slane %v1081, %v5485
    %vm5487 = vcmask 720512
    %v5488 = vsel %vm5487, %v5486, %v5481
    %v5489 = vadd.s32 %v5414, 4294967208
    %v5490 = vlaneseq
    %v5491 = vshrl.u32 %v5490, 7
    %v5492 = vsub.s32 %v5489, %v5491
    %v5493 = vrot.slane %v1084, %v5492
    %vm5494 = vcmask 786112
    %v5495 = vsel %vm5494, %v5493, %v5488
    %v5496 = vadd.s32 %v5414, 4294967200
    %v5497 = vlaneseq
    %v5498 = vshrl.u32 %v5497, 7
    %v5499 = vsub.s32 %v5496, %v5498
    %v5500 = vrot.slane %v1087, %v5499
    %vm5501 = vcmask 851712
    %v5502 = vsel %vm5501, %v5500, %v5495
    %v5503 = vadd.s32 %v5414, 4294967192
    %v5504 = vlaneseq
    %v5505 = vshrl.u32 %v5504, 7
    %v5506 = vsub.s32 %v5503, %v5505
    %v5507 = vrot.slane %v1090, %v5506
    %vm5508 = vcmask 917312
    %v5509 = vsel %vm5508, %v5507, %v5502
    %v5510 = vadd.s32 %v5414, 4294967184
    %v5511 = vlaneseq
    %v5512 = vshrl.u32 %v5511, 7
    %v5513 = vsub.s32 %v5510, %v5512
    %v5514 = vrot.slane %v1093, %v5513
    %vm5515 = vcmask 982912
    %v5516 = vsel %vm5515, %v5514, %v5509
    %v5517 = vadd.s32 %v5414, 4294967176
    %v5518 = vlaneseq
    %v5519 = vshrl.u32 %v5518, 7
    %v5520 = vsub.s32 %v5517, %v5519
    %v5521 = vrot.slane %v1096, %v5520
    %vm5522 = vcmask 1048512
    %v5523 = vsel %vm5522, %v5521, %v5516
    %v5524 = vlaneseq
    %v5525 = vshrl.u32 %v5524, 7
    %v5526 = vsub.s32 %v5414, %v5525
    %v5527 = vrot.slane %v1099, %v5526
    %v5528 = vlaneseq
    %v5529 = vshrl.u32 %v5528, 7
    %v5530 = vsub.s32 %v5419, %v5529
    %v5531 = vrot.slane %v1102, %v5530
    %v5532 = vsel %vm5424, %v5531, %v5527
    %v5533 = vlaneseq
    %v5534 = vshrl.u32 %v5533, 7
    %v5535 = vsub.s32 %v5426, %v5534
    %v5536 = vrot.slane %v1105, %v5535
    %v5537 = vsel %vm5431, %v5536, %v5532
    %v5538 = vlaneseq
    %v5539 = vshrl.u32 %v5538, 7
    %v5540 = vsub.s32 %v5433, %v5539
    %v5541 = vrot.slane %v1108, %v5540
    %v5542 = vsel %vm5438, %v5541, %v5537
    %v5543 = vlaneseq
    %v5544 = vshrl.u32 %v5543, 7
    %v5545 = vsub.s32 %v5440, %v5544
    %v5546 = vrot.slane %v1111, %v5545
    %v5547 = vsel %vm5445, %v5546, %v5542
    %v5548 = vlaneseq
    %v5549 = vshrl.u32 %v5548, 7
    %v5550 = vsub.s32 %v5447, %v5549
    %v5551 = vrot.slane %v1114, %v5550
    %v5552 = vsel %vm5452, %v5551, %v5547
    %v5553 = vlaneseq
    %v5554 = vshrl.u32 %v5553, 7
    %v5555 = vsub.s32 %v5454, %v5554
    %v5556 = vrot.slane %v1117, %v5555
    %v5557 = vsel %vm5459, %v5556, %v5552
    %v5558 = vlaneseq
    %v5559 = vshrl.u32 %v5558, 7
    %v5560 = vsub.s32 %v5461, %v5559
    %v5561 = vrot.slane %v1120, %v5560
    %v5562 = vsel %vm5466, %v5561, %v5557
    %v5563 = vlaneseq
    %v5564 = vshrl.u32 %v5563, 7
    %v5565 = vsub.s32 %v5468, %v5564
    %v5566 = vrot.slane %v1123, %v5565
    %v5567 = vsel %vm5473, %v5566, %v5562
    %v5568 = vlaneseq
    %v5569 = vshrl.u32 %v5568, 7
    %v5570 = vsub.s32 %v5475, %v5569
    %v5571 = vrot.slane %v1126, %v5570
    %v5572 = vsel %vm5480, %v5571, %v5567
    %v5573 = vlaneseq
    %v5574 = vshrl.u32 %v5573, 7
    %v5575 = vsub.s32 %v5482, %v5574
    %v5576 = vrot.slane %v1129, %v5575
    %v5577 = vsel %vm5487, %v5576, %v5572
    %v5578 = vlaneseq
    %v5579 = vshrl.u32 %v5578, 7
    %v5580 = vsub.s32 %v5489, %v5579
    %v5581 = vrot.slane %v1132, %v5580
    %v5582 = vsel %vm5494, %v5581, %v5577
    %v5583 = vlaneseq
    %v5584 = vshrl.u32 %v5583, 7
    %v5585 = vsub.s32 %v5496, %v5584
    %v5586 = vrot.slane %v1135, %v5585
    %v5587 = vsel %vm5501, %v5586, %v5582
    %v5588 = vlaneseq
    %v5589 = vshrl.u32 %v5588, 7
    %v5590 = vsub.s32 %v5503, %v5589
    %v5591 = vrot.slane %v1138, %v5590
    %v5592 = vsel %vm5508, %v5591, %v5587
    %v5593 = vlaneseq
    %v5594 = vshrl.u32 %v5593, 7
    %v5595 = vsub.s32 %v5510, %v5594
    %v5596 = vrot.slane %v1141, %v5595
    %v5597 = vsel %vm5515, %v5596, %v5592
    %v5598 = vlaneseq
    %v5599 = vshrl.u32 %v5598, 7
    %v5600 = vsub.s32 %v5517, %v5599
    %v5601 = vrot.slane %v1144, %v5600
    %v5602 = vsel %vm5522, %v5601, %v5597
    %v5603 = vlaneseq
    %v5604 = vshrl.u32 %v5603, 7
    %v5605 = vsub.s32 %v5414, %v5604
    %v5606 = vrot.slane %v1147, %v5605
    %v5607 = vlaneseq
    %v5608 = vshrl.u32 %v5607, 7
    %v5609 = vsub.s32 %v5419, %v5608
    %v5610 = vrot.slane %v1150, %v5609
    %v5611 = vsel %vm5424, %v5610, %v5606
    %v5612 = vlaneseq
    %v5613 = vshrl.u32 %v5612, 7
    %v5614 = vsub.s32 %v5426, %v5613
    %v5615 = vrot.slane %v1153, %v5614
    %v5616 = vsel %vm5431, %v5615, %v5611
    %v5617 = vlaneseq
    %v5618 = vshrl.u32 %v5617, 7
    %v5619 = vsub.s32 %v5433, %v5618
    %v5620 = vrot.slane %v1156, %v5619
    %v5621 = vsel %vm5438, %v5620, %v5616
    %v5622 = vlaneseq
    %v5623 = vshrl.u32 %v5622, 7
    %v5624 = vsub.s32 %v5440, %v5623
    %v5625 = vrot.slane %v1159, %v5624
    %v5626 = vsel %vm5445, %v5625, %v5621
    %v5627 = vlaneseq
    %v5628 = vshrl.u32 %v5627, 7
    %v5629 = vsub.s32 %v5447, %v5628
    %v5630 = vrot.slane %v1162, %v5629
    %v5631 = vsel %vm5452, %v5630, %v5626
    %v5632 = vlaneseq
    %v5633 = vshrl.u32 %v5632, 7
    %v5634 = vsub.s32 %v5454, %v5633
    %v5635 = vrot.slane %v1165, %v5634
    %v5636 = vsel %vm5459, %v5635, %v5631
    %v5637 = vlaneseq
    %v5638 = vshrl.u32 %v5637, 7
    %v5639 = vsub.s32 %v5461, %v5638
    %v5640 = vrot.slane %v1168, %v5639
    %v5641 = vsel %vm5466, %v5640, %v5636
    %v5642 = vlaneseq
    %v5643 = vshrl.u32 %v5642, 7
    %v5644 = vsub.s32 %v5468, %v5643
    %v5645 = vrot.slane %v1171, %v5644
    %v5646 = vsel %vm5473, %v5645, %v5641
    %v5647 = vlaneseq
    %v5648 = vshrl.u32 %v5647, 7
    %v5649 = vsub.s32 %v5475, %v5648
    %v5650 = vrot.slane %v1174, %v5649
    %v5651 = vsel %vm5480, %v5650, %v5646
    %v5652 = vlaneseq
    %v5653 = vshrl.u32 %v5652, 7
    %v5654 = vsub.s32 %v5482, %v5653
    %v5655 = vrot.slane %v1177, %v5654
    %v5656 = vsel %vm5487, %v5655, %v5651
    %v5657 = vlaneseq
    %v5658 = vshrl.u32 %v5657, 7
    %v5659 = vsub.s32 %v5489, %v5658
    %v5660 = vrot.slane %v1180, %v5659
    %v5661 = vsel %vm5494, %v5660, %v5656
    %v5662 = vlaneseq
    %v5663 = vshrl.u32 %v5662, 7
    %v5664 = vsub.s32 %v5496, %v5663
    %v5665 = vrot.slane %v1183, %v5664
    %v5666 = vsel %vm5501, %v5665, %v5661
    %v5667 = vlaneseq
    %v5668 = vshrl.u32 %v5667, 7
    %v5669 = vsub.s32 %v5503, %v5668
    %v5670 = vrot.slane %v1186, %v5669
    %v5671 = vsel %vm5508, %v5670, %v5666
    %v5672 = vlaneseq
    %v5673 = vshrl.u32 %v5672, 7
    %v5674 = vsub.s32 %v5510, %v5673
    %v5675 = vrot.slane %v1189, %v5674
    %v5676 = vsel %vm5515, %v5675, %v5671
    %v5677 = vlaneseq
    %v5678 = vshrl.u32 %v5677, 7
    %v5679 = vsub.s32 %v5517, %v5678
    %v5680 = vrot.slane %v1192, %v5679
    %v5681 = vsel %vm5522, %v5680, %v5676
    %v5682 = vlaneseq
    %v5683 = vshrl.u32 %v5682, 7
    %v5684 = vsub.s32 %v5414, %v5683
    %v5685 = vrot.slane %v1195, %v5684
    %v5686 = vlaneseq
    %v5687 = vshrl.u32 %v5686, 7
    %v5688 = vsub.s32 %v5419, %v5687
    %v5689 = vrot.slane %v1198, %v5688
    %v5690 = vsel %vm5424, %v5689, %v5685
    %v5691 = vlaneseq
    %v5692 = vshrl.u32 %v5691, 7
    %v5693 = vsub.s32 %v5426, %v5692
    %v5694 = vrot.slane %v1201, %v5693
    %v5695 = vsel %vm5431, %v5694, %v5690
    %v5696 = vlaneseq
    %v5697 = vshrl.u32 %v5696, 7
    %v5698 = vsub.s32 %v5433, %v5697
    %v5699 = vrot.slane %v1204, %v5698
    %v5700 = vsel %vm5438, %v5699, %v5695
    %v5701 = vlaneseq
    %v5702 = vshrl.u32 %v5701, 7
    %v5703 = vsub.s32 %v5440, %v5702
    %v5704 = vrot.slane %v1207, %v5703
    %v5705 = vsel %vm5445, %v5704, %v5700
    %v5706 = vlaneseq
    %v5707 = vshrl.u32 %v5706, 7
    %v5708 = vsub.s32 %v5447, %v5707
    %v5709 = vrot.slane %v1210, %v5708
    %v5710 = vsel %vm5452, %v5709, %v5705
    %v5711 = vlaneseq
    %v5712 = vshrl.u32 %v5711, 7
    %v5713 = vsub.s32 %v5454, %v5712
    %v5714 = vrot.slane %v1213, %v5713
    %v5715 = vsel %vm5459, %v5714, %v5710
    %v5716 = vlaneseq
    %v5717 = vshrl.u32 %v5716, 7
    %v5718 = vsub.s32 %v5461, %v5717
    %v5719 = vrot.slane %v1216, %v5718
    %v5720 = vsel %vm5466, %v5719, %v5715
    %v5721 = vlaneseq
    %v5722 = vshrl.u32 %v5721, 7
    %v5723 = vsub.s32 %v5468, %v5722
    %v5724 = vrot.slane %v1219, %v5723
    %v5725 = vsel %vm5473, %v5724, %v5720
    %v5726 = vlaneseq
    %v5727 = vshrl.u32 %v5726, 7
    %v5728 = vsub.s32 %v5475, %v5727
    %v5729 = vrot.slane %v1222, %v5728
    %v5730 = vsel %vm5480, %v5729, %v5725
    %v5731 = vlaneseq
    %v5732 = vshrl.u32 %v5731, 7
    %v5733 = vsub.s32 %v5482, %v5732
    %v5734 = vrot.slane %v1225, %v5733
    %v5735 = vsel %vm5487, %v5734, %v5730
    %v5736 = vlaneseq
    %v5737 = vshrl.u32 %v5736, 7
    %v5738 = vsub.s32 %v5489, %v5737
    %v5739 = vrot.slane %v1228, %v5738
    %v5740 = vsel %vm5494, %v5739, %v5735
    %v5741 = vlaneseq
    %v5742 = vshrl.u32 %v5741, 7
    %v5743 = vsub.s32 %v5496, %v5742
    %v5744 = vrot.slane %v1231, %v5743
    %v5745 = vsel %vm5501, %v5744, %v5740
    %v5746 = vlaneseq
    %v5747 = vshrl.u32 %v5746, 7
    %v5748 = vsub.s32 %v5503, %v5747
    %v5749 = vrot.slane %v1234, %v5748
    %v5750 = vsel %vm5508, %v5749, %v5745
    %v5751 = vlaneseq
    %v5752 = vshrl.u32 %v5751, 7
    %v5753 = vsub.s32 %v5510, %v5752
    %v5754 = vrot.slane %v1237, %v5753
    %v5755 = vsel %vm5515, %v5754, %v5750
    %v5756 = vlaneseq
    %v5757 = vshrl.u32 %v5756, 7
    %v5758 = vsub.s32 %v5517, %v5757
    %v5759 = vrot.slane %v1240, %v5758
    %v5760 = vsel %vm5522, %v5759, %v5755
    %v5761 = vlaneseq
    %v5762 = vshrl.u32 %v5761, 7
    %v5763 = vsub.s32 %v5414, %v5762
    %v5764 = vrot.slane %v1243, %v5763
    %v5765 = vlaneseq
    %v5766 = vshrl.u32 %v5765, 7
    %v5767 = vsub.s32 %v5419, %v5766
    %v5768 = vrot.slane %v1246, %v5767
    %v5769 = vsel %vm5424, %v5768, %v5764
    %v5770 = vlaneseq
    %v5771 = vshrl.u32 %v5770, 7
    %v5772 = vsub.s32 %v5426, %v5771
    %v5773 = vrot.slane %v1249, %v5772
    %v5774 = vsel %vm5431, %v5773, %v5769
    %v5775 = vlaneseq
    %v5776 = vshrl.u32 %v5775, 7
    %v5777 = vsub.s32 %v5433, %v5776
    %v5778 = vrot.slane %v1252, %v5777
    %v5779 = vsel %vm5438, %v5778, %v5774
    %v5780 = vlaneseq
    %v5781 = vshrl.u32 %v5780, 7
    %v5782 = vsub.s32 %v5440, %v5781
    %v5783 = vrot.slane %v1255, %v5782
    %v5784 = vsel %vm5445, %v5783, %v5779
    %v5785 = vlaneseq
    %v5786 = vshrl.u32 %v5785, 7
    %v5787 = vsub.s32 %v5447, %v5786
    %v5788 = vrot.slane %v1258, %v5787
    %v5789 = vsel %vm5452, %v5788, %v5784
    %v5790 = vlaneseq
    %v5791 = vshrl.u32 %v5790, 7
    %v5792 = vsub.s32 %v5454, %v5791
    %v5793 = vrot.slane %v1261, %v5792
    %v5794 = vsel %vm5459, %v5793, %v5789
    %v5795 = vlaneseq
    %v5796 = vshrl.u32 %v5795, 7
    %v5797 = vsub.s32 %v5461, %v5796
    %v5798 = vrot.slane %v1264, %v5797
    %v5799 = vsel %vm5466, %v5798, %v5794
    %v5800 = vlaneseq
    %v5801 = vshrl.u32 %v5800, 7
    %v5802 = vsub.s32 %v5468, %v5801
    %v5803 = vrot.slane %v1267, %v5802
    %v5804 = vsel %vm5473, %v5803, %v5799
    %v5805 = vlaneseq
    %v5806 = vshrl.u32 %v5805, 7
    %v5807 = vsub.s32 %v5475, %v5806
    %v5808 = vrot.slane %v1270, %v5807
    %v5809 = vsel %vm5480, %v5808, %v5804
    %v5810 = vlaneseq
    %v5811 = vshrl.u32 %v5810, 7
    %v5812 = vsub.s32 %v5482, %v5811
    %v5813 = vrot.slane %v1273, %v5812
    %v5814 = vsel %vm5487, %v5813, %v5809
    %v5815 = vlaneseq
    %v5816 = vshrl.u32 %v5815, 7
    %v5817 = vsub.s32 %v5489, %v5816
    %v5818 = vrot.slane %v1276, %v5817
    %v5819 = vsel %vm5494, %v5818, %v5814
    %v5820 = vlaneseq
    %v5821 = vshrl.u32 %v5820, 7
    %v5822 = vsub.s32 %v5496, %v5821
    %v5823 = vrot.slane %v1279, %v5822
    %v5824 = vsel %vm5501, %v5823, %v5819
    %v5825 = vlaneseq
    %v5826 = vshrl.u32 %v5825, 7
    %v5827 = vsub.s32 %v5503, %v5826
    %v5828 = vrot.slane %v1282, %v5827
    %v5829 = vsel %vm5508, %v5828, %v5824
    %v5830 = vlaneseq
    %v5831 = vshrl.u32 %v5830, 7
    %v5832 = vsub.s32 %v5510, %v5831
    %v5833 = vrot.slane %v1285, %v5832
    %v5834 = vsel %vm5515, %v5833, %v5829
    %v5835 = vlaneseq
    %v5836 = vshrl.u32 %v5835, 7
    %v5837 = vsub.s32 %v5517, %v5836
    %v5838 = vrot.slane %v1288, %v5837
    %v5839 = vsel %vm5522, %v5838, %v5834
    %v5840 = vlaneseq
    %v5841 = vshrl.u32 %v5840, 7
    %v5842 = vsub.s32 %v5414, %v5841
    %v5843 = vrot.slane %v1291, %v5842
    %v5844 = vlaneseq
    %v5845 = vshrl.u32 %v5844, 7
    %v5846 = vsub.s32 %v5419, %v5845
    %v5847 = vrot.slane %v1294, %v5846
    %v5848 = vsel %vm5424, %v5847, %v5843
    %v5849 = vlaneseq
    %v5850 = vshrl.u32 %v5849, 7
    %v5851 = vsub.s32 %v5426, %v5850
    %v5852 = vrot.slane %v1297, %v5851
    %v5853 = vsel %vm5431, %v5852, %v5848
    %v5854 = vlaneseq
    %v5855 = vshrl.u32 %v5854, 7
    %v5856 = vsub.s32 %v5433, %v5855
    %v5857 = vrot.slane %v1300, %v5856
    %v5858 = vsel %vm5438, %v5857, %v5853
    %v5859 = vlaneseq
    %v5860 = vshrl.u32 %v5859, 7
    %v5861 = vsub.s32 %v5440, %v5860
    %v5862 = vrot.slane %v1303, %v5861
    %v5863 = vsel %vm5445, %v5862, %v5858
    %v5864 = vlaneseq
    %v5865 = vshrl.u32 %v5864, 7
    %v5866 = vsub.s32 %v5447, %v5865
    %v5867 = vrot.slane %v1306, %v5866
    %v5868 = vsel %vm5452, %v5867, %v5863
    %v5869 = vlaneseq
    %v5870 = vshrl.u32 %v5869, 7
    %v5871 = vsub.s32 %v5454, %v5870
    %v5872 = vrot.slane %v1309, %v5871
    %v5873 = vsel %vm5459, %v5872, %v5868
    %v5874 = vlaneseq
    %v5875 = vshrl.u32 %v5874, 7
    %v5876 = vsub.s32 %v5461, %v5875
    %v5877 = vrot.slane %v1312, %v5876
    %v5878 = vsel %vm5466, %v5877, %v5873
    %v5879 = vlaneseq
    %v5880 = vshrl.u32 %v5879, 7
    %v5881 = vsub.s32 %v5468, %v5880
    %v5882 = vrot.slane %v1315, %v5881
    %v5883 = vsel %vm5473, %v5882, %v5878
    %v5884 = vlaneseq
    %v5885 = vshrl.u32 %v5884, 7
    %v5886 = vsub.s32 %v5475, %v5885
    %v5887 = vrot.slane %v1318, %v5886
    %v5888 = vsel %vm5480, %v5887, %v5883
    %v5889 = vlaneseq
    %v5890 = vshrl.u32 %v5889, 7
    %v5891 = vsub.s32 %v5482, %v5890
    %v5892 = vrot.slane %v1321, %v5891
    %v5893 = vsel %vm5487, %v5892, %v5888
    %v5894 = vlaneseq
    %v5895 = vshrl.u32 %v5894, 7
    %v5896 = vsub.s32 %v5489, %v5895
    %v5897 = vrot.slane %v1324, %v5896
    %v5898 = vsel %vm5494, %v5897, %v5893
    %v5899 = vlaneseq
    %v5900 = vshrl.u32 %v5899, 7
    %v5901 = vsub.s32 %v5496, %v5900
    %v5902 = vrot.slane %v1327, %v5901
    %v5903 = vsel %vm5501, %v5902, %v5898
    %v5904 = vlaneseq
    %v5905 = vshrl.u32 %v5904, 7
    %v5906 = vsub.s32 %v5503, %v5905
    %v5907 = vrot.slane %v1330, %v5906
    %v5908 = vsel %vm5508, %v5907, %v5903
    %v5909 = vlaneseq
    %v5910 = vshrl.u32 %v5909, 7
    %v5911 = vsub.s32 %v5510, %v5910
    %v5912 = vrot.slane %v1333, %v5911
    %v5913 = vsel %vm5515, %v5912, %v5908
    %v5914 = vlaneseq
    %v5915 = vshrl.u32 %v5914, 7
    %v5916 = vsub.s32 %v5517, %v5915
    %v5917 = vrot.slane %v1336, %v5916
    %v5918 = vsel %vm5522, %v5917, %v5913
    %v5919 = vlaneseq
    %v5920 = vshrl.u32 %v5919, 7
    %v5921 = vsub.s32 %v5414, %v5920
    %v5922 = vrot.slane %v1339, %v5921
    %v5923 = vlaneseq
    %v5924 = vshrl.u32 %v5923, 7
    %v5925 = vsub.s32 %v5419, %v5924
    %v5926 = vrot.slane %v1342, %v5925
    %v5927 = vsel %vm5424, %v5926, %v5922
    %v5928 = vlaneseq
    %v5929 = vshrl.u32 %v5928, 7
    %v5930 = vsub.s32 %v5426, %v5929
    %v5931 = vrot.slane %v1345, %v5930
    %v5932 = vsel %vm5431, %v5931, %v5927
    %v5933 = vlaneseq
    %v5934 = vshrl.u32 %v5933, 7
    %v5935 = vsub.s32 %v5433, %v5934
    %v5936 = vrot.slane %v1348, %v5935
    %v5937 = vsel %vm5438, %v5936, %v5932
    %v5938 = vlaneseq
    %v5939 = vshrl.u32 %v5938, 7
    %v5940 = vsub.s32 %v5440, %v5939
    %v5941 = vrot.slane %v1351, %v5940
    %v5942 = vsel %vm5445, %v5941, %v5937
    %v5943 = vlaneseq
    %v5944 = vshrl.u32 %v5943, 7
    %v5945 = vsub.s32 %v5447, %v5944
    %v5946 = vrot.slane %v1354, %v5945
    %v5947 = vsel %vm5452, %v5946, %v5942
    %v5948 = vlaneseq
    %v5949 = vshrl.u32 %v5948, 7
    %v5950 = vsub.s32 %v5454, %v5949
    %v5951 = vrot.slane %v1357, %v5950
    %v5952 = vsel %vm5459, %v5951, %v5947
    %v5953 = vlaneseq
    %v5954 = vshrl.u32 %v5953, 7
    %v5955 = vsub.s32 %v5461, %v5954
    %v5956 = vrot.slane %v1360, %v5955
    %v5957 = vsel %vm5466, %v5956, %v5952
    %v5958 = vlaneseq
    %v5959 = vshrl.u32 %v5958, 7
    %v5960 = vsub.s32 %v5468, %v5959
    %v5961 = vrot.slane %v1363, %v5960
    %v5962 = vsel %vm5473, %v5961, %v5957
    %v5963 = vlaneseq
    %v5964 = vshrl.u32 %v5963, 7
    %v5965 = vsub.s32 %v5475, %v5964
    %v5966 = vrot.slane %v1366, %v5965
    %v5967 = vsel %vm5480, %v5966, %v5962
    %v5968 = vlaneseq
    %v5969 = vshrl.u32 %v5968, 7
    %v5970 = vsub.s32 %v5482, %v5969
    %v5971 = vrot.slane %v1369, %v5970
    %v5972 = vsel %vm5487, %v5971, %v5967
    %v5973 = vlaneseq
    %v5974 = vshrl.u32 %v5973, 7
    %v5975 = vsub.s32 %v5489, %v5974
    %v5976 = vrot.slane %v1372, %v5975
    %v5977 = vsel %vm5494, %v5976, %v5972
    %v5978 = vlaneseq
    %v5979 = vshrl.u32 %v5978, 7
    %v5980 = vsub.s32 %v5496, %v5979
    %v5981 = vrot.slane %v1375, %v5980
    %v5982 = vsel %vm5501, %v5981, %v5977
    %v5983 = vlaneseq
    %v5984 = vshrl.u32 %v5983, 7
    %v5985 = vsub.s32 %v5503, %v5984
    %v5986 = vrot.slane %v1378, %v5985
    %v5987 = vsel %vm5508, %v5986, %v5982
    %v5988 = vlaneseq
    %v5989 = vshrl.u32 %v5988, 7
    %v5990 = vsub.s32 %v5510, %v5989
    %v5991 = vrot.slane %v1381, %v5990
    %v5992 = vsel %vm5515, %v5991, %v5987
    %v5993 = vlaneseq
    %v5994 = vshrl.u32 %v5993, 7
    %v5995 = vsub.s32 %v5517, %v5994
    %v5996 = vrot.slane %v1384, %v5995
    %v5997 = vsel %vm5522, %v5996, %v5992
    %v5998 = vlaneseq
    %v5999 = vshrl.u32 %v5998, 7
    %v6000 = vsub.s32 %v5414, %v5999
    %v6001 = vrot.slane %v1387, %v6000
    %v6002 = vlaneseq
    %v6003 = vshrl.u32 %v6002, 7
    %v6004 = vsub.s32 %v5419, %v6003
    %v6005 = vrot.slane %v1390, %v6004
    %v6006 = vsel %vm5424, %v6005, %v6001
    %v6007 = vlaneseq
    %v6008 = vshrl.u32 %v6007, 7
    %v6009 = vsub.s32 %v5426, %v6008
    %v6010 = vrot.slane %v1393, %v6009
    %v6011 = vsel %vm5431, %v6010, %v6006
    %v6012 = vlaneseq
    %v6013 = vshrl.u32 %v6012, 7
    %v6014 = vsub.s32 %v5433, %v6013
    %v6015 = vrot.slane %v1396, %v6014
    %v6016 = vsel %vm5438, %v6015, %v6011
    %v6017 = vlaneseq
    %v6018 = vshrl.u32 %v6017, 7
    %v6019 = vsub.s32 %v5440, %v6018
    %v6020 = vrot.slane %v1399, %v6019
    %v6021 = vsel %vm5445, %v6020, %v6016
    %v6022 = vlaneseq
    %v6023 = vshrl.u32 %v6022, 7
    %v6024 = vsub.s32 %v5447, %v6023
    %v6025 = vrot.slane %v1402, %v6024
    %v6026 = vsel %vm5452, %v6025, %v6021
    %v6027 = vlaneseq
    %v6028 = vshrl.u32 %v6027, 7
    %v6029 = vsub.s32 %v5454, %v6028
    %v6030 = vrot.slane %v1405, %v6029
    %v6031 = vsel %vm5459, %v6030, %v6026
    %v6032 = vlaneseq
    %v6033 = vshrl.u32 %v6032, 7
    %v6034 = vsub.s32 %v5461, %v6033
    %v6035 = vrot.slane %v1408, %v6034
    %v6036 = vsel %vm5466, %v6035, %v6031
    %v6037 = vlaneseq
    %v6038 = vshrl.u32 %v6037, 7
    %v6039 = vsub.s32 %v5468, %v6038
    %v6040 = vrot.slane %v1411, %v6039
    %v6041 = vsel %vm5473, %v6040, %v6036
    %v6042 = vlaneseq
    %v6043 = vshrl.u32 %v6042, 7
    %v6044 = vsub.s32 %v5475, %v6043
    %v6045 = vrot.slane %v1414, %v6044
    %v6046 = vsel %vm5480, %v6045, %v6041
    %v6047 = vlaneseq
    %v6048 = vshrl.u32 %v6047, 7
    %v6049 = vsub.s32 %v5482, %v6048
    %v6050 = vrot.slane %v1417, %v6049
    %v6051 = vsel %vm5487, %v6050, %v6046
    %v6052 = vlaneseq
    %v6053 = vshrl.u32 %v6052, 7
    %v6054 = vsub.s32 %v5489, %v6053
    %v6055 = vrot.slane %v1420, %v6054
    %v6056 = vsel %vm5494, %v6055, %v6051
    %v6057 = vlaneseq
    %v6058 = vshrl.u32 %v6057, 7
    %v6059 = vsub.s32 %v5496, %v6058
    %v6060 = vrot.slane %v1423, %v6059
    %v6061 = vsel %vm5501, %v6060, %v6056
    %v6062 = vlaneseq
    %v6063 = vshrl.u32 %v6062, 7
    %v6064 = vsub.s32 %v5503, %v6063
    %v6065 = vrot.slane %v1426, %v6064
    %v6066 = vsel %vm5508, %v6065, %v6061
    %v6067 = vlaneseq
    %v6068 = vshrl.u32 %v6067, 7
    %v6069 = vsub.s32 %v5510, %v6068
    %v6070 = vrot.slane %v1429, %v6069
    %v6071 = vsel %vm5515, %v6070, %v6066
    %v6072 = vlaneseq
    %v6073 = vshrl.u32 %v6072, 7
    %v6074 = vsub.s32 %v5517, %v6073
    %v6075 = vrot.slane %v1432, %v6074
    %v6076 = vsel %vm5522, %v6075, %v6071
    %v6077 = vlaneseq
    %v6078 = vshrl.u32 %v6077, 7
    %v6079 = vsub.s32 %v5414, %v6078
    %v6080 = vrot.slane %v1435, %v6079
    %v6081 = vlaneseq
    %v6082 = vshrl.u32 %v6081, 7
    %v6083 = vsub.s32 %v5419, %v6082
    %v6084 = vrot.slane %v1438, %v6083
    %v6085 = vsel %vm5424, %v6084, %v6080
    %v6086 = vlaneseq
    %v6087 = vshrl.u32 %v6086, 7
    %v6088 = vsub.s32 %v5426, %v6087
    %v6089 = vrot.slane %v1441, %v6088
    %v6090 = vsel %vm5431, %v6089, %v6085
    %v6091 = vlaneseq
    %v6092 = vshrl.u32 %v6091, 7
    %v6093 = vsub.s32 %v5433, %v6092
    %v6094 = vrot.slane %v1444, %v6093
    %v6095 = vsel %vm5438, %v6094, %v6090
    %v6096 = vlaneseq
    %v6097 = vshrl.u32 %v6096, 7
    %v6098 = vsub.s32 %v5440, %v6097
    %v6099 = vrot.slane %v1447, %v6098
    %v6100 = vsel %vm5445, %v6099, %v6095
    %v6101 = vlaneseq
    %v6102 = vshrl.u32 %v6101, 7
    %v6103 = vsub.s32 %v5447, %v6102
    %v6104 = vrot.slane %v1450, %v6103
    %v6105 = vsel %vm5452, %v6104, %v6100
    %v6106 = vlaneseq
    %v6107 = vshrl.u32 %v6106, 7
    %v6108 = vsub.s32 %v5454, %v6107
    %v6109 = vrot.slane %v1453, %v6108
    %v6110 = vsel %vm5459, %v6109, %v6105
    %v6111 = vlaneseq
    %v6112 = vshrl.u32 %v6111, 7
    %v6113 = vsub.s32 %v5461, %v6112
    %v6114 = vrot.slane %v1456, %v6113
    %v6115 = vsel %vm5466, %v6114, %v6110
    %v6116 = vlaneseq
    %v6117 = vshrl.u32 %v6116, 7
    %v6118 = vsub.s32 %v5468, %v6117
    %v6119 = vrot.slane %v1459, %v6118
    %v6120 = vsel %vm5473, %v6119, %v6115
    %v6121 = vlaneseq
    %v6122 = vshrl.u32 %v6121, 7
    %v6123 = vsub.s32 %v5475, %v6122
    %v6124 = vrot.slane %v1462, %v6123
    %v6125 = vsel %vm5480, %v6124, %v6120
    %v6126 = vlaneseq
    %v6127 = vshrl.u32 %v6126, 7
    %v6128 = vsub.s32 %v5482, %v6127
    %v6129 = vrot.slane %v1465, %v6128
    %v6130 = vsel %vm5487, %v6129, %v6125
    %v6131 = vlaneseq
    %v6132 = vshrl.u32 %v6131, 7
    %v6133 = vsub.s32 %v5489, %v6132
    %v6134 = vrot.slane %v1468, %v6133
    %v6135 = vsel %vm5494, %v6134, %v6130
    %v6136 = vlaneseq
    %v6137 = vshrl.u32 %v6136, 7
    %v6138 = vsub.s32 %v5496, %v6137
    %v6139 = vrot.slane %v1471, %v6138
    %v6140 = vsel %vm5501, %v6139, %v6135
    %v6141 = vlaneseq
    %v6142 = vshrl.u32 %v6141, 7
    %v6143 = vsub.s32 %v5503, %v6142
    %v6144 = vrot.slane %v1474, %v6143
    %v6145 = vsel %vm5508, %v6144, %v6140
    %v6146 = vlaneseq
    %v6147 = vshrl.u32 %v6146, 7
    %v6148 = vsub.s32 %v5510, %v6147
    %v6149 = vrot.slane %v1477, %v6148
    %v6150 = vsel %vm5515, %v6149, %v6145
    %v6151 = vlaneseq
    %v6152 = vshrl.u32 %v6151, 7
    %v6153 = vsub.s32 %v5517, %v6152
    %v6154 = vrot.slane %v1480, %v6153
    %v6155 = vsel %vm5522, %v6154, %v6150
    %v6156 = vlaneseq
    %v6157 = vshrl.u32 %v6156, 7
    %v6158 = vsub.s32 %v5414, %v6157
    %v6159 = vrot.slane %v1483, %v6158
    %v6160 = vlaneseq
    %v6161 = vshrl.u32 %v6160, 7
    %v6162 = vsub.s32 %v5419, %v6161
    %v6163 = vrot.slane %v1486, %v6162
    %v6164 = vsel %vm5424, %v6163, %v6159
    %v6165 = vlaneseq
    %v6166 = vshrl.u32 %v6165, 7
    %v6167 = vsub.s32 %v5426, %v6166
    %v6168 = vrot.slane %v1489, %v6167
    %v6169 = vsel %vm5431, %v6168, %v6164
    %v6170 = vlaneseq
    %v6171 = vshrl.u32 %v6170, 7
    %v6172 = vsub.s32 %v5433, %v6171
    %v6173 = vrot.slane %v1492, %v6172
    %v6174 = vsel %vm5438, %v6173, %v6169
    %v6175 = vlaneseq
    %v6176 = vshrl.u32 %v6175, 7
    %v6177 = vsub.s32 %v5440, %v6176
    %v6178 = vrot.slane %v1495, %v6177
    %v6179 = vsel %vm5445, %v6178, %v6174
    %v6180 = vlaneseq
    %v6181 = vshrl.u32 %v6180, 7
    %v6182 = vsub.s32 %v5447, %v6181
    %v6183 = vrot.slane %v1498, %v6182
    %v6184 = vsel %vm5452, %v6183, %v6179
    %v6185 = vlaneseq
    %v6186 = vshrl.u32 %v6185, 7
    %v6187 = vsub.s32 %v5454, %v6186
    %v6188 = vrot.slane %v1501, %v6187
    %v6189 = vsel %vm5459, %v6188, %v6184
    %v6190 = vlaneseq
    %v6191 = vshrl.u32 %v6190, 7
    %v6192 = vsub.s32 %v5461, %v6191
    %v6193 = vrot.slane %v1504, %v6192
    %v6194 = vsel %vm5466, %v6193, %v6189
    %v6195 = vlaneseq
    %v6196 = vshrl.u32 %v6195, 7
    %v6197 = vsub.s32 %v5468, %v6196
    %v6198 = vrot.slane %v1507, %v6197
    %v6199 = vsel %vm5473, %v6198, %v6194
    %v6200 = vlaneseq
    %v6201 = vshrl.u32 %v6200, 7
    %v6202 = vsub.s32 %v5475, %v6201
    %v6203 = vrot.slane %v1510, %v6202
    %v6204 = vsel %vm5480, %v6203, %v6199
    %v6205 = vlaneseq
    %v6206 = vshrl.u32 %v6205, 7
    %v6207 = vsub.s32 %v5482, %v6206
    %v6208 = vrot.slane %v1513, %v6207
    %v6209 = vsel %vm5487, %v6208, %v6204
    %v6210 = vlaneseq
    %v6211 = vshrl.u32 %v6210, 7
    %v6212 = vsub.s32 %v5489, %v6211
    %v6213 = vrot.slane %v1516, %v6212
    %v6214 = vsel %vm5494, %v6213, %v6209
    %v6215 = vlaneseq
    %v6216 = vshrl.u32 %v6215, 7
    %v6217 = vsub.s32 %v5496, %v6216
    %v6218 = vrot.slane %v1519, %v6217
    %v6219 = vsel %vm5501, %v6218, %v6214
    %v6220 = vlaneseq
    %v6221 = vshrl.u32 %v6220, 7
    %v6222 = vsub.s32 %v5503, %v6221
    %v6223 = vrot.slane %v1522, %v6222
    %v6224 = vsel %vm5508, %v6223, %v6219
    %v6225 = vlaneseq
    %v6226 = vshrl.u32 %v6225, 7
    %v6227 = vsub.s32 %v5510, %v6226
    %v6228 = vrot.slane %v1525, %v6227
    %v6229 = vsel %vm5515, %v6228, %v6224
    %v6230 = vlaneseq
    %v6231 = vshrl.u32 %v6230, 7
    %v6232 = vsub.s32 %v5517, %v6231
    %v6233 = vrot.slane %v1528, %v6232
    %v6234 = vsel %vm5522, %v6233, %v6229
    %v6235 = vlaneseq
    %v6236 = vshrl.u32 %v6235, 7
    %v6237 = vsub.s32 %v5414, %v6236
    %v6238 = vrot.slane %v1531, %v6237
    %v6239 = vlaneseq
    %v6240 = vshrl.u32 %v6239, 7
    %v6241 = vsub.s32 %v5419, %v6240
    %v6242 = vrot.slane %v1534, %v6241
    %v6243 = vsel %vm5424, %v6242, %v6238
    %v6244 = vlaneseq
    %v6245 = vshrl.u32 %v6244, 7
    %v6246 = vsub.s32 %v5426, %v6245
    %v6247 = vrot.slane %v1537, %v6246
    %v6248 = vsel %vm5431, %v6247, %v6243
    %v6249 = vlaneseq
    %v6250 = vshrl.u32 %v6249, 7
    %v6251 = vsub.s32 %v5433, %v6250
    %v6252 = vrot.slane %v1540, %v6251
    %v6253 = vsel %vm5438, %v6252, %v6248
    %v6254 = vlaneseq
    %v6255 = vshrl.u32 %v6254, 7
    %v6256 = vsub.s32 %v5440, %v6255
    %v6257 = vrot.slane %v1543, %v6256
    %v6258 = vsel %vm5445, %v6257, %v6253
    %v6259 = vlaneseq
    %v6260 = vshrl.u32 %v6259, 7
    %v6261 = vsub.s32 %v5447, %v6260
    %v6262 = vrot.slane %v1546, %v6261
    %v6263 = vsel %vm5452, %v6262, %v6258
    %v6264 = vlaneseq
    %v6265 = vshrl.u32 %v6264, 7
    %v6266 = vsub.s32 %v5454, %v6265
    %v6267 = vrot.slane %v1549, %v6266
    %v6268 = vsel %vm5459, %v6267, %v6263
    %v6269 = vlaneseq
    %v6270 = vshrl.u32 %v6269, 7
    %v6271 = vsub.s32 %v5461, %v6270
    %v6272 = vrot.slane %v1552, %v6271
    %v6273 = vsel %vm5466, %v6272, %v6268
    %v6274 = vlaneseq
    %v6275 = vshrl.u32 %v6274, 7
    %v6276 = vsub.s32 %v5468, %v6275
    %v6277 = vrot.slane %v1555, %v6276
    %v6278 = vsel %vm5473, %v6277, %v6273
    %v6279 = vlaneseq
    %v6280 = vshrl.u32 %v6279, 7
    %v6281 = vsub.s32 %v5475, %v6280
    %v6282 = vrot.slane %v1558, %v6281
    %v6283 = vsel %vm5480, %v6282, %v6278
    %v6284 = vlaneseq
    %v6285 = vshrl.u32 %v6284, 7
    %v6286 = vsub.s32 %v5482, %v6285
    %v6287 = vrot.slane %v1561, %v6286
    %v6288 = vsel %vm5487, %v6287, %v6283
    %v6289 = vlaneseq
    %v6290 = vshrl.u32 %v6289, 7
    %v6291 = vsub.s32 %v5489, %v6290
    %v6292 = vrot.slane %v1564, %v6291
    %v6293 = vsel %vm5494, %v6292, %v6288
    %v6294 = vlaneseq
    %v6295 = vshrl.u32 %v6294, 7
    %v6296 = vsub.s32 %v5496, %v6295
    %v6297 = vrot.slane %v1567, %v6296
    %v6298 = vsel %vm5501, %v6297, %v6293
    %v6299 = vlaneseq
    %v6300 = vshrl.u32 %v6299, 7
    %v6301 = vsub.s32 %v5503, %v6300
    %v6302 = vrot.slane %v1570, %v6301
    %v6303 = vsel %vm5508, %v6302, %v6298
    %v6304 = vlaneseq
    %v6305 = vshrl.u32 %v6304, 7
    %v6306 = vsub.s32 %v5510, %v6305
    %v6307 = vrot.slane %v1573, %v6306
    %v6308 = vsel %vm5515, %v6307, %v6303
    %v6309 = vlaneseq
    %v6310 = vshrl.u32 %v6309, 7
    %v6311 = vsub.s32 %v5517, %v6310
    %v6312 = vrot.slane %v1576, %v6311
    %v6313 = vsel %vm5522, %v6312, %v6308
    %v6314 = vlaneseq
    %v6315 = vshrl.u32 %v6314, 7
    %v6316 = vsub.s32 %v5414, %v6315
    %v6317 = vrot.slane %v1579, %v6316
    %v6318 = vlaneseq
    %v6319 = vshrl.u32 %v6318, 7
    %v6320 = vsub.s32 %v5419, %v6319
    %v6321 = vrot.slane %v1582, %v6320
    %v6322 = vsel %vm5424, %v6321, %v6317
    %v6323 = vlaneseq
    %v6324 = vshrl.u32 %v6323, 7
    %v6325 = vsub.s32 %v5426, %v6324
    %v6326 = vrot.slane %v1585, %v6325
    %v6327 = vsel %vm5431, %v6326, %v6322
    %v6328 = vlaneseq
    %v6329 = vshrl.u32 %v6328, 7
    %v6330 = vsub.s32 %v5433, %v6329
    %v6331 = vrot.slane %v1588, %v6330
    %v6332 = vsel %vm5438, %v6331, %v6327
    %v6333 = vlaneseq
    %v6334 = vshrl.u32 %v6333, 7
    %v6335 = vsub.s32 %v5440, %v6334
    %v6336 = vrot.slane %v1591, %v6335
    %v6337 = vsel %vm5445, %v6336, %v6332
    %v6338 = vlaneseq
    %v6339 = vshrl.u32 %v6338, 7
    %v6340 = vsub.s32 %v5447, %v6339
    %v6341 = vrot.slane %v1594, %v6340
    %v6342 = vsel %vm5452, %v6341, %v6337
    %v6343 = vlaneseq
    %v6344 = vshrl.u32 %v6343, 7
    %v6345 = vsub.s32 %v5454, %v6344
    %v6346 = vrot.slane %v1597, %v6345
    %v6347 = vsel %vm5459, %v6346, %v6342
    %v6348 = vlaneseq
    %v6349 = vshrl.u32 %v6348, 7
    %v6350 = vsub.s32 %v5461, %v6349
    %v6351 = vrot.slane %v1600, %v6350
    %v6352 = vsel %vm5466, %v6351, %v6347
    %v6353 = vlaneseq
    %v6354 = vshrl.u32 %v6353, 7
    %v6355 = vsub.s32 %v5468, %v6354
    %v6356 = vrot.slane %v1603, %v6355
    %v6357 = vsel %vm5473, %v6356, %v6352
    %v6358 = vlaneseq
    %v6359 = vshrl.u32 %v6358, 7
    %v6360 = vsub.s32 %v5475, %v6359
    %v6361 = vrot.slane %v1606, %v6360
    %v6362 = vsel %vm5480, %v6361, %v6357
    %v6363 = vlaneseq
    %v6364 = vshrl.u32 %v6363, 7
    %v6365 = vsub.s32 %v5482, %v6364
    %v6366 = vrot.slane %v1609, %v6365
    %v6367 = vsel %vm5487, %v6366, %v6362
    %v6368 = vlaneseq
    %v6369 = vshrl.u32 %v6368, 7
    %v6370 = vsub.s32 %v5489, %v6369
    %v6371 = vrot.slane %v1612, %v6370
    %v6372 = vsel %vm5494, %v6371, %v6367
    %v6373 = vlaneseq
    %v6374 = vshrl.u32 %v6373, 7
    %v6375 = vsub.s32 %v5496, %v6374
    %v6376 = vrot.slane %v1615, %v6375
    %v6377 = vsel %vm5501, %v6376, %v6372
    %v6378 = vlaneseq
    %v6379 = vshrl.u32 %v6378, 7
    %v6380 = vsub.s32 %v5503, %v6379
    %v6381 = vrot.slane %v1618, %v6380
    %v6382 = vsel %vm5508, %v6381, %v6377
    %v6383 = vlaneseq
    %v6384 = vshrl.u32 %v6383, 7
    %v6385 = vsub.s32 %v5510, %v6384
    %v6386 = vrot.slane %v1621, %v6385
    %v6387 = vsel %vm5515, %v6386, %v6382
    %v6388 = vlaneseq
    %v6389 = vshrl.u32 %v6388, 7
    %v6390 = vsub.s32 %v5517, %v6389
    %v6391 = vrot.slane %v1624, %v6390
    %v6392 = vsel %vm5522, %v6391, %v6387
    %v6393 = vlaneseq
    %v6394 = vshrl.u32 %v6393, 7
    %v6395 = vsub.s32 %v5414, %v6394
    %v6396 = vrot.slane %v1627, %v6395
    %v6397 = vlaneseq
    %v6398 = vshrl.u32 %v6397, 7
    %v6399 = vsub.s32 %v5419, %v6398
    %v6400 = vrot.slane %v1630, %v6399
    %v6401 = vsel %vm5424, %v6400, %v6396
    %v6402 = vlaneseq
    %v6403 = vshrl.u32 %v6402, 7
    %v6404 = vsub.s32 %v5426, %v6403
    %v6405 = vrot.slane %v1633, %v6404
    %v6406 = vsel %vm5431, %v6405, %v6401
    %v6407 = vlaneseq
    %v6408 = vshrl.u32 %v6407, 7
    %v6409 = vsub.s32 %v5433, %v6408
    %v6410 = vrot.slane %v1636, %v6409
    %v6411 = vsel %vm5438, %v6410, %v6406
    %v6412 = vlaneseq
    %v6413 = vshrl.u32 %v6412, 7
    %v6414 = vsub.s32 %v5440, %v6413
    %v6415 = vrot.slane %v1639, %v6414
    %v6416 = vsel %vm5445, %v6415, %v6411
    %v6417 = vlaneseq
    %v6418 = vshrl.u32 %v6417, 7
    %v6419 = vsub.s32 %v5447, %v6418
    %v6420 = vrot.slane %v1642, %v6419
    %v6421 = vsel %vm5452, %v6420, %v6416
    %v6422 = vlaneseq
    %v6423 = vshrl.u32 %v6422, 7
    %v6424 = vsub.s32 %v5454, %v6423
    %v6425 = vrot.slane %v1645, %v6424
    %v6426 = vsel %vm5459, %v6425, %v6421
    %v6427 = vlaneseq
    %v6428 = vshrl.u32 %v6427, 7
    %v6429 = vsub.s32 %v5461, %v6428
    %v6430 = vrot.slane %v1648, %v6429
    %v6431 = vsel %vm5466, %v6430, %v6426
    %v6432 = vlaneseq
    %v6433 = vshrl.u32 %v6432, 7
    %v6434 = vsub.s32 %v5468, %v6433
    %v6435 = vrot.slane %v1651, %v6434
    %v6436 = vsel %vm5473, %v6435, %v6431
    %v6437 = vlaneseq
    %v6438 = vshrl.u32 %v6437, 7
    %v6439 = vsub.s32 %v5475, %v6438
    %v6440 = vrot.slane %v1654, %v6439
    %v6441 = vsel %vm5480, %v6440, %v6436
    %v6442 = vlaneseq
    %v6443 = vshrl.u32 %v6442, 7
    %v6444 = vsub.s32 %v5482, %v6443
    %v6445 = vrot.slane %v1657, %v6444
    %v6446 = vsel %vm5487, %v6445, %v6441
    %v6447 = vlaneseq
    %v6448 = vshrl.u32 %v6447, 7
    %v6449 = vsub.s32 %v5489, %v6448
    %v6450 = vrot.slane %v1660, %v6449
    %v6451 = vsel %vm5494, %v6450, %v6446
    %v6452 = vlaneseq
    %v6453 = vshrl.u32 %v6452, 7
    %v6454 = vsub.s32 %v5496, %v6453
    %v6455 = vrot.slane %v1663, %v6454
    %v6456 = vsel %vm5501, %v6455, %v6451
    %v6457 = vlaneseq
    %v6458 = vshrl.u32 %v6457, 7
    %v6459 = vsub.s32 %v5503, %v6458
    %v6460 = vrot.slane %v1666, %v6459
    %v6461 = vsel %vm5508, %v6460, %v6456
    %v6462 = vlaneseq
    %v6463 = vshrl.u32 %v6462, 7
    %v6464 = vsub.s32 %v5510, %v6463
    %v6465 = vrot.slane %v1669, %v6464
    %v6466 = vsel %vm5515, %v6465, %v6461
    %v6467 = vlaneseq
    %v6468 = vshrl.u32 %v6467, 7
    %v6469 = vsub.s32 %v5517, %v6468
    %v6470 = vrot.slane %v1672, %v6469
    %v6471 = vsel %vm5522, %v6470, %v6466
    %v6472 = vlaneseq
    %v6473 = vshrl.u32 %v6472, 7
    %v6474 = vsub.s32 %v5414, %v6473
    %v6475 = vrot.slane %v1675, %v6474
    %v6476 = vlaneseq
    %v6477 = vshrl.u32 %v6476, 7
    %v6478 = vsub.s32 %v5419, %v6477
    %v6479 = vrot.slane %v1678, %v6478
    %v6480 = vsel %vm5424, %v6479, %v6475
    %v6481 = vlaneseq
    %v6482 = vshrl.u32 %v6481, 7
    %v6483 = vsub.s32 %v5426, %v6482
    %v6484 = vrot.slane %v1681, %v6483
    %v6485 = vsel %vm5431, %v6484, %v6480
    %v6486 = vlaneseq
    %v6487 = vshrl.u32 %v6486, 7
    %v6488 = vsub.s32 %v5433, %v6487
    %v6489 = vrot.slane %v1684, %v6488
    %v6490 = vsel %vm5438, %v6489, %v6485
    %v6491 = vlaneseq
    %v6492 = vshrl.u32 %v6491, 7
    %v6493 = vsub.s32 %v5440, %v6492
    %v6494 = vrot.slane %v1687, %v6493
    %v6495 = vsel %vm5445, %v6494, %v6490
    %v6496 = vlaneseq
    %v6497 = vshrl.u32 %v6496, 7
    %v6498 = vsub.s32 %v5447, %v6497
    %v6499 = vrot.slane %v1690, %v6498
    %v6500 = vsel %vm5452, %v6499, %v6495
    %v6501 = vlaneseq
    %v6502 = vshrl.u32 %v6501, 7
    %v6503 = vsub.s32 %v5454, %v6502
    %v6504 = vrot.slane %v1693, %v6503
    %v6505 = vsel %vm5459, %v6504, %v6500
    %v6506 = vlaneseq
    %v6507 = vshrl.u32 %v6506, 7
    %v6508 = vsub.s32 %v5461, %v6507
    %v6509 = vrot.slane %v1696, %v6508
    %v6510 = vsel %vm5466, %v6509, %v6505
    %v6511 = vlaneseq
    %v6512 = vshrl.u32 %v6511, 7
    %v6513 = vsub.s32 %v5468, %v6512
    %v6514 = vrot.slane %v1699, %v6513
    %v6515 = vsel %vm5473, %v6514, %v6510
    %v6516 = vlaneseq
    %v6517 = vshrl.u32 %v6516, 7
    %v6518 = vsub.s32 %v5475, %v6517
    %v6519 = vrot.slane %v1702, %v6518
    %v6520 = vsel %vm5480, %v6519, %v6515
    %v6521 = vlaneseq
    %v6522 = vshrl.u32 %v6521, 7
    %v6523 = vsub.s32 %v5482, %v6522
    %v6524 = vrot.slane %v1705, %v6523
    %v6525 = vsel %vm5487, %v6524, %v6520
    %v6526 = vlaneseq
    %v6527 = vshrl.u32 %v6526, 7
    %v6528 = vsub.s32 %v5489, %v6527
    %v6529 = vrot.slane %v1708, %v6528
    %v6530 = vsel %vm5494, %v6529, %v6525
    %v6531 = vlaneseq
    %v6532 = vshrl.u32 %v6531, 7
    %v6533 = vsub.s32 %v5496, %v6532
    %v6534 = vrot.slane %v1711, %v6533
    %v6535 = vsel %vm5501, %v6534, %v6530
    %v6536 = vlaneseq
    %v6537 = vshrl.u32 %v6536, 7
    %v6538 = vsub.s32 %v5503, %v6537
    %v6539 = vrot.slane %v1714, %v6538
    %v6540 = vsel %vm5508, %v6539, %v6535
    %v6541 = vlaneseq
    %v6542 = vshrl.u32 %v6541, 7
    %v6543 = vsub.s32 %v5510, %v6542
    %v6544 = vrot.slane %v1717, %v6543
    %v6545 = vsel %vm5515, %v6544, %v6540
    %v6546 = vlaneseq
    %v6547 = vshrl.u32 %v6546, 7
    %v6548 = vsub.s32 %v5517, %v6547
    %v6549 = vrot.slane %v1720, %v6548
    %v6550 = vsel %vm5522, %v6549, %v6545
    %v6551 = vlaneseq
    %v6552 = vshrl.u32 %v6551, 7
    %v6553 = vsub.s32 %v5414, %v6552
    %v6554 = vrot.slane %v1723, %v6553
    %v6555 = vlaneseq
    %v6556 = vshrl.u32 %v6555, 7
    %v6557 = vsub.s32 %v5419, %v6556
    %v6558 = vrot.slane %v1726, %v6557
    %v6559 = vsel %vm5424, %v6558, %v6554
    %v6560 = vlaneseq
    %v6561 = vshrl.u32 %v6560, 7
    %v6562 = vsub.s32 %v5426, %v6561
    %v6563 = vrot.slane %v1729, %v6562
    %v6564 = vsel %vm5431, %v6563, %v6559
    %v6565 = vlaneseq
    %v6566 = vshrl.u32 %v6565, 7
    %v6567 = vsub.s32 %v5433, %v6566
    %v6568 = vrot.slane %v1732, %v6567
    %v6569 = vsel %vm5438, %v6568, %v6564
    %v6570 = vlaneseq
    %v6571 = vshrl.u32 %v6570, 7
    %v6572 = vsub.s32 %v5440, %v6571
    %v6573 = vrot.slane %v1735, %v6572
    %v6574 = vsel %vm5445, %v6573, %v6569
    %v6575 = vlaneseq
    %v6576 = vshrl.u32 %v6575, 7
    %v6577 = vsub.s32 %v5447, %v6576
    %v6578 = vrot.slane %v1738, %v6577
    %v6579 = vsel %vm5452, %v6578, %v6574
    %v6580 = vlaneseq
    %v6581 = vshrl.u32 %v6580, 7
    %v6582 = vsub.s32 %v5454, %v6581
    %v6583 = vrot.slane %v1741, %v6582
    %v6584 = vsel %vm5459, %v6583, %v6579
    %v6585 = vlaneseq
    %v6586 = vshrl.u32 %v6585, 7
    %v6587 = vsub.s32 %v5461, %v6586
    %v6588 = vrot.slane %v1744, %v6587
    %v6589 = vsel %vm5466, %v6588, %v6584
    %v6590 = vlaneseq
    %v6591 = vshrl.u32 %v6590, 7
    %v6592 = vsub.s32 %v5468, %v6591
    %v6593 = vrot.slane %v1747, %v6592
    %v6594 = vsel %vm5473, %v6593, %v6589
    %v6595 = vlaneseq
    %v6596 = vshrl.u32 %v6595, 7
    %v6597 = vsub.s32 %v5475, %v6596
    %v6598 = vrot.slane %v1750, %v6597
    %v6599 = vsel %vm5480, %v6598, %v6594
    %v6600 = vlaneseq
    %v6601 = vshrl.u32 %v6600, 7
    %v6602 = vsub.s32 %v5482, %v6601
    %v6603 = vrot.slane %v1753, %v6602
    %v6604 = vsel %vm5487, %v6603, %v6599
    %v6605 = vlaneseq
    %v6606 = vshrl.u32 %v6605, 7
    %v6607 = vsub.s32 %v5489, %v6606
    %v6608 = vrot.slane %v1756, %v6607
    %v6609 = vsel %vm5494, %v6608, %v6604
    %v6610 = vlaneseq
    %v6611 = vshrl.u32 %v6610, 7
    %v6612 = vsub.s32 %v5496, %v6611
    %v6613 = vrot.slane %v1759, %v6612
    %v6614 = vsel %vm5501, %v6613, %v6609
    %v6615 = vlaneseq
    %v6616 = vshrl.u32 %v6615, 7
    %v6617 = vsub.s32 %v5503, %v6616
    %v6618 = vrot.slane %v1762, %v6617
    %v6619 = vsel %vm5508, %v6618, %v6614
    %v6620 = vlaneseq
    %v6621 = vshrl.u32 %v6620, 7
    %v6622 = vsub.s32 %v5510, %v6621
    %v6623 = vrot.slane %v1765, %v6622
    %v6624 = vsel %vm5515, %v6623, %v6619
    %v6625 = vlaneseq
    %v6626 = vshrl.u32 %v6625, 7
    %v6627 = vsub.s32 %v5517, %v6626
    %v6628 = vrot.slane %v1768, %v6627
    %v6629 = vsel %vm5522, %v6628, %v6624
    %v6630 = vlaneseq
    %v6631 = vshrl.u32 %v6630, 7
    %v6632 = vsub.s32 %v5414, %v6631
    %v6633 = vrot.slane %v1771, %v6632
    %v6634 = vlaneseq
    %v6635 = vshrl.u32 %v6634, 7
    %v6636 = vsub.s32 %v5419, %v6635
    %v6637 = vrot.slane %v1774, %v6636
    %v6638 = vsel %vm5424, %v6637, %v6633
    %v6639 = vlaneseq
    %v6640 = vshrl.u32 %v6639, 7
    %v6641 = vsub.s32 %v5426, %v6640
    %v6642 = vrot.slane %v1777, %v6641
    %v6643 = vsel %vm5431, %v6642, %v6638
    %v6644 = vlaneseq
    %v6645 = vshrl.u32 %v6644, 7
    %v6646 = vsub.s32 %v5433, %v6645
    %v6647 = vrot.slane %v1780, %v6646
    %v6648 = vsel %vm5438, %v6647, %v6643
    %v6649 = vlaneseq
    %v6650 = vshrl.u32 %v6649, 7
    %v6651 = vsub.s32 %v5440, %v6650
    %v6652 = vrot.slane %v1783, %v6651
    %v6653 = vsel %vm5445, %v6652, %v6648
    %v6654 = vlaneseq
    %v6655 = vshrl.u32 %v6654, 7
    %v6656 = vsub.s32 %v5447, %v6655
    %v6657 = vrot.slane %v1786, %v6656
    %v6658 = vsel %vm5452, %v6657, %v6653
    %v6659 = vlaneseq
    %v6660 = vshrl.u32 %v6659, 7
    %v6661 = vsub.s32 %v5454, %v6660
    %v6662 = vrot.slane %v1789, %v6661
    %v6663 = vsel %vm5459, %v6662, %v6658
    %v6664 = vlaneseq
    %v6665 = vshrl.u32 %v6664, 7
    %v6666 = vsub.s32 %v5461, %v6665
    %v6667 = vrot.slane %v1792, %v6666
    %v6668 = vsel %vm5466, %v6667, %v6663
    %v6669 = vlaneseq
    %v6670 = vshrl.u32 %v6669, 7
    %v6671 = vsub.s32 %v5468, %v6670
    %v6672 = vrot.slane %v1795, %v6671
    %v6673 = vsel %vm5473, %v6672, %v6668
    %v6674 = vlaneseq
    %v6675 = vshrl.u32 %v6674, 7
    %v6676 = vsub.s32 %v5475, %v6675
    %v6677 = vrot.slane %v1798, %v6676
    %v6678 = vsel %vm5480, %v6677, %v6673
    %v6679 = vlaneseq
    %v6680 = vshrl.u32 %v6679, 7
    %v6681 = vsub.s32 %v5482, %v6680
    %v6682 = vrot.slane %v1801, %v6681
    %v6683 = vsel %vm5487, %v6682, %v6678
    %v6684 = vlaneseq
    %v6685 = vshrl.u32 %v6684, 7
    %v6686 = vsub.s32 %v5489, %v6685
    %v6687 = vrot.slane %v1804, %v6686
    %v6688 = vsel %vm5494, %v6687, %v6683
    %v6689 = vlaneseq
    %v6690 = vshrl.u32 %v6689, 7
    %v6691 = vsub.s32 %v5496, %v6690
    %v6692 = vrot.slane %v1807, %v6691
    %v6693 = vsel %vm5501, %v6692, %v6688
    %v6694 = vlaneseq
    %v6695 = vshrl.u32 %v6694, 7
    %v6696 = vsub.s32 %v5503, %v6695
    %v6697 = vrot.slane %v1810, %v6696
    %v6698 = vsel %vm5508, %v6697, %v6693
    %v6699 = vlaneseq
    %v6700 = vshrl.u32 %v6699, 7
    %v6701 = vsub.s32 %v5510, %v6700
    %v6702 = vrot.slane %v1813, %v6701
    %v6703 = vsel %vm5515, %v6702, %v6698
    %v6704 = vlaneseq
    %v6705 = vshrl.u32 %v6704, 7
    %v6706 = vsub.s32 %v5517, %v6705
    %v6707 = vrot.slane %v1816, %v6706
    %v6708 = vsel %vm5522, %v6707, %v6703
    %v6709 = vlaneseq
    %v6710 = vshrl.u32 %v6709, 7
    %v6711 = vsub.s32 %v5414, %v6710
    %v6712 = vrot.slane %v1819, %v6711
    %v6713 = vlaneseq
    %v6714 = vshrl.u32 %v6713, 7
    %v6715 = vsub.s32 %v5419, %v6714
    %v6716 = vrot.slane %v1822, %v6715
    %v6717 = vsel %vm5424, %v6716, %v6712
    %v6718 = vlaneseq
    %v6719 = vshrl.u32 %v6718, 7
    %v6720 = vsub.s32 %v5426, %v6719
    %v6721 = vrot.slane %v1825, %v6720
    %v6722 = vsel %vm5431, %v6721, %v6717
    %v6723 = vlaneseq
    %v6724 = vshrl.u32 %v6723, 7
    %v6725 = vsub.s32 %v5433, %v6724
    %v6726 = vrot.slane %v1828, %v6725
    %v6727 = vsel %vm5438, %v6726, %v6722
    %v6728 = vlaneseq
    %v6729 = vshrl.u32 %v6728, 7
    %v6730 = vsub.s32 %v5440, %v6729
    %v6731 = vrot.slane %v1831, %v6730
    %v6732 = vsel %vm5445, %v6731, %v6727
    %v6733 = vlaneseq
    %v6734 = vshrl.u32 %v6733, 7
    %v6735 = vsub.s32 %v5447, %v6734
    %v6736 = vrot.slane %v1834, %v6735
    %v6737 = vsel %vm5452, %v6736, %v6732
    %v6738 = vlaneseq
    %v6739 = vshrl.u32 %v6738, 7
    %v6740 = vsub.s32 %v5454, %v6739
    %v6741 = vrot.slane %v1837, %v6740
    %v6742 = vsel %vm5459, %v6741, %v6737
    %v6743 = vlaneseq
    %v6744 = vshrl.u32 %v6743, 7
    %v6745 = vsub.s32 %v5461, %v6744
    %v6746 = vrot.slane %v1840, %v6745
    %v6747 = vsel %vm5466, %v6746, %v6742
    %v6748 = vlaneseq
    %v6749 = vshrl.u32 %v6748, 7
    %v6750 = vsub.s32 %v5468, %v6749
    %v6751 = vrot.slane %v1843, %v6750
    %v6752 = vsel %vm5473, %v6751, %v6747
    %v6753 = vlaneseq
    %v6754 = vshrl.u32 %v6753, 7
    %v6755 = vsub.s32 %v5475, %v6754
    %v6756 = vrot.slane %v1846, %v6755
    %v6757 = vsel %vm5480, %v6756, %v6752
    %v6758 = vlaneseq
    %v6759 = vshrl.u32 %v6758, 7
    %v6760 = vsub.s32 %v5482, %v6759
    %v6761 = vrot.slane %v1849, %v6760
    %v6762 = vsel %vm5487, %v6761, %v6757
    %v6763 = vlaneseq
    %v6764 = vshrl.u32 %v6763, 7
    %v6765 = vsub.s32 %v5489, %v6764
    %v6766 = vrot.slane %v1852, %v6765
    %v6767 = vsel %vm5494, %v6766, %v6762
    %v6768 = vlaneseq
    %v6769 = vshrl.u32 %v6768, 7
    %v6770 = vsub.s32 %v5496, %v6769
    %v6771 = vrot.slane %v1855, %v6770
    %v6772 = vsel %vm5501, %v6771, %v6767
    %v6773 = vlaneseq
    %v6774 = vshrl.u32 %v6773, 7
    %v6775 = vsub.s32 %v5503, %v6774
    %v6776 = vrot.slane %v1858, %v6775
    %v6777 = vsel %vm5508, %v6776, %v6772
    %v6778 = vlaneseq
    %v6779 = vshrl.u32 %v6778, 7
    %v6780 = vsub.s32 %v5510, %v6779
    %v6781 = vrot.slane %v1861, %v6780
    %v6782 = vsel %vm5515, %v6781, %v6777
    %v6783 = vlaneseq
    %v6784 = vshrl.u32 %v6783, 7
    %v6785 = vsub.s32 %v5517, %v6784
    %v6786 = vrot.slane %v1864, %v6785
    %v6787 = vsel %vm5522, %v6786, %v6782
    %v6788 = vlaneseq
    %v6789 = vshrl.u32 %v6788, 7
    %v6790 = vsub.s32 %v5414, %v6789
    %v6791 = vrot.slane %v1867, %v6790
    %v6792 = vlaneseq
    %v6793 = vshrl.u32 %v6792, 7
    %v6794 = vsub.s32 %v5419, %v6793
    %v6795 = vrot.slane %v1870, %v6794
    %v6796 = vsel %vm5424, %v6795, %v6791
    %v6797 = vlaneseq
    %v6798 = vshrl.u32 %v6797, 7
    %v6799 = vsub.s32 %v5426, %v6798
    %v6800 = vrot.slane %v1873, %v6799
    %v6801 = vsel %vm5431, %v6800, %v6796
    %v6802 = vlaneseq
    %v6803 = vshrl.u32 %v6802, 7
    %v6804 = vsub.s32 %v5433, %v6803
    %v6805 = vrot.slane %v1876, %v6804
    %v6806 = vsel %vm5438, %v6805, %v6801
    %v6807 = vlaneseq
    %v6808 = vshrl.u32 %v6807, 7
    %v6809 = vsub.s32 %v5440, %v6808
    %v6810 = vrot.slane %v1879, %v6809
    %v6811 = vsel %vm5445, %v6810, %v6806
    %v6812 = vlaneseq
    %v6813 = vshrl.u32 %v6812, 7
    %v6814 = vsub.s32 %v5447, %v6813
    %v6815 = vrot.slane %v1882, %v6814
    %v6816 = vsel %vm5452, %v6815, %v6811
    %v6817 = vlaneseq
    %v6818 = vshrl.u32 %v6817, 7
    %v6819 = vsub.s32 %v5454, %v6818
    %v6820 = vrot.slane %v1885, %v6819
    %v6821 = vsel %vm5459, %v6820, %v6816
    %v6822 = vlaneseq
    %v6823 = vshrl.u32 %v6822, 7
    %v6824 = vsub.s32 %v5461, %v6823
    %v6825 = vrot.slane %v1888, %v6824
    %v6826 = vsel %vm5466, %v6825, %v6821
    %v6827 = vlaneseq
    %v6828 = vshrl.u32 %v6827, 7
    %v6829 = vsub.s32 %v5468, %v6828
    %v6830 = vrot.slane %v1891, %v6829
    %v6831 = vsel %vm5473, %v6830, %v6826
    %v6832 = vlaneseq
    %v6833 = vshrl.u32 %v6832, 7
    %v6834 = vsub.s32 %v5475, %v6833
    %v6835 = vrot.slane %v1894, %v6834
    %v6836 = vsel %vm5480, %v6835, %v6831
    %v6837 = vlaneseq
    %v6838 = vshrl.u32 %v6837, 7
    %v6839 = vsub.s32 %v5482, %v6838
    %v6840 = vrot.slane %v1897, %v6839
    %v6841 = vsel %vm5487, %v6840, %v6836
    %v6842 = vlaneseq
    %v6843 = vshrl.u32 %v6842, 7
    %v6844 = vsub.s32 %v5489, %v6843
    %v6845 = vrot.slane %v1900, %v6844
    %v6846 = vsel %vm5494, %v6845, %v6841
    %v6847 = vlaneseq
    %v6848 = vshrl.u32 %v6847, 7
    %v6849 = vsub.s32 %v5496, %v6848
    %v6850 = vrot.slane %v1903, %v6849
    %v6851 = vsel %vm5501, %v6850, %v6846
    %v6852 = vlaneseq
    %v6853 = vshrl.u32 %v6852, 7
    %v6854 = vsub.s32 %v5503, %v6853
    %v6855 = vrot.slane %v1906, %v6854
    %v6856 = vsel %vm5508, %v6855, %v6851
    %v6857 = vlaneseq
    %v6858 = vshrl.u32 %v6857, 7
    %v6859 = vsub.s32 %v5510, %v6858
    %v6860 = vrot.slane %v1909, %v6859
    %v6861 = vsel %vm5515, %v6860, %v6856
    %v6862 = vlaneseq
    %v6863 = vshrl.u32 %v6862, 7
    %v6864 = vsub.s32 %v5517, %v6863
    %v6865 = vrot.slane %v1912, %v6864
    %v6866 = vsel %vm5522, %v6865, %v6861
    %v6867 = vlaneseq
    %v6868 = vshrl.u32 %v6867, 7
    %v6869 = vsub.s32 %v5414, %v6868
    %v6870 = vrot.slane %v1915, %v6869
    %v6871 = vlaneseq
    %v6872 = vshrl.u32 %v6871, 7
    %v6873 = vsub.s32 %v5419, %v6872
    %v6874 = vrot.slane %v1918, %v6873
    %v6875 = vsel %vm5424, %v6874, %v6870
    %v6876 = vlaneseq
    %v6877 = vshrl.u32 %v6876, 7
    %v6878 = vsub.s32 %v5426, %v6877
    %v6879 = vrot.slane %v1921, %v6878
    %v6880 = vsel %vm5431, %v6879, %v6875
    %v6881 = vlaneseq
    %v6882 = vshrl.u32 %v6881, 7
    %v6883 = vsub.s32 %v5433, %v6882
    %v6884 = vrot.slane %v1924, %v6883
    %v6885 = vsel %vm5438, %v6884, %v6880
    %v6886 = vlaneseq
    %v6887 = vshrl.u32 %v6886, 7
    %v6888 = vsub.s32 %v5440, %v6887
    %v6889 = vrot.slane %v1927, %v6888
    %v6890 = vsel %vm5445, %v6889, %v6885
    %v6891 = vlaneseq
    %v6892 = vshrl.u32 %v6891, 7
    %v6893 = vsub.s32 %v5447, %v6892
    %v6894 = vrot.slane %v1930, %v6893
    %v6895 = vsel %vm5452, %v6894, %v6890
    %v6896 = vlaneseq
    %v6897 = vshrl.u32 %v6896, 7
    %v6898 = vsub.s32 %v5454, %v6897
    %v6899 = vrot.slane %v1933, %v6898
    %v6900 = vsel %vm5459, %v6899, %v6895
    %v6901 = vlaneseq
    %v6902 = vshrl.u32 %v6901, 7
    %v6903 = vsub.s32 %v5461, %v6902
    %v6904 = vrot.slane %v1936, %v6903
    %v6905 = vsel %vm5466, %v6904, %v6900
    %v6906 = vlaneseq
    %v6907 = vshrl.u32 %v6906, 7
    %v6908 = vsub.s32 %v5468, %v6907
    %v6909 = vrot.slane %v1939, %v6908
    %v6910 = vsel %vm5473, %v6909, %v6905
    %v6911 = vlaneseq
    %v6912 = vshrl.u32 %v6911, 7
    %v6913 = vsub.s32 %v5475, %v6912
    %v6914 = vrot.slane %v1942, %v6913
    %v6915 = vsel %vm5480, %v6914, %v6910
    %v6916 = vlaneseq
    %v6917 = vshrl.u32 %v6916, 7
    %v6918 = vsub.s32 %v5482, %v6917
    %v6919 = vrot.slane %v1945, %v6918
    %v6920 = vsel %vm5487, %v6919, %v6915
    %v6921 = vlaneseq
    %v6922 = vshrl.u32 %v6921, 7
    %v6923 = vsub.s32 %v5489, %v6922
    %v6924 = vrot.slane %v1948, %v6923
    %v6925 = vsel %vm5494, %v6924, %v6920
    %v6926 = vlaneseq
    %v6927 = vshrl.u32 %v6926, 7
    %v6928 = vsub.s32 %v5496, %v6927
    %v6929 = vrot.slane %v1951, %v6928
    %v6930 = vsel %vm5501, %v6929, %v6925
    %v6931 = vlaneseq
    %v6932 = vshrl.u32 %v6931, 7
    %v6933 = vsub.s32 %v5503, %v6932
    %v6934 = vrot.slane %v1954, %v6933
    %v6935 = vsel %vm5508, %v6934, %v6930
    %v6936 = vlaneseq
    %v6937 = vshrl.u32 %v6936, 7
    %v6938 = vsub.s32 %v5510, %v6937
    %v6939 = vrot.slane %v1957, %v6938
    %v6940 = vsel %vm5515, %v6939, %v6935
    %v6941 = vlaneseq
    %v6942 = vshrl.u32 %v6941, 7
    %v6943 = vsub.s32 %v5517, %v6942
    %v6944 = vrot.slane %v1960, %v6943
    %v6945 = vsel %vm5522, %v6944, %v6940
    %v6946 = vlaneseq
    %v6947 = vshrl.u32 %v6946, 7
    %v6948 = vsub.s32 %v5414, %v6947
    %v6949 = vrot.slane %v1963, %v6948
    %v6950 = vlaneseq
    %v6951 = vshrl.u32 %v6950, 7
    %v6952 = vsub.s32 %v5419, %v6951
    %v6953 = vrot.slane %v1966, %v6952
    %v6954 = vsel %vm5424, %v6953, %v6949
    %v6955 = vlaneseq
    %v6956 = vshrl.u32 %v6955, 7
    %v6957 = vsub.s32 %v5426, %v6956
    %v6958 = vrot.slane %v1969, %v6957
    %v6959 = vsel %vm5431, %v6958, %v6954
    %v6960 = vlaneseq
    %v6961 = vshrl.u32 %v6960, 7
    %v6962 = vsub.s32 %v5433, %v6961
    %v6963 = vrot.slane %v1972, %v6962
    %v6964 = vsel %vm5438, %v6963, %v6959
    %v6965 = vlaneseq
    %v6966 = vshrl.u32 %v6965, 7
    %v6967 = vsub.s32 %v5440, %v6966
    %v6968 = vrot.slane %v1975, %v6967
    %v6969 = vsel %vm5445, %v6968, %v6964
    %v6970 = vlaneseq
    %v6971 = vshrl.u32 %v6970, 7
    %v6972 = vsub.s32 %v5447, %v6971
    %v6973 = vrot.slane %v1978, %v6972
    %v6974 = vsel %vm5452, %v6973, %v6969
    %v6975 = vlaneseq
    %v6976 = vshrl.u32 %v6975, 7
    %v6977 = vsub.s32 %v5454, %v6976
    %v6978 = vrot.slane %v1981, %v6977
    %v6979 = vsel %vm5459, %v6978, %v6974
    %v6980 = vlaneseq
    %v6981 = vshrl.u32 %v6980, 7
    %v6982 = vsub.s32 %v5461, %v6981
    %v6983 = vrot.slane %v1984, %v6982
    %v6984 = vsel %vm5466, %v6983, %v6979
    %v6985 = vlaneseq
    %v6986 = vshrl.u32 %v6985, 7
    %v6987 = vsub.s32 %v5468, %v6986
    %v6988 = vrot.slane %v1987, %v6987
    %v6989 = vsel %vm5473, %v6988, %v6984
    %v6990 = vlaneseq
    %v6991 = vshrl.u32 %v6990, 7
    %v6992 = vsub.s32 %v5475, %v6991
    %v6993 = vrot.slane %v1990, %v6992
    %v6994 = vsel %vm5480, %v6993, %v6989
    %v6995 = vlaneseq
    %v6996 = vshrl.u32 %v6995, 7
    %v6997 = vsub.s32 %v5482, %v6996
    %v6998 = vrot.slane %v1993, %v6997
    %v6999 = vsel %vm5487, %v6998, %v6994
    %v7000 = vlaneseq
    %v7001 = vshrl.u32 %v7000, 7
    %v7002 = vsub.s32 %v5489, %v7001
    %v7003 = vrot.slane %v1996, %v7002
    %v7004 = vsel %vm5494, %v7003, %v6999
    %v7005 = vlaneseq
    %v7006 = vshrl.u32 %v7005, 7
    %v7007 = vsub.s32 %v5496, %v7006
    %v7008 = vrot.slane %v1999, %v7007
    %v7009 = vsel %vm5501, %v7008, %v7004
    %v7010 = vlaneseq
    %v7011 = vshrl.u32 %v7010, 7
    %v7012 = vsub.s32 %v5503, %v7011
    %v7013 = vrot.slane %v2002, %v7012
    %v7014 = vsel %vm5508, %v7013, %v7009
    %v7015 = vlaneseq
    %v7016 = vshrl.u32 %v7015, 7
    %v7017 = vsub.s32 %v5510, %v7016
    %v7018 = vrot.slane %v2005, %v7017
    %v7019 = vsel %vm5515, %v7018, %v7014
    %v7020 = vlaneseq
    %v7021 = vshrl.u32 %v7020, 7
    %v7022 = vsub.s32 %v5517, %v7021
    %v7023 = vrot.slane %v2008, %v7022
    %v7024 = vsel %vm5522, %v7023, %v7019
    %v7025 = vlaneseq
    %v7026 = vshrl.u32 %v7025, 7
    %v7027 = vsub.s32 %v5414, %v7026
    %v7028 = vrot.slane %v2011, %v7027
    %v7029 = vlaneseq
    %v7030 = vshrl.u32 %v7029, 7
    %v7031 = vsub.s32 %v5419, %v7030
    %v7032 = vrot.slane %v2014, %v7031
    %v7033 = vsel %vm5424, %v7032, %v7028
    %v7034 = vlaneseq
    %v7035 = vshrl.u32 %v7034, 7
    %v7036 = vsub.s32 %v5426, %v7035
    %v7037 = vrot.slane %v2017, %v7036
    %v7038 = vsel %vm5431, %v7037, %v7033
    %v7039 = vlaneseq
    %v7040 = vshrl.u32 %v7039, 7
    %v7041 = vsub.s32 %v5433, %v7040
    %v7042 = vrot.slane %v2020, %v7041
    %v7043 = vsel %vm5438, %v7042, %v7038
    %v7044 = vlaneseq
    %v7045 = vshrl.u32 %v7044, 7
    %v7046 = vsub.s32 %v5440, %v7045
    %v7047 = vrot.slane %v2023, %v7046
    %v7048 = vsel %vm5445, %v7047, %v7043
    %v7049 = vlaneseq
    %v7050 = vshrl.u32 %v7049, 7
    %v7051 = vsub.s32 %v5447, %v7050
    %v7052 = vrot.slane %v2026, %v7051
    %v7053 = vsel %vm5452, %v7052, %v7048
    %v7054 = vlaneseq
    %v7055 = vshrl.u32 %v7054, 7
    %v7056 = vsub.s32 %v5454, %v7055
    %v7057 = vrot.slane %v2029, %v7056
    %v7058 = vsel %vm5459, %v7057, %v7053
    %v7059 = vlaneseq
    %v7060 = vshrl.u32 %v7059, 7
    %v7061 = vsub.s32 %v5461, %v7060
    %v7062 = vrot.slane %v2032, %v7061
    %v7063 = vsel %vm5466, %v7062, %v7058
    %v7064 = vlaneseq
    %v7065 = vshrl.u32 %v7064, 7
    %v7066 = vsub.s32 %v5468, %v7065
    %v7067 = vrot.slane %v2035, %v7066
    %v7068 = vsel %vm5473, %v7067, %v7063
    %v7069 = vlaneseq
    %v7070 = vshrl.u32 %v7069, 7
    %v7071 = vsub.s32 %v5475, %v7070
    %v7072 = vrot.slane %v2038, %v7071
    %v7073 = vsel %vm5480, %v7072, %v7068
    %v7074 = vlaneseq
    %v7075 = vshrl.u32 %v7074, 7
    %v7076 = vsub.s32 %v5482, %v7075
    %v7077 = vrot.slane %v2041, %v7076
    %v7078 = vsel %vm5487, %v7077, %v7073
    %v7079 = vlaneseq
    %v7080 = vshrl.u32 %v7079, 7
    %v7081 = vsub.s32 %v5489, %v7080
    %v7082 = vrot.slane %v2044, %v7081
    %v7083 = vsel %vm5494, %v7082, %v7078
    %v7084 = vlaneseq
    %v7085 = vshrl.u32 %v7084, 7
    %v7086 = vsub.s32 %v5496, %v7085
    %v7087 = vrot.slane %v2047, %v7086
    %v7088 = vsel %vm5501, %v7087, %v7083
    %v7089 = vlaneseq
    %v7090 = vshrl.u32 %v7089, 7
    %v7091 = vsub.s32 %v5503, %v7090
    %v7092 = vrot.slane %v2050, %v7091
    %v7093 = vsel %vm5508, %v7092, %v7088
    %v7094 = vlaneseq
    %v7095 = vshrl.u32 %v7094, 7
    %v7096 = vsub.s32 %v5510, %v7095
    %v7097 = vrot.slane %v2053, %v7096
    %v7098 = vsel %vm5515, %v7097, %v7093
    %v7099 = vlaneseq
    %v7100 = vshrl.u32 %v7099, 7
    %v7101 = vsub.s32 %v5517, %v7100
    %v7102 = vrot.slane %v2056, %v7101
    %v7103 = vsel %vm5522, %v7102, %v7098
    %v7104 = vlaneseq
    %v7105 = vshrl.u32 %v7104, 7
    %v7106 = vsub.s32 %v5414, %v7105
    %v7107 = vrot.slane %v2059, %v7106
    %v7108 = vlaneseq
    %v7109 = vshrl.u32 %v7108, 7
    %v7110 = vsub.s32 %v5419, %v7109
    %v7111 = vrot.slane %v2062, %v7110
    %v7112 = vsel %vm5424, %v7111, %v7107
    %v7113 = vlaneseq
    %v7114 = vshrl.u32 %v7113, 7
    %v7115 = vsub.s32 %v5426, %v7114
    %v7116 = vrot.slane %v2065, %v7115
    %v7117 = vsel %vm5431, %v7116, %v7112
    %v7118 = vlaneseq
    %v7119 = vshrl.u32 %v7118, 7
    %v7120 = vsub.s32 %v5433, %v7119
    %v7121 = vrot.slane %v2068, %v7120
    %v7122 = vsel %vm5438, %v7121, %v7117
    %v7123 = vlaneseq
    %v7124 = vshrl.u32 %v7123, 7
    %v7125 = vsub.s32 %v5440, %v7124
    %v7126 = vrot.slane %v2071, %v7125
    %v7127 = vsel %vm5445, %v7126, %v7122
    %v7128 = vlaneseq
    %v7129 = vshrl.u32 %v7128, 7
    %v7130 = vsub.s32 %v5447, %v7129
    %v7131 = vrot.slane %v2074, %v7130
    %v7132 = vsel %vm5452, %v7131, %v7127
    %v7133 = vlaneseq
    %v7134 = vshrl.u32 %v7133, 7
    %v7135 = vsub.s32 %v5454, %v7134
    %v7136 = vrot.slane %v2077, %v7135
    %v7137 = vsel %vm5459, %v7136, %v7132
    %v7138 = vlaneseq
    %v7139 = vshrl.u32 %v7138, 7
    %v7140 = vsub.s32 %v5461, %v7139
    %v7141 = vrot.slane %v2080, %v7140
    %v7142 = vsel %vm5466, %v7141, %v7137
    %v7143 = vlaneseq
    %v7144 = vshrl.u32 %v7143, 7
    %v7145 = vsub.s32 %v5468, %v7144
    %v7146 = vrot.slane %v2083, %v7145
    %v7147 = vsel %vm5473, %v7146, %v7142
    %v7148 = vlaneseq
    %v7149 = vshrl.u32 %v7148, 7
    %v7150 = vsub.s32 %v5475, %v7149
    %v7151 = vrot.slane %v2086, %v7150
    %v7152 = vsel %vm5480, %v7151, %v7147
    %v7153 = vlaneseq
    %v7154 = vshrl.u32 %v7153, 7
    %v7155 = vsub.s32 %v5482, %v7154
    %v7156 = vrot.slane %v2089, %v7155
    %v7157 = vsel %vm5487, %v7156, %v7152
    %v7158 = vlaneseq
    %v7159 = vshrl.u32 %v7158, 7
    %v7160 = vsub.s32 %v5489, %v7159
    %v7161 = vrot.slane %v2092, %v7160
    %v7162 = vsel %vm5494, %v7161, %v7157
    %v7163 = vlaneseq
    %v7164 = vshrl.u32 %v7163, 7
    %v7165 = vsub.s32 %v5496, %v7164
    %v7166 = vrot.slane %v2095, %v7165
    %v7167 = vsel %vm5501, %v7166, %v7162
    %v7168 = vlaneseq
    %v7169 = vshrl.u32 %v7168, 7
    %v7170 = vsub.s32 %v5503, %v7169
    %v7171 = vrot.slane %v2098, %v7170
    %v7172 = vsel %vm5508, %v7171, %v7167
    %v7173 = vlaneseq
    %v7174 = vshrl.u32 %v7173, 7
    %v7175 = vsub.s32 %v5510, %v7174
    %v7176 = vrot.slane %v2101, %v7175
    %v7177 = vsel %vm5515, %v7176, %v7172
    %v7178 = vlaneseq
    %v7179 = vshrl.u32 %v7178, 7
    %v7180 = vsub.s32 %v5517, %v7179
    %v7181 = vrot.slane %v2104, %v7180
    %v7182 = vsel %vm5522, %v7181, %v7177
    %v7183 = vlaneseq
    %v7184 = vshrl.u32 %v7183, 7
    %v7185 = vsub.s32 %v5414, %v7184
    %v7186 = vrot.slane %v2107, %v7185
    %v7187 = vlaneseq
    %v7188 = vshrl.u32 %v7187, 7
    %v7189 = vsub.s32 %v5419, %v7188
    %v7190 = vrot.slane %v2110, %v7189
    %v7191 = vsel %vm5424, %v7190, %v7186
    %v7192 = vlaneseq
    %v7193 = vshrl.u32 %v7192, 7
    %v7194 = vsub.s32 %v5426, %v7193
    %v7195 = vrot.slane %v2113, %v7194
    %v7196 = vsel %vm5431, %v7195, %v7191
    %v7197 = vlaneseq
    %v7198 = vshrl.u32 %v7197, 7
    %v7199 = vsub.s32 %v5433, %v7198
    %v7200 = vrot.slane %v2116, %v7199
    %v7201 = vsel %vm5438, %v7200, %v7196
    %v7202 = vlaneseq
    %v7203 = vshrl.u32 %v7202, 7
    %v7204 = vsub.s32 %v5440, %v7203
    %v7205 = vrot.slane %v2119, %v7204
    %v7206 = vsel %vm5445, %v7205, %v7201
    %v7207 = vlaneseq
    %v7208 = vshrl.u32 %v7207, 7
    %v7209 = vsub.s32 %v5447, %v7208
    %v7210 = vrot.slane %v2122, %v7209
    %v7211 = vsel %vm5452, %v7210, %v7206
    %v7212 = vlaneseq
    %v7213 = vshrl.u32 %v7212, 7
    %v7214 = vsub.s32 %v5454, %v7213
    %v7215 = vrot.slane %v2125, %v7214
    %v7216 = vsel %vm5459, %v7215, %v7211
    %v7217 = vlaneseq
    %v7218 = vshrl.u32 %v7217, 7
    %v7219 = vsub.s32 %v5461, %v7218
    %v7220 = vrot.slane %v2128, %v7219
    %v7221 = vsel %vm5466, %v7220, %v7216
    %v7222 = vlaneseq
    %v7223 = vshrl.u32 %v7222, 7
    %v7224 = vsub.s32 %v5468, %v7223
    %v7225 = vrot.slane %v2131, %v7224
    %v7226 = vsel %vm5473, %v7225, %v7221
    %v7227 = vlaneseq
    %v7228 = vshrl.u32 %v7227, 7
    %v7229 = vsub.s32 %v5475, %v7228
    %v7230 = vrot.slane %v2134, %v7229
    %v7231 = vsel %vm5480, %v7230, %v7226
    %v7232 = vlaneseq
    %v7233 = vshrl.u32 %v7232, 7
    %v7234 = vsub.s32 %v5482, %v7233
    %v7235 = vrot.slane %v2137, %v7234
    %v7236 = vsel %vm5487, %v7235, %v7231
    %v7237 = vlaneseq
    %v7238 = vshrl.u32 %v7237, 7
    %v7239 = vsub.s32 %v5489, %v7238
    %v7240 = vrot.slane %v2140, %v7239
    %v7241 = vsel %vm5494, %v7240, %v7236
    %v7242 = vlaneseq
    %v7243 = vshrl.u32 %v7242, 7
    %v7244 = vsub.s32 %v5496, %v7243
    %v7245 = vrot.slane %v2143, %v7244
    %v7246 = vsel %vm5501, %v7245, %v7241
    %v7247 = vlaneseq
    %v7248 = vshrl.u32 %v7247, 7
    %v7249 = vsub.s32 %v5503, %v7248
    %v7250 = vrot.slane %v2146, %v7249
    %v7251 = vsel %vm5508, %v7250, %v7246
    %v7252 = vlaneseq
    %v7253 = vshrl.u32 %v7252, 7
    %v7254 = vsub.s32 %v5510, %v7253
    %v7255 = vrot.slane %v2149, %v7254
    %v7256 = vsel %vm5515, %v7255, %v7251
    %v7257 = vlaneseq
    %v7258 = vshrl.u32 %v7257, 7
    %v7259 = vsub.s32 %v5517, %v7258
    %v7260 = vrot.slane %v2152, %v7259
    %v7261 = vsel %vm5522, %v7260, %v7256
    %v7262 = vlaneseq
    %v7263 = vshrl.u32 %v7262, 7
    %v7264 = vsub.s32 %v5414, %v7263
    %v7265 = vrot.slane %v2155, %v7264
    %v7266 = vlaneseq
    %v7267 = vshrl.u32 %v7266, 7
    %v7268 = vsub.s32 %v5419, %v7267
    %v7269 = vrot.slane %v2158, %v7268
    %v7270 = vsel %vm5424, %v7269, %v7265
    %v7271 = vlaneseq
    %v7272 = vshrl.u32 %v7271, 7
    %v7273 = vsub.s32 %v5426, %v7272
    %v7274 = vrot.slane %v2161, %v7273
    %v7275 = vsel %vm5431, %v7274, %v7270
    %v7276 = vlaneseq
    %v7277 = vshrl.u32 %v7276, 7
    %v7278 = vsub.s32 %v5433, %v7277
    %v7279 = vrot.slane %v2164, %v7278
    %v7280 = vsel %vm5438, %v7279, %v7275
    %v7281 = vlaneseq
    %v7282 = vshrl.u32 %v7281, 7
    %v7283 = vsub.s32 %v5440, %v7282
    %v7284 = vrot.slane %v2167, %v7283
    %v7285 = vsel %vm5445, %v7284, %v7280
    %v7286 = vlaneseq
    %v7287 = vshrl.u32 %v7286, 7
    %v7288 = vsub.s32 %v5447, %v7287
    %v7289 = vrot.slane %v2170, %v7288
    %v7290 = vsel %vm5452, %v7289, %v7285
    %v7291 = vlaneseq
    %v7292 = vshrl.u32 %v7291, 7
    %v7293 = vsub.s32 %v5454, %v7292
    %v7294 = vrot.slane %v2173, %v7293
    %v7295 = vsel %vm5459, %v7294, %v7290
    %v7296 = vlaneseq
    %v7297 = vshrl.u32 %v7296, 7
    %v7298 = vsub.s32 %v5461, %v7297
    %v7299 = vrot.slane %v2176, %v7298
    %v7300 = vsel %vm5466, %v7299, %v7295
    %v7301 = vlaneseq
    %v7302 = vshrl.u32 %v7301, 7
    %v7303 = vsub.s32 %v5468, %v7302
    %v7304 = vrot.slane %v2179, %v7303
    %v7305 = vsel %vm5473, %v7304, %v7300
    %v7306 = vlaneseq
    %v7307 = vshrl.u32 %v7306, 7
    %v7308 = vsub.s32 %v5475, %v7307
    %v7309 = vrot.slane %v2182, %v7308
    %v7310 = vsel %vm5480, %v7309, %v7305
    %v7311 = vlaneseq
    %v7312 = vshrl.u32 %v7311, 7
    %v7313 = vsub.s32 %v5482, %v7312
    %v7314 = vrot.slane %v2185, %v7313
    %v7315 = vsel %vm5487, %v7314, %v7310
    %v7316 = vlaneseq
    %v7317 = vshrl.u32 %v7316, 7
    %v7318 = vsub.s32 %v5489, %v7317
    %v7319 = vrot.slane %v2188, %v7318
    %v7320 = vsel %vm5494, %v7319, %v7315
    %v7321 = vlaneseq
    %v7322 = vshrl.u32 %v7321, 7
    %v7323 = vsub.s32 %v5496, %v7322
    %v7324 = vrot.slane %v2191, %v7323
    %v7325 = vsel %vm5501, %v7324, %v7320
    %v7326 = vlaneseq
    %v7327 = vshrl.u32 %v7326, 7
    %v7328 = vsub.s32 %v5503, %v7327
    %v7329 = vrot.slane %v2194, %v7328
    %v7330 = vsel %vm5508, %v7329, %v7325
    %v7331 = vlaneseq
    %v7332 = vshrl.u32 %v7331, 7
    %v7333 = vsub.s32 %v5510, %v7332
    %v7334 = vrot.slane %v2197, %v7333
    %v7335 = vsel %vm5515, %v7334, %v7330
    %v7336 = vlaneseq
    %v7337 = vshrl.u32 %v7336, 7
    %v7338 = vsub.s32 %v5517, %v7337
    %v7339 = vrot.slane %v2200, %v7338
    %v7340 = vsel %vm5522, %v7339, %v7335
    %v7341 = vlaneseq
    %v7342 = vshrl.u32 %v7341, 7
    %v7343 = vsub.s32 %v5414, %v7342
    %v7344 = vrot.slane %v2203, %v7343
    %v7345 = vlaneseq
    %v7346 = vshrl.u32 %v7345, 7
    %v7347 = vsub.s32 %v5419, %v7346
    %v7348 = vrot.slane %v2206, %v7347
    %v7349 = vsel %vm5424, %v7348, %v7344
    %v7350 = vlaneseq
    %v7351 = vshrl.u32 %v7350, 7
    %v7352 = vsub.s32 %v5426, %v7351
    %v7353 = vrot.slane %v2209, %v7352
    %v7354 = vsel %vm5431, %v7353, %v7349
    %v7355 = vlaneseq
    %v7356 = vshrl.u32 %v7355, 7
    %v7357 = vsub.s32 %v5433, %v7356
    %v7358 = vrot.slane %v2212, %v7357
    %v7359 = vsel %vm5438, %v7358, %v7354
    %v7360 = vlaneseq
    %v7361 = vshrl.u32 %v7360, 7
    %v7362 = vsub.s32 %v5440, %v7361
    %v7363 = vrot.slane %v2215, %v7362
    %v7364 = vsel %vm5445, %v7363, %v7359
    %v7365 = vlaneseq
    %v7366 = vshrl.u32 %v7365, 7
    %v7367 = vsub.s32 %v5447, %v7366
    %v7368 = vrot.slane %v2218, %v7367
    %v7369 = vsel %vm5452, %v7368, %v7364
    %v7370 = vlaneseq
    %v7371 = vshrl.u32 %v7370, 7
    %v7372 = vsub.s32 %v5454, %v7371
    %v7373 = vrot.slane %v2221, %v7372
    %v7374 = vsel %vm5459, %v7373, %v7369
    %v7375 = vlaneseq
    %v7376 = vshrl.u32 %v7375, 7
    %v7377 = vsub.s32 %v5461, %v7376
    %v7378 = vrot.slane %v2224, %v7377
    %v7379 = vsel %vm5466, %v7378, %v7374
    %v7380 = vlaneseq
    %v7381 = vshrl.u32 %v7380, 7
    %v7382 = vsub.s32 %v5468, %v7381
    %v7383 = vrot.slane %v2227, %v7382
    %v7384 = vsel %vm5473, %v7383, %v7379
    %v7385 = vlaneseq
    %v7386 = vshrl.u32 %v7385, 7
    %v7387 = vsub.s32 %v5475, %v7386
    %v7388 = vrot.slane %v2230, %v7387
    %v7389 = vsel %vm5480, %v7388, %v7384
    %v7390 = vlaneseq
    %v7391 = vshrl.u32 %v7390, 7
    %v7392 = vsub.s32 %v5482, %v7391
    %v7393 = vrot.slane %v2233, %v7392
    %v7394 = vsel %vm5487, %v7393, %v7389
    %v7395 = vlaneseq
    %v7396 = vshrl.u32 %v7395, 7
    %v7397 = vsub.s32 %v5489, %v7396
    %v7398 = vrot.slane %v2236, %v7397
    %v7399 = vsel %vm5494, %v7398, %v7394
    %v7400 = vlaneseq
    %v7401 = vshrl.u32 %v7400, 7
    %v7402 = vsub.s32 %v5496, %v7401
    %v7403 = vrot.slane %v2239, %v7402
    %v7404 = vsel %vm5501, %v7403, %v7399
    %v7405 = vlaneseq
    %v7406 = vshrl.u32 %v7405, 7
    %v7407 = vsub.s32 %v5503, %v7406
    %v7408 = vrot.slane %v2242, %v7407
    %v7409 = vsel %vm5508, %v7408, %v7404
    %v7410 = vlaneseq
    %v7411 = vshrl.u32 %v7410, 7
    %v7412 = vsub.s32 %v5510, %v7411
    %v7413 = vrot.slane %v2245, %v7412
    %v7414 = vsel %vm5515, %v7413, %v7409
    %v7415 = vlaneseq
    %v7416 = vshrl.u32 %v7415, 7
    %v7417 = vsub.s32 %v5517, %v7416
    %v7418 = vrot.slane %v2248, %v7417
    %v7419 = vsel %vm5522, %v7418, %v7414
    %v7420 = vlaneseq
    %v7421 = vshrl.u32 %v7420, 7
    %v7422 = vsub.s32 %v5414, %v7421
    %v7423 = vrot.slane %v2251, %v7422
    %v7424 = vlaneseq
    %v7425 = vshrl.u32 %v7424, 7
    %v7426 = vsub.s32 %v5419, %v7425
    %v7427 = vrot.slane %v2254, %v7426
    %v7428 = vsel %vm5424, %v7427, %v7423
    %v7429 = vlaneseq
    %v7430 = vshrl.u32 %v7429, 7
    %v7431 = vsub.s32 %v5426, %v7430
    %v7432 = vrot.slane %v2257, %v7431
    %v7433 = vsel %vm5431, %v7432, %v7428
    %v7434 = vlaneseq
    %v7435 = vshrl.u32 %v7434, 7
    %v7436 = vsub.s32 %v5433, %v7435
    %v7437 = vrot.slane %v2260, %v7436
    %v7438 = vsel %vm5438, %v7437, %v7433
    %v7439 = vlaneseq
    %v7440 = vshrl.u32 %v7439, 7
    %v7441 = vsub.s32 %v5440, %v7440
    %v7442 = vrot.slane %v2263, %v7441
    %v7443 = vsel %vm5445, %v7442, %v7438
    %v7444 = vlaneseq
    %v7445 = vshrl.u32 %v7444, 7
    %v7446 = vsub.s32 %v5447, %v7445
    %v7447 = vrot.slane %v2266, %v7446
    %v7448 = vsel %vm5452, %v7447, %v7443
    %v7449 = vlaneseq
    %v7450 = vshrl.u32 %v7449, 7
    %v7451 = vsub.s32 %v5454, %v7450
    %v7452 = vrot.slane %v2269, %v7451
    %v7453 = vsel %vm5459, %v7452, %v7448
    %v7454 = vlaneseq
    %v7455 = vshrl.u32 %v7454, 7
    %v7456 = vsub.s32 %v5461, %v7455
    %v7457 = vrot.slane %v2272, %v7456
    %v7458 = vsel %vm5466, %v7457, %v7453
    %v7459 = vlaneseq
    %v7460 = vshrl.u32 %v7459, 7
    %v7461 = vsub.s32 %v5468, %v7460
    %v7462 = vrot.slane %v2275, %v7461
    %v7463 = vsel %vm5473, %v7462, %v7458
    %v7464 = vlaneseq
    %v7465 = vshrl.u32 %v7464, 7
    %v7466 = vsub.s32 %v5475, %v7465
    %v7467 = vrot.slane %v2278, %v7466
    %v7468 = vsel %vm5480, %v7467, %v7463
    %v7469 = vlaneseq
    %v7470 = vshrl.u32 %v7469, 7
    %v7471 = vsub.s32 %v5482, %v7470
    %v7472 = vrot.slane %v2281, %v7471
    %v7473 = vsel %vm5487, %v7472, %v7468
    %v7474 = vlaneseq
    %v7475 = vshrl.u32 %v7474, 7
    %v7476 = vsub.s32 %v5489, %v7475
    %v7477 = vrot.slane %v2284, %v7476
    %v7478 = vsel %vm5494, %v7477, %v7473
    %v7479 = vlaneseq
    %v7480 = vshrl.u32 %v7479, 7
    %v7481 = vsub.s32 %v5496, %v7480
    %v7482 = vrot.slane %v2287, %v7481
    %v7483 = vsel %vm5501, %v7482, %v7478
    %v7484 = vlaneseq
    %v7485 = vshrl.u32 %v7484, 7
    %v7486 = vsub.s32 %v5503, %v7485
    %v7487 = vrot.slane %v2290, %v7486
    %v7488 = vsel %vm5508, %v7487, %v7483
    %v7489 = vlaneseq
    %v7490 = vshrl.u32 %v7489, 7
    %v7491 = vsub.s32 %v5510, %v7490
    %v7492 = vrot.slane %v2293, %v7491
    %v7493 = vsel %vm5515, %v7492, %v7488
    %v7494 = vlaneseq
    %v7495 = vshrl.u32 %v7494, 7
    %v7496 = vsub.s32 %v5517, %v7495
    %v7497 = vrot.slane %v2296, %v7496
    %v7498 = vsel %vm5522, %v7497, %v7493
    %v7499 = vlaneseq
    %v7500 = vshrl.u32 %v7499, 7
    %v7501 = vsub.s32 %v5414, %v7500
    %v7502 = vrot.slane %v2299, %v7501
    %v7503 = vlaneseq
    %v7504 = vshrl.u32 %v7503, 7
    %v7505 = vsub.s32 %v5419, %v7504
    %v7506 = vrot.slane %v2302, %v7505
    %v7507 = vsel %vm5424, %v7506, %v7502
    %v7508 = vlaneseq
    %v7509 = vshrl.u32 %v7508, 7
    %v7510 = vsub.s32 %v5426, %v7509
    %v7511 = vrot.slane %v2305, %v7510
    %v7512 = vsel %vm5431, %v7511, %v7507
    %v7513 = vlaneseq
    %v7514 = vshrl.u32 %v7513, 7
    %v7515 = vsub.s32 %v5433, %v7514
    %v7516 = vrot.slane %v2308, %v7515
    %v7517 = vsel %vm5438, %v7516, %v7512
    %v7518 = vlaneseq
    %v7519 = vshrl.u32 %v7518, 7
    %v7520 = vsub.s32 %v5440, %v7519
    %v7521 = vrot.slane %v2311, %v7520
    %v7522 = vsel %vm5445, %v7521, %v7517
    %v7523 = vlaneseq
    %v7524 = vshrl.u32 %v7523, 7
    %v7525 = vsub.s32 %v5447, %v7524
    %v7526 = vrot.slane %v2314, %v7525
    %v7527 = vsel %vm5452, %v7526, %v7522
    %v7528 = vlaneseq
    %v7529 = vshrl.u32 %v7528, 7
    %v7530 = vsub.s32 %v5454, %v7529
    %v7531 = vrot.slane %v2317, %v7530
    %v7532 = vsel %vm5459, %v7531, %v7527
    %v7533 = vlaneseq
    %v7534 = vshrl.u32 %v7533, 7
    %v7535 = vsub.s32 %v5461, %v7534
    %v7536 = vrot.slane %v2320, %v7535
    %v7537 = vsel %vm5466, %v7536, %v7532
    %v7538 = vlaneseq
    %v7539 = vshrl.u32 %v7538, 7
    %v7540 = vsub.s32 %v5468, %v7539
    %v7541 = vrot.slane %v2323, %v7540
    %v7542 = vsel %vm5473, %v7541, %v7537
    %v7543 = vlaneseq
    %v7544 = vshrl.u32 %v7543, 7
    %v7545 = vsub.s32 %v5475, %v7544
    %v7546 = vrot.slane %v2326, %v7545
    %v7547 = vsel %vm5480, %v7546, %v7542
    %v7548 = vlaneseq
    %v7549 = vshrl.u32 %v7548, 7
    %v7550 = vsub.s32 %v5482, %v7549
    %v7551 = vrot.slane %v2329, %v7550
    %v7552 = vsel %vm5487, %v7551, %v7547
    %v7553 = vlaneseq
    %v7554 = vshrl.u32 %v7553, 7
    %v7555 = vsub.s32 %v5489, %v7554
    %v7556 = vrot.slane %v2332, %v7555
    %v7557 = vsel %vm5494, %v7556, %v7552
    %v7558 = vlaneseq
    %v7559 = vshrl.u32 %v7558, 7
    %v7560 = vsub.s32 %v5496, %v7559
    %v7561 = vrot.slane %v2335, %v7560
    %v7562 = vsel %vm5501, %v7561, %v7557
    %v7563 = vlaneseq
    %v7564 = vshrl.u32 %v7563, 7
    %v7565 = vsub.s32 %v5503, %v7564
    %v7566 = vrot.slane %v2338, %v7565
    %v7567 = vsel %vm5508, %v7566, %v7562
    %v7568 = vlaneseq
    %v7569 = vshrl.u32 %v7568, 7
    %v7570 = vsub.s32 %v5510, %v7569
    %v7571 = vrot.slane %v2341, %v7570
    %v7572 = vsel %vm5515, %v7571, %v7567
    %v7573 = vlaneseq
    %v7574 = vshrl.u32 %v7573, 7
    %v7575 = vsub.s32 %v5517, %v7574
    %v7576 = vrot.slane %v2344, %v7575
    %v7577 = vsel %vm5522, %v7576, %v7572
    %v7578 = vlaneseq
    %v7579 = vshrl.u32 %v7578, 7
    %v7580 = vsub.s32 %v5414, %v7579
    %v7581 = vrot.slane %v2347, %v7580
    %v7582 = vlaneseq
    %v7583 = vshrl.u32 %v7582, 7
    %v7584 = vsub.s32 %v5419, %v7583
    %v7585 = vrot.slane %v2350, %v7584
    %v7586 = vsel %vm5424, %v7585, %v7581
    %v7587 = vlaneseq
    %v7588 = vshrl.u32 %v7587, 7
    %v7589 = vsub.s32 %v5426, %v7588
    %v7590 = vrot.slane %v2353, %v7589
    %v7591 = vsel %vm5431, %v7590, %v7586
    %v7592 = vlaneseq
    %v7593 = vshrl.u32 %v7592, 7
    %v7594 = vsub.s32 %v5433, %v7593
    %v7595 = vrot.slane %v2356, %v7594
    %v7596 = vsel %vm5438, %v7595, %v7591
    %v7597 = vlaneseq
    %v7598 = vshrl.u32 %v7597, 7
    %v7599 = vsub.s32 %v5440, %v7598
    %v7600 = vrot.slane %v2359, %v7599
    %v7601 = vsel %vm5445, %v7600, %v7596
    %v7602 = vlaneseq
    %v7603 = vshrl.u32 %v7602, 7
    %v7604 = vsub.s32 %v5447, %v7603
    %v7605 = vrot.slane %v2362, %v7604
    %v7606 = vsel %vm5452, %v7605, %v7601
    %v7607 = vlaneseq
    %v7608 = vshrl.u32 %v7607, 7
    %v7609 = vsub.s32 %v5454, %v7608
    %v7610 = vrot.slane %v2365, %v7609
    %v7611 = vsel %vm5459, %v7610, %v7606
    %v7612 = vlaneseq
    %v7613 = vshrl.u32 %v7612, 7
    %v7614 = vsub.s32 %v5461, %v7613
    %v7615 = vrot.slane %v2368, %v7614
    %v7616 = vsel %vm5466, %v7615, %v7611
    %v7617 = vlaneseq
    %v7618 = vshrl.u32 %v7617, 7
    %v7619 = vsub.s32 %v5468, %v7618
    %v7620 = vrot.slane %v2371, %v7619
    %v7621 = vsel %vm5473, %v7620, %v7616
    %v7622 = vlaneseq
    %v7623 = vshrl.u32 %v7622, 7
    %v7624 = vsub.s32 %v5475, %v7623
    %v7625 = vrot.slane %v2374, %v7624
    %v7626 = vsel %vm5480, %v7625, %v7621
    %v7627 = vlaneseq
    %v7628 = vshrl.u32 %v7627, 7
    %v7629 = vsub.s32 %v5482, %v7628
    %v7630 = vrot.slane %v2377, %v7629
    %v7631 = vsel %vm5487, %v7630, %v7626
    %v7632 = vlaneseq
    %v7633 = vshrl.u32 %v7632, 7
    %v7634 = vsub.s32 %v5489, %v7633
    %v7635 = vrot.slane %v2380, %v7634
    %v7636 = vsel %vm5494, %v7635, %v7631
    %v7637 = vlaneseq
    %v7638 = vshrl.u32 %v7637, 7
    %v7639 = vsub.s32 %v5496, %v7638
    %v7640 = vrot.slane %v2383, %v7639
    %v7641 = vsel %vm5501, %v7640, %v7636
    %v7642 = vlaneseq
    %v7643 = vshrl.u32 %v7642, 7
    %v7644 = vsub.s32 %v5503, %v7643
    %v7645 = vrot.slane %v2386, %v7644
    %v7646 = vsel %vm5508, %v7645, %v7641
    %v7647 = vlaneseq
    %v7648 = vshrl.u32 %v7647, 7
    %v7649 = vsub.s32 %v5510, %v7648
    %v7650 = vrot.slane %v2389, %v7649
    %v7651 = vsel %vm5515, %v7650, %v7646
    %v7652 = vlaneseq
    %v7653 = vshrl.u32 %v7652, 7
    %v7654 = vsub.s32 %v5517, %v7653
    %v7655 = vrot.slane %v2392, %v7654
    %v7656 = vsel %vm5522, %v7655, %v7651
    %v7657 = vlaneseq
    %v7658 = vshrl.u32 %v7657, 7
    %v7659 = vsub.s32 %v5414, %v7658
    %v7660 = vrot.slane %v2395, %v7659
    %v7661 = vlaneseq
    %v7662 = vshrl.u32 %v7661, 7
    %v7663 = vsub.s32 %v5419, %v7662
    %v7664 = vrot.slane %v2398, %v7663
    %v7665 = vsel %vm5424, %v7664, %v7660
    %v7666 = vlaneseq
    %v7667 = vshrl.u32 %v7666, 7
    %v7668 = vsub.s32 %v5426, %v7667
    %v7669 = vrot.slane %v2401, %v7668
    %v7670 = vsel %vm5431, %v7669, %v7665
    %v7671 = vlaneseq
    %v7672 = vshrl.u32 %v7671, 7
    %v7673 = vsub.s32 %v5433, %v7672
    %v7674 = vrot.slane %v2404, %v7673
    %v7675 = vsel %vm5438, %v7674, %v7670
    %v7676 = vlaneseq
    %v7677 = vshrl.u32 %v7676, 7
    %v7678 = vsub.s32 %v5440, %v7677
    %v7679 = vrot.slane %v2407, %v7678
    %v7680 = vsel %vm5445, %v7679, %v7675
    %v7681 = vlaneseq
    %v7682 = vshrl.u32 %v7681, 7
    %v7683 = vsub.s32 %v5447, %v7682
    %v7684 = vrot.slane %v2410, %v7683
    %v7685 = vsel %vm5452, %v7684, %v7680
    %v7686 = vlaneseq
    %v7687 = vshrl.u32 %v7686, 7
    %v7688 = vsub.s32 %v5454, %v7687
    %v7689 = vrot.slane %v2413, %v7688
    %v7690 = vsel %vm5459, %v7689, %v7685
    %v7691 = vlaneseq
    %v7692 = vshrl.u32 %v7691, 7
    %v7693 = vsub.s32 %v5461, %v7692
    %v7694 = vrot.slane %v2416, %v7693
    %v7695 = vsel %vm5466, %v7694, %v7690
    %v7696 = vlaneseq
    %v7697 = vshrl.u32 %v7696, 7
    %v7698 = vsub.s32 %v5468, %v7697
    %v7699 = vrot.slane %v2419, %v7698
    %v7700 = vsel %vm5473, %v7699, %v7695
    %v7701 = vlaneseq
    %v7702 = vshrl.u32 %v7701, 7
    %v7703 = vsub.s32 %v5475, %v7702
    %v7704 = vrot.slane %v2422, %v7703
    %v7705 = vsel %vm5480, %v7704, %v7700
    %v7706 = vlaneseq
    %v7707 = vshrl.u32 %v7706, 7
    %v7708 = vsub.s32 %v5482, %v7707
    %v7709 = vrot.slane %v2425, %v7708
    %v7710 = vsel %vm5487, %v7709, %v7705
    %v7711 = vlaneseq
    %v7712 = vshrl.u32 %v7711, 7
    %v7713 = vsub.s32 %v5489, %v7712
    %v7714 = vrot.slane %v2428, %v7713
    %v7715 = vsel %vm5494, %v7714, %v7710
    %v7716 = vlaneseq
    %v7717 = vshrl.u32 %v7716, 7
    %v7718 = vsub.s32 %v5496, %v7717
    %v7719 = vrot.slane %v2431, %v7718
    %v7720 = vsel %vm5501, %v7719, %v7715
    %v7721 = vlaneseq
    %v7722 = vshrl.u32 %v7721, 7
    %v7723 = vsub.s32 %v5503, %v7722
    %v7724 = vrot.slane %v2434, %v7723
    %v7725 = vsel %vm5508, %v7724, %v7720
    %v7726 = vlaneseq
    %v7727 = vshrl.u32 %v7726, 7
    %v7728 = vsub.s32 %v5510, %v7727
    %v7729 = vrot.slane %v2437, %v7728
    %v7730 = vsel %vm5515, %v7729, %v7725
    %v7731 = vlaneseq
    %v7732 = vshrl.u32 %v7731, 7
    %v7733 = vsub.s32 %v5517, %v7732
    %v7734 = vrot.slane %v2440, %v7733
    %v7735 = vsel %vm5522, %v7734, %v7730
    %v7736 = vlaneseq
    %v7737 = vshrl.u32 %v7736, 7
    %v7738 = vsub.s32 %v5414, %v7737
    %v7739 = vrot.slane %v2443, %v7738
    %v7740 = vlaneseq
    %v7741 = vshrl.u32 %v7740, 7
    %v7742 = vsub.s32 %v5419, %v7741
    %v7743 = vrot.slane %v2446, %v7742
    %v7744 = vsel %vm5424, %v7743, %v7739
    %v7745 = vlaneseq
    %v7746 = vshrl.u32 %v7745, 7
    %v7747 = vsub.s32 %v5426, %v7746
    %v7748 = vrot.slane %v2449, %v7747
    %v7749 = vsel %vm5431, %v7748, %v7744
    %v7750 = vlaneseq
    %v7751 = vshrl.u32 %v7750, 7
    %v7752 = vsub.s32 %v5433, %v7751
    %v7753 = vrot.slane %v2452, %v7752
    %v7754 = vsel %vm5438, %v7753, %v7749
    %v7755 = vlaneseq
    %v7756 = vshrl.u32 %v7755, 7
    %v7757 = vsub.s32 %v5440, %v7756
    %v7758 = vrot.slane %v2455, %v7757
    %v7759 = vsel %vm5445, %v7758, %v7754
    %v7760 = vlaneseq
    %v7761 = vshrl.u32 %v7760, 7
    %v7762 = vsub.s32 %v5447, %v7761
    %v7763 = vrot.slane %v2458, %v7762
    %v7764 = vsel %vm5452, %v7763, %v7759
    %v7765 = vlaneseq
    %v7766 = vshrl.u32 %v7765, 7
    %v7767 = vsub.s32 %v5454, %v7766
    %v7768 = vrot.slane %v2461, %v7767
    %v7769 = vsel %vm5459, %v7768, %v7764
    %v7770 = vlaneseq
    %v7771 = vshrl.u32 %v7770, 7
    %v7772 = vsub.s32 %v5461, %v7771
    %v7773 = vrot.slane %v2464, %v7772
    %v7774 = vsel %vm5466, %v7773, %v7769
    %v7775 = vlaneseq
    %v7776 = vshrl.u32 %v7775, 7
    %v7777 = vsub.s32 %v5468, %v7776
    %v7778 = vrot.slane %v2467, %v7777
    %v7779 = vsel %vm5473, %v7778, %v7774
    %v7780 = vlaneseq
    %v7781 = vshrl.u32 %v7780, 7
    %v7782 = vsub.s32 %v5475, %v7781
    %v7783 = vrot.slane %v2470, %v7782
    %v7784 = vsel %vm5480, %v7783, %v7779
    %v7785 = vlaneseq
    %v7786 = vshrl.u32 %v7785, 7
    %v7787 = vsub.s32 %v5482, %v7786
    %v7788 = vrot.slane %v2473, %v7787
    %v7789 = vsel %vm5487, %v7788, %v7784
    %v7790 = vlaneseq
    %v7791 = vshrl.u32 %v7790, 7
    %v7792 = vsub.s32 %v5489, %v7791
    %v7793 = vrot.slane %v2476, %v7792
    %v7794 = vsel %vm5494, %v7793, %v7789
    %v7795 = vlaneseq
    %v7796 = vshrl.u32 %v7795, 7
    %v7797 = vsub.s32 %v5496, %v7796
    %v7798 = vrot.slane %v2479, %v7797
    %v7799 = vsel %vm5501, %v7798, %v7794
    %v7800 = vlaneseq
    %v7801 = vshrl.u32 %v7800, 7
    %v7802 = vsub.s32 %v5503, %v7801
    %v7803 = vrot.slane %v2482, %v7802
    %v7804 = vsel %vm5508, %v7803, %v7799
    %v7805 = vlaneseq
    %v7806 = vshrl.u32 %v7805, 7
    %v7807 = vsub.s32 %v5510, %v7806
    %v7808 = vrot.slane %v2485, %v7807
    %v7809 = vsel %vm5515, %v7808, %v7804
    %v7810 = vlaneseq
    %v7811 = vshrl.u32 %v7810, 7
    %v7812 = vsub.s32 %v5517, %v7811
    %v7813 = vrot.slane %v2488, %v7812
    %v7814 = vsel %vm5522, %v7813, %v7809
    %v7815 = vlaneseq
    %v7816 = vshrl.u32 %v7815, 7
    %v7817 = vsub.s32 %v5414, %v7816
    %v7818 = vrot.slane %v2491, %v7817
    %v7819 = vlaneseq
    %v7820 = vshrl.u32 %v7819, 7
    %v7821 = vsub.s32 %v5419, %v7820
    %v7822 = vrot.slane %v2494, %v7821
    %v7823 = vsel %vm5424, %v7822, %v7818
    %v7824 = vlaneseq
    %v7825 = vshrl.u32 %v7824, 7
    %v7826 = vsub.s32 %v5426, %v7825
    %v7827 = vrot.slane %v2497, %v7826
    %v7828 = vsel %vm5431, %v7827, %v7823
    %v7829 = vlaneseq
    %v7830 = vshrl.u32 %v7829, 7
    %v7831 = vsub.s32 %v5433, %v7830
    %v7832 = vrot.slane %v2500, %v7831
    %v7833 = vsel %vm5438, %v7832, %v7828
    %v7834 = vlaneseq
    %v7835 = vshrl.u32 %v7834, 7
    %v7836 = vsub.s32 %v5440, %v7835
    %v7837 = vrot.slane %v2503, %v7836
    %v7838 = vsel %vm5445, %v7837, %v7833
    %v7839 = vlaneseq
    %v7840 = vshrl.u32 %v7839, 7
    %v7841 = vsub.s32 %v5447, %v7840
    %v7842 = vrot.slane %v2506, %v7841
    %v7843 = vsel %vm5452, %v7842, %v7838
    %v7844 = vlaneseq
    %v7845 = vshrl.u32 %v7844, 7
    %v7846 = vsub.s32 %v5454, %v7845
    %v7847 = vrot.slane %v2509, %v7846
    %v7848 = vsel %vm5459, %v7847, %v7843
    %v7849 = vlaneseq
    %v7850 = vshrl.u32 %v7849, 7
    %v7851 = vsub.s32 %v5461, %v7850
    %v7852 = vrot.slane %v2512, %v7851
    %v7853 = vsel %vm5466, %v7852, %v7848
    %v7854 = vlaneseq
    %v7855 = vshrl.u32 %v7854, 7
    %v7856 = vsub.s32 %v5468, %v7855
    %v7857 = vrot.slane %v2515, %v7856
    %v7858 = vsel %vm5473, %v7857, %v7853
    %v7859 = vlaneseq
    %v7860 = vshrl.u32 %v7859, 7
    %v7861 = vsub.s32 %v5475, %v7860
    %v7862 = vrot.slane %v2518, %v7861
    %v7863 = vsel %vm5480, %v7862, %v7858
    %v7864 = vlaneseq
    %v7865 = vshrl.u32 %v7864, 7
    %v7866 = vsub.s32 %v5482, %v7865
    %v7867 = vrot.slane %v2521, %v7866
    %v7868 = vsel %vm5487, %v7867, %v7863
    %v7869 = vlaneseq
    %v7870 = vshrl.u32 %v7869, 7
    %v7871 = vsub.s32 %v5489, %v7870
    %v7872 = vrot.slane %v2524, %v7871
    %v7873 = vsel %vm5494, %v7872, %v7868
    %v7874 = vlaneseq
    %v7875 = vshrl.u32 %v7874, 7
    %v7876 = vsub.s32 %v5496, %v7875
    %v7877 = vrot.slane %v2527, %v7876
    %v7878 = vsel %vm5501, %v7877, %v7873
    %v7879 = vlaneseq
    %v7880 = vshrl.u32 %v7879, 7
    %v7881 = vsub.s32 %v5503, %v7880
    %v7882 = vrot.slane %v2530, %v7881
    %v7883 = vsel %vm5508, %v7882, %v7878
    %v7884 = vlaneseq
    %v7885 = vshrl.u32 %v7884, 7
    %v7886 = vsub.s32 %v5510, %v7885
    %v7887 = vrot.slane %v2533, %v7886
    %v7888 = vsel %vm5515, %v7887, %v7883
    %v7889 = vlaneseq
    %v7890 = vshrl.u32 %v7889, 7
    %v7891 = vsub.s32 %v5517, %v7890
    %v7892 = vrot.slane %v2536, %v7891
    %v7893 = vsel %vm5522, %v7892, %v7888
    %v7894 = vlaneseq
    %v7895 = vshrl.u32 %v7894, 7
    %v7896 = vsub.s32 %v5414, %v7895
    %v7897 = vrot.slane %v2539, %v7896
    %v7898 = vlaneseq
    %v7899 = vshrl.u32 %v7898, 7
    %v7900 = vsub.s32 %v5419, %v7899
    %v7901 = vrot.slane %v2542, %v7900
    %v7902 = vsel %vm5424, %v7901, %v7897
    %v7903 = vlaneseq
    %v7904 = vshrl.u32 %v7903, 7
    %v7905 = vsub.s32 %v5426, %v7904
    %v7906 = vrot.slane %v2545, %v7905
    %v7907 = vsel %vm5431, %v7906, %v7902
    %v7908 = vlaneseq
    %v7909 = vshrl.u32 %v7908, 7
    %v7910 = vsub.s32 %v5433, %v7909
    %v7911 = vrot.slane %v2548, %v7910
    %v7912 = vsel %vm5438, %v7911, %v7907
    %v7913 = vlaneseq
    %v7914 = vshrl.u32 %v7913, 7
    %v7915 = vsub.s32 %v5440, %v7914
    %v7916 = vrot.slane %v2551, %v7915
    %v7917 = vsel %vm5445, %v7916, %v7912
    %v7918 = vlaneseq
    %v7919 = vshrl.u32 %v7918, 7
    %v7920 = vsub.s32 %v5447, %v7919
    %v7921 = vrot.slane %v2554, %v7920
    %v7922 = vsel %vm5452, %v7921, %v7917
    %v7923 = vlaneseq
    %v7924 = vshrl.u32 %v7923, 7
    %v7925 = vsub.s32 %v5454, %v7924
    %v7926 = vrot.slane %v2557, %v7925
    %v7927 = vsel %vm5459, %v7926, %v7922
    %v7928 = vlaneseq
    %v7929 = vshrl.u32 %v7928, 7
    %v7930 = vsub.s32 %v5461, %v7929
    %v7931 = vrot.slane %v2560, %v7930
    %v7932 = vsel %vm5466, %v7931, %v7927
    %v7933 = vlaneseq
    %v7934 = vshrl.u32 %v7933, 7
    %v7935 = vsub.s32 %v5468, %v7934
    %v7936 = vrot.slane %v2563, %v7935
    %v7937 = vsel %vm5473, %v7936, %v7932
    %v7938 = vlaneseq
    %v7939 = vshrl.u32 %v7938, 7
    %v7940 = vsub.s32 %v5475, %v7939
    %v7941 = vrot.slane %v2566, %v7940
    %v7942 = vsel %vm5480, %v7941, %v7937
    %v7943 = vlaneseq
    %v7944 = vshrl.u32 %v7943, 7
    %v7945 = vsub.s32 %v5482, %v7944
    %v7946 = vrot.slane %v2569, %v7945
    %v7947 = vsel %vm5487, %v7946, %v7942
    %v7948 = vlaneseq
    %v7949 = vshrl.u32 %v7948, 7
    %v7950 = vsub.s32 %v5489, %v7949
    %v7951 = vrot.slane %v2572, %v7950
    %v7952 = vsel %vm5494, %v7951, %v7947
    %v7953 = vlaneseq
    %v7954 = vshrl.u32 %v7953, 7
    %v7955 = vsub.s32 %v5496, %v7954
    %v7956 = vrot.slane %v2575, %v7955
    %v7957 = vsel %vm5501, %v7956, %v7952
    %v7958 = vlaneseq
    %v7959 = vshrl.u32 %v7958, 7
    %v7960 = vsub.s32 %v5503, %v7959
    %v7961 = vrot.slane %v2578, %v7960
    %v7962 = vsel %vm5508, %v7961, %v7957
    %v7963 = vlaneseq
    %v7964 = vshrl.u32 %v7963, 7
    %v7965 = vsub.s32 %v5510, %v7964
    %v7966 = vrot.slane %v2581, %v7965
    %v7967 = vsel %vm5515, %v7966, %v7962
    %v7968 = vlaneseq
    %v7969 = vshrl.u32 %v7968, 7
    %v7970 = vsub.s32 %v5517, %v7969
    %v7971 = vrot.slane %v2584, %v7970
    %v7972 = vsel %vm5522, %v7971, %v7967
    %v7973 = vlaneseq
    %v7974 = vshrl.u32 %v7973, 7
    %v7975 = vsub.s32 %v5414, %v7974
    %v7976 = vrot.slane %v2587, %v7975
    %v7977 = vlaneseq
    %v7978 = vshrl.u32 %v7977, 7
    %v7979 = vsub.s32 %v5419, %v7978
    %v7980 = vrot.slane %v2590, %v7979
    %v7981 = vsel %vm5424, %v7980, %v7976
    %v7982 = vlaneseq
    %v7983 = vshrl.u32 %v7982, 7
    %v7984 = vsub.s32 %v5426, %v7983
    %v7985 = vrot.slane %v2593, %v7984
    %v7986 = vsel %vm5431, %v7985, %v7981
    %v7987 = vlaneseq
    %v7988 = vshrl.u32 %v7987, 7
    %v7989 = vsub.s32 %v5433, %v7988
    %v7990 = vrot.slane %v2596, %v7989
    %v7991 = vsel %vm5438, %v7990, %v7986
    %v7992 = vlaneseq
    %v7993 = vshrl.u32 %v7992, 7
    %v7994 = vsub.s32 %v5440, %v7993
    %v7995 = vrot.slane %v2599, %v7994
    %v7996 = vsel %vm5445, %v7995, %v7991
    %v7997 = vlaneseq
    %v7998 = vshrl.u32 %v7997, 7
    %v7999 = vsub.s32 %v5447, %v7998
    %v8000 = vrot.slane %v2602, %v7999
    %v8001 = vsel %vm5452, %v8000, %v7996
    %v8002 = vlaneseq
    %v8003 = vshrl.u32 %v8002, 7
    %v8004 = vsub.s32 %v5454, %v8003
    %v8005 = vrot.slane %v2605, %v8004
    %v8006 = vsel %vm5459, %v8005, %v8001
    %v8007 = vlaneseq
    %v8008 = vshrl.u32 %v8007, 7
    %v8009 = vsub.s32 %v5461, %v8008
    %v8010 = vrot.slane %v2608, %v8009
    %v8011 = vsel %vm5466, %v8010, %v8006
    %v8012 = vlaneseq
    %v8013 = vshrl.u32 %v8012, 7
    %v8014 = vsub.s32 %v5468, %v8013
    %v8015 = vrot.slane %v2611, %v8014
    %v8016 = vsel %vm5473, %v8015, %v8011
    %v8017 = vlaneseq
    %v8018 = vshrl.u32 %v8017, 7
    %v8019 = vsub.s32 %v5475, %v8018
    %v8020 = vrot.slane %v2614, %v8019
    %v8021 = vsel %vm5480, %v8020, %v8016
    %v8022 = vlaneseq
    %v8023 = vshrl.u32 %v8022, 7
    %v8024 = vsub.s32 %v5482, %v8023
    %v8025 = vrot.slane %v2617, %v8024
    %v8026 = vsel %vm5487, %v8025, %v8021
    %v8027 = vlaneseq
    %v8028 = vshrl.u32 %v8027, 7
    %v8029 = vsub.s32 %v5489, %v8028
    %v8030 = vrot.slane %v2620, %v8029
    %v8031 = vsel %vm5494, %v8030, %v8026
    %v8032 = vlaneseq
    %v8033 = vshrl.u32 %v8032, 7
    %v8034 = vsub.s32 %v5496, %v8033
    %v8035 = vrot.slane %v2623, %v8034
    %v8036 = vsel %vm5501, %v8035, %v8031
    %v8037 = vlaneseq
    %v8038 = vshrl.u32 %v8037, 7
    %v8039 = vsub.s32 %v5503, %v8038
    %v8040 = vrot.slane %v2626, %v8039
    %v8041 = vsel %vm5508, %v8040, %v8036
    %v8042 = vlaneseq
    %v8043 = vshrl.u32 %v8042, 7
    %v8044 = vsub.s32 %v5510, %v8043
    %v8045 = vrot.slane %v2629, %v8044
    %v8046 = vsel %vm5515, %v8045, %v8041
    %v8047 = vlaneseq
    %v8048 = vshrl.u32 %v8047, 7
    %v8049 = vsub.s32 %v5517, %v8048
    %v8050 = vrot.slane %v2632, %v8049
    %v8051 = vsel %vm5522, %v8050, %v8046
    %v8052 = vlaneseq
    %v8053 = vshrl.u32 %v8052, 7
    %v8054 = vsub.s32 %v5414, %v8053
    %v8055 = vrot.slane %v2635, %v8054
    %v8056 = vlaneseq
    %v8057 = vshrl.u32 %v8056, 7
    %v8058 = vsub.s32 %v5419, %v8057
    %v8059 = vrot.slane %v2638, %v8058
    %v8060 = vsel %vm5424, %v8059, %v8055
    %v8061 = vlaneseq
    %v8062 = vshrl.u32 %v8061, 7
    %v8063 = vsub.s32 %v5426, %v8062
    %v8064 = vrot.slane %v2641, %v8063
    %v8065 = vsel %vm5431, %v8064, %v8060
    %v8066 = vlaneseq
    %v8067 = vshrl.u32 %v8066, 7
    %v8068 = vsub.s32 %v5433, %v8067
    %v8069 = vrot.slane %v2644, %v8068
    %v8070 = vsel %vm5438, %v8069, %v8065
    %v8071 = vlaneseq
    %v8072 = vshrl.u32 %v8071, 7
    %v8073 = vsub.s32 %v5440, %v8072
    %v8074 = vrot.slane %v2647, %v8073
    %v8075 = vsel %vm5445, %v8074, %v8070
    %v8076 = vlaneseq
    %v8077 = vshrl.u32 %v8076, 7
    %v8078 = vsub.s32 %v5447, %v8077
    %v8079 = vrot.slane %v2650, %v8078
    %v8080 = vsel %vm5452, %v8079, %v8075
    %v8081 = vlaneseq
    %v8082 = vshrl.u32 %v8081, 7
    %v8083 = vsub.s32 %v5454, %v8082
    %v8084 = vrot.slane %v2653, %v8083
    %v8085 = vsel %vm5459, %v8084, %v8080
    %v8086 = vlaneseq
    %v8087 = vshrl.u32 %v8086, 7
    %v8088 = vsub.s32 %v5461, %v8087
    %v8089 = vrot.slane %v2656, %v8088
    %v8090 = vsel %vm5466, %v8089, %v8085
    %v8091 = vlaneseq
    %v8092 = vshrl.u32 %v8091, 7
    %v8093 = vsub.s32 %v5468, %v8092
    %v8094 = vrot.slane %v2659, %v8093
    %v8095 = vsel %vm5473, %v8094, %v8090
    %v8096 = vlaneseq
    %v8097 = vshrl.u32 %v8096, 7
    %v8098 = vsub.s32 %v5475, %v8097
    %v8099 = vrot.slane %v2662, %v8098
    %v8100 = vsel %vm5480, %v8099, %v8095
    %v8101 = vlaneseq
    %v8102 = vshrl.u32 %v8101, 7
    %v8103 = vsub.s32 %v5482, %v8102
    %v8104 = vrot.slane %v2665, %v8103
    %v8105 = vsel %vm5487, %v8104, %v8100
    %v8106 = vlaneseq
    %v8107 = vshrl.u32 %v8106, 7
    %v8108 = vsub.s32 %v5489, %v8107
    %v8109 = vrot.slane %v2668, %v8108
    %v8110 = vsel %vm5494, %v8109, %v8105
    %v8111 = vlaneseq
    %v8112 = vshrl.u32 %v8111, 7
    %v8113 = vsub.s32 %v5496, %v8112
    %v8114 = vrot.slane %v2671, %v8113
    %v8115 = vsel %vm5501, %v8114, %v8110
    %v8116 = vlaneseq
    %v8117 = vshrl.u32 %v8116, 7
    %v8118 = vsub.s32 %v5503, %v8117
    %v8119 = vrot.slane %v2674, %v8118
    %v8120 = vsel %vm5508, %v8119, %v8115
    %v8121 = vlaneseq
    %v8122 = vshrl.u32 %v8121, 7
    %v8123 = vsub.s32 %v5510, %v8122
    %v8124 = vrot.slane %v2677, %v8123
    %v8125 = vsel %vm5515, %v8124, %v8120
    %v8126 = vlaneseq
    %v8127 = vshrl.u32 %v8126, 7
    %v8128 = vsub.s32 %v5517, %v8127
    %v8129 = vrot.slane %v2680, %v8128
    %v8130 = vsel %vm5522, %v8129, %v8125
    %v8131 = vlaneseq
    %v8132 = vshrl.u32 %v8131, 7
    %v8133 = vsub.s32 %v5414, %v8132
    %v8134 = vrot.slane %v2683, %v8133
    %v8135 = vlaneseq
    %v8136 = vshrl.u32 %v8135, 7
    %v8137 = vsub.s32 %v5419, %v8136
    %v8138 = vrot.slane %v2686, %v8137
    %v8139 = vsel %vm5424, %v8138, %v8134
    %v8140 = vlaneseq
    %v8141 = vshrl.u32 %v8140, 7
    %v8142 = vsub.s32 %v5426, %v8141
    %v8143 = vrot.slane %v2689, %v8142
    %v8144 = vsel %vm5431, %v8143, %v8139
    %v8145 = vlaneseq
    %v8146 = vshrl.u32 %v8145, 7
    %v8147 = vsub.s32 %v5433, %v8146
    %v8148 = vrot.slane %v2692, %v8147
    %v8149 = vsel %vm5438, %v8148, %v8144
    %v8150 = vlaneseq
    %v8151 = vshrl.u32 %v8150, 7
    %v8152 = vsub.s32 %v5440, %v8151
    %v8153 = vrot.slane %v2695, %v8152
    %v8154 = vsel %vm5445, %v8153, %v8149
    %v8155 = vlaneseq
    %v8156 = vshrl.u32 %v8155, 7
    %v8157 = vsub.s32 %v5447, %v8156
    %v8158 = vrot.slane %v2698, %v8157
    %v8159 = vsel %vm5452, %v8158, %v8154
    %v8160 = vlaneseq
    %v8161 = vshrl.u32 %v8160, 7
    %v8162 = vsub.s32 %v5454, %v8161
    %v8163 = vrot.slane %v2701, %v8162
    %v8164 = vsel %vm5459, %v8163, %v8159
    %v8165 = vlaneseq
    %v8166 = vshrl.u32 %v8165, 7
    %v8167 = vsub.s32 %v5461, %v8166
    %v8168 = vrot.slane %v2704, %v8167
    %v8169 = vsel %vm5466, %v8168, %v8164
    %v8170 = vlaneseq
    %v8171 = vshrl.u32 %v8170, 7
    %v8172 = vsub.s32 %v5468, %v8171
    %v8173 = vrot.slane %v2707, %v8172
    %v8174 = vsel %vm5473, %v8173, %v8169
    %v8175 = vlaneseq
    %v8176 = vshrl.u32 %v8175, 7
    %v8177 = vsub.s32 %v5475, %v8176
    %v8178 = vrot.slane %v2710, %v8177
    %v8179 = vsel %vm5480, %v8178, %v8174
    %v8180 = vlaneseq
    %v8181 = vshrl.u32 %v8180, 7
    %v8182 = vsub.s32 %v5482, %v8181
    %v8183 = vrot.slane %v2713, %v8182
    %v8184 = vsel %vm5487, %v8183, %v8179
    %v8185 = vlaneseq
    %v8186 = vshrl.u32 %v8185, 7
    %v8187 = vsub.s32 %v5489, %v8186
    %v8188 = vrot.slane %v2716, %v8187
    %v8189 = vsel %vm5494, %v8188, %v8184
    %v8190 = vlaneseq
    %v8191 = vshrl.u32 %v8190, 7
    %v8192 = vsub.s32 %v5496, %v8191
    %v8193 = vrot.slane %v2719, %v8192
    %v8194 = vsel %vm5501, %v8193, %v8189
    %v8195 = vlaneseq
    %v8196 = vshrl.u32 %v8195, 7
    %v8197 = vsub.s32 %v5503, %v8196
    %v8198 = vrot.slane %v2722, %v8197
    %v8199 = vsel %vm5508, %v8198, %v8194
    %v8200 = vlaneseq
    %v8201 = vshrl.u32 %v8200, 7
    %v8202 = vsub.s32 %v5510, %v8201
    %v8203 = vrot.slane %v2725, %v8202
    %v8204 = vsel %vm5515, %v8203, %v8199
    %v8205 = vlaneseq
    %v8206 = vshrl.u32 %v8205, 7
    %v8207 = vsub.s32 %v5517, %v8206
    %v8208 = vrot.slane %v2728, %v8207
    %v8209 = vsel %vm5522, %v8208, %v8204
    %v8210 = vlaneseq
    %v8211 = vshrl.u32 %v8210, 7
    %v8212 = vsub.s32 %v5414, %v8211
    %v8213 = vrot.slane %v2731, %v8212
    %v8214 = vlaneseq
    %v8215 = vshrl.u32 %v8214, 7
    %v8216 = vsub.s32 %v5419, %v8215
    %v8217 = vrot.slane %v2734, %v8216
    %v8218 = vsel %vm5424, %v8217, %v8213
    %v8219 = vlaneseq
    %v8220 = vshrl.u32 %v8219, 7
    %v8221 = vsub.s32 %v5426, %v8220
    %v8222 = vrot.slane %v2737, %v8221
    %v8223 = vsel %vm5431, %v8222, %v8218
    %v8224 = vlaneseq
    %v8225 = vshrl.u32 %v8224, 7
    %v8226 = vsub.s32 %v5433, %v8225
    %v8227 = vrot.slane %v2740, %v8226
    %v8228 = vsel %vm5438, %v8227, %v8223
    %v8229 = vlaneseq
    %v8230 = vshrl.u32 %v8229, 7
    %v8231 = vsub.s32 %v5440, %v8230
    %v8232 = vrot.slane %v2743, %v8231
    %v8233 = vsel %vm5445, %v8232, %v8228
    %v8234 = vlaneseq
    %v8235 = vshrl.u32 %v8234, 7
    %v8236 = vsub.s32 %v5447, %v8235
    %v8237 = vrot.slane %v2746, %v8236
    %v8238 = vsel %vm5452, %v8237, %v8233
    %v8239 = vlaneseq
    %v8240 = vshrl.u32 %v8239, 7
    %v8241 = vsub.s32 %v5454, %v8240
    %v8242 = vrot.slane %v2749, %v8241
    %v8243 = vsel %vm5459, %v8242, %v8238
    %v8244 = vlaneseq
    %v8245 = vshrl.u32 %v8244, 7
    %v8246 = vsub.s32 %v5461, %v8245
    %v8247 = vrot.slane %v2752, %v8246
    %v8248 = vsel %vm5466, %v8247, %v8243
    %v8249 = vlaneseq
    %v8250 = vshrl.u32 %v8249, 7
    %v8251 = vsub.s32 %v5468, %v8250
    %v8252 = vrot.slane %v2755, %v8251
    %v8253 = vsel %vm5473, %v8252, %v8248
    %v8254 = vlaneseq
    %v8255 = vshrl.u32 %v8254, 7
    %v8256 = vsub.s32 %v5475, %v8255
    %v8257 = vrot.slane %v2758, %v8256
    %v8258 = vsel %vm5480, %v8257, %v8253
    %v8259 = vlaneseq
    %v8260 = vshrl.u32 %v8259, 7
    %v8261 = vsub.s32 %v5482, %v8260
    %v8262 = vrot.slane %v2761, %v8261
    %v8263 = vsel %vm5487, %v8262, %v8258
    %v8264 = vlaneseq
    %v8265 = vshrl.u32 %v8264, 7
    %v8266 = vsub.s32 %v5489, %v8265
    %v8267 = vrot.slane %v2764, %v8266
    %v8268 = vsel %vm5494, %v8267, %v8263
    %v8269 = vlaneseq
    %v8270 = vshrl.u32 %v8269, 7
    %v8271 = vsub.s32 %v5496, %v8270
    %v8272 = vrot.slane %v2767, %v8271
    %v8273 = vsel %vm5501, %v8272, %v8268
    %v8274 = vlaneseq
    %v8275 = vshrl.u32 %v8274, 7
    %v8276 = vsub.s32 %v5503, %v8275
    %v8277 = vrot.slane %v2770, %v8276
    %v8278 = vsel %vm5508, %v8277, %v8273
    %v8279 = vlaneseq
    %v8280 = vshrl.u32 %v8279, 7
    %v8281 = vsub.s32 %v5510, %v8280
    %v8282 = vrot.slane %v2773, %v8281
    %v8283 = vsel %vm5515, %v8282, %v8278
    %v8284 = vlaneseq
    %v8285 = vshrl.u32 %v8284, 7
    %v8286 = vsub.s32 %v5517, %v8285
    %v8287 = vrot.slane %v2776, %v8286
    %v8288 = vsel %vm5522, %v8287, %v8283
    %v8289 = vlaneseq
    %v8290 = vshrl.u32 %v8289, 7
    %v8291 = vsub.s32 %v5414, %v8290
    %v8292 = vrot.slane %v2779, %v8291
    %v8293 = vlaneseq
    %v8294 = vshrl.u32 %v8293, 7
    %v8295 = vsub.s32 %v5419, %v8294
    %v8296 = vrot.slane %v2782, %v8295
    %v8297 = vsel %vm5424, %v8296, %v8292
    %v8298 = vlaneseq
    %v8299 = vshrl.u32 %v8298, 7
    %v8300 = vsub.s32 %v5426, %v8299
    %v8301 = vrot.slane %v2785, %v8300
    %v8302 = vsel %vm5431, %v8301, %v8297
    %v8303 = vlaneseq
    %v8304 = vshrl.u32 %v8303, 7
    %v8305 = vsub.s32 %v5433, %v8304
    %v8306 = vrot.slane %v2788, %v8305
    %v8307 = vsel %vm5438, %v8306, %v8302
    %v8308 = vlaneseq
    %v8309 = vshrl.u32 %v8308, 7
    %v8310 = vsub.s32 %v5440, %v8309
    %v8311 = vrot.slane %v2791, %v8310
    %v8312 = vsel %vm5445, %v8311, %v8307
    %v8313 = vlaneseq
    %v8314 = vshrl.u32 %v8313, 7
    %v8315 = vsub.s32 %v5447, %v8314
    %v8316 = vrot.slane %v2794, %v8315
    %v8317 = vsel %vm5452, %v8316, %v8312
    %v8318 = vlaneseq
    %v8319 = vshrl.u32 %v8318, 7
    %v8320 = vsub.s32 %v5454, %v8319
    %v8321 = vrot.slane %v2797, %v8320
    %v8322 = vsel %vm5459, %v8321, %v8317
    %v8323 = vlaneseq
    %v8324 = vshrl.u32 %v8323, 7
    %v8325 = vsub.s32 %v5461, %v8324
    %v8326 = vrot.slane %v2800, %v8325
    %v8327 = vsel %vm5466, %v8326, %v8322
    %v8328 = vlaneseq
    %v8329 = vshrl.u32 %v8328, 7
    %v8330 = vsub.s32 %v5468, %v8329
    %v8331 = vrot.slane %v2803, %v8330
    %v8332 = vsel %vm5473, %v8331, %v8327
    %v8333 = vlaneseq
    %v8334 = vshrl.u32 %v8333, 7
    %v8335 = vsub.s32 %v5475, %v8334
    %v8336 = vrot.slane %v2806, %v8335
    %v8337 = vsel %vm5480, %v8336, %v8332
    %v8338 = vlaneseq
    %v8339 = vshrl.u32 %v8338, 7
    %v8340 = vsub.s32 %v5482, %v8339
    %v8341 = vrot.slane %v2809, %v8340
    %v8342 = vsel %vm5487, %v8341, %v8337
    %v8343 = vlaneseq
    %v8344 = vshrl.u32 %v8343, 7
    %v8345 = vsub.s32 %v5489, %v8344
    %v8346 = vrot.slane %v2812, %v8345
    %v8347 = vsel %vm5494, %v8346, %v8342
    %v8348 = vlaneseq
    %v8349 = vshrl.u32 %v8348, 7
    %v8350 = vsub.s32 %v5496, %v8349
    %v8351 = vrot.slane %v2815, %v8350
    %v8352 = vsel %vm5501, %v8351, %v8347
    %v8353 = vlaneseq
    %v8354 = vshrl.u32 %v8353, 7
    %v8355 = vsub.s32 %v5503, %v8354
    %v8356 = vrot.slane %v2818, %v8355
    %v8357 = vsel %vm5508, %v8356, %v8352
    %v8358 = vlaneseq
    %v8359 = vshrl.u32 %v8358, 7
    %v8360 = vsub.s32 %v5510, %v8359
    %v8361 = vrot.slane %v2821, %v8360
    %v8362 = vsel %vm5515, %v8361, %v8357
    %v8363 = vlaneseq
    %v8364 = vshrl.u32 %v8363, 7
    %v8365 = vsub.s32 %v5517, %v8364
    %v8366 = vrot.slane %v2824, %v8365
    %v8367 = vsel %vm5522, %v8366, %v8362
    %v8368 = vlaneseq
    %v8369 = vshrl.u32 %v8368, 7
    %v8370 = vsub.s32 %v5414, %v8369
    %v8371 = vrot.slane %v2827, %v8370
    %v8372 = vlaneseq
    %v8373 = vshrl.u32 %v8372, 7
    %v8374 = vsub.s32 %v5419, %v8373
    %v8375 = vrot.slane %v2830, %v8374
    %v8376 = vsel %vm5424, %v8375, %v8371
    %v8377 = vlaneseq
    %v8378 = vshrl.u32 %v8377, 7
    %v8379 = vsub.s32 %v5426, %v8378
    %v8380 = vrot.slane %v2833, %v8379
    %v8381 = vsel %vm5431, %v8380, %v8376
    %v8382 = vlaneseq
    %v8383 = vshrl.u32 %v8382, 7
    %v8384 = vsub.s32 %v5433, %v8383
    %v8385 = vrot.slane %v2836, %v8384
    %v8386 = vsel %vm5438, %v8385, %v8381
    %v8387 = vlaneseq
    %v8388 = vshrl.u32 %v8387, 7
    %v8389 = vsub.s32 %v5440, %v8388
    %v8390 = vrot.slane %v2839, %v8389
    %v8391 = vsel %vm5445, %v8390, %v8386
    %v8392 = vlaneseq
    %v8393 = vshrl.u32 %v8392, 7
    %v8394 = vsub.s32 %v5447, %v8393
    %v8395 = vrot.slane %v2842, %v8394
    %v8396 = vsel %vm5452, %v8395, %v8391
    %v8397 = vlaneseq
    %v8398 = vshrl.u32 %v8397, 7
    %v8399 = vsub.s32 %v5454, %v8398
    %v8400 = vrot.slane %v2845, %v8399
    %v8401 = vsel %vm5459, %v8400, %v8396
    %v8402 = vlaneseq
    %v8403 = vshrl.u32 %v8402, 7
    %v8404 = vsub.s32 %v5461, %v8403
    %v8405 = vrot.slane %v2848, %v8404
    %v8406 = vsel %vm5466, %v8405, %v8401
    %v8407 = vlaneseq
    %v8408 = vshrl.u32 %v8407, 7
    %v8409 = vsub.s32 %v5468, %v8408
    %v8410 = vrot.slane %v2851, %v8409
    %v8411 = vsel %vm5473, %v8410, %v8406
    %v8412 = vlaneseq
    %v8413 = vshrl.u32 %v8412, 7
    %v8414 = vsub.s32 %v5475, %v8413
    %v8415 = vrot.slane %v2854, %v8414
    %v8416 = vsel %vm5480, %v8415, %v8411
    %v8417 = vlaneseq
    %v8418 = vshrl.u32 %v8417, 7
    %v8419 = vsub.s32 %v5482, %v8418
    %v8420 = vrot.slane %v2857, %v8419
    %v8421 = vsel %vm5487, %v8420, %v8416
    %v8422 = vlaneseq
    %v8423 = vshrl.u32 %v8422, 7
    %v8424 = vsub.s32 %v5489, %v8423
    %v8425 = vrot.slane %v2860, %v8424
    %v8426 = vsel %vm5494, %v8425, %v8421
    %v8427 = vlaneseq
    %v8428 = vshrl.u32 %v8427, 7
    %v8429 = vsub.s32 %v5496, %v8428
    %v8430 = vrot.slane %v2863, %v8429
    %v8431 = vsel %vm5501, %v8430, %v8426
    %v8432 = vlaneseq
    %v8433 = vshrl.u32 %v8432, 7
    %v8434 = vsub.s32 %v5503, %v8433
    %v8435 = vrot.slane %v2866, %v8434
    %v8436 = vsel %vm5508, %v8435, %v8431
    %v8437 = vlaneseq
    %v8438 = vshrl.u32 %v8437, 7
    %v8439 = vsub.s32 %v5510, %v8438
    %v8440 = vrot.slane %v2869, %v8439
    %v8441 = vsel %vm5515, %v8440, %v8436
    %v8442 = vlaneseq
    %v8443 = vshrl.u32 %v8442, 7
    %v8444 = vsub.s32 %v5517, %v8443
    %v8445 = vrot.slane %v2872, %v8444
    %v8446 = vsel %vm5522, %v8445, %v8441
    %v8447 = vlaneseq
    %v8448 = vshrl.u32 %v8447, 7
    %v8449 = vsub.s32 %v5414, %v8448
    %v8450 = vrot.slane %v2875, %v8449
    %v8451 = vlaneseq
    %v8452 = vshrl.u32 %v8451, 7
    %v8453 = vsub.s32 %v5419, %v8452
    %v8454 = vrot.slane %v2878, %v8453
    %v8455 = vsel %vm5424, %v8454, %v8450
    %v8456 = vlaneseq
    %v8457 = vshrl.u32 %v8456, 7
    %v8458 = vsub.s32 %v5426, %v8457
    %v8459 = vrot.slane %v2881, %v8458
    %v8460 = vsel %vm5431, %v8459, %v8455
    %v8461 = vlaneseq
    %v8462 = vshrl.u32 %v8461, 7
    %v8463 = vsub.s32 %v5433, %v8462
    %v8464 = vrot.slane %v2884, %v8463
    %v8465 = vsel %vm5438, %v8464, %v8460
    %v8466 = vlaneseq
    %v8467 = vshrl.u32 %v8466, 7
    %v8468 = vsub.s32 %v5440, %v8467
    %v8469 = vrot.slane %v2887, %v8468
    %v8470 = vsel %vm5445, %v8469, %v8465
    %v8471 = vlaneseq
    %v8472 = vshrl.u32 %v8471, 7
    %v8473 = vsub.s32 %v5447, %v8472
    %v8474 = vrot.slane %v2890, %v8473
    %v8475 = vsel %vm5452, %v8474, %v8470
    %v8476 = vlaneseq
    %v8477 = vshrl.u32 %v8476, 7
    %v8478 = vsub.s32 %v5454, %v8477
    %v8479 = vrot.slane %v2893, %v8478
    %v8480 = vsel %vm5459, %v8479, %v8475
    %v8481 = vlaneseq
    %v8482 = vshrl.u32 %v8481, 7
    %v8483 = vsub.s32 %v5461, %v8482
    %v8484 = vrot.slane %v2896, %v8483
    %v8485 = vsel %vm5466, %v8484, %v8480
    %v8486 = vlaneseq
    %v8487 = vshrl.u32 %v8486, 7
    %v8488 = vsub.s32 %v5468, %v8487
    %v8489 = vrot.slane %v2899, %v8488
    %v8490 = vsel %vm5473, %v8489, %v8485
    %v8491 = vlaneseq
    %v8492 = vshrl.u32 %v8491, 7
    %v8493 = vsub.s32 %v5475, %v8492
    %v8494 = vrot.slane %v2902, %v8493
    %v8495 = vsel %vm5480, %v8494, %v8490
    %v8496 = vlaneseq
    %v8497 = vshrl.u32 %v8496, 7
    %v8498 = vsub.s32 %v5482, %v8497
    %v8499 = vrot.slane %v2905, %v8498
    %v8500 = vsel %vm5487, %v8499, %v8495
    %v8501 = vlaneseq
    %v8502 = vshrl.u32 %v8501, 7
    %v8503 = vsub.s32 %v5489, %v8502
    %v8504 = vrot.slane %v2908, %v8503
    %v8505 = vsel %vm5494, %v8504, %v8500
    %v8506 = vlaneseq
    %v8507 = vshrl.u32 %v8506, 7
    %v8508 = vsub.s32 %v5496, %v8507
    %v8509 = vrot.slane %v2911, %v8508
    %v8510 = vsel %vm5501, %v8509, %v8505
    %v8511 = vlaneseq
    %v8512 = vshrl.u32 %v8511, 7
    %v8513 = vsub.s32 %v5503, %v8512
    %v8514 = vrot.slane %v2914, %v8513
    %v8515 = vsel %vm5508, %v8514, %v8510
    %v8516 = vlaneseq
    %v8517 = vshrl.u32 %v8516, 7
    %v8518 = vsub.s32 %v5510, %v8517
    %v8519 = vrot.slane %v2917, %v8518
    %v8520 = vsel %vm5515, %v8519, %v8515
    %v8521 = vlaneseq
    %v8522 = vshrl.u32 %v8521, 7
    %v8523 = vsub.s32 %v5517, %v8522
    %v8524 = vrot.slane %v2920, %v8523
    %v8525 = vsel %vm5522, %v8524, %v8520
    %v8526 = vlaneseq
    %v8527 = vshrl.u32 %v8526, 7
    %v8528 = vsub.s32 %v5414, %v8527
    %v8529 = vrot.slane %v2923, %v8528
    %v8530 = vlaneseq
    %v8531 = vshrl.u32 %v8530, 7
    %v8532 = vsub.s32 %v5419, %v8531
    %v8533 = vrot.slane %v2926, %v8532
    %v8534 = vsel %vm5424, %v8533, %v8529
    %v8535 = vlaneseq
    %v8536 = vshrl.u32 %v8535, 7
    %v8537 = vsub.s32 %v5426, %v8536
    %v8538 = vrot.slane %v2929, %v8537
    %v8539 = vsel %vm5431, %v8538, %v8534
    %v8540 = vlaneseq
    %v8541 = vshrl.u32 %v8540, 7
    %v8542 = vsub.s32 %v5433, %v8541
    %v8543 = vrot.slane %v2932, %v8542
    %v8544 = vsel %vm5438, %v8543, %v8539
    %v8545 = vlaneseq
    %v8546 = vshrl.u32 %v8545, 7
    %v8547 = vsub.s32 %v5440, %v8546
    %v8548 = vrot.slane %v2935, %v8547
    %v8549 = vsel %vm5445, %v8548, %v8544
    %v8550 = vlaneseq
    %v8551 = vshrl.u32 %v8550, 7
    %v8552 = vsub.s32 %v5447, %v8551
    %v8553 = vrot.slane %v2938, %v8552
    %v8554 = vsel %vm5452, %v8553, %v8549
    %v8555 = vlaneseq
    %v8556 = vshrl.u32 %v8555, 7
    %v8557 = vsub.s32 %v5454, %v8556
    %v8558 = vrot.slane %v2941, %v8557
    %v8559 = vsel %vm5459, %v8558, %v8554
    %v8560 = vlaneseq
    %v8561 = vshrl.u32 %v8560, 7
    %v8562 = vsub.s32 %v5461, %v8561
    %v8563 = vrot.slane %v2944, %v8562
    %v8564 = vsel %vm5466, %v8563, %v8559
    %v8565 = vlaneseq
    %v8566 = vshrl.u32 %v8565, 7
    %v8567 = vsub.s32 %v5468, %v8566
    %v8568 = vrot.slane %v2947, %v8567
    %v8569 = vsel %vm5473, %v8568, %v8564
    %v8570 = vlaneseq
    %v8571 = vshrl.u32 %v8570, 7
    %v8572 = vsub.s32 %v5475, %v8571
    %v8573 = vrot.slane %v2950, %v8572
    %v8574 = vsel %vm5480, %v8573, %v8569
    %v8575 = vlaneseq
    %v8576 = vshrl.u32 %v8575, 7
    %v8577 = vsub.s32 %v5482, %v8576
    %v8578 = vrot.slane %v2953, %v8577
    %v8579 = vsel %vm5487, %v8578, %v8574
    %v8580 = vlaneseq
    %v8581 = vshrl.u32 %v8580, 7
    %v8582 = vsub.s32 %v5489, %v8581
    %v8583 = vrot.slane %v2956, %v8582
    %v8584 = vsel %vm5494, %v8583, %v8579
    %v8585 = vlaneseq
    %v8586 = vshrl.u32 %v8585, 7
    %v8587 = vsub.s32 %v5496, %v8586
    %v8588 = vrot.slane %v2959, %v8587
    %v8589 = vsel %vm5501, %v8588, %v8584
    %v8590 = vlaneseq
    %v8591 = vshrl.u32 %v8590, 7
    %v8592 = vsub.s32 %v5503, %v8591
    %v8593 = vrot.slane %v2962, %v8592
    %v8594 = vsel %vm5508, %v8593, %v8589
    %v8595 = vlaneseq
    %v8596 = vshrl.u32 %v8595, 7
    %v8597 = vsub.s32 %v5510, %v8596
    %v8598 = vrot.slane %v2965, %v8597
    %v8599 = vsel %vm5515, %v8598, %v8594
    %v8600 = vlaneseq
    %v8601 = vshrl.u32 %v8600, 7
    %v8602 = vsub.s32 %v5517, %v8601
    %v8603 = vrot.slane %v2968, %v8602
    %v8604 = vsel %vm5522, %v8603, %v8599
    %v8605 = vlaneseq
    %v8606 = vshrl.u32 %v8605, 7
    %v8607 = vsub.s32 %v5414, %v8606
    %v8608 = vrot.slane %v2971, %v8607
    %v8609 = vlaneseq
    %v8610 = vshrl.u32 %v8609, 7
    %v8611 = vsub.s32 %v5419, %v8610
    %v8612 = vrot.slane %v2974, %v8611
    %v8613 = vsel %vm5424, %v8612, %v8608
    %v8614 = vlaneseq
    %v8615 = vshrl.u32 %v8614, 7
    %v8616 = vsub.s32 %v5426, %v8615
    %v8617 = vrot.slane %v2977, %v8616
    %v8618 = vsel %vm5431, %v8617, %v8613
    %v8619 = vlaneseq
    %v8620 = vshrl.u32 %v8619, 7
    %v8621 = vsub.s32 %v5433, %v8620
    %v8622 = vrot.slane %v2980, %v8621
    %v8623 = vsel %vm5438, %v8622, %v8618
    %v8624 = vlaneseq
    %v8625 = vshrl.u32 %v8624, 7
    %v8626 = vsub.s32 %v5440, %v8625
    %v8627 = vrot.slane %v2983, %v8626
    %v8628 = vsel %vm5445, %v8627, %v8623
    %v8629 = vlaneseq
    %v8630 = vshrl.u32 %v8629, 7
    %v8631 = vsub.s32 %v5447, %v8630
    %v8632 = vrot.slane %v2986, %v8631
    %v8633 = vsel %vm5452, %v8632, %v8628
    %v8634 = vlaneseq
    %v8635 = vshrl.u32 %v8634, 7
    %v8636 = vsub.s32 %v5454, %v8635
    %v8637 = vrot.slane %v2989, %v8636
    %v8638 = vsel %vm5459, %v8637, %v8633
    %v8639 = vlaneseq
    %v8640 = vshrl.u32 %v8639, 7
    %v8641 = vsub.s32 %v5461, %v8640
    %v8642 = vrot.slane %v2992, %v8641
    %v8643 = vsel %vm5466, %v8642, %v8638
    %v8644 = vlaneseq
    %v8645 = vshrl.u32 %v8644, 7
    %v8646 = vsub.s32 %v5468, %v8645
    %v8647 = vrot.slane %v2995, %v8646
    %v8648 = vsel %vm5473, %v8647, %v8643
    %v8649 = vlaneseq
    %v8650 = vshrl.u32 %v8649, 7
    %v8651 = vsub.s32 %v5475, %v8650
    %v8652 = vrot.slane %v2998, %v8651
    %v8653 = vsel %vm5480, %v8652, %v8648
    %v8654 = vlaneseq
    %v8655 = vshrl.u32 %v8654, 7
    %v8656 = vsub.s32 %v5482, %v8655
    %v8657 = vrot.slane %v3001, %v8656
    %v8658 = vsel %vm5487, %v8657, %v8653
    %v8659 = vlaneseq
    %v8660 = vshrl.u32 %v8659, 7
    %v8661 = vsub.s32 %v5489, %v8660
    %v8662 = vrot.slane %v3004, %v8661
    %v8663 = vsel %vm5494, %v8662, %v8658
    %v8664 = vlaneseq
    %v8665 = vshrl.u32 %v8664, 7
    %v8666 = vsub.s32 %v5496, %v8665
    %v8667 = vrot.slane %v3007, %v8666
    %v8668 = vsel %vm5501, %v8667, %v8663
    %v8669 = vlaneseq
    %v8670 = vshrl.u32 %v8669, 7
    %v8671 = vsub.s32 %v5503, %v8670
    %v8672 = vrot.slane %v3010, %v8671
    %v8673 = vsel %vm5508, %v8672, %v8668
    %v8674 = vlaneseq
    %v8675 = vshrl.u32 %v8674, 7
    %v8676 = vsub.s32 %v5510, %v8675
    %v8677 = vrot.slane %v3013, %v8676
    %v8678 = vsel %vm5515, %v8677, %v8673
    %v8679 = vlaneseq
    %v8680 = vshrl.u32 %v8679, 7
    %v8681 = vsub.s32 %v5517, %v8680
    %v8682 = vrot.slane %v3016, %v8681
    %v8683 = vsel %vm5522, %v8682, %v8678
    %v8684 = vlaneseq
    %v8685 = vshrl.u32 %v8684, 7
    %v8686 = vsub.s32 %v5414, %v8685
    %v8687 = vrot.slane %v3019, %v8686
    %v8688 = vlaneseq
    %v8689 = vshrl.u32 %v8688, 7
    %v8690 = vsub.s32 %v5419, %v8689
    %v8691 = vrot.slane %v3022, %v8690
    %v8692 = vsel %vm5424, %v8691, %v8687
    %v8693 = vlaneseq
    %v8694 = vshrl.u32 %v8693, 7
    %v8695 = vsub.s32 %v5426, %v8694
    %v8696 = vrot.slane %v3025, %v8695
    %v8697 = vsel %vm5431, %v8696, %v8692
    %v8698 = vlaneseq
    %v8699 = vshrl.u32 %v8698, 7
    %v8700 = vsub.s32 %v5433, %v8699
    %v8701 = vrot.slane %v3028, %v8700
    %v8702 = vsel %vm5438, %v8701, %v8697
    %v8703 = vlaneseq
    %v8704 = vshrl.u32 %v8703, 7
    %v8705 = vsub.s32 %v5440, %v8704
    %v8706 = vrot.slane %v3031, %v8705
    %v8707 = vsel %vm5445, %v8706, %v8702
    %v8708 = vlaneseq
    %v8709 = vshrl.u32 %v8708, 7
    %v8710 = vsub.s32 %v5447, %v8709
    %v8711 = vrot.slane %v3034, %v8710
    %v8712 = vsel %vm5452, %v8711, %v8707
    %v8713 = vlaneseq
    %v8714 = vshrl.u32 %v8713, 7
    %v8715 = vsub.s32 %v5454, %v8714
    %v8716 = vrot.slane %v3037, %v8715
    %v8717 = vsel %vm5459, %v8716, %v8712
    %v8718 = vlaneseq
    %v8719 = vshrl.u32 %v8718, 7
    %v8720 = vsub.s32 %v5461, %v8719
    %v8721 = vrot.slane %v3040, %v8720
    %v8722 = vsel %vm5466, %v8721, %v8717
    %v8723 = vlaneseq
    %v8724 = vshrl.u32 %v8723, 7
    %v8725 = vsub.s32 %v5468, %v8724
    %v8726 = vrot.slane %v3043, %v8725
    %v8727 = vsel %vm5473, %v8726, %v8722
    %v8728 = vlaneseq
    %v8729 = vshrl.u32 %v8728, 7
    %v8730 = vsub.s32 %v5475, %v8729
    %v8731 = vrot.slane %v3046, %v8730
    %v8732 = vsel %vm5480, %v8731, %v8727
    %v8733 = vlaneseq
    %v8734 = vshrl.u32 %v8733, 7
    %v8735 = vsub.s32 %v5482, %v8734
    %v8736 = vrot.slane %v3049, %v8735
    %v8737 = vsel %vm5487, %v8736, %v8732
    %v8738 = vlaneseq
    %v8739 = vshrl.u32 %v8738, 7
    %v8740 = vsub.s32 %v5489, %v8739
    %v8741 = vrot.slane %v3052, %v8740
    %v8742 = vsel %vm5494, %v8741, %v8737
    %v8743 = vlaneseq
    %v8744 = vshrl.u32 %v8743, 7
    %v8745 = vsub.s32 %v5496, %v8744
    %v8746 = vrot.slane %v3055, %v8745
    %v8747 = vsel %vm5501, %v8746, %v8742
    %v8748 = vlaneseq
    %v8749 = vshrl.u32 %v8748, 7
    %v8750 = vsub.s32 %v5503, %v8749
    %v8751 = vrot.slane %v3058, %v8750
    %v8752 = vsel %vm5508, %v8751, %v8747
    %v8753 = vlaneseq
    %v8754 = vshrl.u32 %v8753, 7
    %v8755 = vsub.s32 %v5510, %v8754
    %v8756 = vrot.slane %v3061, %v8755
    %v8757 = vsel %vm5515, %v8756, %v8752
    %v8758 = vlaneseq
    %v8759 = vshrl.u32 %v8758, 7
    %v8760 = vsub.s32 %v5517, %v8759
    %v8761 = vrot.slane %v3064, %v8760
    %v8762 = vsel %vm5522, %v8761, %v8757
    %v8763 = vlaneseq
    %v8764 = vshrl.u32 %v8763, 7
    %v8765 = vsub.s32 %v5414, %v8764
    %v8766 = vrot.slane %v3067, %v8765
    %v8767 = vlaneseq
    %v8768 = vshrl.u32 %v8767, 7
    %v8769 = vsub.s32 %v5419, %v8768
    %v8770 = vrot.slane %v3070, %v8769
    %v8771 = vsel %vm5424, %v8770, %v8766
    %v8772 = vlaneseq
    %v8773 = vshrl.u32 %v8772, 7
    %v8774 = vsub.s32 %v5426, %v8773
    %v8775 = vrot.slane %v3073, %v8774
    %v8776 = vsel %vm5431, %v8775, %v8771
    %v8777 = vlaneseq
    %v8778 = vshrl.u32 %v8777, 7
    %v8779 = vsub.s32 %v5433, %v8778
    %v8780 = vrot.slane %v3076, %v8779
    %v8781 = vsel %vm5438, %v8780, %v8776
    %v8782 = vlaneseq
    %v8783 = vshrl.u32 %v8782, 7
    %v8784 = vsub.s32 %v5440, %v8783
    %v8785 = vrot.slane %v3079, %v8784
    %v8786 = vsel %vm5445, %v8785, %v8781
    %v8787 = vlaneseq
    %v8788 = vshrl.u32 %v8787, 7
    %v8789 = vsub.s32 %v5447, %v8788
    %v8790 = vrot.slane %v3082, %v8789
    %v8791 = vsel %vm5452, %v8790, %v8786
    %v8792 = vlaneseq
    %v8793 = vshrl.u32 %v8792, 7
    %v8794 = vsub.s32 %v5454, %v8793
    %v8795 = vrot.slane %v3085, %v8794
    %v8796 = vsel %vm5459, %v8795, %v8791
    %v8797 = vlaneseq
    %v8798 = vshrl.u32 %v8797, 7
    %v8799 = vsub.s32 %v5461, %v8798
    %v8800 = vrot.slane %v3088, %v8799
    %v8801 = vsel %vm5466, %v8800, %v8796
    %v8802 = vlaneseq
    %v8803 = vshrl.u32 %v8802, 7
    %v8804 = vsub.s32 %v5468, %v8803
    %v8805 = vrot.slane %v3091, %v8804
    %v8806 = vsel %vm5473, %v8805, %v8801
    %v8807 = vlaneseq
    %v8808 = vshrl.u32 %v8807, 7
    %v8809 = vsub.s32 %v5475, %v8808
    %v8810 = vrot.slane %v3094, %v8809
    %v8811 = vsel %vm5480, %v8810, %v8806
    %v8812 = vlaneseq
    %v8813 = vshrl.u32 %v8812, 7
    %v8814 = vsub.s32 %v5482, %v8813
    %v8815 = vrot.slane %v3097, %v8814
    %v8816 = vsel %vm5487, %v8815, %v8811
    %v8817 = vlaneseq
    %v8818 = vshrl.u32 %v8817, 7
    %v8819 = vsub.s32 %v5489, %v8818
    %v8820 = vrot.slane %v3100, %v8819
    %v8821 = vsel %vm5494, %v8820, %v8816
    %v8822 = vlaneseq
    %v8823 = vshrl.u32 %v8822, 7
    %v8824 = vsub.s32 %v5496, %v8823
    %v8825 = vrot.slane %v3103, %v8824
    %v8826 = vsel %vm5501, %v8825, %v8821
    %v8827 = vlaneseq
    %v8828 = vshrl.u32 %v8827, 7
    %v8829 = vsub.s32 %v5503, %v8828
    %v8830 = vrot.slane %v3106, %v8829
    %v8831 = vsel %vm5508, %v8830, %v8826
    %v8832 = vlaneseq
    %v8833 = vshrl.u32 %v8832, 7
    %v8834 = vsub.s32 %v5510, %v8833
    %v8835 = vrot.slane %v3109, %v8834
    %v8836 = vsel %vm5515, %v8835, %v8831
    %v8837 = vlaneseq
    %v8838 = vshrl.u32 %v8837, 7
    %v8839 = vsub.s32 %v5517, %v8838
    %v8840 = vrot.slane %v3112, %v8839
    %v8841 = vsel %vm5522, %v8840, %v8836
    %v8842 = vlaneseq
    %v8843 = vshrl.u32 %v8842, 7
    %v8844 = vsub.s32 %v5414, %v8843
    %v8845 = vrot.slane %v3115, %v8844
    %v8846 = vlaneseq
    %v8847 = vshrl.u32 %v8846, 7
    %v8848 = vsub.s32 %v5419, %v8847
    %v8849 = vrot.slane %v3118, %v8848
    %v8850 = vsel %vm5424, %v8849, %v8845
    %v8851 = vlaneseq
    %v8852 = vshrl.u32 %v8851, 7
    %v8853 = vsub.s32 %v5426, %v8852
    %v8854 = vrot.slane %v3121, %v8853
    %v8855 = vsel %vm5431, %v8854, %v8850
    %v8856 = vlaneseq
    %v8857 = vshrl.u32 %v8856, 7
    %v8858 = vsub.s32 %v5433, %v8857
    %v8859 = vrot.slane %v3124, %v8858
    %v8860 = vsel %vm5438, %v8859, %v8855
    %v8861 = vlaneseq
    %v8862 = vshrl.u32 %v8861, 7
    %v8863 = vsub.s32 %v5440, %v8862
    %v8864 = vrot.slane %v3127, %v8863
    %v8865 = vsel %vm5445, %v8864, %v8860
    %v8866 = vlaneseq
    %v8867 = vshrl.u32 %v8866, 7
    %v8868 = vsub.s32 %v5447, %v8867
    %v8869 = vrot.slane %v3130, %v8868
    %v8870 = vsel %vm5452, %v8869, %v8865
    %v8871 = vlaneseq
    %v8872 = vshrl.u32 %v8871, 7
    %v8873 = vsub.s32 %v5454, %v8872
    %v8874 = vrot.slane %v3133, %v8873
    %v8875 = vsel %vm5459, %v8874, %v8870
    %v8876 = vlaneseq
    %v8877 = vshrl.u32 %v8876, 7
    %v8878 = vsub.s32 %v5461, %v8877
    %v8879 = vrot.slane %v3136, %v8878
    %v8880 = vsel %vm5466, %v8879, %v8875
    %v8881 = vlaneseq
    %v8882 = vshrl.u32 %v8881, 7
    %v8883 = vsub.s32 %v5468, %v8882
    %v8884 = vrot.slane %v3139, %v8883
    %v8885 = vsel %vm5473, %v8884, %v8880
    %v8886 = vlaneseq
    %v8887 = vshrl.u32 %v8886, 7
    %v8888 = vsub.s32 %v5475, %v8887
    %v8889 = vrot.slane %v3142, %v8888
    %v8890 = vsel %vm5480, %v8889, %v8885
    %v8891 = vlaneseq
    %v8892 = vshrl.u32 %v8891, 7
    %v8893 = vsub.s32 %v5482, %v8892
    %v8894 = vrot.slane %v3145, %v8893
    %v8895 = vsel %vm5487, %v8894, %v8890
    %v8896 = vlaneseq
    %v8897 = vshrl.u32 %v8896, 7
    %v8898 = vsub.s32 %v5489, %v8897
    %v8899 = vrot.slane %v3148, %v8898
    %v8900 = vsel %vm5494, %v8899, %v8895
    %v8901 = vlaneseq
    %v8902 = vshrl.u32 %v8901, 7
    %v8903 = vsub.s32 %v5496, %v8902
    %v8904 = vrot.slane %v3151, %v8903
    %v8905 = vsel %vm5501, %v8904, %v8900
    %v8906 = vlaneseq
    %v8907 = vshrl.u32 %v8906, 7
    %v8908 = vsub.s32 %v5503, %v8907
    %v8909 = vrot.slane %v3154, %v8908
    %v8910 = vsel %vm5508, %v8909, %v8905
    %v8911 = vlaneseq
    %v8912 = vshrl.u32 %v8911, 7
    %v8913 = vsub.s32 %v5510, %v8912
    %v8914 = vrot.slane %v3157, %v8913
    %v8915 = vsel %vm5515, %v8914, %v8910
    %v8916 = vlaneseq
    %v8917 = vshrl.u32 %v8916, 7
    %v8918 = vsub.s32 %v5517, %v8917
    %v8919 = vrot.slane %v3160, %v8918
    %v8920 = vsel %vm5522, %v8919, %v8915
    %v8921 = vlaneseq
    %v8922 = vshrl.u32 %v8921, 7
    %v8923 = vsub.s32 %v5414, %v8922
    %v8924 = vrot.slane %v3163, %v8923
    %v8925 = vlaneseq
    %v8926 = vshrl.u32 %v8925, 7
    %v8927 = vsub.s32 %v5419, %v8926
    %v8928 = vrot.slane %v3166, %v8927
    %v8929 = vsel %vm5424, %v8928, %v8924
    %v8930 = vlaneseq
    %v8931 = vshrl.u32 %v8930, 7
    %v8932 = vsub.s32 %v5426, %v8931
    %v8933 = vrot.slane %v3169, %v8932
    %v8934 = vsel %vm5431, %v8933, %v8929
    %v8935 = vlaneseq
    %v8936 = vshrl.u32 %v8935, 7
    %v8937 = vsub.s32 %v5433, %v8936
    %v8938 = vrot.slane %v3172, %v8937
    %v8939 = vsel %vm5438, %v8938, %v8934
    %v8940 = vlaneseq
    %v8941 = vshrl.u32 %v8940, 7
    %v8942 = vsub.s32 %v5440, %v8941
    %v8943 = vrot.slane %v3175, %v8942
    %v8944 = vsel %vm5445, %v8943, %v8939
    %v8945 = vlaneseq
    %v8946 = vshrl.u32 %v8945, 7
    %v8947 = vsub.s32 %v5447, %v8946
    %v8948 = vrot.slane %v3178, %v8947
    %v8949 = vsel %vm5452, %v8948, %v8944
    %v8950 = vlaneseq
    %v8951 = vshrl.u32 %v8950, 7
    %v8952 = vsub.s32 %v5454, %v8951
    %v8953 = vrot.slane %v3181, %v8952
    %v8954 = vsel %vm5459, %v8953, %v8949
    %v8955 = vlaneseq
    %v8956 = vshrl.u32 %v8955, 7
    %v8957 = vsub.s32 %v5461, %v8956
    %v8958 = vrot.slane %v3184, %v8957
    %v8959 = vsel %vm5466, %v8958, %v8954
    %v8960 = vlaneseq
    %v8961 = vshrl.u32 %v8960, 7
    %v8962 = vsub.s32 %v5468, %v8961
    %v8963 = vrot.slane %v3187, %v8962
    %v8964 = vsel %vm5473, %v8963, %v8959
    %v8965 = vlaneseq
    %v8966 = vshrl.u32 %v8965, 7
    %v8967 = vsub.s32 %v5475, %v8966
    %v8968 = vrot.slane %v3190, %v8967
    %v8969 = vsel %vm5480, %v8968, %v8964
    %v8970 = vlaneseq
    %v8971 = vshrl.u32 %v8970, 7
    %v8972 = vsub.s32 %v5482, %v8971
    %v8973 = vrot.slane %v3193, %v8972
    %v8974 = vsel %vm5487, %v8973, %v8969
    %v8975 = vlaneseq
    %v8976 = vshrl.u32 %v8975, 7
    %v8977 = vsub.s32 %v5489, %v8976
    %v8978 = vrot.slane %v3196, %v8977
    %v8979 = vsel %vm5494, %v8978, %v8974
    %v8980 = vlaneseq
    %v8981 = vshrl.u32 %v8980, 7
    %v8982 = vsub.s32 %v5496, %v8981
    %v8983 = vrot.slane %v3199, %v8982
    %v8984 = vsel %vm5501, %v8983, %v8979
    %v8985 = vlaneseq
    %v8986 = vshrl.u32 %v8985, 7
    %v8987 = vsub.s32 %v5503, %v8986
    %v8988 = vrot.slane %v3202, %v8987
    %v8989 = vsel %vm5508, %v8988, %v8984
    %v8990 = vlaneseq
    %v8991 = vshrl.u32 %v8990, 7
    %v8992 = vsub.s32 %v5510, %v8991
    %v8993 = vrot.slane %v3205, %v8992
    %v8994 = vsel %vm5515, %v8993, %v8989
    %v8995 = vlaneseq
    %v8996 = vshrl.u32 %v8995, 7
    %v8997 = vsub.s32 %v5517, %v8996
    %v8998 = vrot.slane %v3208, %v8997
    %v8999 = vsel %vm5522, %v8998, %v8994
    %v9000 = vlaneseq
    %v9001 = vshrl.u32 %v9000, 7
    %v9002 = vsub.s32 %v5414, %v9001
    %v9003 = vrot.slane %v3211, %v9002
    %v9004 = vlaneseq
    %v9005 = vshrl.u32 %v9004, 7
    %v9006 = vsub.s32 %v5419, %v9005
    %v9007 = vrot.slane %v3214, %v9006
    %v9008 = vsel %vm5424, %v9007, %v9003
    %v9009 = vlaneseq
    %v9010 = vshrl.u32 %v9009, 7
    %v9011 = vsub.s32 %v5426, %v9010
    %v9012 = vrot.slane %v3217, %v9011
    %v9013 = vsel %vm5431, %v9012, %v9008
    %v9014 = vlaneseq
    %v9015 = vshrl.u32 %v9014, 7
    %v9016 = vsub.s32 %v5433, %v9015
    %v9017 = vrot.slane %v3220, %v9016
    %v9018 = vsel %vm5438, %v9017, %v9013
    %v9019 = vlaneseq
    %v9020 = vshrl.u32 %v9019, 7
    %v9021 = vsub.s32 %v5440, %v9020
    %v9022 = vrot.slane %v3223, %v9021
    %v9023 = vsel %vm5445, %v9022, %v9018
    %v9024 = vlaneseq
    %v9025 = vshrl.u32 %v9024, 7
    %v9026 = vsub.s32 %v5447, %v9025
    %v9027 = vrot.slane %v3226, %v9026
    %v9028 = vsel %vm5452, %v9027, %v9023
    %v9029 = vlaneseq
    %v9030 = vshrl.u32 %v9029, 7
    %v9031 = vsub.s32 %v5454, %v9030
    %v9032 = vrot.slane %v3229, %v9031
    %v9033 = vsel %vm5459, %v9032, %v9028
    %v9034 = vlaneseq
    %v9035 = vshrl.u32 %v9034, 7
    %v9036 = vsub.s32 %v5461, %v9035
    %v9037 = vrot.slane %v3232, %v9036
    %v9038 = vsel %vm5466, %v9037, %v9033
    %v9039 = vlaneseq
    %v9040 = vshrl.u32 %v9039, 7
    %v9041 = vsub.s32 %v5468, %v9040
    %v9042 = vrot.slane %v3235, %v9041
    %v9043 = vsel %vm5473, %v9042, %v9038
    %v9044 = vlaneseq
    %v9045 = vshrl.u32 %v9044, 7
    %v9046 = vsub.s32 %v5475, %v9045
    %v9047 = vrot.slane %v3238, %v9046
    %v9048 = vsel %vm5480, %v9047, %v9043
    %v9049 = vlaneseq
    %v9050 = vshrl.u32 %v9049, 7
    %v9051 = vsub.s32 %v5482, %v9050
    %v9052 = vrot.slane %v3241, %v9051
    %v9053 = vsel %vm5487, %v9052, %v9048
    %v9054 = vlaneseq
    %v9055 = vshrl.u32 %v9054, 7
    %v9056 = vsub.s32 %v5489, %v9055
    %v9057 = vrot.slane %v3244, %v9056
    %v9058 = vsel %vm5494, %v9057, %v9053
    %v9059 = vlaneseq
    %v9060 = vshrl.u32 %v9059, 7
    %v9061 = vsub.s32 %v5496, %v9060
    %v9062 = vrot.slane %v3247, %v9061
    %v9063 = vsel %vm5501, %v9062, %v9058
    %v9064 = vlaneseq
    %v9065 = vshrl.u32 %v9064, 7
    %v9066 = vsub.s32 %v5503, %v9065
    %v9067 = vrot.slane %v3250, %v9066
    %v9068 = vsel %vm5508, %v9067, %v9063
    %v9069 = vlaneseq
    %v9070 = vshrl.u32 %v9069, 7
    %v9071 = vsub.s32 %v5510, %v9070
    %v9072 = vrot.slane %v3253, %v9071
    %v9073 = vsel %vm5515, %v9072, %v9068
    %v9074 = vlaneseq
    %v9075 = vshrl.u32 %v9074, 7
    %v9076 = vsub.s32 %v5517, %v9075
    %v9077 = vrot.slane %v3256, %v9076
    %v9078 = vsel %vm5522, %v9077, %v9073
    %v9079 = vlaneseq
    %v9080 = vshrl.u32 %v9079, 7
    %v9081 = vsub.s32 %v5414, %v9080
    %v9082 = vrot.slane %v3259, %v9081
    %v9083 = vlaneseq
    %v9084 = vshrl.u32 %v9083, 7
    %v9085 = vsub.s32 %v5419, %v9084
    %v9086 = vrot.slane %v3262, %v9085
    %v9087 = vsel %vm5424, %v9086, %v9082
    %v9088 = vlaneseq
    %v9089 = vshrl.u32 %v9088, 7
    %v9090 = vsub.s32 %v5426, %v9089
    %v9091 = vrot.slane %v3265, %v9090
    %v9092 = vsel %vm5431, %v9091, %v9087
    %v9093 = vlaneseq
    %v9094 = vshrl.u32 %v9093, 7
    %v9095 = vsub.s32 %v5433, %v9094
    %v9096 = vrot.slane %v3268, %v9095
    %v9097 = vsel %vm5438, %v9096, %v9092
    %v9098 = vlaneseq
    %v9099 = vshrl.u32 %v9098, 7
    %v9100 = vsub.s32 %v5440, %v9099
    %v9101 = vrot.slane %v3271, %v9100
    %v9102 = vsel %vm5445, %v9101, %v9097
    %v9103 = vlaneseq
    %v9104 = vshrl.u32 %v9103, 7
    %v9105 = vsub.s32 %v5447, %v9104
    %v9106 = vrot.slane %v3274, %v9105
    %v9107 = vsel %vm5452, %v9106, %v9102
    %v9108 = vlaneseq
    %v9109 = vshrl.u32 %v9108, 7
    %v9110 = vsub.s32 %v5454, %v9109
    %v9111 = vrot.slane %v3277, %v9110
    %v9112 = vsel %vm5459, %v9111, %v9107
    %v9113 = vlaneseq
    %v9114 = vshrl.u32 %v9113, 7
    %v9115 = vsub.s32 %v5461, %v9114
    %v9116 = vrot.slane %v3280, %v9115
    %v9117 = vsel %vm5466, %v9116, %v9112
    %v9118 = vlaneseq
    %v9119 = vshrl.u32 %v9118, 7
    %v9120 = vsub.s32 %v5468, %v9119
    %v9121 = vrot.slane %v3283, %v9120
    %v9122 = vsel %vm5473, %v9121, %v9117
    %v9123 = vlaneseq
    %v9124 = vshrl.u32 %v9123, 7
    %v9125 = vsub.s32 %v5475, %v9124
    %v9126 = vrot.slane %v3286, %v9125
    %v9127 = vsel %vm5480, %v9126, %v9122
    %v9128 = vlaneseq
    %v9129 = vshrl.u32 %v9128, 7
    %v9130 = vsub.s32 %v5482, %v9129
    %v9131 = vrot.slane %v3289, %v9130
    %v9132 = vsel %vm5487, %v9131, %v9127
    %v9133 = vlaneseq
    %v9134 = vshrl.u32 %v9133, 7
    %v9135 = vsub.s32 %v5489, %v9134
    %v9136 = vrot.slane %v3292, %v9135
    %v9137 = vsel %vm5494, %v9136, %v9132
    %v9138 = vlaneseq
    %v9139 = vshrl.u32 %v9138, 7
    %v9140 = vsub.s32 %v5496, %v9139
    %v9141 = vrot.slane %v3295, %v9140
    %v9142 = vsel %vm5501, %v9141, %v9137
    %v9143 = vlaneseq
    %v9144 = vshrl.u32 %v9143, 7
    %v9145 = vsub.s32 %v5503, %v9144
    %v9146 = vrot.slane %v3298, %v9145
    %v9147 = vsel %vm5508, %v9146, %v9142
    %v9148 = vlaneseq
    %v9149 = vshrl.u32 %v9148, 7
    %v9150 = vsub.s32 %v5510, %v9149
    %v9151 = vrot.slane %v3301, %v9150
    %v9152 = vsel %vm5515, %v9151, %v9147
    %v9153 = vlaneseq
    %v9154 = vshrl.u32 %v9153, 7
    %v9155 = vsub.s32 %v5517, %v9154
    %v9156 = vrot.slane %v3304, %v9155
    %v9157 = vsel %vm5522, %v9156, %v9152
    %v9158 = vlaneseq
    %v9159 = vshrl.u32 %v9158, 7
    %v9160 = vsub.s32 %v5414, %v9159
    %v9161 = vrot.slane %v3307, %v9160
    %v9162 = vlaneseq
    %v9163 = vshrl.u32 %v9162, 7
    %v9164 = vsub.s32 %v5419, %v9163
    %v9165 = vrot.slane %v3310, %v9164
    %v9166 = vsel %vm5424, %v9165, %v9161
    %v9167 = vlaneseq
    %v9168 = vshrl.u32 %v9167, 7
    %v9169 = vsub.s32 %v5426, %v9168
    %v9170 = vrot.slane %v3313, %v9169
    %v9171 = vsel %vm5431, %v9170, %v9166
    %v9172 = vlaneseq
    %v9173 = vshrl.u32 %v9172, 7
    %v9174 = vsub.s32 %v5433, %v9173
    %v9175 = vrot.slane %v3316, %v9174
    %v9176 = vsel %vm5438, %v9175, %v9171
    %v9177 = vlaneseq
    %v9178 = vshrl.u32 %v9177, 7
    %v9179 = vsub.s32 %v5440, %v9178
    %v9180 = vrot.slane %v3319, %v9179
    %v9181 = vsel %vm5445, %v9180, %v9176
    %v9182 = vlaneseq
    %v9183 = vshrl.u32 %v9182, 7
    %v9184 = vsub.s32 %v5447, %v9183
    %v9185 = vrot.slane %v3322, %v9184
    %v9186 = vsel %vm5452, %v9185, %v9181
    %v9187 = vlaneseq
    %v9188 = vshrl.u32 %v9187, 7
    %v9189 = vsub.s32 %v5454, %v9188
    %v9190 = vrot.slane %v3325, %v9189
    %v9191 = vsel %vm5459, %v9190, %v9186
    %v9192 = vlaneseq
    %v9193 = vshrl.u32 %v9192, 7
    %v9194 = vsub.s32 %v5461, %v9193
    %v9195 = vrot.slane %v3328, %v9194
    %v9196 = vsel %vm5466, %v9195, %v9191
    %v9197 = vlaneseq
    %v9198 = vshrl.u32 %v9197, 7
    %v9199 = vsub.s32 %v5468, %v9198
    %v9200 = vrot.slane %v3331, %v9199
    %v9201 = vsel %vm5473, %v9200, %v9196
    %v9202 = vlaneseq
    %v9203 = vshrl.u32 %v9202, 7
    %v9204 = vsub.s32 %v5475, %v9203
    %v9205 = vrot.slane %v3334, %v9204
    %v9206 = vsel %vm5480, %v9205, %v9201
    %v9207 = vlaneseq
    %v9208 = vshrl.u32 %v9207, 7
    %v9209 = vsub.s32 %v5482, %v9208
    %v9210 = vrot.slane %v3337, %v9209
    %v9211 = vsel %vm5487, %v9210, %v9206
    %v9212 = vlaneseq
    %v9213 = vshrl.u32 %v9212, 7
    %v9214 = vsub.s32 %v5489, %v9213
    %v9215 = vrot.slane %v3340, %v9214
    %v9216 = vsel %vm5494, %v9215, %v9211
    %v9217 = vlaneseq
    %v9218 = vshrl.u32 %v9217, 7
    %v9219 = vsub.s32 %v5496, %v9218
    %v9220 = vrot.slane %v3343, %v9219
    %v9221 = vsel %vm5501, %v9220, %v9216
    %v9222 = vlaneseq
    %v9223 = vshrl.u32 %v9222, 7
    %v9224 = vsub.s32 %v5503, %v9223
    %v9225 = vrot.slane %v3346, %v9224
    %v9226 = vsel %vm5508, %v9225, %v9221
    %v9227 = vlaneseq
    %v9228 = vshrl.u32 %v9227, 7
    %v9229 = vsub.s32 %v5510, %v9228
    %v9230 = vrot.slane %v3349, %v9229
    %v9231 = vsel %vm5515, %v9230, %v9226
    %v9232 = vlaneseq
    %v9233 = vshrl.u32 %v9232, 7
    %v9234 = vsub.s32 %v5517, %v9233
    %v9235 = vrot.slane %v3352, %v9234
    %v9236 = vsel %vm5522, %v9235, %v9231
    %v9237 = vlaneseq
    %v9238 = vshrl.u32 %v9237, 7
    %v9239 = vsub.s32 %v5414, %v9238
    %v9240 = vrot.slane %v3355, %v9239
    %v9241 = vlaneseq
    %v9242 = vshrl.u32 %v9241, 7
    %v9243 = vsub.s32 %v5419, %v9242
    %v9244 = vrot.slane %v3358, %v9243
    %v9245 = vsel %vm5424, %v9244, %v9240
    %v9246 = vlaneseq
    %v9247 = vshrl.u32 %v9246, 7
    %v9248 = vsub.s32 %v5426, %v9247
    %v9249 = vrot.slane %v3361, %v9248
    %v9250 = vsel %vm5431, %v9249, %v9245
    %v9251 = vlaneseq
    %v9252 = vshrl.u32 %v9251, 7
    %v9253 = vsub.s32 %v5433, %v9252
    %v9254 = vrot.slane %v3364, %v9253
    %v9255 = vsel %vm5438, %v9254, %v9250
    %v9256 = vlaneseq
    %v9257 = vshrl.u32 %v9256, 7
    %v9258 = vsub.s32 %v5440, %v9257
    %v9259 = vrot.slane %v3367, %v9258
    %v9260 = vsel %vm5445, %v9259, %v9255
    %v9261 = vlaneseq
    %v9262 = vshrl.u32 %v9261, 7
    %v9263 = vsub.s32 %v5447, %v9262
    %v9264 = vrot.slane %v3370, %v9263
    %v9265 = vsel %vm5452, %v9264, %v9260
    %v9266 = vlaneseq
    %v9267 = vshrl.u32 %v9266, 7
    %v9268 = vsub.s32 %v5454, %v9267
    %v9269 = vrot.slane %v3373, %v9268
    %v9270 = vsel %vm5459, %v9269, %v9265
    %v9271 = vlaneseq
    %v9272 = vshrl.u32 %v9271, 7
    %v9273 = vsub.s32 %v5461, %v9272
    %v9274 = vrot.slane %v3376, %v9273
    %v9275 = vsel %vm5466, %v9274, %v9270
    %v9276 = vlaneseq
    %v9277 = vshrl.u32 %v9276, 7
    %v9278 = vsub.s32 %v5468, %v9277
    %v9279 = vrot.slane %v3379, %v9278
    %v9280 = vsel %vm5473, %v9279, %v9275
    %v9281 = vlaneseq
    %v9282 = vshrl.u32 %v9281, 7
    %v9283 = vsub.s32 %v5475, %v9282
    %v9284 = vrot.slane %v3382, %v9283
    %v9285 = vsel %vm5480, %v9284, %v9280
    %v9286 = vlaneseq
    %v9287 = vshrl.u32 %v9286, 7
    %v9288 = vsub.s32 %v5482, %v9287
    %v9289 = vrot.slane %v3385, %v9288
    %v9290 = vsel %vm5487, %v9289, %v9285
    %v9291 = vlaneseq
    %v9292 = vshrl.u32 %v9291, 7
    %v9293 = vsub.s32 %v5489, %v9292
    %v9294 = vrot.slane %v3388, %v9293
    %v9295 = vsel %vm5494, %v9294, %v9290
    %v9296 = vlaneseq
    %v9297 = vshrl.u32 %v9296, 7
    %v9298 = vsub.s32 %v5496, %v9297
    %v9299 = vrot.slane %v3391, %v9298
    %v9300 = vsel %vm5501, %v9299, %v9295
    %v9301 = vlaneseq
    %v9302 = vshrl.u32 %v9301, 7
    %v9303 = vsub.s32 %v5503, %v9302
    %v9304 = vrot.slane %v3394, %v9303
    %v9305 = vsel %vm5508, %v9304, %v9300
    %v9306 = vlaneseq
    %v9307 = vshrl.u32 %v9306, 7
    %v9308 = vsub.s32 %v5510, %v9307
    %v9309 = vrot.slane %v3397, %v9308
    %v9310 = vsel %vm5515, %v9309, %v9305
    %v9311 = vlaneseq
    %v9312 = vshrl.u32 %v9311, 7
    %v9313 = vsub.s32 %v5517, %v9312
    %v9314 = vrot.slane %v3400, %v9313
    %v9315 = vsel %vm5522, %v9314, %v9310
    %v9316 = vlaneseq
    %v9317 = vshrl.u32 %v9316, 7
    %v9318 = vsub.s32 %v5414, %v9317
    %v9319 = vrot.slane %v3403, %v9318
    %v9320 = vlaneseq
    %v9321 = vshrl.u32 %v9320, 7
    %v9322 = vsub.s32 %v5419, %v9321
    %v9323 = vrot.slane %v3406, %v9322
    %v9324 = vsel %vm5424, %v9323, %v9319
    %v9325 = vlaneseq
    %v9326 = vshrl.u32 %v9325, 7
    %v9327 = vsub.s32 %v5426, %v9326
    %v9328 = vrot.slane %v3409, %v9327
    %v9329 = vsel %vm5431, %v9328, %v9324
    %v9330 = vlaneseq
    %v9331 = vshrl.u32 %v9330, 7
    %v9332 = vsub.s32 %v5433, %v9331
    %v9333 = vrot.slane %v3412, %v9332
    %v9334 = vsel %vm5438, %v9333, %v9329
    %v9335 = vlaneseq
    %v9336 = vshrl.u32 %v9335, 7
    %v9337 = vsub.s32 %v5440, %v9336
    %v9338 = vrot.slane %v3415, %v9337
    %v9339 = vsel %vm5445, %v9338, %v9334
    %v9340 = vlaneseq
    %v9341 = vshrl.u32 %v9340, 7
    %v9342 = vsub.s32 %v5447, %v9341
    %v9343 = vrot.slane %v3418, %v9342
    %v9344 = vsel %vm5452, %v9343, %v9339
    %v9345 = vlaneseq
    %v9346 = vshrl.u32 %v9345, 7
    %v9347 = vsub.s32 %v5454, %v9346
    %v9348 = vrot.slane %v3421, %v9347
    %v9349 = vsel %vm5459, %v9348, %v9344
    %v9350 = vlaneseq
    %v9351 = vshrl.u32 %v9350, 7
    %v9352 = vsub.s32 %v5461, %v9351
    %v9353 = vrot.slane %v3424, %v9352
    %v9354 = vsel %vm5466, %v9353, %v9349
    %v9355 = vlaneseq
    %v9356 = vshrl.u32 %v9355, 7
    %v9357 = vsub.s32 %v5468, %v9356
    %v9358 = vrot.slane %v3427, %v9357
    %v9359 = vsel %vm5473, %v9358, %v9354
    %v9360 = vlaneseq
    %v9361 = vshrl.u32 %v9360, 7
    %v9362 = vsub.s32 %v5475, %v9361
    %v9363 = vrot.slane %v3430, %v9362
    %v9364 = vsel %vm5480, %v9363, %v9359
    %v9365 = vlaneseq
    %v9366 = vshrl.u32 %v9365, 7
    %v9367 = vsub.s32 %v5482, %v9366
    %v9368 = vrot.slane %v3433, %v9367
    %v9369 = vsel %vm5487, %v9368, %v9364
    %v9370 = vlaneseq
    %v9371 = vshrl.u32 %v9370, 7
    %v9372 = vsub.s32 %v5489, %v9371
    %v9373 = vrot.slane %v3436, %v9372
    %v9374 = vsel %vm5494, %v9373, %v9369
    %v9375 = vlaneseq
    %v9376 = vshrl.u32 %v9375, 7
    %v9377 = vsub.s32 %v5496, %v9376
    %v9378 = vrot.slane %v3439, %v9377
    %v9379 = vsel %vm5501, %v9378, %v9374
    %v9380 = vlaneseq
    %v9381 = vshrl.u32 %v9380, 7
    %v9382 = vsub.s32 %v5503, %v9381
    %v9383 = vrot.slane %v3442, %v9382
    %v9384 = vsel %vm5508, %v9383, %v9379
    %v9385 = vlaneseq
    %v9386 = vshrl.u32 %v9385, 7
    %v9387 = vsub.s32 %v5510, %v9386
    %v9388 = vrot.slane %v3445, %v9387
    %v9389 = vsel %vm5515, %v9388, %v9384
    %v9390 = vlaneseq
    %v9391 = vshrl.u32 %v9390, 7
    %v9392 = vsub.s32 %v5517, %v9391
    %v9393 = vrot.slane %v3448, %v9392
    %v9394 = vsel %vm5522, %v9393, %v9389
    %v9395 = vlaneseq
    %v9396 = vshrl.u32 %v9395, 7
    %v9397 = vsub.s32 %v5414, %v9396
    %v9398 = vrot.slane %v3451, %v9397
    %v9399 = vlaneseq
    %v9400 = vshrl.u32 %v9399, 7
    %v9401 = vsub.s32 %v5419, %v9400
    %v9402 = vrot.slane %v3454, %v9401
    %v9403 = vsel %vm5424, %v9402, %v9398
    %v9404 = vlaneseq
    %v9405 = vshrl.u32 %v9404, 7
    %v9406 = vsub.s32 %v5426, %v9405
    %v9407 = vrot.slane %v3457, %v9406
    %v9408 = vsel %vm5431, %v9407, %v9403
    %v9409 = vlaneseq
    %v9410 = vshrl.u32 %v9409, 7
    %v9411 = vsub.s32 %v5433, %v9410
    %v9412 = vrot.slane %v3460, %v9411
    %v9413 = vsel %vm5438, %v9412, %v9408
    %v9414 = vlaneseq
    %v9415 = vshrl.u32 %v9414, 7
    %v9416 = vsub.s32 %v5440, %v9415
    %v9417 = vrot.slane %v3463, %v9416
    %v9418 = vsel %vm5445, %v9417, %v9413
    %v9419 = vlaneseq
    %v9420 = vshrl.u32 %v9419, 7
    %v9421 = vsub.s32 %v5447, %v9420
    %v9422 = vrot.slane %v3466, %v9421
    %v9423 = vsel %vm5452, %v9422, %v9418
    %v9424 = vlaneseq
    %v9425 = vshrl.u32 %v9424, 7
    %v9426 = vsub.s32 %v5454, %v9425
    %v9427 = vrot.slane %v3469, %v9426
    %v9428 = vsel %vm5459, %v9427, %v9423
    %v9429 = vlaneseq
    %v9430 = vshrl.u32 %v9429, 7
    %v9431 = vsub.s32 %v5461, %v9430
    %v9432 = vrot.slane %v3472, %v9431
    %v9433 = vsel %vm5466, %v9432, %v9428
    %v9434 = vlaneseq
    %v9435 = vshrl.u32 %v9434, 7
    %v9436 = vsub.s32 %v5468, %v9435
    %v9437 = vrot.slane %v3475, %v9436
    %v9438 = vsel %vm5473, %v9437, %v9433
    %v9439 = vlaneseq
    %v9440 = vshrl.u32 %v9439, 7
    %v9441 = vsub.s32 %v5475, %v9440
    %v9442 = vrot.slane %v3478, %v9441
    %v9443 = vsel %vm5480, %v9442, %v9438
    %v9444 = vlaneseq
    %v9445 = vshrl.u32 %v9444, 7
    %v9446 = vsub.s32 %v5482, %v9445
    %v9447 = vrot.slane %v3481, %v9446
    %v9448 = vsel %vm5487, %v9447, %v9443
    %v9449 = vlaneseq
    %v9450 = vshrl.u32 %v9449, 7
    %v9451 = vsub.s32 %v5489, %v9450
    %v9452 = vrot.slane %v3484, %v9451
    %v9453 = vsel %vm5494, %v9452, %v9448
    %v9454 = vlaneseq
    %v9455 = vshrl.u32 %v9454, 7
    %v9456 = vsub.s32 %v5496, %v9455
    %v9457 = vrot.slane %v3487, %v9456
    %v9458 = vsel %vm5501, %v9457, %v9453
    %v9459 = vlaneseq
    %v9460 = vshrl.u32 %v9459, 7
    %v9461 = vsub.s32 %v5503, %v9460
    %v9462 = vrot.slane %v3490, %v9461
    %v9463 = vsel %vm5508, %v9462, %v9458
    %v9464 = vlaneseq
    %v9465 = vshrl.u32 %v9464, 7
    %v9466 = vsub.s32 %v5510, %v9465
    %v9467 = vrot.slane %v3493, %v9466
    %v9468 = vsel %vm5515, %v9467, %v9463
    %v9469 = vlaneseq
    %v9470 = vshrl.u32 %v9469, 7
    %v9471 = vsub.s32 %v5517, %v9470
    %v9472 = vrot.slane %v3496, %v9471
    %v9473 = vsel %vm5522, %v9472, %v9468
    %v9474 = vlaneseq
    %v9475 = vshrl.u32 %v9474, 7
    %v9476 = vsub.s32 %v5414, %v9475
    %v9477 = vrot.slane %v3499, %v9476
    %v9478 = vlaneseq
    %v9479 = vshrl.u32 %v9478, 7
    %v9480 = vsub.s32 %v5419, %v9479
    %v9481 = vrot.slane %v3502, %v9480
    %v9482 = vsel %vm5424, %v9481, %v9477
    %v9483 = vlaneseq
    %v9484 = vshrl.u32 %v9483, 7
    %v9485 = vsub.s32 %v5426, %v9484
    %v9486 = vrot.slane %v3505, %v9485
    %v9487 = vsel %vm5431, %v9486, %v9482
    %v9488 = vlaneseq
    %v9489 = vshrl.u32 %v9488, 7
    %v9490 = vsub.s32 %v5433, %v9489
    %v9491 = vrot.slane %v3508, %v9490
    %v9492 = vsel %vm5438, %v9491, %v9487
    %v9493 = vlaneseq
    %v9494 = vshrl.u32 %v9493, 7
    %v9495 = vsub.s32 %v5440, %v9494
    %v9496 = vrot.slane %v3511, %v9495
    %v9497 = vsel %vm5445, %v9496, %v9492
    %v9498 = vlaneseq
    %v9499 = vshrl.u32 %v9498, 7
    %v9500 = vsub.s32 %v5447, %v9499
    %v9501 = vrot.slane %v3514, %v9500
    %v9502 = vsel %vm5452, %v9501, %v9497
    %v9503 = vlaneseq
    %v9504 = vshrl.u32 %v9503, 7
    %v9505 = vsub.s32 %v5454, %v9504
    %v9506 = vrot.slane %v3517, %v9505
    %v9507 = vsel %vm5459, %v9506, %v9502
    %v9508 = vlaneseq
    %v9509 = vshrl.u32 %v9508, 7
    %v9510 = vsub.s32 %v5461, %v9509
    %v9511 = vrot.slane %v3520, %v9510
    %v9512 = vsel %vm5466, %v9511, %v9507
    %v9513 = vlaneseq
    %v9514 = vshrl.u32 %v9513, 7
    %v9515 = vsub.s32 %v5468, %v9514
    %v9516 = vrot.slane %v3523, %v9515
    %v9517 = vsel %vm5473, %v9516, %v9512
    %v9518 = vlaneseq
    %v9519 = vshrl.u32 %v9518, 7
    %v9520 = vsub.s32 %v5475, %v9519
    %v9521 = vrot.slane %v3526, %v9520
    %v9522 = vsel %vm5480, %v9521, %v9517
    %v9523 = vlaneseq
    %v9524 = vshrl.u32 %v9523, 7
    %v9525 = vsub.s32 %v5482, %v9524
    %v9526 = vrot.slane %v3529, %v9525
    %v9527 = vsel %vm5487, %v9526, %v9522
    %v9528 = vlaneseq
    %v9529 = vshrl.u32 %v9528, 7
    %v9530 = vsub.s32 %v5489, %v9529
    %v9531 = vrot.slane %v3532, %v9530
    %v9532 = vsel %vm5494, %v9531, %v9527
    %v9533 = vlaneseq
    %v9534 = vshrl.u32 %v9533, 7
    %v9535 = vsub.s32 %v5496, %v9534
    %v9536 = vrot.slane %v3535, %v9535
    %v9537 = vsel %vm5501, %v9536, %v9532
    %v9538 = vlaneseq
    %v9539 = vshrl.u32 %v9538, 7
    %v9540 = vsub.s32 %v5503, %v9539
    %v9541 = vrot.slane %v3538, %v9540
    %v9542 = vsel %vm5508, %v9541, %v9537
    %v9543 = vlaneseq
    %v9544 = vshrl.u32 %v9543, 7
    %v9545 = vsub.s32 %v5510, %v9544
    %v9546 = vrot.slane %v3541, %v9545
    %v9547 = vsel %vm5515, %v9546, %v9542
    %v9548 = vlaneseq
    %v9549 = vshrl.u32 %v9548, 7
    %v9550 = vsub.s32 %v5517, %v9549
    %v9551 = vrot.slane %v3544, %v9550
    %v9552 = vsel %vm5522, %v9551, %v9547
    %v9553 = vlaneseq
    %v9554 = vshrl.u32 %v9553, 7
    %v9555 = vsub.s32 %v5414, %v9554
    %v9556 = vrot.slane %v3547, %v9555
    %v9557 = vlaneseq
    %v9558 = vshrl.u32 %v9557, 7
    %v9559 = vsub.s32 %v5419, %v9558
    %v9560 = vrot.slane %v3550, %v9559
    %v9561 = vsel %vm5424, %v9560, %v9556
    %v9562 = vlaneseq
    %v9563 = vshrl.u32 %v9562, 7
    %v9564 = vsub.s32 %v5426, %v9563
    %v9565 = vrot.slane %v3553, %v9564
    %v9566 = vsel %vm5431, %v9565, %v9561
    %v9567 = vlaneseq
    %v9568 = vshrl.u32 %v9567, 7
    %v9569 = vsub.s32 %v5433, %v9568
    %v9570 = vrot.slane %v3556, %v9569
    %v9571 = vsel %vm5438, %v9570, %v9566
    %v9572 = vlaneseq
    %v9573 = vshrl.u32 %v9572, 7
    %v9574 = vsub.s32 %v5440, %v9573
    %v9575 = vrot.slane %v3559, %v9574
    %v9576 = vsel %vm5445, %v9575, %v9571
    %v9577 = vlaneseq
    %v9578 = vshrl.u32 %v9577, 7
    %v9579 = vsub.s32 %v5447, %v9578
    %v9580 = vrot.slane %v3562, %v9579
    %v9581 = vsel %vm5452, %v9580, %v9576
    %v9582 = vlaneseq
    %v9583 = vshrl.u32 %v9582, 7
    %v9584 = vsub.s32 %v5454, %v9583
    %v9585 = vrot.slane %v3565, %v9584
    %v9586 = vsel %vm5459, %v9585, %v9581
    %v9587 = vlaneseq
    %v9588 = vshrl.u32 %v9587, 7
    %v9589 = vsub.s32 %v5461, %v9588
    %v9590 = vrot.slane %v3568, %v9589
    %v9591 = vsel %vm5466, %v9590, %v9586
    %v9592 = vlaneseq
    %v9593 = vshrl.u32 %v9592, 7
    %v9594 = vsub.s32 %v5468, %v9593
    %v9595 = vrot.slane %v3571, %v9594
    %v9596 = vsel %vm5473, %v9595, %v9591
    %v9597 = vlaneseq
    %v9598 = vshrl.u32 %v9597, 7
    %v9599 = vsub.s32 %v5475, %v9598
    %v9600 = vrot.slane %v3574, %v9599
    %v9601 = vsel %vm5480, %v9600, %v9596
    %v9602 = vlaneseq
    %v9603 = vshrl.u32 %v9602, 7
    %v9604 = vsub.s32 %v5482, %v9603
    %v9605 = vrot.slane %v3577, %v9604
    %v9606 = vsel %vm5487, %v9605, %v9601
    %v9607 = vlaneseq
    %v9608 = vshrl.u32 %v9607, 7
    %v9609 = vsub.s32 %v5489, %v9608
    %v9610 = vrot.slane %v3580, %v9609
    %v9611 = vsel %vm5494, %v9610, %v9606
    %v9612 = vlaneseq
    %v9613 = vshrl.u32 %v9612, 7
    %v9614 = vsub.s32 %v5496, %v9613
    %v9615 = vrot.slane %v3583, %v9614
    %v9616 = vsel %vm5501, %v9615, %v9611
    %v9617 = vlaneseq
    %v9618 = vshrl.u32 %v9617, 7
    %v9619 = vsub.s32 %v5503, %v9618
    %v9620 = vrot.slane %v3586, %v9619
    %v9621 = vsel %vm5508, %v9620, %v9616
    %v9622 = vlaneseq
    %v9623 = vshrl.u32 %v9622, 7
    %v9624 = vsub.s32 %v5510, %v9623
    %v9625 = vrot.slane %v3589, %v9624
    %v9626 = vsel %vm5515, %v9625, %v9621
    %v9627 = vlaneseq
    %v9628 = vshrl.u32 %v9627, 7
    %v9629 = vsub.s32 %v5517, %v9628
    %v9630 = vrot.slane %v3592, %v9629
    %v9631 = vsel %vm5522, %v9630, %v9626
    %v9632 = vlaneseq
    %v9633 = vshrl.u32 %v9632, 7
    %v9634 = vsub.s32 %v5414, %v9633
    %v9635 = vrot.slane %v3595, %v9634
    %v9636 = vlaneseq
    %v9637 = vshrl.u32 %v9636, 7
    %v9638 = vsub.s32 %v5419, %v9637
    %v9639 = vrot.slane %v3598, %v9638
    %v9640 = vsel %vm5424, %v9639, %v9635
    %v9641 = vlaneseq
    %v9642 = vshrl.u32 %v9641, 7
    %v9643 = vsub.s32 %v5426, %v9642
    %v9644 = vrot.slane %v3601, %v9643
    %v9645 = vsel %vm5431, %v9644, %v9640
    %v9646 = vlaneseq
    %v9647 = vshrl.u32 %v9646, 7
    %v9648 = vsub.s32 %v5433, %v9647
    %v9649 = vrot.slane %v3604, %v9648
    %v9650 = vsel %vm5438, %v9649, %v9645
    %v9651 = vlaneseq
    %v9652 = vshrl.u32 %v9651, 7
    %v9653 = vsub.s32 %v5440, %v9652
    %v9654 = vrot.slane %v3607, %v9653
    %v9655 = vsel %vm5445, %v9654, %v9650
    %v9656 = vlaneseq
    %v9657 = vshrl.u32 %v9656, 7
    %v9658 = vsub.s32 %v5447, %v9657
    %v9659 = vrot.slane %v3610, %v9658
    %v9660 = vsel %vm5452, %v9659, %v9655
    %v9661 = vlaneseq
    %v9662 = vshrl.u32 %v9661, 7
    %v9663 = vsub.s32 %v5454, %v9662
    %v9664 = vrot.slane %v3613, %v9663
    %v9665 = vsel %vm5459, %v9664, %v9660
    %v9666 = vlaneseq
    %v9667 = vshrl.u32 %v9666, 7
    %v9668 = vsub.s32 %v5461, %v9667
    %v9669 = vrot.slane %v3616, %v9668
    %v9670 = vsel %vm5466, %v9669, %v9665
    %v9671 = vlaneseq
    %v9672 = vshrl.u32 %v9671, 7
    %v9673 = vsub.s32 %v5468, %v9672
    %v9674 = vrot.slane %v3619, %v9673
    %v9675 = vsel %vm5473, %v9674, %v9670
    %v9676 = vlaneseq
    %v9677 = vshrl.u32 %v9676, 7
    %v9678 = vsub.s32 %v5475, %v9677
    %v9679 = vrot.slane %v3622, %v9678
    %v9680 = vsel %vm5480, %v9679, %v9675
    %v9681 = vlaneseq
    %v9682 = vshrl.u32 %v9681, 7
    %v9683 = vsub.s32 %v5482, %v9682
    %v9684 = vrot.slane %v3625, %v9683
    %v9685 = vsel %vm5487, %v9684, %v9680
    %v9686 = vlaneseq
    %v9687 = vshrl.u32 %v9686, 7
    %v9688 = vsub.s32 %v5489, %v9687
    %v9689 = vrot.slane %v3628, %v9688
    %v9690 = vsel %vm5494, %v9689, %v9685
    %v9691 = vlaneseq
    %v9692 = vshrl.u32 %v9691, 7
    %v9693 = vsub.s32 %v5496, %v9692
    %v9694 = vrot.slane %v3631, %v9693
    %v9695 = vsel %vm5501, %v9694, %v9690
    %v9696 = vlaneseq
    %v9697 = vshrl.u32 %v9696, 7
    %v9698 = vsub.s32 %v5503, %v9697
    %v9699 = vrot.slane %v3634, %v9698
    %v9700 = vsel %vm5508, %v9699, %v9695
    %v9701 = vlaneseq
    %v9702 = vshrl.u32 %v9701, 7
    %v9703 = vsub.s32 %v5510, %v9702
    %v9704 = vrot.slane %v3637, %v9703
    %v9705 = vsel %vm5515, %v9704, %v9700
    %v9706 = vlaneseq
    %v9707 = vshrl.u32 %v9706, 7
    %v9708 = vsub.s32 %v5517, %v9707
    %v9709 = vrot.slane %v3640, %v9708
    %v9710 = vsel %vm5522, %v9709, %v9705
    %v9711 = vlaneseq
    %v9712 = vshrl.u32 %v9711, 7
    %v9713 = vsub.s32 %v5414, %v9712
    %v9714 = vrot.slane %v3643, %v9713
    %v9715 = vlaneseq
    %v9716 = vshrl.u32 %v9715, 7
    %v9717 = vsub.s32 %v5419, %v9716
    %v9718 = vrot.slane %v3646, %v9717
    %v9719 = vsel %vm5424, %v9718, %v9714
    %v9720 = vlaneseq
    %v9721 = vshrl.u32 %v9720, 7
    %v9722 = vsub.s32 %v5426, %v9721
    %v9723 = vrot.slane %v3649, %v9722
    %v9724 = vsel %vm5431, %v9723, %v9719
    %v9725 = vlaneseq
    %v9726 = vshrl.u32 %v9725, 7
    %v9727 = vsub.s32 %v5433, %v9726
    %v9728 = vrot.slane %v3652, %v9727
    %v9729 = vsel %vm5438, %v9728, %v9724
    %v9730 = vlaneseq
    %v9731 = vshrl.u32 %v9730, 7
    %v9732 = vsub.s32 %v5440, %v9731
    %v9733 = vrot.slane %v3655, %v9732
    %v9734 = vsel %vm5445, %v9733, %v9729
    %v9735 = vlaneseq
    %v9736 = vshrl.u32 %v9735, 7
    %v9737 = vsub.s32 %v5447, %v9736
    %v9738 = vrot.slane %v3658, %v9737
    %v9739 = vsel %vm5452, %v9738, %v9734
    %v9740 = vlaneseq
    %v9741 = vshrl.u32 %v9740, 7
    %v9742 = vsub.s32 %v5454, %v9741
    %v9743 = vrot.slane %v3661, %v9742
    %v9744 = vsel %vm5459, %v9743, %v9739
    %v9745 = vlaneseq
    %v9746 = vshrl.u32 %v9745, 7
    %v9747 = vsub.s32 %v5461, %v9746
    %v9748 = vrot.slane %v3664, %v9747
    %v9749 = vsel %vm5466, %v9748, %v9744
    %v9750 = vlaneseq
    %v9751 = vshrl.u32 %v9750, 7
    %v9752 = vsub.s32 %v5468, %v9751
    %v9753 = vrot.slane %v3667, %v9752
    %v9754 = vsel %vm5473, %v9753, %v9749
    %v9755 = vlaneseq
    %v9756 = vshrl.u32 %v9755, 7
    %v9757 = vsub.s32 %v5475, %v9756
    %v9758 = vrot.slane %v3670, %v9757
    %v9759 = vsel %vm5480, %v9758, %v9754
    %v9760 = vlaneseq
    %v9761 = vshrl.u32 %v9760, 7
    %v9762 = vsub.s32 %v5482, %v9761
    %v9763 = vrot.slane %v3673, %v9762
    %v9764 = vsel %vm5487, %v9763, %v9759
    %v9765 = vlaneseq
    %v9766 = vshrl.u32 %v9765, 7
    %v9767 = vsub.s32 %v5489, %v9766
    %v9768 = vrot.slane %v3676, %v9767
    %v9769 = vsel %vm5494, %v9768, %v9764
    %v9770 = vlaneseq
    %v9771 = vshrl.u32 %v9770, 7
    %v9772 = vsub.s32 %v5496, %v9771
    %v9773 = vrot.slane %v3679, %v9772
    %v9774 = vsel %vm5501, %v9773, %v9769
    %v9775 = vlaneseq
    %v9776 = vshrl.u32 %v9775, 7
    %v9777 = vsub.s32 %v5503, %v9776
    %v9778 = vrot.slane %v3682, %v9777
    %v9779 = vsel %vm5508, %v9778, %v9774
    %v9780 = vlaneseq
    %v9781 = vshrl.u32 %v9780, 7
    %v9782 = vsub.s32 %v5510, %v9781
    %v9783 = vrot.slane %v3685, %v9782
    %v9784 = vsel %vm5515, %v9783, %v9779
    %v9785 = vlaneseq
    %v9786 = vshrl.u32 %v9785, 7
    %v9787 = vsub.s32 %v5517, %v9786
    %v9788 = vrot.slane %v3688, %v9787
    %v9789 = vsel %vm5522, %v9788, %v9784
    %v9790 = vlaneseq
    %v9791 = vshrl.u32 %v9790, 7
    %v9792 = vsub.s32 %v5414, %v9791
    %v9793 = vrot.slane %v3691, %v9792
    %v9794 = vlaneseq
    %v9795 = vshrl.u32 %v9794, 7
    %v9796 = vsub.s32 %v5419, %v9795
    %v9797 = vrot.slane %v3694, %v9796
    %v9798 = vsel %vm5424, %v9797, %v9793
    %v9799 = vlaneseq
    %v9800 = vshrl.u32 %v9799, 7
    %v9801 = vsub.s32 %v5426, %v9800
    %v9802 = vrot.slane %v3697, %v9801
    %v9803 = vsel %vm5431, %v9802, %v9798
    %v9804 = vlaneseq
    %v9805 = vshrl.u32 %v9804, 7
    %v9806 = vsub.s32 %v5433, %v9805
    %v9807 = vrot.slane %v3700, %v9806
    %v9808 = vsel %vm5438, %v9807, %v9803
    %v9809 = vlaneseq
    %v9810 = vshrl.u32 %v9809, 7
    %v9811 = vsub.s32 %v5440, %v9810
    %v9812 = vrot.slane %v3703, %v9811
    %v9813 = vsel %vm5445, %v9812, %v9808
    %v9814 = vlaneseq
    %v9815 = vshrl.u32 %v9814, 7
    %v9816 = vsub.s32 %v5447, %v9815
    %v9817 = vrot.slane %v3706, %v9816
    %v9818 = vsel %vm5452, %v9817, %v9813
    %v9819 = vlaneseq
    %v9820 = vshrl.u32 %v9819, 7
    %v9821 = vsub.s32 %v5454, %v9820
    %v9822 = vrot.slane %v3709, %v9821
    %v9823 = vsel %vm5459, %v9822, %v9818
    %v9824 = vlaneseq
    %v9825 = vshrl.u32 %v9824, 7
    %v9826 = vsub.s32 %v5461, %v9825
    %v9827 = vrot.slane %v3712, %v9826
    %v9828 = vsel %vm5466, %v9827, %v9823
    %v9829 = vlaneseq
    %v9830 = vshrl.u32 %v9829, 7
    %v9831 = vsub.s32 %v5468, %v9830
    %v9832 = vrot.slane %v3715, %v9831
    %v9833 = vsel %vm5473, %v9832, %v9828
    %v9834 = vlaneseq
    %v9835 = vshrl.u32 %v9834, 7
    %v9836 = vsub.s32 %v5475, %v9835
    %v9837 = vrot.slane %v3718, %v9836
    %v9838 = vsel %vm5480, %v9837, %v9833
    %v9839 = vlaneseq
    %v9840 = vshrl.u32 %v9839, 7
    %v9841 = vsub.s32 %v5482, %v9840
    %v9842 = vrot.slane %v3721, %v9841
    %v9843 = vsel %vm5487, %v9842, %v9838
    %v9844 = vlaneseq
    %v9845 = vshrl.u32 %v9844, 7
    %v9846 = vsub.s32 %v5489, %v9845
    %v9847 = vrot.slane %v3724, %v9846
    %v9848 = vsel %vm5494, %v9847, %v9843
    %v9849 = vlaneseq
    %v9850 = vshrl.u32 %v9849, 7
    %v9851 = vsub.s32 %v5496, %v9850
    %v9852 = vrot.slane %v3727, %v9851
    %v9853 = vsel %vm5501, %v9852, %v9848
    %v9854 = vlaneseq
    %v9855 = vshrl.u32 %v9854, 7
    %v9856 = vsub.s32 %v5503, %v9855
    %v9857 = vrot.slane %v3730, %v9856
    %v9858 = vsel %vm5508, %v9857, %v9853
    %v9859 = vlaneseq
    %v9860 = vshrl.u32 %v9859, 7
    %v9861 = vsub.s32 %v5510, %v9860
    %v9862 = vrot.slane %v3733, %v9861
    %v9863 = vsel %vm5515, %v9862, %v9858
    %v9864 = vlaneseq
    %v9865 = vshrl.u32 %v9864, 7
    %v9866 = vsub.s32 %v5517, %v9865
    %v9867 = vrot.slane %v3736, %v9866
    %v9868 = vsel %vm5522, %v9867, %v9863
    %v9869 = vlaneseq
    %v9870 = vshrl.u32 %v9869, 7
    %v9871 = vsub.s32 %v5414, %v9870
    %v9872 = vrot.slane %v3739, %v9871
    %v9873 = vlaneseq
    %v9874 = vshrl.u32 %v9873, 7
    %v9875 = vsub.s32 %v5419, %v9874
    %v9876 = vrot.slane %v3742, %v9875
    %v9877 = vsel %vm5424, %v9876, %v9872
    %v9878 = vlaneseq
    %v9879 = vshrl.u32 %v9878, 7
    %v9880 = vsub.s32 %v5426, %v9879
    %v9881 = vrot.slane %v3745, %v9880
    %v9882 = vsel %vm5431, %v9881, %v9877
    %v9883 = vlaneseq
    %v9884 = vshrl.u32 %v9883, 7
    %v9885 = vsub.s32 %v5433, %v9884
    %v9886 = vrot.slane %v3748, %v9885
    %v9887 = vsel %vm5438, %v9886, %v9882
    %v9888 = vlaneseq
    %v9889 = vshrl.u32 %v9888, 7
    %v9890 = vsub.s32 %v5440, %v9889
    %v9891 = vrot.slane %v3751, %v9890
    %v9892 = vsel %vm5445, %v9891, %v9887
    %v9893 = vlaneseq
    %v9894 = vshrl.u32 %v9893, 7
    %v9895 = vsub.s32 %v5447, %v9894
    %v9896 = vrot.slane %v3754, %v9895
    %v9897 = vsel %vm5452, %v9896, %v9892
    %v9898 = vlaneseq
    %v9899 = vshrl.u32 %v9898, 7
    %v9900 = vsub.s32 %v5454, %v9899
    %v9901 = vrot.slane %v3757, %v9900
    %v9902 = vsel %vm5459, %v9901, %v9897
    %v9903 = vlaneseq
    %v9904 = vshrl.u32 %v9903, 7
    %v9905 = vsub.s32 %v5461, %v9904
    %v9906 = vrot.slane %v3760, %v9905
    %v9907 = vsel %vm5466, %v9906, %v9902
    %v9908 = vlaneseq
    %v9909 = vshrl.u32 %v9908, 7
    %v9910 = vsub.s32 %v5468, %v9909
    %v9911 = vrot.slane %v3763, %v9910
    %v9912 = vsel %vm5473, %v9911, %v9907
    %v9913 = vlaneseq
    %v9914 = vshrl.u32 %v9913, 7
    %v9915 = vsub.s32 %v5475, %v9914
    %v9916 = vrot.slane %v3766, %v9915
    %v9917 = vsel %vm5480, %v9916, %v9912
    %v9918 = vlaneseq
    %v9919 = vshrl.u32 %v9918, 7
    %v9920 = vsub.s32 %v5482, %v9919
    %v9921 = vrot.slane %v3769, %v9920
    %v9922 = vsel %vm5487, %v9921, %v9917
    %v9923 = vlaneseq
    %v9924 = vshrl.u32 %v9923, 7
    %v9925 = vsub.s32 %v5489, %v9924
    %v9926 = vrot.slane %v3772, %v9925
    %v9927 = vsel %vm5494, %v9926, %v9922
    %v9928 = vlaneseq
    %v9929 = vshrl.u32 %v9928, 7
    %v9930 = vsub.s32 %v5496, %v9929
    %v9931 = vrot.slane %v3775, %v9930
    %v9932 = vsel %vm5501, %v9931, %v9927
    %v9933 = vlaneseq
    %v9934 = vshrl.u32 %v9933, 7
    %v9935 = vsub.s32 %v5503, %v9934
    %v9936 = vrot.slane %v3778, %v9935
    %v9937 = vsel %vm5508, %v9936, %v9932
    %v9938 = vlaneseq
    %v9939 = vshrl.u32 %v9938, 7
    %v9940 = vsub.s32 %v5510, %v9939
    %v9941 = vrot.slane %v3781, %v9940
    %v9942 = vsel %vm5515, %v9941, %v9937
    %v9943 = vlaneseq
    %v9944 = vshrl.u32 %v9943, 7
    %v9945 = vsub.s32 %v5517, %v9944
    %v9946 = vrot.slane %v3784, %v9945
    %v9947 = vsel %vm5522, %v9946, %v9942
    %v9948 = vlaneseq
    %v9949 = vshrl.u32 %v9948, 7
    %v9950 = vsub.s32 %v5414, %v9949
    %v9951 = vrot.slane %v3787, %v9950
    %v9952 = vlaneseq
    %v9953 = vshrl.u32 %v9952, 7
    %v9954 = vsub.s32 %v5419, %v9953
    %v9955 = vrot.slane %v3790, %v9954
    %v9956 = vsel %vm5424, %v9955, %v9951
    %v9957 = vlaneseq
    %v9958 = vshrl.u32 %v9957, 7
    %v9959 = vsub.s32 %v5426, %v9958
    %v9960 = vrot.slane %v3793, %v9959
    %v9961 = vsel %vm5431, %v9960, %v9956
    %v9962 = vlaneseq
    %v9963 = vshrl.u32 %v9962, 7
    %v9964 = vsub.s32 %v5433, %v9963
    %v9965 = vrot.slane %v3796, %v9964
    %v9966 = vsel %vm5438, %v9965, %v9961
    %v9967 = vlaneseq
    %v9968 = vshrl.u32 %v9967, 7
    %v9969 = vsub.s32 %v5440, %v9968
    %v9970 = vrot.slane %v3799, %v9969
    %v9971 = vsel %vm5445, %v9970, %v9966
    %v9972 = vlaneseq
    %v9973 = vshrl.u32 %v9972, 7
    %v9974 = vsub.s32 %v5447, %v9973
    %v9975 = vrot.slane %v3802, %v9974
    %v9976 = vsel %vm5452, %v9975, %v9971
    %v9977 = vlaneseq
    %v9978 = vshrl.u32 %v9977, 7
    %v9979 = vsub.s32 %v5454, %v9978
    %v9980 = vrot.slane %v3805, %v9979
    %v9981 = vsel %vm5459, %v9980, %v9976
    %v9982 = vlaneseq
    %v9983 = vshrl.u32 %v9982, 7
    %v9984 = vsub.s32 %v5461, %v9983
    %v9985 = vrot.slane %v3808, %v9984
    %v9986 = vsel %vm5466, %v9985, %v9981
    %v9987 = vlaneseq
    %v9988 = vshrl.u32 %v9987, 7
    %v9989 = vsub.s32 %v5468, %v9988
    %v9990 = vrot.slane %v3811, %v9989
    %v9991 = vsel %vm5473, %v9990, %v9986
    %v9992 = vlaneseq
    %v9993 = vshrl.u32 %v9992, 7
    %v9994 = vsub.s32 %v5475, %v9993
    %v9995 = vrot.slane %v3814, %v9994
    %v9996 = vsel %vm5480, %v9995, %v9991
    %v9997 = vlaneseq
    %v9998 = vshrl.u32 %v9997, 7
    %v9999 = vsub.s32 %v5482, %v9998
    %v10000 = vrot.slane %v3817, %v9999
    %v10001 = vsel %vm5487, %v10000, %v9996
    %v10002 = vlaneseq
    %v10003 = vshrl.u32 %v10002, 7
    %v10004 = vsub.s32 %v5489, %v10003
    %v10005 = vrot.slane %v3820, %v10004
    %v10006 = vsel %vm5494, %v10005, %v10001
    %v10007 = vlaneseq
    %v10008 = vshrl.u32 %v10007, 7
    %v10009 = vsub.s32 %v5496, %v10008
    %v10010 = vrot.slane %v3823, %v10009
    %v10011 = vsel %vm5501, %v10010, %v10006
    %v10012 = vlaneseq
    %v10013 = vshrl.u32 %v10012, 7
    %v10014 = vsub.s32 %v5503, %v10013
    %v10015 = vrot.slane %v3826, %v10014
    %v10016 = vsel %vm5508, %v10015, %v10011
    %v10017 = vlaneseq
    %v10018 = vshrl.u32 %v10017, 7
    %v10019 = vsub.s32 %v5510, %v10018
    %v10020 = vrot.slane %v3829, %v10019
    %v10021 = vsel %vm5515, %v10020, %v10016
    %v10022 = vlaneseq
    %v10023 = vshrl.u32 %v10022, 7
    %v10024 = vsub.s32 %v5517, %v10023
    %v10025 = vrot.slane %v3832, %v10024
    %v10026 = vsel %vm5522, %v10025, %v10021
    %v10027 = vlaneseq
    %v10028 = vshrl.u32 %v10027, 7
    %v10029 = vsub.s32 %v5414, %v10028
    %v10030 = vrot.slane %v3835, %v10029
    %v10031 = vlaneseq
    %v10032 = vshrl.u32 %v10031, 7
    %v10033 = vsub.s32 %v5419, %v10032
    %v10034 = vrot.slane %v3838, %v10033
    %v10035 = vsel %vm5424, %v10034, %v10030
    %v10036 = vlaneseq
    %v10037 = vshrl.u32 %v10036, 7
    %v10038 = vsub.s32 %v5426, %v10037
    %v10039 = vrot.slane %v3841, %v10038
    %v10040 = vsel %vm5431, %v10039, %v10035
    %v10041 = vlaneseq
    %v10042 = vshrl.u32 %v10041, 7
    %v10043 = vsub.s32 %v5433, %v10042
    %v10044 = vrot.slane %v3844, %v10043
    %v10045 = vsel %vm5438, %v10044, %v10040
    %v10046 = vlaneseq
    %v10047 = vshrl.u32 %v10046, 7
    %v10048 = vsub.s32 %v5440, %v10047
    %v10049 = vrot.slane %v3847, %v10048
    %v10050 = vsel %vm5445, %v10049, %v10045
    %v10051 = vlaneseq
    %v10052 = vshrl.u32 %v10051, 7
    %v10053 = vsub.s32 %v5447, %v10052
    %v10054 = vrot.slane %v3850, %v10053
    %v10055 = vsel %vm5452, %v10054, %v10050
    %v10056 = vlaneseq
    %v10057 = vshrl.u32 %v10056, 7
    %v10058 = vsub.s32 %v5454, %v10057
    %v10059 = vrot.slane %v3853, %v10058
    %v10060 = vsel %vm5459, %v10059, %v10055
    %v10061 = vlaneseq
    %v10062 = vshrl.u32 %v10061, 7
    %v10063 = vsub.s32 %v5461, %v10062
    %v10064 = vrot.slane %v3856, %v10063
    %v10065 = vsel %vm5466, %v10064, %v10060
    %v10066 = vlaneseq
    %v10067 = vshrl.u32 %v10066, 7
    %v10068 = vsub.s32 %v5468, %v10067
    %v10069 = vrot.slane %v3859, %v10068
    %v10070 = vsel %vm5473, %v10069, %v10065
    %v10071 = vlaneseq
    %v10072 = vshrl.u32 %v10071, 7
    %v10073 = vsub.s32 %v5475, %v10072
    %v10074 = vrot.slane %v3862, %v10073
    %v10075 = vsel %vm5480, %v10074, %v10070
    %v10076 = vlaneseq
    %v10077 = vshrl.u32 %v10076, 7
    %v10078 = vsub.s32 %v5482, %v10077
    %v10079 = vrot.slane %v3865, %v10078
    %v10080 = vsel %vm5487, %v10079, %v10075
    %v10081 = vlaneseq
    %v10082 = vshrl.u32 %v10081, 7
    %v10083 = vsub.s32 %v5489, %v10082
    %v10084 = vrot.slane %v3868, %v10083
    %v10085 = vsel %vm5494, %v10084, %v10080
    %v10086 = vlaneseq
    %v10087 = vshrl.u32 %v10086, 7
    %v10088 = vsub.s32 %v5496, %v10087
    %v10089 = vrot.slane %v3871, %v10088
    %v10090 = vsel %vm5501, %v10089, %v10085
    %v10091 = vlaneseq
    %v10092 = vshrl.u32 %v10091, 7
    %v10093 = vsub.s32 %v5503, %v10092
    %v10094 = vrot.slane %v3874, %v10093
    %v10095 = vsel %vm5508, %v10094, %v10090
    %v10096 = vlaneseq
    %v10097 = vshrl.u32 %v10096, 7
    %v10098 = vsub.s32 %v5510, %v10097
    %v10099 = vrot.slane %v3877, %v10098
    %v10100 = vsel %vm5515, %v10099, %v10095
    %v10101 = vlaneseq
    %v10102 = vshrl.u32 %v10101, 7
    %v10103 = vsub.s32 %v5517, %v10102
    %v10104 = vrot.slane %v3880, %v10103
    %v10105 = vsel %vm5522, %v10104, %v10100
    %v10106 = vlaneseq
    %v10107 = vshrl.u32 %v10106, 7
    %v10108 = vsub.s32 %v5414, %v10107
    %v10109 = vrot.slane %v3883, %v10108
    %v10110 = vlaneseq
    %v10111 = vshrl.u32 %v10110, 7
    %v10112 = vsub.s32 %v5419, %v10111
    %v10113 = vrot.slane %v3886, %v10112
    %v10114 = vsel %vm5424, %v10113, %v10109
    %v10115 = vlaneseq
    %v10116 = vshrl.u32 %v10115, 7
    %v10117 = vsub.s32 %v5426, %v10116
    %v10118 = vrot.slane %v3889, %v10117
    %v10119 = vsel %vm5431, %v10118, %v10114
    %v10120 = vlaneseq
    %v10121 = vshrl.u32 %v10120, 7
    %v10122 = vsub.s32 %v5433, %v10121
    %v10123 = vrot.slane %v3892, %v10122
    %v10124 = vsel %vm5438, %v10123, %v10119
    %v10125 = vlaneseq
    %v10126 = vshrl.u32 %v10125, 7
    %v10127 = vsub.s32 %v5440, %v10126
    %v10128 = vrot.slane %v3895, %v10127
    %v10129 = vsel %vm5445, %v10128, %v10124
    %v10130 = vlaneseq
    %v10131 = vshrl.u32 %v10130, 7
    %v10132 = vsub.s32 %v5447, %v10131
    %v10133 = vrot.slane %v3898, %v10132
    %v10134 = vsel %vm5452, %v10133, %v10129
    %v10135 = vlaneseq
    %v10136 = vshrl.u32 %v10135, 7
    %v10137 = vsub.s32 %v5454, %v10136
    %v10138 = vrot.slane %v3901, %v10137
    %v10139 = vsel %vm5459, %v10138, %v10134
    %v10140 = vlaneseq
    %v10141 = vshrl.u32 %v10140, 7
    %v10142 = vsub.s32 %v5461, %v10141
    %v10143 = vrot.slane %v3904, %v10142
    %v10144 = vsel %vm5466, %v10143, %v10139
    %v10145 = vlaneseq
    %v10146 = vshrl.u32 %v10145, 7
    %v10147 = vsub.s32 %v5468, %v10146
    %v10148 = vrot.slane %v3907, %v10147
    %v10149 = vsel %vm5473, %v10148, %v10144
    %v10150 = vlaneseq
    %v10151 = vshrl.u32 %v10150, 7
    %v10152 = vsub.s32 %v5475, %v10151
    %v10153 = vrot.slane %v3910, %v10152
    %v10154 = vsel %vm5480, %v10153, %v10149
    %v10155 = vlaneseq
    %v10156 = vshrl.u32 %v10155, 7
    %v10157 = vsub.s32 %v5482, %v10156
    %v10158 = vrot.slane %v3913, %v10157
    %v10159 = vsel %vm5487, %v10158, %v10154
    %v10160 = vlaneseq
    %v10161 = vshrl.u32 %v10160, 7
    %v10162 = vsub.s32 %v5489, %v10161
    %v10163 = vrot.slane %v3916, %v10162
    %v10164 = vsel %vm5494, %v10163, %v10159
    %v10165 = vlaneseq
    %v10166 = vshrl.u32 %v10165, 7
    %v10167 = vsub.s32 %v5496, %v10166
    %v10168 = vrot.slane %v3919, %v10167
    %v10169 = vsel %vm5501, %v10168, %v10164
    %v10170 = vlaneseq
    %v10171 = vshrl.u32 %v10170, 7
    %v10172 = vsub.s32 %v5503, %v10171
    %v10173 = vrot.slane %v3922, %v10172
    %v10174 = vsel %vm5508, %v10173, %v10169
    %v10175 = vlaneseq
    %v10176 = vshrl.u32 %v10175, 7
    %v10177 = vsub.s32 %v5510, %v10176
    %v10178 = vrot.slane %v3925, %v10177
    %v10179 = vsel %vm5515, %v10178, %v10174
    %v10180 = vlaneseq
    %v10181 = vshrl.u32 %v10180, 7
    %v10182 = vsub.s32 %v5517, %v10181
    %v10183 = vrot.slane %v3928, %v10182
    %v10184 = vsel %vm5522, %v10183, %v10179
    %v10185 = vlaneseq
    %v10186 = vshrl.u32 %v10185, 7
    %v10187 = vsub.s32 %v5414, %v10186
    %v10188 = vrot.slane %v3931, %v10187
    %v10189 = vlaneseq
    %v10190 = vshrl.u32 %v10189, 7
    %v10191 = vsub.s32 %v5419, %v10190
    %v10192 = vrot.slane %v3934, %v10191
    %v10193 = vsel %vm5424, %v10192, %v10188
    %v10194 = vlaneseq
    %v10195 = vshrl.u32 %v10194, 7
    %v10196 = vsub.s32 %v5426, %v10195
    %v10197 = vrot.slane %v3937, %v10196
    %v10198 = vsel %vm5431, %v10197, %v10193
    %v10199 = vlaneseq
    %v10200 = vshrl.u32 %v10199, 7
    %v10201 = vsub.s32 %v5433, %v10200
    %v10202 = vrot.slane %v3940, %v10201
    %v10203 = vsel %vm5438, %v10202, %v10198
    %v10204 = vlaneseq
    %v10205 = vshrl.u32 %v10204, 7
    %v10206 = vsub.s32 %v5440, %v10205
    %v10207 = vrot.slane %v3943, %v10206
    %v10208 = vsel %vm5445, %v10207, %v10203
    %v10209 = vlaneseq
    %v10210 = vshrl.u32 %v10209, 7
    %v10211 = vsub.s32 %v5447, %v10210
    %v10212 = vrot.slane %v3946, %v10211
    %v10213 = vsel %vm5452, %v10212, %v10208
    %v10214 = vlaneseq
    %v10215 = vshrl.u32 %v10214, 7
    %v10216 = vsub.s32 %v5454, %v10215
    %v10217 = vrot.slane %v3949, %v10216
    %v10218 = vsel %vm5459, %v10217, %v10213
    %v10219 = vlaneseq
    %v10220 = vshrl.u32 %v10219, 7
    %v10221 = vsub.s32 %v5461, %v10220
    %v10222 = vrot.slane %v3952, %v10221
    %v10223 = vsel %vm5466, %v10222, %v10218
    %v10224 = vlaneseq
    %v10225 = vshrl.u32 %v10224, 7
    %v10226 = vsub.s32 %v5468, %v10225
    %v10227 = vrot.slane %v3955, %v10226
    %v10228 = vsel %vm5473, %v10227, %v10223
    %v10229 = vlaneseq
    %v10230 = vshrl.u32 %v10229, 7
    %v10231 = vsub.s32 %v5475, %v10230
    %v10232 = vrot.slane %v3958, %v10231
    %v10233 = vsel %vm5480, %v10232, %v10228
    %v10234 = vlaneseq
    %v10235 = vshrl.u32 %v10234, 7
    %v10236 = vsub.s32 %v5482, %v10235
    %v10237 = vrot.slane %v3961, %v10236
    %v10238 = vsel %vm5487, %v10237, %v10233
    %v10239 = vlaneseq
    %v10240 = vshrl.u32 %v10239, 7
    %v10241 = vsub.s32 %v5489, %v10240
    %v10242 = vrot.slane %v3964, %v10241
    %v10243 = vsel %vm5494, %v10242, %v10238
    %v10244 = vlaneseq
    %v10245 = vshrl.u32 %v10244, 7
    %v10246 = vsub.s32 %v5496, %v10245
    %v10247 = vrot.slane %v3967, %v10246
    %v10248 = vsel %vm5501, %v10247, %v10243
    %v10249 = vlaneseq
    %v10250 = vshrl.u32 %v10249, 7
    %v10251 = vsub.s32 %v5503, %v10250
    %v10252 = vrot.slane %v3970, %v10251
    %v10253 = vsel %vm5508, %v10252, %v10248
    %v10254 = vlaneseq
    %v10255 = vshrl.u32 %v10254, 7
    %v10256 = vsub.s32 %v5510, %v10255
    %v10257 = vrot.slane %v3973, %v10256
    %v10258 = vsel %vm5515, %v10257, %v10253
    %v10259 = vlaneseq
    %v10260 = vshrl.u32 %v10259, 7
    %v10261 = vsub.s32 %v5517, %v10260
    %v10262 = vrot.slane %v3976, %v10261
    %v10263 = vsel %vm5522, %v10262, %v10258
    %v10264 = vlaneseq
    %v10265 = vshrl.u32 %v10264, 7
    %v10266 = vsub.s32 %v5414, %v10265
    %v10267 = vrot.slane %v3979, %v10266
    %v10268 = vlaneseq
    %v10269 = vshrl.u32 %v10268, 7
    %v10270 = vsub.s32 %v5419, %v10269
    %v10271 = vrot.slane %v3982, %v10270
    %v10272 = vsel %vm5424, %v10271, %v10267
    %v10273 = vlaneseq
    %v10274 = vshrl.u32 %v10273, 7
    %v10275 = vsub.s32 %v5426, %v10274
    %v10276 = vrot.slane %v3985, %v10275
    %v10277 = vsel %vm5431, %v10276, %v10272
    %v10278 = vlaneseq
    %v10279 = vshrl.u32 %v10278, 7
    %v10280 = vsub.s32 %v5433, %v10279
    %v10281 = vrot.slane %v3988, %v10280
    %v10282 = vsel %vm5438, %v10281, %v10277
    %v10283 = vlaneseq
    %v10284 = vshrl.u32 %v10283, 7
    %v10285 = vsub.s32 %v5440, %v10284
    %v10286 = vrot.slane %v3991, %v10285
    %v10287 = vsel %vm5445, %v10286, %v10282
    %v10288 = vlaneseq
    %v10289 = vshrl.u32 %v10288, 7
    %v10290 = vsub.s32 %v5447, %v10289
    %v10291 = vrot.slane %v3994, %v10290
    %v10292 = vsel %vm5452, %v10291, %v10287
    %v10293 = vlaneseq
    %v10294 = vshrl.u32 %v10293, 7
    %v10295 = vsub.s32 %v5454, %v10294
    %v10296 = vrot.slane %v3997, %v10295
    %v10297 = vsel %vm5459, %v10296, %v10292
    %v10298 = vlaneseq
    %v10299 = vshrl.u32 %v10298, 7
    %v10300 = vsub.s32 %v5461, %v10299
    %v10301 = vrot.slane %v4000, %v10300
    %v10302 = vsel %vm5466, %v10301, %v10297
    %v10303 = vlaneseq
    %v10304 = vshrl.u32 %v10303, 7
    %v10305 = vsub.s32 %v5468, %v10304
    %v10306 = vrot.slane %v4003, %v10305
    %v10307 = vsel %vm5473, %v10306, %v10302
    %v10308 = vlaneseq
    %v10309 = vshrl.u32 %v10308, 7
    %v10310 = vsub.s32 %v5475, %v10309
    %v10311 = vrot.slane %v4006, %v10310
    %v10312 = vsel %vm5480, %v10311, %v10307
    %v10313 = vlaneseq
    %v10314 = vshrl.u32 %v10313, 7
    %v10315 = vsub.s32 %v5482, %v10314
    %v10316 = vrot.slane %v4009, %v10315
    %v10317 = vsel %vm5487, %v10316, %v10312
    %v10318 = vlaneseq
    %v10319 = vshrl.u32 %v10318, 7
    %v10320 = vsub.s32 %v5489, %v10319
    %v10321 = vrot.slane %v4012, %v10320
    %v10322 = vsel %vm5494, %v10321, %v10317
    %v10323 = vlaneseq
    %v10324 = vshrl.u32 %v10323, 7
    %v10325 = vsub.s32 %v5496, %v10324
    %v10326 = vrot.slane %v4015, %v10325
    %v10327 = vsel %vm5501, %v10326, %v10322
    %v10328 = vlaneseq
    %v10329 = vshrl.u32 %v10328, 7
    %v10330 = vsub.s32 %v5503, %v10329
    %v10331 = vrot.slane %v4018, %v10330
    %v10332 = vsel %vm5508, %v10331, %v10327
    %v10333 = vlaneseq
    %v10334 = vshrl.u32 %v10333, 7
    %v10335 = vsub.s32 %v5510, %v10334
    %v10336 = vrot.slane %v4021, %v10335
    %v10337 = vsel %vm5515, %v10336, %v10332
    %v10338 = vlaneseq
    %v10339 = vshrl.u32 %v10338, 7
    %v10340 = vsub.s32 %v5517, %v10339
    %v10341 = vrot.slane %v4024, %v10340
    %v10342 = vsel %vm5522, %v10341, %v10337
    %v10343 = vlaneseq
    %v10344 = vshrl.u32 %v10343, 7
    %v10345 = vsub.s32 %v5414, %v10344
    %v10346 = vrot.slane %v4027, %v10345
    %v10347 = vlaneseq
    %v10348 = vshrl.u32 %v10347, 7
    %v10349 = vsub.s32 %v5419, %v10348
    %v10350 = vrot.slane %v4030, %v10349
    %v10351 = vsel %vm5424, %v10350, %v10346
    %v10352 = vlaneseq
    %v10353 = vshrl.u32 %v10352, 7
    %v10354 = vsub.s32 %v5426, %v10353
    %v10355 = vrot.slane %v4033, %v10354
    %v10356 = vsel %vm5431, %v10355, %v10351
    %v10357 = vlaneseq
    %v10358 = vshrl.u32 %v10357, 7
    %v10359 = vsub.s32 %v5433, %v10358
    %v10360 = vrot.slane %v4036, %v10359
    %v10361 = vsel %vm5438, %v10360, %v10356
    %v10362 = vlaneseq
    %v10363 = vshrl.u32 %v10362, 7
    %v10364 = vsub.s32 %v5440, %v10363
    %v10365 = vrot.slane %v4039, %v10364
    %v10366 = vsel %vm5445, %v10365, %v10361
    %v10367 = vlaneseq
    %v10368 = vshrl.u32 %v10367, 7
    %v10369 = vsub.s32 %v5447, %v10368
    %v10370 = vrot.slane %v4042, %v10369
    %v10371 = vsel %vm5452, %v10370, %v10366
    %v10372 = vlaneseq
    %v10373 = vshrl.u32 %v10372, 7
    %v10374 = vsub.s32 %v5454, %v10373
    %v10375 = vrot.slane %v4045, %v10374
    %v10376 = vsel %vm5459, %v10375, %v10371
    %v10377 = vlaneseq
    %v10378 = vshrl.u32 %v10377, 7
    %v10379 = vsub.s32 %v5461, %v10378
    %v10380 = vrot.slane %v4048, %v10379
    %v10381 = vsel %vm5466, %v10380, %v10376
    %v10382 = vlaneseq
    %v10383 = vshrl.u32 %v10382, 7
    %v10384 = vsub.s32 %v5468, %v10383
    %v10385 = vrot.slane %v4051, %v10384
    %v10386 = vsel %vm5473, %v10385, %v10381
    %v10387 = vlaneseq
    %v10388 = vshrl.u32 %v10387, 7
    %v10389 = vsub.s32 %v5475, %v10388
    %v10390 = vrot.slane %v4054, %v10389
    %v10391 = vsel %vm5480, %v10390, %v10386
    %v10392 = vlaneseq
    %v10393 = vshrl.u32 %v10392, 7
    %v10394 = vsub.s32 %v5482, %v10393
    %v10395 = vrot.slane %v4057, %v10394
    %v10396 = vsel %vm5487, %v10395, %v10391
    %v10397 = vlaneseq
    %v10398 = vshrl.u32 %v10397, 7
    %v10399 = vsub.s32 %v5489, %v10398
    %v10400 = vrot.slane %v4060, %v10399
    %v10401 = vsel %vm5494, %v10400, %v10396
    %v10402 = vlaneseq
    %v10403 = vshrl.u32 %v10402, 7
    %v10404 = vsub.s32 %v5496, %v10403
    %v10405 = vrot.slane %v4063, %v10404
    %v10406 = vsel %vm5501, %v10405, %v10401
    %v10407 = vlaneseq
    %v10408 = vshrl.u32 %v10407, 7
    %v10409 = vsub.s32 %v5503, %v10408
    %v10410 = vrot.slane %v4066, %v10409
    %v10411 = vsel %vm5508, %v10410, %v10406
    %v10412 = vlaneseq
    %v10413 = vshrl.u32 %v10412, 7
    %v10414 = vsub.s32 %v5510, %v10413
    %v10415 = vrot.slane %v4069, %v10414
    %v10416 = vsel %vm5515, %v10415, %v10411
    %v10417 = vlaneseq
    %v10418 = vshrl.u32 %v10417, 7
    %v10419 = vsub.s32 %v5517, %v10418
    %v10420 = vrot.slane %v4072, %v10419
    %v10421 = vsel %vm5522, %v10420, %v10416
    %v10422 = vlaneseq
    %v10423 = vshrl.u32 %v10422, 7
    %v10424 = vsub.s32 %v5414, %v10423
    %v10425 = vrot.slane %v4075, %v10424
    %v10426 = vlaneseq
    %v10427 = vshrl.u32 %v10426, 7
    %v10428 = vsub.s32 %v5419, %v10427
    %v10429 = vrot.slane %v4078, %v10428
    %v10430 = vsel %vm5424, %v10429, %v10425
    %v10431 = vlaneseq
    %v10432 = vshrl.u32 %v10431, 7
    %v10433 = vsub.s32 %v5426, %v10432
    %v10434 = vrot.slane %v4081, %v10433
    %v10435 = vsel %vm5431, %v10434, %v10430
    %v10436 = vlaneseq
    %v10437 = vshrl.u32 %v10436, 7
    %v10438 = vsub.s32 %v5433, %v10437
    %v10439 = vrot.slane %v4084, %v10438
    %v10440 = vsel %vm5438, %v10439, %v10435
    %v10441 = vlaneseq
    %v10442 = vshrl.u32 %v10441, 7
    %v10443 = vsub.s32 %v5440, %v10442
    %v10444 = vrot.slane %v4087, %v10443
    %v10445 = vsel %vm5445, %v10444, %v10440
    %v10446 = vlaneseq
    %v10447 = vshrl.u32 %v10446, 7
    %v10448 = vsub.s32 %v5447, %v10447
    %v10449 = vrot.slane %v4090, %v10448
    %v10450 = vsel %vm5452, %v10449, %v10445
    %v10451 = vlaneseq
    %v10452 = vshrl.u32 %v10451, 7
    %v10453 = vsub.s32 %v5454, %v10452
    %v10454 = vrot.slane %v4093, %v10453
    %v10455 = vsel %vm5459, %v10454, %v10450
    %v10456 = vlaneseq
    %v10457 = vshrl.u32 %v10456, 7
    %v10458 = vsub.s32 %v5461, %v10457
    %v10459 = vrot.slane %v4096, %v10458
    %v10460 = vsel %vm5466, %v10459, %v10455
    %v10461 = vlaneseq
    %v10462 = vshrl.u32 %v10461, 7
    %v10463 = vsub.s32 %v5468, %v10462
    %v10464 = vrot.slane %v4099, %v10463
    %v10465 = vsel %vm5473, %v10464, %v10460
    %v10466 = vlaneseq
    %v10467 = vshrl.u32 %v10466, 7
    %v10468 = vsub.s32 %v5475, %v10467
    %v10469 = vrot.slane %v4102, %v10468
    %v10470 = vsel %vm5480, %v10469, %v10465
    %v10471 = vlaneseq
    %v10472 = vshrl.u32 %v10471, 7
    %v10473 = vsub.s32 %v5482, %v10472
    %v10474 = vrot.slane %v4105, %v10473
    %v10475 = vsel %vm5487, %v10474, %v10470
    %v10476 = vlaneseq
    %v10477 = vshrl.u32 %v10476, 7
    %v10478 = vsub.s32 %v5489, %v10477
    %v10479 = vrot.slane %v4108, %v10478
    %v10480 = vsel %vm5494, %v10479, %v10475
    %v10481 = vlaneseq
    %v10482 = vshrl.u32 %v10481, 7
    %v10483 = vsub.s32 %v5496, %v10482
    %v10484 = vrot.slane %v4111, %v10483
    %v10485 = vsel %vm5501, %v10484, %v10480
    %v10486 = vlaneseq
    %v10487 = vshrl.u32 %v10486, 7
    %v10488 = vsub.s32 %v5503, %v10487
    %v10489 = vrot.slane %v4114, %v10488
    %v10490 = vsel %vm5508, %v10489, %v10485
    %v10491 = vlaneseq
    %v10492 = vshrl.u32 %v10491, 7
    %v10493 = vsub.s32 %v5510, %v10492
    %v10494 = vrot.slane %v4117, %v10493
    %v10495 = vsel %vm5515, %v10494, %v10490
    %v10496 = vlaneseq
    %v10497 = vshrl.u32 %v10496, 7
    %v10498 = vsub.s32 %v5517, %v10497
    %v10499 = vrot.slane %v4120, %v10498
    %v10500 = vsel %vm5522, %v10499, %v10495
    %vm10501 = vcmask 1041409
    %v10502 = vsel %vm10501, %v6155, %v5523
    %vm10503 = vcmask 1042434
    %v10504 = vsel %vm10503, %v6787, %v10502
    %vm10505 = vcmask 1043459
    %v10506 = vsel %vm10505, %v7419, %v10504
    %vm10507 = vcmask 1044484
    %v10508 = vsel %vm10507, %v8051, %v10506
    %vm10509 = vcmask 1045509
    %v10510 = vsel %vm10509, %v8683, %v10508
    %vm10511 = vcmask 1046534
    %v10512 = vsel %vm10511, %v9315, %v10510
    %vm10513 = vcmask 1047559
    %v10514 = vsel %vm10513, %v9947, %v10512
    %v10515 = vsel %vm10501, %v6234, %v5602
    %v10516 = vsel %vm10503, %v6866, %v10515
    %v10517 = vsel %vm10505, %v7498, %v10516
    %v10518 = vsel %vm10507, %v8130, %v10517
    %v10519 = vsel %vm10509, %v8762, %v10518
    %v10520 = vsel %vm10511, %v9394, %v10519
    %v10521 = vsel %vm10513, %v10026, %v10520
    %v10522 = vsel %vm10501, %v6313, %v5681
    %v10523 = vsel %vm10503, %v6945, %v10522
    %v10524 = vsel %vm10505, %v7577, %v10523
    %v10525 = vsel %vm10507, %v8209, %v10524
    %v10526 = vsel %vm10509, %v8841, %v10525
    %v10527 = vsel %vm10511, %v9473, %v10526
    %v10528 = vsel %vm10513, %v10105, %v10527
    %v10529 = vsel %vm10501, %v6392, %v5760
    %v10530 = vsel %vm10503, %v7024, %v10529
    %v10531 = vsel %vm10505, %v7656, %v10530
    %v10532 = vsel %vm10507, %v8288, %v10531
    %v10533 = vsel %vm10509, %v8920, %v10532
    %v10534 = vsel %vm10511, %v9552, %v10533
    %v10535 = vsel %vm10513, %v10184, %v10534
    %v10536 = vsel %vm10501, %v6471, %v5839
    %v10537 = vsel %vm10503, %v7103, %v10536
    %v10538 = vsel %vm10505, %v7735, %v10537
    %v10539 = vsel %vm10507, %v8367, %v10538
    %v10540 = vsel %vm10509, %v8999, %v10539
    %v10541 = vsel %vm10511, %v9631, %v10540
    %v10542 = vsel %vm10513, %v10263, %v10541
    %v10543 = vsel %vm10501, %v6550, %v5918
    %v10544 = vsel %vm10503, %v7182, %v10543
    %v10545 = vsel %vm10505, %v7814, %v10544
    %v10546 = vsel %vm10507, %v8446, %v10545
    %v10547 = vsel %vm10509, %v9078, %v10546
    %v10548 = vsel %vm10511, %v9710, %v10547
    %v10549 = vsel %vm10513, %v10342, %v10548
    %v10550 = vsel %vm10501, %v6629, %v5997
    %v10551 = vsel %vm10503, %v7261, %v10550
    %v10552 = vsel %vm10505, %v7893, %v10551
    %v10553 = vsel %vm10507, %v8525, %v10552
    %v10554 = vsel %vm10509, %v9157, %v10553
    %v10555 = vsel %vm10511, %v9789, %v10554
    %v10556 = vsel %vm10513, %v10421, %v10555
    %v10557 = vsel %vm10501, %v6708, %v6076
    %v10558 = vsel %vm10503, %v7340, %v10557
    %v10559 = vsel %vm10505, %v7972, %v10558
    %v10560 = vsel %vm10507, %v8604, %v10559
    %v10561 = vsel %vm10509, %v9236, %v10560
    %v10562 = vsel %vm10511, %v9868, %v10561
    %v10563 = vsel %vm10513, %v10500, %v10562
    %10572 = vmatprep.subr.mxu0 %v4122
    %10573 = vmatpush1.msra.mxu0 %v4121
    %10574 = vmatprep.subr.mxu0 %v4124
    %10575 = vmatpush1.msra.mxu0 %v4123
    %10576 = vmatprep.subr.mxu0 %v4126
    %10577 = vmatpush1.msra.mxu0 %v4125
    %10578 = vmatprep.subr.mxu0 %v4128
    %10579 = vmatpush1.msra.mxu0 %v4127
    %10580 = vmatprep.subr.mxu0 %v4130
    %10581 = vmatpush1.msra.mxu0 %v4129
    %10582 = vmatprep.subr.mxu0 %v4132
    %10583 = vmatpush1.msra.mxu0 %v4131
    %10584 = vmatprep.subr.mxu0 %v4134
    %10585 = vmatpush1.msra.mxu0 %v4133
    %10586 = vmatprep.subr.mxu0 %v4136
    %10587 = vmatpush1.msra.mxu0 %v4135
    %10588 = vmatprep.subr.mxu0 %v4138
    %10589 = vmatpush1.msra.mxu0 %v4137
    %10590 = vmatprep.subr.mxu0 %v4140
    %10591 = vmatpush1.msra.mxu0 %v4139
    %10592 = vmatprep.subr.mxu0 %v4142
    %10593 = vmatpush1.msra.mxu0 %v4141
    %10594 = vmatprep.subr.mxu0 %v4144
    %10595 = vmatpush1.msra.mxu0 %v4143
    %10596 = vmatprep.subr.mxu0 %v4146
    %10597 = vmatpush1.msra.mxu0 %v4145
    %10598 = vmatprep.subr.mxu0 %v4148
    %10599 = vmatpush1.msra.mxu0 %v4147
    %10600 = vmatprep.subr.mxu0 %v4150
    %10601 = vmatpush1.msra.mxu0 %v4149
    %10602 = vmatprep.subr.mxu0 %v4152
    %10603 = vmatpush1.msra.mxu0 %v4151
    %10604 = vmatprep.subr.mxu0 %v4154
    %10605 = vmatpush1.msra.mxu0 %v4153
    %10606 = vmatprep.subr.mxu0 %v4156
    %10607 = vmatpush1.msra.mxu0 %v4155
    %10608 = vmatprep.subr.mxu0 %v4158
    %10609 = vmatpush1.msra.mxu0 %v4157
    %10610 = vmatprep.subr.mxu0 %v4160
    %10611 = vmatpush1.msra.mxu0 %v4159
    %10612 = vmatprep.subr.mxu0 %v4162
    %10613 = vmatpush1.msra.mxu0 %v4161
    %10614 = vmatprep.subr.mxu0 %v4164
    %10615 = vmatpush1.msra.mxu0 %v4163
    %10616 = vmatprep.subr.mxu0 %v4166
    %10617 = vmatpush1.msra.mxu0 %v4165
    %10618 = vmatprep.subr.mxu0 %v4168
    %10619 = vmatpush1.msra.mxu0 %v4167
    %10620 = vmatprep.subr.mxu0 %v4170
    %10621 = vmatpush1.msra.mxu0 %v4169
    %10622 = vmatprep.subr.mxu0 %v4172
    %10623 = vmatpush1.msra.mxu0 %v4171
    %10624 = vmatprep.subr.mxu0 %v4174
    %10625 = vmatpush1.msra.mxu0 %v4173
    %10626 = vmatprep.subr.mxu0 %v4176
    %10627 = vmatpush1.msra.mxu0 %v4175
    %10628 = vmatprep.subr.mxu0 %v4178
    %10629 = vmatpush1.msra.mxu0 %v4177
    %10630 = vmatprep.subr.mxu0 %v4180
    %10631 = vmatpush1.msra.mxu0 %v4179
    %10632 = vmatprep.subr.mxu0 %v4182
    %10633 = vmatpush1.msra.mxu0 %v4181
    %10634 = vmatprep.subr.mxu0 %v4184
    %10635 = vmatpush1.msra.mxu0 %v4183
    %10636 = vmatprep.mubr.f32.mxu0 %v10521
    %10637 = vmatmul.mubr.f32.gmra.mrb[0].mxu0 %v10514
    %v10638 = vpop.f32.mrb[0].mxu0
    %v10639 = vadd.f32 %v4382, %v10638
    %v10640 = vpop.f32.mrb[0].mxu0
    %v10641 = vadd.f32 %v4386, %v10640
    %10642 = vdwg.mxu0
    %10643 = vmatprep.subr.mxu0 %v4186
    %10644 = vmatpush1.msra.mxu0 %v4185
    %10645 = vmatprep.subr.mxu0 %v4188
    %10646 = vmatpush1.msra.mxu0 %v4187
    %10647 = vmatprep.subr.mxu0 %v4190
    %10648 = vmatpush1.msra.mxu0 %v4189
    %10649 = vmatprep.subr.mxu0 %v4192
    %10650 = vmatpush1.msra.mxu0 %v4191
    %10651 = vmatprep.subr.mxu0 %v4194
    %10652 = vmatpush1.msra.mxu0 %v4193
    %10653 = vmatprep.subr.mxu0 %v4196
    %10654 = vmatpush1.msra.mxu0 %v4195
    %10655 = vmatprep.subr.mxu0 %v4198
    %10656 = vmatpush1.msra.mxu0 %v4197
    %10657 = vmatprep.subr.mxu0 %v4200
    %10658 = vmatpush1.msra.mxu0 %v4199
    %10659 = vmatprep.subr.mxu0 %v4202
    %10660 = vmatpush1.msra.mxu0 %v4201
    %10661 = vmatprep.subr.mxu0 %v4204
    %10662 = vmatpush1.msra.mxu0 %v4203
    %10663 = vmatprep.subr.mxu0 %v4206
    %10664 = vmatpush1.msra.mxu0 %v4205
    %10665 = vmatprep.subr.mxu0 %v4208
    %10666 = vmatpush1.msra.mxu0 %v4207
    %10667 = vmatprep.subr.mxu0 %v4210
    %10668 = vmatpush1.msra.mxu0 %v4209
    %10669 = vmatprep.subr.mxu0 %v4212
    %10670 = vmatpush1.msra.mxu0 %v4211
    %10671 = vmatprep.subr.mxu0 %v4214
    %10672 = vmatpush1.msra.mxu0 %v4213
    %10673 = vmatprep.subr.mxu0 %v4216
    %10674 = vmatpush1.msra.mxu0 %v4215
    %10675 = vmatprep.subr.mxu0 %v4218
    %10676 = vmatpush1.msra.mxu0 %v4217
    %10677 = vmatprep.subr.mxu0 %v4220
    %10678 = vmatpush1.msra.mxu0 %v4219
    %10679 = vmatprep.subr.mxu0 %v4222
    %10680 = vmatpush1.msra.mxu0 %v4221
    %10681 = vmatprep.subr.mxu0 %v4224
    %10682 = vmatpush1.msra.mxu0 %v4223
    %10683 = vmatprep.subr.mxu0 %v4226
    %10684 = vmatpush1.msra.mxu0 %v4225
    %10685 = vmatprep.subr.mxu0 %v4228
    %10686 = vmatpush1.msra.mxu0 %v4227
    %10687 = vmatprep.subr.mxu0 %v4230
    %10688 = vmatpush1.msra.mxu0 %v4229
    %10689 = vmatprep.subr.mxu0 %v4232
    %10690 = vmatpush1.msra.mxu0 %v4231
    %10691 = vmatprep.subr.mxu0 %v4234
    %10692 = vmatpush1.msra.mxu0 %v4233
    %10693 = vmatprep.subr.mxu0 %v4236
    %10694 = vmatpush1.msra.mxu0 %v4235
    %10695 = vmatprep.subr.mxu0 %v4238
    %10696 = vmatpush1.msra.mxu0 %v4237
    %10697 = vmatprep.subr.mxu0 %v4240
    %10698 = vmatpush1.msra.mxu0 %v4239
    %10699 = vmatprep.subr.mxu0 %v4242
    %10700 = vmatpush1.msra.mxu0 %v4241
    %10701 = vmatprep.subr.mxu0 %v4244
    %10702 = vmatpush1.msra.mxu0 %v4243
    %10703 = vmatprep.subr.mxu0 %v4246
    %10704 = vmatpush1.msra.mxu0 %v4245
    %10705 = vmatprep.subr.mxu0 %v4248
    %10706 = vmatpush1.msra.mxu0 %v4247
    %10707 = vmatprep.mubr.f32.mxu0 %v10535
    %10708 = vmatmul.mubr.f32.gmra.mrb[0].mxu0 %v10528
    %v10709 = vpop.f32.mrb[0].mxu0
    %v10710 = vadd.f32 %v10639, %v10709
    %v10711 = vpop.f32.mrb[0].mxu0
    %v10712 = vadd.f32 %v10641, %v10711
    %10713 = vdwg.mxu0
    %10714 = vmatprep.subr.mxu0 %v4250
    %10715 = vmatpush1.msra.mxu0 %v4249
    %10716 = vmatprep.subr.mxu0 %v4252
    %10717 = vmatpush1.msra.mxu0 %v4251
    %10718 = vmatprep.subr.mxu0 %v4254
    %10719 = vmatpush1.msra.mxu0 %v4253
    %10720 = vmatprep.subr.mxu0 %v4256
    %10721 = vmatpush1.msra.mxu0 %v4255
    %10722 = vmatprep.subr.mxu0 %v4258
    %10723 = vmatpush1.msra.mxu0 %v4257
    %10724 = vmatprep.subr.mxu0 %v4260
    %10725 = vmatpush1.msra.mxu0 %v4259
    %10726 = vmatprep.subr.mxu0 %v4262
    %10727 = vmatpush1.msra.mxu0 %v4261
    %10728 = vmatprep.subr.mxu0 %v4264
    %10729 = vmatpush1.msra.mxu0 %v4263
    %10730 = vmatprep.subr.mxu0 %v4266
    %10731 = vmatpush1.msra.mxu0 %v4265
    %10732 = vmatprep.subr.mxu0 %v4268
    %10733 = vmatpush1.msra.mxu0 %v4267
    %10734 = vmatprep.subr.mxu0 %v4270
    %10735 = vmatpush1.msra.mxu0 %v4269
    %10736 = vmatprep.subr.mxu0 %v4272
    %10737 = vmatpush1.msra.mxu0 %v4271
    %10738 = vmatprep.subr.mxu0 %v4274
    %10739 = vmatpush1.msra.mxu0 %v4273
    %10740 = vmatprep.subr.mxu0 %v4276
    %10741 = vmatpush1.msra.mxu0 %v4275
    %10742 = vmatprep.subr.mxu0 %v4278
    %10743 = vmatpush1.msra.mxu0 %v4277
    %10744 = vmatprep.subr.mxu0 %v4280
    %10745 = vmatpush1.msra.mxu0 %v4279
    %10746 = vmatprep.subr.mxu0 %v4282
    %10747 = vmatpush1.msra.mxu0 %v4281
    %10748 = vmatprep.subr.mxu0 %v4284
    %10749 = vmatpush1.msra.mxu0 %v4283
    %10750 = vmatprep.subr.mxu0 %v4286
    %10751 = vmatpush1.msra.mxu0 %v4285
    %10752 = vmatprep.subr.mxu0 %v4288
    %10753 = vmatpush1.msra.mxu0 %v4287
    %10754 = vmatprep.subr.mxu0 %v4290
    %10755 = vmatpush1.msra.mxu0 %v4289
    %10756 = vmatprep.subr.mxu0 %v4292
    %10757 = vmatpush1.msra.mxu0 %v4291
    %10758 = vmatprep.subr.mxu0 %v4294
    %10759 = vmatpush1.msra.mxu0 %v4293
    %10760 = vmatprep.subr.mxu0 %v4296
    %10761 = vmatpush1.msra.mxu0 %v4295
    %10762 = vmatprep.subr.mxu0 %v4298
    %10763 = vmatpush1.msra.mxu0 %v4297
    %10764 = vmatprep.subr.mxu0 %v4300
    %10765 = vmatpush1.msra.mxu0 %v4299
    %10766 = vmatprep.subr.mxu0 %v4302
    %10767 = vmatpush1.msra.mxu0 %v4301
    %10768 = vmatprep.subr.mxu0 %v4304
    %10769 = vmatpush1.msra.mxu0 %v4303
    %10770 = vmatprep.subr.mxu0 %v4306
    %10771 = vmatpush1.msra.mxu0 %v4305
    %10772 = vmatprep.subr.mxu0 %v4308
    %10773 = vmatpush1.msra.mxu0 %v4307
    %10774 = vmatprep.subr.mxu0 %v4310
    %10775 = vmatpush1.msra.mxu0 %v4309
    %10776 = vmatprep.subr.mxu0 %v4312
    %10777 = vmatpush1.msra.mxu0 %v4311
    %10778 = vmatprep.mubr.f32.mxu0 %v10549
    %10779 = vmatmul.mubr.f32.gmra.mrb[0].mxu0 %v10542
    %v10780 = vpop.f32.mrb[0].mxu0
    %v10781 = vadd.f32 %v10710, %v10780
    %v10782 = vpop.f32.mrb[0].mxu0
    %v10783 = vadd.f32 %v10712, %v10782
    %10784 = vdwg.mxu0
    %10785 = vmatprep.subr.mxu0 %v4314
    %10786 = vmatpush1.msra.mxu0 %v4313
    %10787 = vmatprep.subr.mxu0 %v4316
    %10788 = vmatpush1.msra.mxu0 %v4315
    %10789 = vmatprep.subr.mxu0 %v4318
    %10790 = vmatpush1.msra.mxu0 %v4317
    %10791 = vmatprep.subr.mxu0 %v4320
    %10792 = vmatpush1.msra.mxu0 %v4319
    %10793 = vmatprep.subr.mxu0 %v4322
    %10794 = vmatpush1.msra.mxu0 %v4321
    %10795 = vmatprep.subr.mxu0 %v4324
    %10796 = vmatpush1.msra.mxu0 %v4323
    %10797 = vmatprep.subr.mxu0 %v4326
    %10798 = vmatpush1.msra.mxu0 %v4325
    %10799 = vmatprep.subr.mxu0 %v4328
    %10800 = vmatpush1.msra.mxu0 %v4327
    %10801 = vmatprep.subr.mxu0 %v4330
    %10802 = vmatpush1.msra.mxu0 %v4329
    %10803 = vmatprep.subr.mxu0 %v4332
    %10804 = vmatpush1.msra.mxu0 %v4331
    %10805 = vmatprep.subr.mxu0 %v4334
    %10806 = vmatpush1.msra.mxu0 %v4333
    %10807 = vmatprep.subr.mxu0 %v4336
    %10808 = vmatpush1.msra.mxu0 %v4335
    %10809 = vmatprep.subr.mxu0 %v4338
    %10810 = vmatpush1.msra.mxu0 %v4337
    %10811 = vmatprep.subr.mxu0 %v4340
    %10812 = vmatpush1.msra.mxu0 %v4339
    %10813 = vmatprep.subr.mxu0 %v4342
    %10814 = vmatpush1.msra.mxu0 %v4341
    %10815 = vmatprep.subr.mxu0 %v4344
    %10816 = vmatpush1.msra.mxu0 %v4343
    %10817 = vmatprep.subr.mxu0 %v4346
    %10818 = vmatpush1.msra.mxu0 %v4345
    %10819 = vmatprep.subr.mxu0 %v4348
    %10820 = vmatpush1.msra.mxu0 %v4347
    %10821 = vmatprep.subr.mxu0 %v4350
    %10822 = vmatpush1.msra.mxu0 %v4349
    %10823 = vmatprep.subr.mxu0 %v4352
    %10824 = vmatpush1.msra.mxu0 %v4351
    %10825 = vmatprep.subr.mxu0 %v4354
    %10826 = vmatpush1.msra.mxu0 %v4353
    %10827 = vmatprep.subr.mxu0 %v4356
    %10828 = vmatpush1.msra.mxu0 %v4355
    %10829 = vmatprep.subr.mxu0 %v4358
    %10830 = vmatpush1.msra.mxu0 %v4357
    %10831 = vmatprep.subr.mxu0 %v4360
    %10832 = vmatpush1.msra.mxu0 %v4359
    %10833 = vmatprep.subr.mxu0 %v4362
    %10834 = vmatpush1.msra.mxu0 %v4361
    %10835 = vmatprep.subr.mxu0 %v4364
    %10836 = vmatpush1.msra.mxu0 %v4363
    %10837 = vmatprep.subr.mxu0 %v4366
    %10838 = vmatpush1.msra.mxu0 %v4365
    %10839 = vmatprep.subr.mxu0 %v4368
    %10840 = vmatpush1.msra.mxu0 %v4367
    %10841 = vmatprep.subr.mxu0 %v4370
    %10842 = vmatpush1.msra.mxu0 %v4369
    %10843 = vmatprep.subr.mxu0 %v4372
    %10844 = vmatpush1.msra.mxu0 %v4371
    %10845 = vmatprep.subr.mxu0 %v4374
    %10846 = vmatpush1.msra.mxu0 %v4373
    %10847 = vmatprep.subr.mxu0 %v4376
    %10848 = vmatpush1.msra.mxu0 %v4375
    %10849 = vmatprep.mubr.f32.mxu0 %v10563
    %10850 = vmatmul.mubr.f32.gmra.mrb[0].mxu0 %v10556
    %v10851 = vpop.f32.mrb[0].mxu0
    %v10852 = vadd.f32 %v10781, %v10851
    %v10853 = vpop.f32.mrb[0].mxu0
    %v10854 = vadd.f32 %v10783, %v10853
    %10855 = vdwg.mxu0
    %10856 = vst [vmem:[#allocation2] sm:$0xff] %v10852
    %10857 = vst [vmem:[#allocation2 + $0x8] sm:$0xff] %v10854
    %v10858 = vld [vmem:[%s3] sm:$0xff]
    %v10859 = vld [vmem:[%s3 + $0x8] sm:$0xff]
    %v10860 = vld [vmem:[%s3 + $0x10] sm:$0xff]
    %v10861 = vld [vmem:[%s3 + $0x18] sm:$0xff]
    %v10862 = vld [vmem:[%s3 + $0x20] sm:$0xff]
    %v10863 = vld [vmem:[%s3 + $0x28] sm:$0xff]
    %v10864 = vld [vmem:[%s3 + $0x30] sm:$0xff]
    %v10865 = vld [vmem:[%s3 + $0x38] sm:$0xff]
    %v10866 = vld [vmem:[%s3 + $0x40] sm:$0xff]
    %v10867 = vld [vmem:[%s3 + $0x48] sm:$0xff]
    %v10868 = vld [vmem:[%s3 + $0x50] sm:$0xff]
    %v10869 = vld [vmem:[%s3 + $0x58] sm:$0xff]
    %v10870 = vld [vmem:[%s3 + $0x60] sm:$0xff]
    %v10871 = vld [vmem:[%s3 + $0x68] sm:$0xff]
    %v10872 = vld [vmem:[%s3 + $0x70] sm:$0xff]
    %v10873 = vld [vmem:[%s3 + $0x78] sm:$0xff]
    %v10874 = vld [vmem:[%s3 + $0x80] sm:$0xff]
    %v10875 = vld [vmem:[%s3 + $0x88] sm:$0xff]
    %v10876 = vld [vmem:[%s3 + $0x90] sm:$0xff]
    %v10877 = vld [vmem:[%s3 + $0x98] sm:$0xff]
    %v10878 = vld [vmem:[%s3 + $0xa0] sm:$0xff]
    %v10879 = vld [vmem:[%s3 + $0xa8] sm:$0xff]
    %v10880 = vld [vmem:[%s3 + $0xb0] sm:$0xff]
    %v10881 = vld [vmem:[%s3 + $0xb8] sm:$0xff]
    %v10882 = vld [vmem:[%s3 + $0xc0] sm:$0xff]
    %v10883 = vld [vmem:[%s3 + $0xc8] sm:$0xff]
    %v10884 = vld [vmem:[%s3 + $0xd0] sm:$0xff]
    %v10885 = vld [vmem:[%s3 + $0xd8] sm:$0xff]
    %v10886 = vld [vmem:[%s3 + $0xe0] sm:$0xff]
    %v10887 = vld [vmem:[%s3 + $0xe8] sm:$0xff]
    %v10888 = vld [vmem:[%s3 + $0xf0] sm:$0xff]
    %v10889 = vld [vmem:[%s3 + $0xf8] sm:$0xff]
    %v10890 = vld [vmem:[%s3 + $0x100] sm:$0xff]
    %v10891 = vld [vmem:[%s3 + $0x108] sm:$0xff]
    %v10892 = vld [vmem:[%s3 + $0x110] sm:$0xff]
    %v10893 = vld [vmem:[%s3 + $0x118] sm:$0xff]
    %v10894 = vld [vmem:[%s3 + $0x120] sm:$0xff]
    %v10895 = vld [vmem:[%s3 + $0x128] sm:$0xff]
    %v10896 = vld [vmem:[%s3 + $0x130] sm:$0xff]
    %v10897 = vld [vmem:[%s3 + $0x138] sm:$0xff]
    %v10898 = vld [vmem:[%s3 + $0x140] sm:$0xff]
    %v10899 = vld [vmem:[%s3 + $0x148] sm:$0xff]
    %v10900 = vld [vmem:[%s3 + $0x150] sm:$0xff]
    %v10901 = vld [vmem:[%s3 + $0x158] sm:$0xff]
    %v10902 = vld [vmem:[%s3 + $0x160] sm:$0xff]
    %v10903 = vld [vmem:[%s3 + $0x168] sm:$0xff]
    %v10904 = vld [vmem:[%s3 + $0x170] sm:$0xff]
    %v10905 = vld [vmem:[%s3 + $0x178] sm:$0xff]
    %v10906 = vld [vmem:[%s3 + $0x180] sm:$0xff]
    %v10907 = vld [vmem:[%s3 + $0x188] sm:$0xff]
    %v10908 = vld [vmem:[%s3 + $0x190] sm:$0xff]
    %v10909 = vld [vmem:[%s3 + $0x198] sm:$0xff]
    %v10910 = vld [vmem:[%s3 + $0x1a0] sm:$0xff]
    %v10911 = vld [vmem:[%s3 + $0x1a8] sm:$0xff]
    %v10912 = vld [vmem:[%s3 + $0x1b0] sm:$0xff]
    %v10913 = vld [vmem:[%s3 + $0x1b8] sm:$0xff]
    %v10914 = vld [vmem:[%s3 + $0x1c0] sm:$0xff]
    %v10915 = vld [vmem:[%s3 + $0x1c8] sm:$0xff]
    %v10916 = vld [vmem:[%s3 + $0x1d0] sm:$0xff]
    %v10917 = vld [vmem:[%s3 + $0x1d8] sm:$0xff]
    %v10918 = vld [vmem:[%s3 + $0x1e0] sm:$0xff]
    %v10919 = vld [vmem:[%s3 + $0x1e8] sm:$0xff]
    %v10920 = vld [vmem:[%s3 + $0x1f0] sm:$0xff]
    %v10921 = vld [vmem:[%s3 + $0x1f8] sm:$0xff]
    %v10922 = vld [vmem:[%s3 + $0x200] sm:$0xff]
    %v10923 = vld [vmem:[%s3 + $0x208] sm:$0xff]
    %v10924 = vld [vmem:[%s3 + $0x210] sm:$0xff]
    %v10925 = vld [vmem:[%s3 + $0x218] sm:$0xff]
    %v10926 = vld [vmem:[%s3 + $0x220] sm:$0xff]
    %v10927 = vld [vmem:[%s3 + $0x228] sm:$0xff]
    %v10928 = vld [vmem:[%s3 + $0x230] sm:$0xff]
    %v10929 = vld [vmem:[%s3 + $0x238] sm:$0xff]
    %v10930 = vld [vmem:[%s3 + $0x240] sm:$0xff]
    %v10931 = vld [vmem:[%s3 + $0x248] sm:$0xff]
    %v10932 = vld [vmem:[%s3 + $0x250] sm:$0xff]
    %v10933 = vld [vmem:[%s3 + $0x258] sm:$0xff]
    %v10934 = vld [vmem:[%s3 + $0x260] sm:$0xff]
    %v10935 = vld [vmem:[%s3 + $0x268] sm:$0xff]
    %v10936 = vld [vmem:[%s3 + $0x270] sm:$0xff]
    %v10937 = vld [vmem:[%s3 + $0x278] sm:$0xff]
    %v10938 = vld [vmem:[%s3 + $0x280] sm:$0xff]
    %v10939 = vld [vmem:[%s3 + $0x288] sm:$0xff]
    %v10940 = vld [vmem:[%s3 + $0x290] sm:$0xff]
    %v10941 = vld [vmem:[%s3 + $0x298] sm:$0xff]
    %v10942 = vld [vmem:[%s3 + $0x2a0] sm:$0xff]
    %v10943 = vld [vmem:[%s3 + $0x2a8] sm:$0xff]
    %v10944 = vld [vmem:[%s3 + $0x2b0] sm:$0xff]
    %v10945 = vld [vmem:[%s3 + $0x2b8] sm:$0xff]
    %v10946 = vld [vmem:[%s3 + $0x2c0] sm:$0xff]
    %v10947 = vld [vmem:[%s3 + $0x2c8] sm:$0xff]
    %v10948 = vld [vmem:[%s3 + $0x2d0] sm:$0xff]
    %v10949 = vld [vmem:[%s3 + $0x2d8] sm:$0xff]
    %v10950 = vld [vmem:[%s3 + $0x2e0] sm:$0xff]
    %v10951 = vld [vmem:[%s3 + $0x2e8] sm:$0xff]
    %v10952 = vld [vmem:[%s3 + $0x2f0] sm:$0xff]
    %v10953 = vld [vmem:[%s3 + $0x2f8] sm:$0xff]
    %v10954 = vld [vmem:[%s3 + $0x300] sm:$0xff]
    %v10955 = vld [vmem:[%s3 + $0x308] sm:$0xff]
    %v10956 = vld [vmem:[%s3 + $0x310] sm:$0xff]
    %v10957 = vld [vmem:[%s3 + $0x318] sm:$0xff]
    %v10958 = vld [vmem:[%s3 + $0x320] sm:$0xff]
    %v10959 = vld [vmem:[%s3 + $0x328] sm:$0xff]
    %v10960 = vld [vmem:[%s3 + $0x330] sm:$0xff]
    %v10961 = vld [vmem:[%s3 + $0x338] sm:$0xff]
    %v10962 = vld [vmem:[%s3 + $0x340] sm:$0xff]
    %v10963 = vld [vmem:[%s3 + $0x348] sm:$0xff]
    %v10964 = vld [vmem:[%s3 + $0x350] sm:$0xff]
    %v10965 = vld [vmem:[%s3 + $0x358] sm:$0xff]
    %v10966 = vld [vmem:[%s3 + $0x360] sm:$0xff]
    %v10967 = vld [vmem:[%s3 + $0x368] sm:$0xff]
    %v10968 = vld [vmem:[%s3 + $0x370] sm:$0xff]
    %v10969 = vld [vmem:[%s3 + $0x378] sm:$0xff]
    %v10970 = vld [vmem:[%s3 + $0x380] sm:$0xff]
    %v10971 = vld [vmem:[%s3 + $0x388] sm:$0xff]
    %v10972 = vld [vmem:[%s3 + $0x390] sm:$0xff]
    %v10973 = vld [vmem:[%s3 + $0x398] sm:$0xff]
    %v10974 = vld [vmem:[%s3 + $0x3a0] sm:$0xff]
    %v10975 = vld [vmem:[%s3 + $0x3a8] sm:$0xff]
    %v10976 = vld [vmem:[%s3 + $0x3b0] sm:$0xff]
    %v10977 = vld [vmem:[%s3 + $0x3b8] sm:$0xff]
    %v10978 = vld [vmem:[%s3 + $0x3c0] sm:$0xff]
    %v10979 = vld [vmem:[%s3 + $0x3c8] sm:$0xff]
    %v10980 = vld [vmem:[%s3 + $0x3d0] sm:$0xff]
    %v10981 = vld [vmem:[%s3 + $0x3d8] sm:$0xff]
    %v10982 = vld [vmem:[%s3 + $0x3e0] sm:$0xff]
    %v10983 = vld [vmem:[%s3 + $0x3e8] sm:$0xff]
    %v10984 = vld [vmem:[%s3 + $0x3f0] sm:$0xff]
    %v10985 = vld [vmem:[%s3 + $0x3f8] sm:$0xff]
    %v10986 = vld [vmem:[%s3 + $0x400] sm:$0xff]
    %v10987 = vld [vmem:[%s3 + $0x408] sm:$0xff]
    %v10988 = vld [vmem:[%s3 + $0x410] sm:$0xff]
    %v10989 = vld [vmem:[%s3 + $0x418] sm:$0xff]
    %v10990 = vld [vmem:[%s3 + $0x420] sm:$0xff]
    %v10991 = vld [vmem:[%s3 + $0x428] sm:$0xff]
    %v10992 = vld [vmem:[%s3 + $0x430] sm:$0xff]
    %v10993 = vld [vmem:[%s3 + $0x438] sm:$0xff]
    %v10994 = vld [vmem:[%s3 + $0x440] sm:$0xff]
    %v10995 = vld [vmem:[%s3 + $0x448] sm:$0xff]
    %v10996 = vld [vmem:[%s3 + $0x450] sm:$0xff]
    %v10997 = vld [vmem:[%s3 + $0x458] sm:$0xff]
    %v10998 = vld [vmem:[%s3 + $0x460] sm:$0xff]
    %v10999 = vld [vmem:[%s3 + $0x468] sm:$0xff]
    %v11000 = vld [vmem:[%s3 + $0x470] sm:$0xff]
    %v11001 = vld [vmem:[%s3 + $0x478] sm:$0xff]
    %v11002 = vld [vmem:[%s3 + $0x480] sm:$0xff]
    %v11003 = vld [vmem:[%s3 + $0x488] sm:$0xff]
    %v11004 = vld [vmem:[%s3 + $0x490] sm:$0xff]
    %v11005 = vld [vmem:[%s3 + $0x498] sm:$0xff]
    %v11006 = vld [vmem:[%s3 + $0x4a0] sm:$0xff]
    %v11007 = vld [vmem:[%s3 + $0x4a8] sm:$0xff]
    %v11008 = vld [vmem:[%s3 + $0x4b0] sm:$0xff]
    %v11009 = vld [vmem:[%s3 + $0x4b8] sm:$0xff]
    %v11010 = vld [vmem:[%s3 + $0x4c0] sm:$0xff]
    %v11011 = vld [vmem:[%s3 + $0x4c8] sm:$0xff]
    %v11012 = vld [vmem:[%s3 + $0x4d0] sm:$0xff]
    %v11013 = vld [vmem:[%s3 + $0x4d8] sm:$0xff]
    %v11014 = vld [vmem:[%s3 + $0x4e0] sm:$0xff]
    %v11015 = vld [vmem:[%s3 + $0x4e8] sm:$0xff]
    %v11016 = vld [vmem:[%s3 + $0x4f0] sm:$0xff]
    %v11017 = vld [vmem:[%s3 + $0x4f8] sm:$0xff]
    %v11018 = vld [vmem:[%s3 + $0x500] sm:$0xff]
    %v11019 = vld [vmem:[%s3 + $0x508] sm:$0xff]
    %v11020 = vld [vmem:[%s3 + $0x510] sm:$0xff]
    %v11021 = vld [vmem:[%s3 + $0x518] sm:$0xff]
    %v11022 = vld [vmem:[%s3 + $0x520] sm:$0xff]
    %v11023 = vld [vmem:[%s3 + $0x528] sm:$0xff]
    %v11024 = vld [vmem:[%s3 + $0x530] sm:$0xff]
    %v11025 = vld [vmem:[%s3 + $0x538] sm:$0xff]
    %v11026 = vld [vmem:[%s3 + $0x540] sm:$0xff]
    %v11027 = vld [vmem:[%s3 + $0x548] sm:$0xff]
    %v11028 = vld [vmem:[%s3 + $0x550] sm:$0xff]
    %v11029 = vld [vmem:[%s3 + $0x558] sm:$0xff]
    %v11030 = vld [vmem:[%s3 + $0x560] sm:$0xff]
    %v11031 = vld [vmem:[%s3 + $0x568] sm:$0xff]
    %v11032 = vld [vmem:[%s3 + $0x570] sm:$0xff]
    %v11033 = vld [vmem:[%s3 + $0x578] sm:$0xff]
    %v11034 = vld [vmem:[%s3 + $0x580] sm:$0xff]
    %v11035 = vld [vmem:[%s3 + $0x588] sm:$0xff]
    %v11036 = vld [vmem:[%s3 + $0x590] sm:$0xff]
    %v11037 = vld [vmem:[%s3 + $0x598] sm:$0xff]
    %v11038 = vld [vmem:[%s3 + $0x5a0] sm:$0xff]
    %v11039 = vld [vmem:[%s3 + $0x5a8] sm:$0xff]
    %v11040 = vld [vmem:[%s3 + $0x5b0] sm:$0xff]
    %v11041 = vld [vmem:[%s3 + $0x5b8] sm:$0xff]
    %v11042 = vld [vmem:[%s3 + $0x5c0] sm:$0xff]
    %v11043 = vld [vmem:[%s3 + $0x5c8] sm:$0xff]
    %v11044 = vld [vmem:[%s3 + $0x5d0] sm:$0xff]
    %v11045 = vld [vmem:[%s3 + $0x5d8] sm:$0xff]
    %v11046 = vld [vmem:[%s3 + $0x5e0] sm:$0xff]
    %v11047 = vld [vmem:[%s3 + $0x5e8] sm:$0xff]
    %v11048 = vld [vmem:[%s3 + $0x5f0] sm:$0xff]
    %v11049 = vld [vmem:[%s3 + $0x5f8] sm:$0xff]
    %v11050 = vld [vmem:[%s4] sm:$0x3f]
    %v11052 = vlaneseq
    %v11053 = vshrl.u32 %v11052, 7
    %v11054 = vsub.s32 0, %v11053
    %v11055 = vrot.slane %v11050, %v11054
    %v11056 = vlaneseq
    %v11057 = vshrl.u32 %v11056, 7
    %v11058 = vsub.s32 1, %v11057
    %v11059 = vrot.slane %v11050, %v11058
    %v11060 = vlaneseq
    %v11061 = vshrl.u32 %v11060, 7
    %v11062 = vsub.s32 2, %v11061
    %v11063 = vrot.slane %v11050, %v11062
    %v11064 = vlaneseq
    %v11065 = vshrl.u32 %v11064, 7
    %v11066 = vsub.s32 3, %v11065
    %v11067 = vrot.slane %v11050, %v11066
    %v11068 = vlaneseq
    %v11069 = vshrl.u32 %v11068, 7
    %v11070 = vsub.s32 4, %v11069
    %v11071 = vrot.slane %v11050, %v11070
    %v11072 = vlaneseq
    %v11073 = vshrl.u32 %v11072, 7
    %v11074 = vsub.s32 5, %v11073
    %v11075 = vrot.slane %v11050, %v11074
    %11082 = vmatprep.subr.mxu0 %v10859
    %11083 = vmatpush1.msra.mxu0 %v10858
    %11084 = vmatprep.subr.mxu0 %v10865
    %11085 = vmatpush1.msra.mxu0 %v10864
    %11086 = vmatprep.subr.mxu0 %v10871
    %11087 = vmatpush1.msra.mxu0 %v10870
    %11088 = vmatprep.subr.mxu0 %v10877
    %11089 = vmatpush1.msra.mxu0 %v10876
    %11090 = vmatprep.subr.mxu0 %v10883
    %11091 = vmatpush1.msra.mxu0 %v10882
    %11092 = vmatprep.subr.mxu0 %v10889
    %11093 = vmatpush1.msra.mxu0 %v10888
    %11094 = vmatprep.subr.mxu0 %v10895
    %11095 = vmatpush1.msra.mxu0 %v10894
    %11096 = vmatprep.subr.mxu0 %v10901
    %11097 = vmatpush1.msra.mxu0 %v10900
    %11098 = vmatprep.subr.mxu0 %v10907
    %11099 = vmatpush1.msra.mxu0 %v10906
    %11100 = vmatprep.subr.mxu0 %v10913
    %11101 = vmatpush1.msra.mxu0 %v10912
    %11102 = vmatprep.subr.mxu0 %v10919
    %11103 = vmatpush1.msra.mxu0 %v10918
    %11104 = vmatprep.subr.mxu0 %v10925
    %11105 = vmatpush1.msra.mxu0 %v10924
    %11106 = vmatprep.subr.mxu0 %v10931
    %11107 = vmatpush1.msra.mxu0 %v10930
    %11108 = vmatprep.subr.mxu0 %v10937
    %11109 = vmatpush1.msra.mxu0 %v10936
    %11110 = vmatprep.subr.mxu0 %v10943
    %11111 = vmatpush1.msra.mxu0 %v10942
    %11112 = vmatprep.subr.mxu0 %v10949
    %11113 = vmatpush1.msra.mxu0 %v10948
    %11114 = vmatprep.subr.mxu0 %v10955
    %11115 = vmatpush1.msra.mxu0 %v10954
    %11116 = vmatprep.subr.mxu0 %v10961
    %11117 = vmatpush1.msra.mxu0 %v10960
    %11118 = vmatprep.subr.mxu0 %v10967
    %11119 = vmatpush1.msra.mxu0 %v10966
    %11120 = vmatprep.subr.mxu0 %v10973
    %11121 = vmatpush1.msra.mxu0 %v10972
    %11122 = vmatprep.subr.mxu0 %v10979
    %11123 = vmatpush1.msra.mxu0 %v10978
    %11124 = vmatprep.subr.mxu0 %v10985
    %11125 = vmatpush1.msra.mxu0 %v10984
    %11126 = vmatprep.subr.mxu0 %v10991
    %11127 = vmatpush1.msra.mxu0 %v10990
    %11128 = vmatprep.subr.mxu0 %v10997
    %11129 = vmatpush1.msra.mxu0 %v10996
    %11130 = vmatprep.subr.mxu0 %v11003
    %11131 = vmatpush1.msra.mxu0 %v11002
    %11132 = vmatprep.subr.mxu0 %v11009
    %11133 = vmatpush1.msra.mxu0 %v11008
    %11134 = vmatprep.subr.mxu0 %v11015
    %11135 = vmatpush1.msra.mxu0 %v11014
    %11136 = vmatprep.subr.mxu0 %v11021
    %11137 = vmatpush1.msra.mxu0 %v11020
    %11138 = vmatprep.subr.mxu0 %v11027
    %11139 = vmatpush1.msra.mxu0 %v11026
    %11140 = vmatprep.subr.mxu0 %v11033
    %11141 = vmatpush1.msra.mxu0 %v11032
    %11142 = vmatprep.subr.mxu0 %v11039
    %11143 = vmatpush1.msra.mxu0 %v11038
    %11144 = vmatprep.subr.mxu0 %v11045
    %11145 = vmatpush1.msra.mxu0 %v11044
    %11146 = vmatprep.mubr.f32.mxu0 %v10854
    %11147 = vmatmul.mubr.f32.gmra.mrb[0].mxu0 %v10852
    %v11148 = vpop.f32.mrb[0].mxu0
    %v11149 = vadd.f32 %v11055, %v11148
    %v11150 = vpop.f32.mrb[0].mxu0
    %v11151 = vadd.f32 %v11059, %v11150
    %11152 = vdwg.mxu0
    %11153 = vmatprep.subr.mxu0 %v10861
    %11154 = vmatpush1.msra.mxu0 %v10860
    %11155 = vmatprep.subr.mxu0 %v10867
    %11156 = vmatpush1.msra.mxu0 %v10866
    %11157 = vmatprep.subr.mxu0 %v10873
    %11158 = vmatpush1.msra.mxu0 %v10872
    %11159 = vmatprep.subr.mxu0 %v10879
    %11160 = vmatpush1.msra.mxu0 %v10878
    %11161 = vmatprep.subr.mxu0 %v10885
    %11162 = vmatpush1.msra.mxu0 %v10884
    %11163 = vmatprep.subr.mxu0 %v10891
    %11164 = vmatpush1.msra.mxu0 %v10890
    %11165 = vmatprep.subr.mxu0 %v10897
    %11166 = vmatpush1.msra.mxu0 %v10896
    %11167 = vmatprep.subr.mxu0 %v10903
    %11168 = vmatpush1.msra.mxu0 %v10902
    %11169 = vmatprep.subr.mxu0 %v10909
    %11170 = vmatpush1.msra.mxu0 %v10908
    %11171 = vmatprep.subr.mxu0 %v10915
    %11172 = vmatpush1.msra.mxu0 %v10914
    %11173 = vmatprep.subr.mxu0 %v10921
    %11174 = vmatpush1.msra.mxu0 %v10920
    %11175 = vmatprep.subr.mxu0 %v10927
    %11176 = vmatpush1.msra.mxu0 %v10926
    %11177 = vmatprep.subr.mxu0 %v10933
    %11178 = vmatpush1.msra.mxu0 %v10932
    %11179 = vmatprep.subr.mxu0 %v10939
    %11180 = vmatpush1.msra.mxu0 %v10938
    %11181 = vmatprep.subr.mxu0 %v10945
    %11182 = vmatpush1.msra.mxu0 %v10944
    %11183 = vmatprep.subr.mxu0 %v10951
    %11184 = vmatpush1.msra.mxu0 %v10950
    %11185 = vmatprep.subr.mxu0 %v10957
    %11186 = vmatpush1.msra.mxu0 %v10956
    %11187 = vmatprep.subr.mxu0 %v10963
    %11188 = vmatpush1.msra.mxu0 %v10962
    %11189 = vmatprep.subr.mxu0 %v10969
    %11190 = vmatpush1.msra.mxu0 %v10968
    %11191 = vmatprep.subr.mxu0 %v10975
    %11192 = vmatpush1.msra.mxu0 %v10974
    %11193 = vmatprep.subr.mxu0 %v10981
    %11194 = vmatpush1.msra.mxu0 %v10980
    %11195 = vmatprep.subr.mxu0 %v10987
    %11196 = vmatpush1.msra.mxu0 %v10986
    %11197 = vmatprep.subr.mxu0 %v10993
    %11198 = vmatpush1.msra.mxu0 %v10992
    %11199 = vmatprep.subr.mxu0 %v10999
    %11200 = vmatpush1.msra.mxu0 %v10998
    %11201 = vmatprep.subr.mxu0 %v11005
    %11202 = vmatpush1.msra.mxu0 %v11004
    %11203 = vmatprep.subr.mxu0 %v11011
    %11204 = vmatpush1.msra.mxu0 %v11010
    %11205 = vmatprep.subr.mxu0 %v11017
    %11206 = vmatpush1.msra.mxu0 %v11016
    %11207 = vmatprep.subr.mxu0 %v11023
    %11208 = vmatpush1.msra.mxu0 %v11022
    %11209 = vmatprep.subr.mxu0 %v11029
    %11210 = vmatpush1.msra.mxu0 %v11028
    %11211 = vmatprep.subr.mxu0 %v11035
    %11212 = vmatpush1.msra.mxu0 %v11034
    %11213 = vmatprep.subr.mxu0 %v11041
    %11214 = vmatpush1.msra.mxu0 %v11040
    %11215 = vmatprep.subr.mxu0 %v11047
    %11216 = vmatpush1.msra.mxu0 %v11046
    %11217 = vmatprep.mubr.f32.mxu0 %v10854
    %11218 = vmatmul.mubr.f32.gmra.mrb[0].mxu0 %v10852
    %v11219 = vpop.f32.mrb[0].mxu0
    %v11220 = vadd.f32 %v11063, %v11219
    %v11221 = vpop.f32.mrb[0].mxu0
    %v11222 = vadd.f32 %v11067, %v11221
    %11223 = vdwg.mxu0
    %11224 = vmatprep.subr.mxu0 %v10863
    %11225 = vmatpush1.msra.mxu0 %v10862
    %11226 = vmatprep.subr.mxu0 %v10869
    %11227 = vmatpush1.msra.mxu0 %v10868
    %11228 = vmatprep.subr.mxu0 %v10875
    %11229 = vmatpush1.msra.mxu0 %v10874
    %11230 = vmatprep.subr.mxu0 %v10881
    %11231 = vmatpush1.msra.mxu0 %v10880
    %11232 = vmatprep.subr.mxu0 %v10887
    %11233 = vmatpush1.msra.mxu0 %v10886
    %11234 = vmatprep.subr.mxu0 %v10893
    %11235 = vmatpush1.msra.mxu0 %v10892
    %11236 = vmatprep.subr.mxu0 %v10899
    %11237 = vmatpush1.msra.mxu0 %v10898
    %11238 = vmatprep.subr.mxu0 %v10905
    %11239 = vmatpush1.msra.mxu0 %v10904
    %11240 = vmatprep.subr.mxu0 %v10911
    %11241 = vmatpush1.msra.mxu0 %v10910
    %11242 = vmatprep.subr.mxu0 %v10917
    %11243 = vmatpush1.msra.mxu0 %v10916
    %11244 = vmatprep.subr.mxu0 %v10923
    %11245 = vmatpush1.msra.mxu0 %v10922
    %11246 = vmatprep.subr.mxu0 %v10929
    %11247 = vmatpush1.msra.mxu0 %v10928
    %11248 = vmatprep.subr.mxu0 %v10935
    %11249 = vmatpush1.msra.mxu0 %v10934
    %11250 = vmatprep.subr.mxu0 %v10941
    %11251 = vmatpush1.msra.mxu0 %v10940
    %11252 = vmatprep.subr.mxu0 %v10947
    %11253 = vmatpush1.msra.mxu0 %v10946
    %11254 = vmatprep.subr.mxu0 %v10953
    %11255 = vmatpush1.msra.mxu0 %v10952
    %11256 = vmatprep.subr.mxu0 %v10959
    %11257 = vmatpush1.msra.mxu0 %v10958
    %11258 = vmatprep.subr.mxu0 %v10965
    %11259 = vmatpush1.msra.mxu0 %v10964
    %11260 = vmatprep.subr.mxu0 %v10971
    %11261 = vmatpush1.msra.mxu0 %v10970
    %11262 = vmatprep.subr.mxu0 %v10977
    %11263 = vmatpush1.msra.mxu0 %v10976
    %11264 = vmatprep.subr.mxu0 %v10983
    %11265 = vmatpush1.msra.mxu0 %v10982
    %11266 = vmatprep.subr.mxu0 %v10989
    %11267 = vmatpush1.msra.mxu0 %v10988
    %11268 = vmatprep.subr.mxu0 %v10995
    %11269 = vmatpush1.msra.mxu0 %v10994
    %11270 = vmatprep.subr.mxu0 %v11001
    %11271 = vmatpush1.msra.mxu0 %v11000
    %11272 = vmatprep.subr.mxu0 %v11007
    %11273 = vmatpush1.msra.mxu0 %v11006
    %11274 = vmatprep.subr.mxu0 %v11013
    %11275 = vmatpush1.msra.mxu0 %v11012
    %11276 = vmatprep.subr.mxu0 %v11019
    %11277 = vmatpush1.msra.mxu0 %v11018
    %11278 = vmatprep.subr.mxu0 %v11025
    %11279 = vmatpush1.msra.mxu0 %v11024
    %11280 = vmatprep.subr.mxu0 %v11031
    %11281 = vmatpush1.msra.mxu0 %v11030
    %11282 = vmatprep.subr.mxu0 %v11037
    %11283 = vmatpush1.msra.mxu0 %v11036
    %11284 = vmatprep.subr.mxu0 %v11043
    %11285 = vmatpush1.msra.mxu0 %v11042
    %11286 = vmatprep.subr.mxu0 %v11049
    %11287 = vmatpush1.msra.mxu0 %v11048
    %11288 = vmatprep.mubr.f32.mxu0 %v10854
    %11289 = vmatmul.mubr.f32.gmra.mrb[0].mxu0 %v10852
    %v11290 = vpop.f32.mrb[0].mxu0
    %v11291 = vadd.f32 %v11071, %v11290
    %v11292 = vpop.f32.mrb[0].mxu0
    %v11293 = vadd.f32 %v11075, %v11292
    %11294 = vdwg.mxu0
    %11295 = vst [vmem:[#allocation4] sm:$0xff] %v11149
    %11296 = vst [vmem:[#allocation4 + $0x8] sm:$0xff] %v11151
    %11297 = vst [vmem:[#allocation4 + $0x10] sm:$0xff] %v11220
    %11298 = vst [vmem:[#allocation4 + $0x18] sm:$0xff] %v11222
    %11299 = vst [vmem:[#allocation4 + $0x20] sm:$0xff] %v11291
    %11300 = vst [vmem:[#allocation4 + $0x28] sm:$0xff] %v11293
    // Predicated region
    $region22: #{tpu_custom_call.1} parent=1 // pred_check
      _
    $region23: #{tpu_custom_call.1} parent=1 // pred_check_branch
      %11302 = sbr.rel (0) target = $region25
    $region24: #{tpu_custom_call.1} parent=1 // pred_region
      %s11304 = ssub.s32 256, 256
      %11305 = vsyncadd [#allocation3], %s11304
      %s11307 = sshll.u32 [#allocation2], 4
      %s11308 = int_to_ptr.vmem [resolvable:$true] %s11307
      %11310 = dma.vmem_to_hbm [thread:$0]  %s11308, 256, %s5, [#allocation3]
    $region25: #{tpu_custom_call.1} parent=1 // pred_fallthru
      _
    // Predicated region
    $region26: #{tpu_custom_call.1} parent=1 // pred_check
      _
    $region27: #{tpu_custom_call.1} parent=1 // pred_check_branch
      %11312 = sbr.rel (0) target = $region29
    $region28: #{tpu_custom_call.1} parent=1 // pred_region
      %s11314 = ssub.s32 768, 768
      %11315 = vsyncadd [#allocation5], %s11314
      %s11317 = sshll.u32 [#allocation4], 4
      %s11318 = int_to_ptr.vmem [resolvable:$true] %s11317
      %11320 = dma.vmem_to_hbm [thread:$0]  %s11318, 768, %s6, [#allocation5]
    $region29: #{tpu_custom_call.1} parent=1 // pred_fallthru
      _
    // Predicated region
    $region30: #{tpu_custom_call.1} parent=1 // pred_check
      _
    $region31: #{tpu_custom_call.1} parent=1 // pred_check_branch
      %11322 = sbr.rel (0) target = $region33
    $region32: #{tpu_custom_call.1} parent=1 // pred_region
      %11323 = dma.done [#allocation3], 256
    $region33: #{tpu_custom_call.1} parent=1 // pred_fallthru
      _
    // Predicated region
    $region34: #{tpu_custom_call.1} parent=1 // pred_check
      _
    $region35: #{tpu_custom_call.1} parent=1 // pred_check_branch
      %11325 = sbr.rel (0) target = $region37
    $region36: #{tpu_custom_call.1} parent=1 // pred_region
      %11326 = dma.done [#allocation5], 768
    $region37: #{tpu_custom_call.1} parent=1 // pred_fallthru
      _
    %11327 = vsyncpa [#allocation3], 1
    %11328 = vsyncpa [#allocation5], 1

</llo_original>
